<compile_context>
chip_gen: v7x
topology: tpu7x:2x2x1
jax: 0.10.0
libtpu: 0.0.40
codegen_flags: <defaults>
</compile_context>

<pallas_src>
import jax
import jax.numpy as jnp
from jax.experimental import pallas as pl

# ----------------------------------------------------------------------------
# Synthetic encoding dims (get_*_encoding_dim() are not provided in the module)
# ----------------------------------------------------------------------------
DIM_ENC_CARD = 16
DIM_ENC_CHARACTER = 12
DIM_ENC_MONSTER = 20
DIM_ENC_ENERGY = 4

# Model dims (dim_card must be divisible by num_heads = 4)
DIM_CARD = 32
DIM_CHAR = 16
DIM_MONSTER = 16
DIM_ENERGY = 8
NUM_HEADS = 4
HEAD_DIM = DIM_CARD // NUM_HEADS
NUM_CT_LAYERS = 2          # card_transformer_1 and card_transformer_2 (distinct weights)
NUM_STREAMS = 3            # hand, draw, disc

DIM_OTHER = DIM_CHAR + DIM_MONSTER + DIM_ENERGY           # 40
DIM_MID = NUM_STREAMS * DIM_CARD + 3 + DIM_OTHER          # 139  (x_global width)
DIM_BIG = DIM_MID + DIM_CARD                              # 171

NEG_INF = -1e30
# TODO(synk): dim_big/dim_mid (171/139) are not 128-aligned; padding them would
# change the (synthetic) model dims, so lane padding is left to Mosaic.

N_DATA = 11
N_CARD_W = 14
N_TAIL_W = 44


# ----------------------------------------------------------------------------
# In-kernel helpers
# ----------------------------------------------------------------------------
def _dot(a, b):
    """MXU matmul: bf16 inputs, f32 accumulation."""
    return jnp.dot(a.astype(jnp.bfloat16), b.astype(jnp.bfloat16),
                   preferred_element_type=jnp.float32)


def _layernorm(x, g, b):
    mean = jnp.mean(x, axis=-1, keepdims=True)
    c = x - mean
    var = jnp.mean(c * c, axis=-1, keepdims=True)
    return c * jax.lax.rsqrt(var + 1e-5) * g + b


def _relu(x):
    return jnp.maximum(x, 0.0)


# ----------------------------------------------------------------------------
# The fused forward kernel
# ----------------------------------------------------------------------------
def _dqn_kernel(*refs):
    (x_enc_ref, bias_ref, keep_ref, valid_ref, pool_ref, lens_ref,
     rep_ref, act_ref, mon_ref, chr_ref, eng_ref) = refs[:N_DATA]

    (emb_w, emb_b, wqkv, bqkv, wo, bo, ln1g, ln1b,
     ff1w, ff1b, ff2w, ff2b, ln2g, ln2b) = refs[N_DATA:N_DATA + N_CARD_W]

    (emb_mon_w1, emb_mon_b1, emb_mon_w2, emb_mon_b2,
     emb_chr_w1, emb_chr_b1, emb_chr_w2, emb_chr_b2,
     emb_eng_w1, emb_eng_b1, emb_eng_w2, emb_eng_b2,
     oth_w_mon, oth_w_chr, oth_w_eng, oth_b1, oth_w2, oth_b2,
     card_w_pool, card_w_len, card_w_oth, card_w_hand, card_b1,
     card_w2, card_b2, card_wh, card_bh,
     mon_w_pool, mon_w_len, mon_w_oth, mon_w_act, mon_b1,
     mon_w2, mon_b2, mon_wh, mon_bh,
     end_w_pool, end_w_len, end_w_oth, end_b1,
     end_w2, end_b2, end_wh, end_bh) = refs[N_DATA + N_CARD_W:
                                            N_DATA + N_CARD_W + N_TAIL_W]

    qcard_ref, qmon_ref, qend_ref = refs[N_DATA + N_CARD_W + N_TAIL_W:]

    E = DIM_CARD
    hd = HEAD_DIM
    scale = 1.0 / (hd ** 0.5)
    BH = rep_ref.shape[0]                 # batch * max_size_hand (static)

    bias = bias_ref[...]                  # (N, N) additive attention bias (0 / -1e30)
    keep = keep_ref[...]                  # (N, 1) 0.0 for rows whose stream is fully padded

    # ---- card embedding (plain Linear) + 2 CardTransformer blocks ----
    x = _dot(x_enc_ref[...], emb_w[...]) + emb_b[...]               # (N, E)

    for layer in range(NUM_CT_LAYERS):
        # fused QKV projection
        qkv = _dot(x, wqkv[layer]) + bqkv[layer]                    # (N, 3E)
        w_out = wo[layer]                                           # (E, E) f32
        acc = jnp.zeros_like(x)                                     # (N, E)
        for h in range(NUM_HEADS):
            q = qkv[:, h * hd:(h + 1) * hd] * scale                 # scale Q, not logits
            k = qkv[:, E + h * hd:E + (h + 1) * hd]
            v = qkv[:, 2 * E + h * hd:2 * E + (h + 1) * hd]
            logits = jax.lax.dot_general(
                q.astype(jnp.bfloat16), k.astype(jnp.bfloat16),
                (((1,), (1,)), ((), ())),
                preferred_element_type=jnp.float32) + bias          # (N, N)
            m = jnp.max(logits, axis=-1, keepdims=True)
            p = jnp.exp(logits - m)
            attn = p * pl.reciprocal(jnp.sum(p, axis=-1, keepdims=True), approx=True)
            head_out = _dot(attn, v)                                # (N, hd)
            acc = acc + _dot(head_out, w_out[h * hd:(h + 1) * hd, :])
        # fallback of _mha_with_fallback: zero MHA output for fully-padded streams
        mha = (acc + bo[layer]) * keep

        x = _layernorm(x + mha, ln1g[layer], ln1b[layer])
        ff = _relu(_dot(x, ff1w[layer]) + ff1b[layer])
        ff = _dot(ff, ff2w[layer]) + ff2b[layer]
        x = _layernorm(x + ff, ln2g[layer], ln2b[layer])

    # final masking (x_card *= x_mask_v)
    cards = x * valid_ref[...]                                      # (N, E)
    hand = cards[:BH, :]                                            # hand stream rows first

    # masked per-stream mean pooling (one small matmul per stream)
    pooled = [_dot(pool_ref[s], cards) for s in range(NUM_STREAMS)] # 3 x (B, E)

    # ---- embedding MLPs (Linear->ReLU, Linear->ReLU) ----
    xm = _relu(_dot(mon_ref[...], emb_mon_w1[...]) + emb_mon_b1[...])
    xm = _relu(_dot(xm, emb_mon_w2[...]) + emb_mon_b2[...])
    xc = _relu(_dot(chr_ref[...], emb_chr_w1[...]) + emb_chr_b1[...])
    xc = _relu(_dot(xc, emb_chr_w2[...]) + emb_chr_b2[...])
    xe = _relu(_dot(eng_ref[...], emb_eng_w1[...]) + emb_eng_b1[...])
    xe = _relu(_dot(xe, emb_eng_w2[...]) + emb_eng_b2[...])

    # ---- mlp_other on concat([monster, char, energy]) via split weights ----
    xo = _relu(_dot(xm, oth_w_mon[...]) + _dot(xc, oth_w_chr[...])
               + _dot(xe, oth_w_eng[...]) + oth_b1[...])
    xo = _relu(_dot(xo, oth_w2[...]) + oth_b2[...])                 # (B, DIM_OTHER)

    lens = lens_ref[...]                                            # (B, 3) len/max per stream

    # x_global = [pooled_hand, pooled_draw, pooled_disc, lens, x_other], consumed
    # through split weight blocks (no in-kernel concatenation / reshape).
    def global_matmul(w_pool, w_len, w_oth):
        g = _dot(lens, w_len[...]) + _dot(xo, w_oth[...])
        for s in range(NUM_STREAMS):
            g = g + _dot(pooled[s], w_pool[s])
        return g

    # ---- mlp_card: per hand slot, input = concat([x_global, card_feat]) ----
    g_card = global_matmul(card_w_pool, card_w_len, card_w_oth)     # (B, DIM_BIG)
    h1 = _relu(_dot(rep_ref[...], g_card)                           # replicate per hand slot
               + _dot(hand, card_w_hand[...]) + card_b1[...])       # (B*H, DIM_BIG)
    h1 = _relu(_dot(h1, card_w2[...]) + card_b2[...])
    qcard_ref[...] = _dot(h1, card_wh[...]) + card_bh[...]          # (B*H, 2)

    # ---- mlp_monster: input = concat([x_global, x_card_active]) ----
    x_active = _dot(act_ref[...], hand)                             # (B, DIM_CARD)
    hm = _relu(global_matmul(mon_w_pool, mon_w_len, mon_w_oth)
               + _dot(x_active, mon_w_act[...]) + mon_b1[...])
    hm = _relu(_dot(hm, mon_w2[...]) + mon_b2[...])
    qmon_ref[...] = _dot(hm, mon_wh[...]) + mon_bh[...]             # (B, 1)

    # ---- mlp_end_turn: input = x_global ----
    he = _relu(global_matmul(end_w_pool, end_w_len, end_w_oth) + end_b1[...])
    he = _relu(_dot(he, end_w2[...]) + end_b2[...])
    qend_ref[...] = _dot(he, end_wh[...]) + end_bh[...]             # (B, 1)


# ----------------------------------------------------------------------------
# Parameter construction (deterministic, synthetic)
# ----------------------------------------------------------------------------
_CARD_KEYS = ("emb_w", "emb_b", "wqkv", "bqkv", "wo", "bo",
              "ln1_g", "ln1_b", "ff1_w", "ff1_b", "ff2_w", "ff2_b",
              "ln2_g", "ln2_b")

_TAIL_KEYS = (
    "emb_mon_w1", "emb_mon_b1", "emb_mon_w2", "emb_mon_b2",
    "emb_chr_w1", "emb_chr_b1", "emb_chr_w2", "emb_chr_b2",
    "emb_eng_w1", "emb_eng_b1", "emb_eng_w2", "emb_eng_b2",
    "oth_w_mon", "oth_w_chr", "oth_w_eng", "oth_b1", "oth_w2", "oth_b2",
    "card_w_pool", "card_w_len", "card_w_oth", "card_w_hand", "card_b1",
    "card_w2", "card_b2", "card_wh", "card_bh",
    "mon_w_pool", "mon_w_len", "mon_w_oth", "mon_w_act", "mon_b1",
    "mon_w2", "mon_b2", "mon_wh", "mon_bh",
    "end_w_pool", "end_w_len", "end_w_oth", "end_b1",
    "end_w2", "end_b2", "end_wh", "end_bh",
)


def _bf(w):
    return w.astype(jnp.bfloat16)


def _uniform(key, shape, scale):
    return jax.random.uniform(key, shape, jnp.float32, -scale, scale)


def init_linear(key, din, dout):
    kw, kb = jax.random.split(key)
    s = 1.0 / (din ** 0.5)
    return _uniform(kw, (din, dout), s), _uniform(kb, (1, dout), s)


def init_split_linear(key, dins, dout):
    """One Linear over a concatenated input, stored as per-chunk weight blocks."""
    n = len(dins)
    ks = jax.random.split(key, n + 1)
    s = 1.0 / (sum(dins) ** 0.5)
    ws = [_uniform(ks[i], (d, dout), s) for i, d in enumerate(dins)]
    b = _uniform(ks[n], (1, dout), s)
    return ws, b


def init_ct_stack(key, embed_dim, ff_dim, n_layers):
    def one(k):
        ks = jax.random.split(k, 4)
        wqkv, bqkv = init_linear(ks[0], embed_dim, 3 * embed_dim)
        wo, bo = init_linear(ks[1], embed_dim, embed_dim)
        ff1w, ff1b = init_linear(ks[2], embed_dim, ff_dim)
        ff2w, ff2b = init_linear(ks[3], ff_dim, embed_dim)
        return dict(
            wqkv=wqkv, bqkv=bqkv, wo=wo, bo=bo,
            ln1_g=jnp.ones((1, embed_dim), jnp.float32),
            ln1_b=jnp.zeros((1, embed_dim), jnp.float32),
            ff1_w=ff1w, ff1_b=ff1b, ff2_w=ff2w, ff2_b=ff2b,
            ln2_g=jnp.ones((1, embed_dim), jnp.float32),
            ln2_b=jnp.zeros((1, embed_dim), jnp.float32))
    layers = [one(k) for k in jax.random.split(key, n_layers)]
    stacked = {k: jnp.stack([l[k] for l in layers]) for k in layers[0]}
    for k in ("wqkv", "ff1_w", "ff2_w"):     # consumed whole -> store in bf16
        stacked[k] = _bf(stacked[k])
    # wo is sliced per head inside the kernel -> keep f32 (sublane-aligned slices)
    return stacked


def init_card_params(key):
    k1, k2 = jax.random.split(key)
    emb_w, emb_b = init_linear(k1, DIM_ENC_CARD, DIM_CARD)
    p = {"emb_w": _bf(emb_w), "emb_b": emb_b}
    p.update(init_ct_stack(k2, DIM_CARD, DIM_CARD, NUM_CT_LAYERS))
    return p


def init_tail_params(key):
    ks = jax.random.split(key, 16)
    P = {}
    w, b = init_linear(ks[0], DIM_ENC_MONSTER, DIM_MONSTER); P["emb_mon_w1"], P["emb_mon_b1"] = _bf(w), b
    w, b = init_linear(ks[1], DIM_MONSTER, DIM_MONSTER);     P["emb_mon_w2"], P["emb_mon_b2"] = _bf(w), b
    w, b = init_linear(ks[2], DIM_ENC_CHARACTER, DIM_CHAR);  P["emb_chr_w1"], P["emb_chr_b1"] = _bf(w), b
    w, b = init_linear(ks[3], DIM_CHAR, DIM_CHAR);           P["emb_chr_w2"], P["emb_chr_b2"] = _bf(w), b
    w, b = init_linear(ks[4], DIM_ENC_ENERGY, DIM_ENERGY);   P["emb_eng_w1"], P["emb_eng_b1"] = _bf(w), b
    w, b = init_linear(ks[5], DIM_ENERGY, DIM_ENERGY);       P["emb_eng_w2"], P["emb_eng_b2"] = _bf(w), b
    # mlp_other over concat([monster(16), char(16), energy(8)])
    ws, b = init_split_linear(ks[6], [DIM_MONSTER, DIM_CHAR, DIM_ENERGY], DIM_OTHER)
    P["oth_w_mon"], P["oth_w_chr"], P["oth_w_eng"] = map(_bf, ws); P["oth_b1"] = b
    w, b = init_linear(ks[7], DIM_OTHER, DIM_OTHER);         P["oth_w2"], P["oth_b2"] = _bf(w), b
    # mlp_card over concat([pool_h, pool_d, pool_di, lens(3), other(40), hand_card(32)])
    ws, b = init_split_linear(ks[8], [DIM_CARD] * 3 + [3, DIM_OTHER, DIM_CARD], DIM_BIG)
    P["card_w_pool"] = _bf(jnp.stack(ws[:3]))
    P["card_w_len"], P["card_w_oth"], P["card_w_hand"] = map(_bf, ws[3:]); P["card_b1"] = b
    w, b = init_linear(ks[9], DIM_BIG, DIM_BIG);              P["card_w2"], P["card_b2"] = _bf(w), b
    w, b = init_linear(ks[10], DIM_BIG, 2);                   P["card_wh"], P["card_bh"] = _bf(w), b
    # mlp_monster over concat([pool_h, pool_d, pool_di, lens(3), other(40), active_card(32)])
    ws, b = init_split_linear(ks[11], [DIM_CARD] * 3 + [3, DIM_OTHER, DIM_CARD], DIM_BIG)
    P["mon_w_pool"] = _bf(jnp.stack(ws[:3]))
    P["mon_w_len"], P["mon_w_oth"], P["mon_w_act"] = map(_bf, ws[3:]); P["mon_b1"] = b
    w, b = init_linear(ks[12], DIM_BIG, DIM_BIG);             P["mon_w2"], P["mon_b2"] = _bf(w), b
    w, b = init_linear(ks[13], DIM_BIG, 1);                   P["mon_wh"], P["mon_bh"] = _bf(w), b
    # mlp_end_turn over x_global = concat([pool_h, pool_d, pool_di, lens(3), other(40)])
    ws, b = init_split_linear(ks[14], [DIM_CARD] * 3 + [3, DIM_OTHER], DIM_MID)
    P["end_w_pool"] = _bf(jnp.stack(ws[:3]))
    P["end_w_len"], P["end_w_oth"] = map(_bf, ws[3:]); P["end_b1"] = b
    kk = jax.random.split(ks[15], 2)
    w, b = init_linear(kk[0], DIM_MID, DIM_MID);              P["end_w2"], P["end_b2"] = _bf(w), b
    w, b = init_linear(kk[1], DIM_MID, 1);                    P["end_wh"], P["end_bh"] = _bf(w), b
    return P


def init_dqn_params(key):
    k1, k2 = jax.random.split(key)
    return {"card": init_card_params(k1), "tail": init_tail_params(k2)}


# ----------------------------------------------------------------------------
# Model forward (mask/bias/pool-matrix glue in plain JAX, fused under jax.jit)
# ----------------------------------------------------------------------------
def dqn_forward(params,
                x_mask_hand, x_mask_draw, x_mask_disc, x_card_active_mask,
                x_card_hand, x_card_draw, x_card_disc,
                x_char, x_monster, x_energy):
    B, H = x_mask_hand.shape
    Dr = x_mask_draw.shape[1]
    Di = x_mask_disc.shape[1]
    sizes = (H, Dr, Di)
    N = B * (H + Dr + Di)
    E = DIM_CARD

    masks = [x_mask_hand, x_mask_draw, x_mask_disc]        # 1.0 = real card
    # stream-major flattening: all hand rows first (batch-major within a stream),
    # then draw, then disc -> hand rows are cards[:B*H] inside the kernel.
    valid_flat = jnp.concatenate([m.reshape(-1) for m in masks])            # (N,)
    sid = jnp.concatenate([jnp.full((B * s,), i, jnp.int32)
                           for i, s in enumerate(sizes)])                   # (N,)
    bid = jnp.concatenate([jnp.repeat(jnp.arange(B, dtype=jnp.int32), s)
                           for s in sizes])                                 # (N,)

    # block-diagonal attention bias: attend only within (batch, stream), only to
    # non-padded keys (== key_padding_mask of the original per-stream MHA calls)
    same = (bid[:, None] == bid[None, :]) & (sid[:, None] == sid[None, :])
    allowed = same & (valid_flat[None, :] > 0.5)
    attn_bias = jnp.where(allowed, 0.0, NEG_INF).astype(jnp.float32)        # (N, N)

    lens = jnp.stack([jnp.sum(m, axis=1) for m in masks], axis=1)           # (B, 3)
    keep_bs = (lens > 0.5).astype(jnp.float32)            # 0 if stream fully padded
    keep = keep_bs[bid, sid][:, None]                                       # (N, 1)

    # per-stream masked mean-pool matrices: pool[s, b, r] = valid[r]/clamp(len,1)
    inv_len = 1.0 / jnp.maximum(lens, 1.0)                                   # (B, 3)
    sel = ((bid[None, None, :] == jnp.arange(B)[None, :, None])
           & (sid[None, None, :] == jnp.arange(NUM_STREAMS)[:, None, None]))
    pool = (sel.astype(jnp.float32) * valid_flat[None, None, :]
            * jnp.transpose(inv_len)[:, :, None])                           # (3, B, N)

    lens_norm = lens / jnp.array([float(H), float(Dr), float(Di)], jnp.float32)

    # replication / active-card selection matrices (keep the kernel pure 2-D matmul)
    rep = jnp.repeat(jnp.eye(B, dtype=jnp.float32), H, axis=0)              # (B*H, B)
    act = (jnp.eye(B, dtype=jnp.float32)[:, :, None]
           * x_card_active_mask[None, :, :]).reshape(B, B * H)              # (B, B*H)

    x_enc = jnp.concatenate([x_card_hand.reshape(B * H, DIM_ENC_CARD),
                             x_card_draw.reshape(B * Dr, DIM_ENC_CARD),
                             x_card_disc.reshape(B * Di, DIM_ENC_CARD)], axis=0)

    c = params["card"]
    t = params["tail"]
    args = (x_enc, attn_bias, keep, valid_flat[:, None], pool, lens_norm,
            rep, act, x_monster, x_char, x_energy) \
        + tuple(c[k] for k in _CARD_KEYS) + tuple(t[k] for k in _TAIL_KEYS)

    q_card, q_mon, q_end = pl.pallas_call(
        _dqn_kernel,
        out_shape=(jax.ShapeDtypeStruct((B * H, 2), jnp.float32),
                   jax.ShapeDtypeStruct((B, 1), jnp.float32),
                   jax.ShapeDtypeStruct((B, 1), jnp.float32)),
    )(*args)

    q_card = q_card.reshape(B, H, 2)
    # torch.flatten(x_card.permute(0, 2, 1), 1) == [all q0, then all q1]
    return jnp.concatenate([q_card[:, :, 0], q_card[:, :, 1], q_mon, q_end], axis=1)


dqn_forward_jit = jax.jit(dqn_forward)


# ----------------------------------------------------------------------------
# Main
# ----------------------------------------------------------------------------
if __name__ == "__main__":
    B, H, Dr, Di = 2, 8, 10, 6

    params = init_dqn_params(jax.random.PRNGKey(1))

    key = jax.random.PRNGKey(0)
    ks = jax.random.split(key, 10)

    x_mask_hand = (jax.random.uniform(ks[0], (B, H)) > 0.3).astype(jnp.float32)
    x_mask_hand = x_mask_hand.at[:, 0].set(1.0)
    x_mask_draw = (jax.random.uniform(ks[1], (B, Dr)) > 0.3).astype(jnp.float32)
    x_mask_draw = x_mask_draw.at[:, 0].set(1.0)
    x_mask_disc = (jax.random.uniform(ks[2], (B, Di)) > 0.3).astype(jnp.float32)
    x_mask_disc = x_mask_disc.at[1, :].set(0.0)   # exercise the all-empty fallback

    x_card_active_mask = jnp.zeros((B, H), jnp.float32).at[:, 0].set(1.0)
    x_card_hand = jax.random.normal(ks[3], (B, H, DIM_ENC_CARD), jnp.float32)
    x_card_draw = jax.random.normal(ks[4], (B, Dr, DIM_ENC_CARD), jnp.float32)
    x_card_disc = jax.random.normal(ks[5], (B, Di, DIM_ENC_CARD), jnp.float32)
    x_char = jax.random.normal(ks[6], (B, DIM_ENC_CHARACTER), jnp.float32)
    x_monster = jax.random.normal(ks[7], (B, DIM_ENC_MONSTER), jnp.float32)
    x_energy = jax.random.normal(ks[8], (B, DIM_ENC_ENERGY), jnp.float32)

    out = dqn_forward_jit(params,
                          x_mask_hand, x_mask_draw, x_mask_disc, x_card_active_mask,
                          x_card_hand, x_card_draw, x_card_disc,
                          x_char, x_monster, x_energy)
    out = jax.block_until_ready(out)

    assert out.shape == (B, 2 * H + 2), out.shape
    assert bool(jnp.all(jnp.isfinite(out)))
    print("KERNEL_OK")
</pallas_src>

<mosaic_0001>
module attributes {stable_mosaic.version = 11 : i64} {
  func.func @_dqn_kernel(%arg0: memref<48x16xf32, #tpu.memory_space<vmem>>, %arg1: memref<48x48xf32, #tpu.memory_space<vmem>>, %arg2: memref<48x1xf32, #tpu.memory_space<vmem>>, %arg3: memref<48x1xf32, #tpu.memory_space<vmem>>, %arg4: memref<3x2x48xf32, #tpu.memory_space<vmem>>, %arg5: memref<2x3xf32, #tpu.memory_space<vmem>>, %arg6: memref<16x2xf32, #tpu.memory_space<vmem>>, %arg7: memref<2x16xf32, #tpu.memory_space<vmem>>, %arg8: memref<2x20xf32, #tpu.memory_space<vmem>>, %arg9: memref<2x12xf32, #tpu.memory_space<vmem>>, %arg10: memref<2x4xf32, #tpu.memory_space<vmem>>, %arg11: memref<16x32xbf16, #tpu.memory_space<vmem>>, %arg12: memref<1x32xf32, #tpu.memory_space<vmem>>, %arg13: memref<2x32x96xbf16, #tpu.memory_space<vmem>>, %arg14: memref<2x1x96xf32, #tpu.memory_space<vmem>>, %arg15: memref<2x32x32xf32, #tpu.memory_space<vmem>>, %arg16: memref<2x1x32xf32, #tpu.memory_space<vmem>>, %arg17: memref<2x1x32xf32, #tpu.memory_space<vmem>>, %arg18: memref<2x1x32xf32, #tpu.memory_space<vmem>>, %arg19: memref<2x32x32xbf16, #tpu.memory_space<vmem>>, %arg20: memref<2x1x32xf32, #tpu.memory_space<vmem>>, %arg21: memref<2x32x32xbf16, #tpu.memory_space<vmem>>, %arg22: memref<2x1x32xf32, #tpu.memory_space<vmem>>, %arg23: memref<2x1x32xf32, #tpu.memory_space<vmem>>, %arg24: memref<2x1x32xf32, #tpu.memory_space<vmem>>, %arg25: memref<20x16xbf16, #tpu.memory_space<vmem>>, %arg26: memref<1x16xf32, #tpu.memory_space<vmem>>, %arg27: memref<16x16xbf16, #tpu.memory_space<vmem>>, %arg28: memref<1x16xf32, #tpu.memory_space<vmem>>, %arg29: memref<12x16xbf16, #tpu.memory_space<vmem>>, %arg30: memref<1x16xf32, #tpu.memory_space<vmem>>, %arg31: memref<16x16xbf16, #tpu.memory_space<vmem>>, %arg32: memref<1x16xf32, #tpu.memory_space<vmem>>, %arg33: memref<4x8xbf16, #tpu.memory_space<vmem>>, %arg34: memref<1x8xf32, #tpu.memory_space<vmem>>, %arg35: memref<8x8xbf16, #tpu.memory_space<vmem>>, %arg36: memref<1x8xf32, #tpu.memory_space<vmem>>, %arg37: memref<16x40xbf16, #tpu.memory_space<vmem>>, %arg38: memref<16x40xbf16, #tpu.memory_space<vmem>>, %arg39: memref<8x40xbf16, #tpu.memory_space<vmem>>, %arg40: memref<1x40xf32, #tpu.memory_space<vmem>>, %arg41: memref<40x40xbf16, #tpu.memory_space<vmem>>, %arg42: memref<1x40xf32, #tpu.memory_space<vmem>>, %arg43: memref<3x32x171xbf16, #tpu.memory_space<vmem>>, %arg44: memref<3x171xbf16, #tpu.memory_space<vmem>>, %arg45: memref<40x171xbf16, #tpu.memory_space<vmem>>, %arg46: memref<32x171xbf16, #tpu.memory_space<vmem>>, %arg47: memref<1x171xf32, #tpu.memory_space<vmem>>, %arg48: memref<171x171xbf16, #tpu.memory_space<vmem>>, %arg49: memref<1x171xf32, #tpu.memory_space<vmem>>, %arg50: memref<171x2xbf16, #tpu.memory_space<vmem>>, %arg51: memref<1x2xf32, #tpu.memory_space<vmem>>, %arg52: memref<3x32x171xbf16, #tpu.memory_space<vmem>>, %arg53: memref<3x171xbf16, #tpu.memory_space<vmem>>, %arg54: memref<40x171xbf16, #tpu.memory_space<vmem>>, %arg55: memref<32x171xbf16, #tpu.memory_space<vmem>>, %arg56: memref<1x171xf32, #tpu.memory_space<vmem>>, %arg57: memref<171x171xbf16, #tpu.memory_space<vmem>>, %arg58: memref<1x171xf32, #tpu.memory_space<vmem>>, %arg59: memref<171x1xbf16, #tpu.memory_space<vmem>>, %arg60: memref<1x1xf32, #tpu.memory_space<vmem>>, %arg61: memref<3x32x139xbf16, #tpu.memory_space<vmem>>, %arg62: memref<3x139xbf16, #tpu.memory_space<vmem>>, %arg63: memref<40x139xbf16, #tpu.memory_space<vmem>>, %arg64: memref<1x139xf32, #tpu.memory_space<vmem>>, %arg65: memref<139x139xbf16, #tpu.memory_space<vmem>>, %arg66: memref<1x139xf32, #tpu.memory_space<vmem>>, %arg67: memref<139x1xbf16, #tpu.memory_space<vmem>>, %arg68: memref<1x1xf32, #tpu.memory_space<vmem>>, %arg69: memref<16x2xf32, #tpu.memory_space<vmem>>, %arg70: memref<2x1xf32, #tpu.memory_space<vmem>>, %arg71: memref<2x1xf32, #tpu.memory_space<vmem>>) attributes {dimension_semantics = [], scalar_prefetch = 0 : i64, scratch_operands = 0 : i64, tpu.core_type = #tpu.core_type<tc>} {
    %c0 = arith.constant 0 : index
    %c0_0 = arith.constant 0 : index
    %0 = vector.load %arg1[%c0, %c0_0] : memref<48x48xf32, #tpu.memory_space<vmem>>, vector<48x48xf32>
    %c0_1 = arith.constant 0 : index
    %c0_2 = arith.constant 0 : index
    %1 = vector.load %arg2[%c0_1, %c0_2] : memref<48x1xf32, #tpu.memory_space<vmem>>, vector<48x1xf32>
    %c0_3 = arith.constant 0 : index
    %c0_4 = arith.constant 0 : index
    %2 = vector.load %arg0[%c0_3, %c0_4] : memref<48x16xf32, #tpu.memory_space<vmem>>, vector<48x16xf32>
    %c0_5 = arith.constant 0 : index
    %c0_6 = arith.constant 0 : index
    %3 = vector.load %arg11[%c0_5, %c0_6] : memref<16x32xbf16, #tpu.memory_space<vmem>>, vector<16x32xbf16>
    %4 = arith.truncf %2 : vector<48x16xf32> to vector<48x16xbf16>
    %cst = arith.constant dense<0.000000e+00> : vector<48x32xf32>
    %5 = tpu.matmul %4, %3, %cst {dimension_numbers = #tpu.dot_dimension_numbers<[1], [0], [0], [1], [0, 0, 1, 1], [], []>} : vector<48x16xbf16>, vector<16x32xbf16>, vector<48x32xf32> -> vector<48x32xf32>
    %c0_7 = arith.constant 0 : index
    %c0_8 = arith.constant 0 : index
    %6 = vector.load %arg12[%c0_7, %c0_8] : memref<1x32xf32, #tpu.memory_space<vmem>>, vector<1x32xf32>
    %7 = vector.broadcast %6 : vector<1x32xf32> to vector<48x32xf32>
    %8 = arith.addf %5, %7 : vector<48x32xf32>
    %c0_9 = arith.constant 0 : index
    %c0_10 = arith.constant 0 : index
    %c0_11 = arith.constant 0 : index
    %9 = vector.load %arg13[%c0_9, %c0_10, %c0_11] : memref<2x32x96xbf16, #tpu.memory_space<vmem>>, vector<1x32x96xbf16>
    %10 = vector.shape_cast %9 : vector<1x32x96xbf16> to vector<32x96xbf16>
    %11 = arith.truncf %8 : vector<48x32xf32> to vector<48x32xbf16>
    %cst_12 = arith.constant dense<0.000000e+00> : vector<48x96xf32>
    %12 = tpu.matmul %11, %10, %cst_12 {dimension_numbers = #tpu.dot_dimension_numbers<[1], [0], [0], [1], [0, 0, 1, 1], [], []>} : vector<48x32xbf16>, vector<32x96xbf16>, vector<48x96xf32> -> vector<48x96xf32>
    %c0_13 = arith.constant 0 : index
    %c0_14 = arith.constant 0 : index
    %c0_15 = arith.constant 0 : index
    %13 = vector.load %arg14[%c0_13, %c0_14, %c0_15] : memref<2x1x96xf32, #tpu.memory_space<vmem>>, vector<1x1x96xf32>
    %14 = vector.shape_cast %13 : vector<1x1x96xf32> to vector<1x96xf32>
    %15 = vector.broadcast %14 : vector<1x96xf32> to vector<48x96xf32>
    %16 = arith.addf %12, %15 : vector<48x96xf32>
    %c0_16 = arith.constant 0 : index
    %c0_17 = arith.constant 0 : index
    %c0_18 = arith.constant 0 : index
    %17 = vector.load %arg15[%c0_16, %c0_17, %c0_18] : memref<2x32x32xf32, #tpu.memory_space<vmem>>, vector<1x32x32xf32>
    %18 = vector.shape_cast %17 : vector<1x32x32xf32> to vector<32x32xf32>
    %cst_19 = arith.constant 0.000000e+00 : f32
    %19 = vector.broadcast %cst_19 : f32 to vector<48x32xf32>
    %20 = vector.extract_strided_slice %16 {offsets = [0, 0], sizes = [48, 8], strides = [1, 1]} : vector<48x96xf32> to vector<48x8xf32>
    %cst_20 = arith.constant 0.353553385 : f32
    %21 = vector.broadcast %cst_20 : f32 to vector<48x8xf32>
    %22 = arith.mulf %20, %21 : vector<48x8xf32>
    %23 = vector.extract_strided_slice %16 {offsets = [0, 32], sizes = [48, 8], strides = [1, 1]} : vector<48x96xf32> to vector<48x8xf32>
    %24 = vector.extract_strided_slice %16 {offsets = [0, 64], sizes = [48, 8], strides = [1, 1]} : vector<48x96xf32> to vector<48x8xf32>
    %25 = arith.truncf %22 : vector<48x8xf32> to vector<48x8xbf16>
    %26 = arith.truncf %23 : vector<48x8xf32> to vector<48x8xbf16>
    %cst_21 = arith.constant dense<0.000000e+00> : vector<48x48xf32>
    %27 = tpu.matmul %25, %26, %cst_21 {dimension_numbers = #tpu.dot_dimension_numbers<[1], [1], [0], [0], [0, 0, 1, 0], [], []>} : vector<48x8xbf16>, vector<48x8xbf16>, vector<48x48xf32> -> vector<48x48xf32>
    %28 = arith.addf %27, %0 : vector<48x48xf32>
    %cst_22 = arith.constant dense<0xFF800000> : vector<48xf32>
    %29 = vector.multi_reduction <maximumf>, %28, %cst_22 [1] : vector<48x48xf32> to vector<48xf32>
    %30 = vector.shape_cast %29 : vector<48xf32> to vector<48x1xf32>
    %31 = vector.broadcast %30 : vector<48x1xf32> to vector<48x48xf32>
    %32 = arith.subf %28, %31 : vector<48x48xf32>
    %33 = math.exp %32 : vector<48x48xf32>
    %cst_23 = arith.constant dense<0.000000e+00> : vector<48xf32>
    %34 = vector.multi_reduction <add>, %33, %cst_23 [1] : vector<48x48xf32> to vector<48xf32>
    %35 = vector.shape_cast %34 : vector<48xf32> to vector<48x1xf32>
    %36 = tpu.reciprocal %35 {approx = true} : vector<48x1xf32> -> vector<48x1xf32>
    %37 = vector.broadcast %36 : vector<48x1xf32> to vector<48x48xf32>
    %38 = arith.mulf %33, %37 : vector<48x48xf32>
    %39 = arith.truncf %38 : vector<48x48xf32> to vector<48x48xbf16>
    %40 = arith.truncf %24 : vector<48x8xf32> to vector<48x8xbf16>
    %cst_24 = arith.constant dense<0.000000e+00> : vector<48x8xf32>
    %41 = tpu.matmul %39, %40, %cst_24 {dimension_numbers = #tpu.dot_dimension_numbers<[1], [0], [0], [1], [0, 0, 1, 1], [], []>} : vector<48x48xbf16>, vector<48x8xbf16>, vector<48x8xf32> -> vector<48x8xf32>
    %42 = vector.extract_strided_slice %18 {offsets = [0, 0], sizes = [8, 32], strides = [1, 1]} : vector<32x32xf32> to vector<8x32xf32>
    %43 = arith.truncf %41 : vector<48x8xf32> to vector<48x8xbf16>
    %44 = arith.truncf %42 : vector<8x32xf32> to vector<8x32xbf16>
    %cst_25 = arith.constant dense<0.000000e+00> : vector<48x32xf32>
    %45 = tpu.matmul %43, %44, %cst_25 {dimension_numbers = #tpu.dot_dimension_numbers<[1], [0], [0], [1], [0, 0, 1, 1], [], []>} : vector<48x8xbf16>, vector<8x32xbf16>, vector<48x32xf32> -> vector<48x32xf32>
    %46 = arith.addf %19, %45 : vector<48x32xf32>
    %47 = vector.extract_strided_slice %16 {offsets = [0, 8], sizes = [48, 8], strides = [1, 1]} : vector<48x96xf32> to vector<48x8xf32>
    %cst_26 = arith.constant 0.353553385 : f32
    %48 = vector.broadcast %cst_26 : f32 to vector<48x8xf32>
    %49 = arith.mulf %47, %48 : vector<48x8xf32>
    %50 = vector.extract_strided_slice %16 {offsets = [0, 40], sizes = [48, 8], strides = [1, 1]} : vector<48x96xf32> to vector<48x8xf32>
    %51 = vector.extract_strided_slice %16 {offsets = [0, 72], sizes = [48, 8], strides = [1, 1]} : vector<48x96xf32> to vector<48x8xf32>
    %52 = arith.truncf %49 : vector<48x8xf32> to vector<48x8xbf16>
    %53 = arith.truncf %50 : vector<48x8xf32> to vector<48x8xbf16>
    %cst_27 = arith.constant dense<0.000000e+00> : vector<48x48xf32>
    %54 = tpu.matmul %52, %53, %cst_27 {dimension_numbers = #tpu.dot_dimension_numbers<[1], [1], [0], [0], [0, 0, 1, 0], [], []>} : vector<48x8xbf16>, vector<48x8xbf16>, vector<48x48xf32> -> vector<48x48xf32>
    %55 = arith.addf %54, %0 : vector<48x48xf32>
    %cst_28 = arith.constant dense<0xFF800000> : vector<48xf32>
    %56 = vector.multi_reduction <maximumf>, %55, %cst_28 [1] : vector<48x48xf32> to vector<48xf32>
    %57 = vector.shape_cast %56 : vector<48xf32> to vector<48x1xf32>
    %58 = vector.broadcast %57 : vector<48x1xf32> to vector<48x48xf32>
    %59 = arith.subf %55, %58 : vector<48x48xf32>
    %60 = math.exp %59 : vector<48x48xf32>
    %cst_29 = arith.constant dense<0.000000e+00> : vector<48xf32>
    %61 = vector.multi_reduction <add>, %60, %cst_29 [1] : vector<48x48xf32> to vector<48xf32>
    %62 = vector.shape_cast %61 : vector<48xf32> to vector<48x1xf32>
    %63 = tpu.reciprocal %62 {approx = true} : vector<48x1xf32> -> vector<48x1xf32>
    %64 = vector.broadcast %63 : vector<48x1xf32> to vector<48x48xf32>
    %65 = arith.mulf %60, %64 : vector<48x48xf32>
    %66 = arith.truncf %65 : vector<48x48xf32> to vector<48x48xbf16>
    %67 = arith.truncf %51 : vector<48x8xf32> to vector<48x8xbf16>
    %cst_30 = arith.constant dense<0.000000e+00> : vector<48x8xf32>
    %68 = tpu.matmul %66, %67, %cst_30 {dimension_numbers = #tpu.dot_dimension_numbers<[1], [0], [0], [1], [0, 0, 1, 1], [], []>} : vector<48x48xbf16>, vector<48x8xbf16>, vector<48x8xf32> -> vector<48x8xf32>
    %69 = vector.extract_strided_slice %18 {offsets = [8, 0], sizes = [8, 32], strides = [1, 1]} : vector<32x32xf32> to vector<8x32xf32>
    %70 = arith.truncf %68 : vector<48x8xf32> to vector<48x8xbf16>
    %71 = arith.truncf %69 : vector<8x32xf32> to vector<8x32xbf16>
    %cst_31 = arith.constant dense<0.000000e+00> : vector<48x32xf32>
    %72 = tpu.matmul %70, %71, %cst_31 {dimension_numbers = #tpu.dot_dimension_numbers<[1], [0], [0], [1], [0, 0, 1, 1], [], []>} : vector<48x8xbf16>, vector<8x32xbf16>, vector<48x32xf32> -> vector<48x32xf32>
    %73 = arith.addf %46, %72 : vector<48x32xf32>
    %74 = vector.extract_strided_slice %16 {offsets = [0, 16], sizes = [48, 8], strides = [1, 1]} : vector<48x96xf32> to vector<48x8xf32>
    %cst_32 = arith.constant 0.353553385 : f32
    %75 = vector.broadcast %cst_32 : f32 to vector<48x8xf32>
    %76 = arith.mulf %74, %75 : vector<48x8xf32>
    %77 = vector.extract_strided_slice %16 {offsets = [0, 48], sizes = [48, 8], strides = [1, 1]} : vector<48x96xf32> to vector<48x8xf32>
    %78 = vector.extract_strided_slice %16 {offsets = [0, 80], sizes = [48, 8], strides = [1, 1]} : vector<48x96xf32> to vector<48x8xf32>
    %79 = arith.truncf %76 : vector<48x8xf32> to vector<48x8xbf16>
    %80 = arith.truncf %77 : vector<48x8xf32> to vector<48x8xbf16>
    %cst_33 = arith.constant dense<0.000000e+00> : vector<48x48xf32>
    %81 = tpu.matmul %79, %80, %cst_33 {dimension_numbers = #tpu.dot_dimension_numbers<[1], [1], [0], [0], [0, 0, 1, 0], [], []>} : vector<48x8xbf16>, vector<48x8xbf16>, vector<48x48xf32> -> vector<48x48xf32>
    %82 = arith.addf %81, %0 : vector<48x48xf32>
    %cst_34 = arith.constant dense<0xFF800000> : vector<48xf32>
    %83 = vector.multi_reduction <maximumf>, %82, %cst_34 [1] : vector<48x48xf32> to vector<48xf32>
    %84 = vector.shape_cast %83 : vector<48xf32> to vector<48x1xf32>
    %85 = vector.broadcast %84 : vector<48x1xf32> to vector<48x48xf32>
    %86 = arith.subf %82, %85 : vector<48x48xf32>
    %87 = math.exp %86 : vector<48x48xf32>
    %cst_35 = arith.constant dense<0.000000e+00> : vector<48xf32>
    %88 = vector.multi_reduction <add>, %87, %cst_35 [1] : vector<48x48xf32> to vector<48xf32>
    %89 = vector.shape_cast %88 : vector<48xf32> to vector<48x1xf32>
    %90 = tpu.reciprocal %89 {approx = true} : vector<48x1xf32> -> vector<48x1xf32>
    %91 = vector.broadcast %90 : vector<48x1xf32> to vector<48x48xf32>
    %92 = arith.mulf %87, %91 : vector<48x48xf32>
    %93 = arith.truncf %92 : vector<48x48xf32> to vector<48x48xbf16>
    %94 = arith.truncf %78 : vector<48x8xf32> to vector<48x8xbf16>
    %cst_36 = arith.constant dense<0.000000e+00> : vector<48x8xf32>
    %95 = tpu.matmul %93, %94, %cst_36 {dimension_numbers = #tpu.dot_dimension_numbers<[1], [0], [0], [1], [0, 0, 1, 1], [], []>} : vector<48x48xbf16>, vector<48x8xbf16>, vector<48x8xf32> -> vector<48x8xf32>
    %96 = vector.extract_strided_slice %18 {offsets = [16, 0], sizes = [8, 32], strides = [1, 1]} : vector<32x32xf32> to vector<8x32xf32>
    %97 = arith.truncf %95 : vector<48x8xf32> to vector<48x8xbf16>
    %98 = arith.truncf %96 : vector<8x32xf32> to vector<8x32xbf16>
    %cst_37 = arith.constant dense<0.000000e+00> : vector<48x32xf32>
    %99 = tpu.matmul %97, %98, %cst_37 {dimension_numbers = #tpu.dot_dimension_numbers<[1], [0], [0], [1], [0, 0, 1, 1], [], []>} : vector<48x8xbf16>, vector<8x32xbf16>, vector<48x32xf32> -> vector<48x32xf32>
    %100 = arith.addf %73, %99 : vector<48x32xf32>
    %101 = vector.extract_strided_slice %16 {offsets = [0, 24], sizes = [48, 8], strides = [1, 1]} : vector<48x96xf32> to vector<48x8xf32>
    %cst_38 = arith.constant 0.353553385 : f32
    %102 = vector.broadcast %cst_38 : f32 to vector<48x8xf32>
    %103 = arith.mulf %101, %102 : vector<48x8xf32>
    %104 = vector.extract_strided_slice %16 {offsets = [0, 56], sizes = [48, 8], strides = [1, 1]} : vector<48x96xf32> to vector<48x8xf32>
    %105 = vector.extract_strided_slice %16 {offsets = [0, 88], sizes = [48, 8], strides = [1, 1]} : vector<48x96xf32> to vector<48x8xf32>
    %106 = arith.truncf %103 : vector<48x8xf32> to vector<48x8xbf16>
    %107 = arith.truncf %104 : vector<48x8xf32> to vector<48x8xbf16>
    %cst_39 = arith.constant dense<0.000000e+00> : vector<48x48xf32>
    %108 = tpu.matmul %106, %107, %cst_39 {dimension_numbers = #tpu.dot_dimension_numbers<[1], [1], [0], [0], [0, 0, 1, 0], [], []>} : vector<48x8xbf16>, vector<48x8xbf16>, vector<48x48xf32> -> vector<48x48xf32>
    %109 = arith.addf %108, %0 : vector<48x48xf32>
    %cst_40 = arith.constant dense<0xFF800000> : vector<48xf32>
    %110 = vector.multi_reduction <maximumf>, %109, %cst_40 [1] : vector<48x48xf32> to vector<48xf32>
    %111 = vector.shape_cast %110 : vector<48xf32> to vector<48x1xf32>
    %112 = vector.broadcast %111 : vector<48x1xf32> to vector<48x48xf32>
    %113 = arith.subf %109, %112 : vector<48x48xf32>
    %114 = math.exp %113 : vector<48x48xf32>
    %cst_41 = arith.constant dense<0.000000e+00> : vector<48xf32>
    %115 = vector.multi_reduction <add>, %114, %cst_41 [1] : vector<48x48xf32> to vector<48xf32>
    %116 = vector.shape_cast %115 : vector<48xf32> to vector<48x1xf32>
    %117 = tpu.reciprocal %116 {approx = true} : vector<48x1xf32> -> vector<48x1xf32>
    %118 = vector.broadcast %117 : vector<48x1xf32> to vector<48x48xf32>
    %119 = arith.mulf %114, %118 : vector<48x48xf32>
    %120 = arith.truncf %119 : vector<48x48xf32> to vector<48x48xbf16>
    %121 = arith.truncf %105 : vector<48x8xf32> to vector<48x8xbf16>
    %cst_42 = arith.constant dense<0.000000e+00> : vector<48x8xf32>
    %122 = tpu.matmul %120, %121, %cst_42 {dimension_numbers = #tpu.dot_dimension_numbers<[1], [0], [0], [1], [0, 0, 1, 1], [], []>} : vector<48x48xbf16>, vector<48x8xbf16>, vector<48x8xf32> -> vector<48x8xf32>
    %123 = vector.extract_strided_slice %18 {offsets = [24, 0], sizes = [8, 32], strides = [1, 1]} : vector<32x32xf32> to vector<8x32xf32>
    %124 = arith.truncf %122 : vector<48x8xf32> to vector<48x8xbf16>
    %125 = arith.truncf %123 : vector<8x32xf32> to vector<8x32xbf16>
    %cst_43 = arith.constant dense<0.000000e+00> : vector<48x32xf32>
    %126 = tpu.matmul %124, %125, %cst_43 {dimension_numbers = #tpu.dot_dimension_numbers<[1], [0], [0], [1], [0, 0, 1, 1], [], []>} : vector<48x8xbf16>, vector<8x32xbf16>, vector<48x32xf32> -> vector<48x32xf32>
    %127 = arith.addf %100, %126 : vector<48x32xf32>
    %c0_44 = arith.constant 0 : index
    %c0_45 = arith.constant 0 : index
    %c0_46 = arith.constant 0 : index
    %128 = vector.load %arg16[%c0_44, %c0_45, %c0_46] : memref<2x1x32xf32, #tpu.memory_space<vmem>>, vector<1x1x32xf32>
    %129 = vector.shape_cast %128 : vector<1x1x32xf32> to vector<1x32xf32>
    %130 = vector.broadcast %129 : vector<1x32xf32> to vector<48x32xf32>
    %131 = arith.addf %127, %130 : vector<48x32xf32>
    %132 = vector.broadcast %1 : vector<48x1xf32> to vector<48x32xf32>
    %133 = arith.mulf %131, %132 : vector<48x32xf32>
    %134 = arith.addf %8, %133 : vector<48x32xf32>
    %c0_47 = arith.constant 0 : index
    %c0_48 = arith.constant 0 : index
    %c0_49 = arith.constant 0 : index
    %135 = vector.load %arg17[%c0_47, %c0_48, %c0_49] : memref<2x1x32xf32, #tpu.memory_space<vmem>>, vector<1x1x32xf32>
    %136 = vector.shape_cast %135 : vector<1x1x32xf32> to vector<1x32xf32>
    %c0_50 = arith.constant 0 : index
    %c0_51 = arith.constant 0 : index
    %c0_52 = arith.constant 0 : index
    %137 = vector.load %arg18[%c0_50, %c0_51, %c0_52] : memref<2x1x32xf32, #tpu.memory_space<vmem>>, vector<1x1x32xf32>
    %138 = vector.shape_cast %137 : vector<1x1x32xf32> to vector<1x32xf32>
    %cst_53 = arith.constant dense<0.000000e+00> : vector<48xf32>
    %139 = vector.multi_reduction <add>, %134, %cst_53 [1] : vector<48x32xf32> to vector<48xf32>
    %140 = vector.shape_cast %139 : vector<48xf32> to vector<48x1xf32>
    %cst_54 = arith.constant 3.200000e+01 : f32
    %141 = vector.broadcast %cst_54 : f32 to vector<48x1xf32>
    %142 = arith.divf %140, %141 : vector<48x1xf32>
    %143 = vector.broadcast %142 : vector<48x1xf32> to vector<48x32xf32>
    %144 = arith.subf %134, %143 : vector<48x32xf32>
    %145 = arith.mulf %144, %144 : vector<48x32xf32>
    %cst_55 = arith.constant dense<0.000000e+00> : vector<48xf32>
    %146 = vector.multi_reduction <add>, %145, %cst_55 [1] : vector<48x32xf32> to vector<48xf32>
    %147 = vector.shape_cast %146 : vector<48xf32> to vector<48x1xf32>
    %cst_56 = arith.constant 3.200000e+01 : f32
    %148 = vector.broadcast %cst_56 : f32 to vector<48x1xf32>
    %149 = arith.divf %147, %148 : vector<48x1xf32>
    %cst_57 = arith.constant 9.99999974E-6 : f32
    %150 = vector.broadcast %cst_57 : f32 to vector<48x1xf32>
    %151 = arith.addf %149, %150 : vector<48x1xf32>
    %152 = math.rsqrt %151 : vector<48x1xf32>
    %153 = vector.broadcast %152 : vector<48x1xf32> to vector<48x32xf32>
    %154 = arith.mulf %144, %153 : vector<48x32xf32>
    %155 = vector.broadcast %136 : vector<1x32xf32> to vector<48x32xf32>
    %156 = arith.mulf %154, %155 : vector<48x32xf32>
    %157 = vector.broadcast %138 : vector<1x32xf32> to vector<48x32xf32>
    %158 = arith.addf %156, %157 : vector<48x32xf32>
    %c0_58 = arith.constant 0 : index
    %c0_59 = arith.constant 0 : index
    %c0_60 = arith.constant 0 : index
    %159 = vector.load %arg19[%c0_58, %c0_59, %c0_60] : memref<2x32x32xbf16, #tpu.memory_space<vmem>>, vector<1x32x32xbf16>
    %160 = vector.shape_cast %159 : vector<1x32x32xbf16> to vector<32x32xbf16>
    %161 = arith.truncf %158 : vector<48x32xf32> to vector<48x32xbf16>
    %cst_61 = arith.constant dense<0.000000e+00> : vector<48x32xf32>
    %162 = tpu.matmul %161, %160, %cst_61 {dimension_numbers = #tpu.dot_dimension_numbers<[1], [0], [0], [1], [0, 0, 1, 1], [], []>} : vector<48x32xbf16>, vector<32x32xbf16>, vector<48x32xf32> -> vector<48x32xf32>
    %c0_62 = arith.constant 0 : index
    %c0_63 = arith.constant 0 : index
    %c0_64 = arith.constant 0 : index
    %163 = vector.load %arg20[%c0_62, %c0_63, %c0_64] : memref<2x1x32xf32, #tpu.memory_space<vmem>>, vector<1x1x32xf32>
    %164 = vector.shape_cast %163 : vector<1x1x32xf32> to vector<1x32xf32>
    %165 = vector.broadcast %164 : vector<1x32xf32> to vector<48x32xf32>
    %166 = arith.addf %162, %165 : vector<48x32xf32>
    %cst_65 = arith.constant 0.000000e+00 : f32
    %167 = vector.broadcast %cst_65 : f32 to vector<48x32xf32>
    %168 = arith.maximumf %166, %167 : vector<48x32xf32>
    %c0_66 = arith.constant 0 : index
    %c0_67 = arith.constant 0 : index
    %c0_68 = arith.constant 0 : index
    %169 = vector.load %arg21[%c0_66, %c0_67, %c0_68] : memref<2x32x32xbf16, #tpu.memory_space<vmem>>, vector<1x32x32xbf16>
    %170 = vector.shape_cast %169 : vector<1x32x32xbf16> to vector<32x32xbf16>
    %171 = arith.truncf %168 : vector<48x32xf32> to vector<48x32xbf16>
    %cst_69 = arith.constant dense<0.000000e+00> : vector<48x32xf32>
    %172 = tpu.matmul %171, %170, %cst_69 {dimension_numbers = #tpu.dot_dimension_numbers<[1], [0], [0], [1], [0, 0, 1, 1], [], []>} : vector<48x32xbf16>, vector<32x32xbf16>, vector<48x32xf32> -> vector<48x32xf32>
    %c0_70 = arith.constant 0 : index
    %c0_71 = arith.constant 0 : index
    %c0_72 = arith.constant 0 : index
    %173 = vector.load %arg22[%c0_70, %c0_71, %c0_72] : memref<2x1x32xf32, #tpu.memory_space<vmem>>, vector<1x1x32xf32>
    %174 = vector.shape_cast %173 : vector<1x1x32xf32> to vector<1x32xf32>
    %175 = vector.broadcast %174 : vector<1x32xf32> to vector<48x32xf32>
    %176 = arith.addf %172, %175 : vector<48x32xf32>
    %177 = arith.addf %158, %176 : vector<48x32xf32>
    %c0_73 = arith.constant 0 : index
    %c0_74 = arith.constant 0 : index
    %c0_75 = arith.constant 0 : index
    %178 = vector.load %arg23[%c0_73, %c0_74, %c0_75] : memref<2x1x32xf32, #tpu.memory_space<vmem>>, vector<1x1x32xf32>
    %179 = vector.shape_cast %178 : vector<1x1x32xf32> to vector<1x32xf32>
    %c0_76 = arith.constant 0 : index
    %c0_77 = arith.constant 0 : index
    %c0_78 = arith.constant 0 : index
    %180 = vector.load %arg24[%c0_76, %c0_77, %c0_78] : memref<2x1x32xf32, #tpu.memory_space<vmem>>, vector<1x1x32xf32>
    %181 = vector.shape_cast %180 : vector<1x1x32xf32> to vector<1x32xf32>
    %cst_79 = arith.constant dense<0.000000e+00> : vector<48xf32>
    %182 = vector.multi_reduction <add>, %177, %cst_79 [1] : vector<48x32xf32> to vector<48xf32>
    %183 = vector.shape_cast %182 : vector<48xf32> to vector<48x1xf32>
    %cst_80 = arith.constant 3.200000e+01 : f32
    %184 = vector.broadcast %cst_80 : f32 to vector<48x1xf32>
    %185 = arith.divf %183, %184 : vector<48x1xf32>
    %186 = vector.broadcast %185 : vector<48x1xf32> to vector<48x32xf32>
    %187 = arith.subf %177, %186 : vector<48x32xf32>
    %188 = arith.mulf %187, %187 : vector<48x32xf32>
    %cst_81 = arith.constant dense<0.000000e+00> : vector<48xf32>
    %189 = vector.multi_reduction <add>, %188, %cst_81 [1] : vector<48x32xf32> to vector<48xf32>
    %190 = vector.shape_cast %189 : vector<48xf32> to vector<48x1xf32>
    %cst_82 = arith.constant 3.200000e+01 : f32
    %191 = vector.broadcast %cst_82 : f32 to vector<48x1xf32>
    %192 = arith.divf %190, %191 : vector<48x1xf32>
    %cst_83 = arith.constant 9.99999974E-6 : f32
    %193 = vector.broadcast %cst_83 : f32 to vector<48x1xf32>
    %194 = arith.addf %192, %193 : vector<48x1xf32>
    %195 = math.rsqrt %194 : vector<48x1xf32>
    %196 = vector.broadcast %195 : vector<48x1xf32> to vector<48x32xf32>
    %197 = arith.mulf %187, %196 : vector<48x32xf32>
    %198 = vector.broadcast %179 : vector<1x32xf32> to vector<48x32xf32>
    %199 = arith.mulf %197, %198 : vector<48x32xf32>
    %200 = vector.broadcast %181 : vector<1x32xf32> to vector<48x32xf32>
    %201 = arith.addf %199, %200 : vector<48x32xf32>
    %c1 = arith.constant 1 : index
    %c0_84 = arith.constant 0 : index
    %c0_85 = arith.constant 0 : index
    %202 = vector.load %arg13[%c1, %c0_84, %c0_85] : memref<2x32x96xbf16, #tpu.memory_space<vmem>>, vector<1x32x96xbf16>
    %203 = vector.shape_cast %202 : vector<1x32x96xbf16> to vector<32x96xbf16>
    %204 = arith.truncf %201 : vector<48x32xf32> to vector<48x32xbf16>
    %cst_86 = arith.constant dense<0.000000e+00> : vector<48x96xf32>
    %205 = tpu.matmul %204, %203, %cst_86 {dimension_numbers = #tpu.dot_dimension_numbers<[1], [0], [0], [1], [0, 0, 1, 1], [], []>} : vector<48x32xbf16>, vector<32x96xbf16>, vector<48x96xf32> -> vector<48x96xf32>
    %c1_87 = arith.constant 1 : index
    %c0_88 = arith.constant 0 : index
    %c0_89 = arith.constant 0 : index
    %206 = vector.load %arg14[%c1_87, %c0_88, %c0_89] : memref<2x1x96xf32, #tpu.memory_space<vmem>>, vector<1x1x96xf32>
    %207 = vector.shape_cast %206 : vector<1x1x96xf32> to vector<1x96xf32>
    %208 = vector.broadcast %207 : vector<1x96xf32> to vector<48x96xf32>
    %209 = arith.addf %205, %208 : vector<48x96xf32>
    %c1_90 = arith.constant 1 : index
    %c0_91 = arith.constant 0 : index
    %c0_92 = arith.constant 0 : index
    %210 = vector.load %arg15[%c1_90, %c0_91, %c0_92] : memref<2x32x32xf32, #tpu.memory_space<vmem>>, vector<1x32x32xf32>
    %211 = vector.shape_cast %210 : vector<1x32x32xf32> to vector<32x32xf32>
    %cst_93 = arith.constant 0.000000e+00 : f32
    %212 = vector.broadcast %cst_93 : f32 to vector<48x32xf32>
    %213 = vector.extract_strided_slice %209 {offsets = [0, 0], sizes = [48, 8], strides = [1, 1]} : vector<48x96xf32> to vector<48x8xf32>
    %cst_94 = arith.constant 0.353553385 : f32
    %214 = vector.broadcast %cst_94 : f32 to vector<48x8xf32>
    %215 = arith.mulf %213, %214 : vector<48x8xf32>
    %216 = vector.extract_strided_slice %209 {offsets = [0, 32], sizes = [48, 8], strides = [1, 1]} : vector<48x96xf32> to vector<48x8xf32>
    %217 = vector.extract_strided_slice %209 {offsets = [0, 64], sizes = [48, 8], strides = [1, 1]} : vector<48x96xf32> to vector<48x8xf32>
    %218 = arith.truncf %215 : vector<48x8xf32> to vector<48x8xbf16>
    %219 = arith.truncf %216 : vector<48x8xf32> to vector<48x8xbf16>
    %cst_95 = arith.constant dense<0.000000e+00> : vector<48x48xf32>
    %220 = tpu.matmul %218, %219, %cst_95 {dimension_numbers = #tpu.dot_dimension_numbers<[1], [1], [0], [0], [0, 0, 1, 0], [], []>} : vector<48x8xbf16>, vector<48x8xbf16>, vector<48x48xf32> -> vector<48x48xf32>
    %221 = arith.addf %220, %0 : vector<48x48xf32>
    %cst_96 = arith.constant dense<0xFF800000> : vector<48xf32>
    %222 = vector.multi_reduction <maximumf>, %221, %cst_96 [1] : vector<48x48xf32> to vector<48xf32>
    %223 = vector.shape_cast %222 : vector<48xf32> to vector<48x1xf32>
    %224 = vector.broadcast %223 : vector<48x1xf32> to vector<48x48xf32>
    %225 = arith.subf %221, %224 : vector<48x48xf32>
    %226 = math.exp %225 : vector<48x48xf32>
    %cst_97 = arith.constant dense<0.000000e+00> : vector<48xf32>
    %227 = vector.multi_reduction <add>, %226, %cst_97 [1] : vector<48x48xf32> to vector<48xf32>
    %228 = vector.shape_cast %227 : vector<48xf32> to vector<48x1xf32>
    %229 = tpu.reciprocal %228 {approx = true} : vector<48x1xf32> -> vector<48x1xf32>
    %230 = vector.broadcast %229 : vector<48x1xf32> to vector<48x48xf32>
    %231 = arith.mulf %226, %230 : vector<48x48xf32>
    %232 = arith.truncf %231 : vector<48x48xf32> to vector<48x48xbf16>
    %233 = arith.truncf %217 : vector<48x8xf32> to vector<48x8xbf16>
    %cst_98 = arith.constant dense<0.000000e+00> : vector<48x8xf32>
    %234 = tpu.matmul %232, %233, %cst_98 {dimension_numbers = #tpu.dot_dimension_numbers<[1], [0], [0], [1], [0, 0, 1, 1], [], []>} : vector<48x48xbf16>, vector<48x8xbf16>, vector<48x8xf32> -> vector<48x8xf32>
    %235 = vector.extract_strided_slice %211 {offsets = [0, 0], sizes = [8, 32], strides = [1, 1]} : vector<32x32xf32> to vector<8x32xf32>
    %236 = arith.truncf %234 : vector<48x8xf32> to vector<48x8xbf16>
    %237 = arith.truncf %235 : vector<8x32xf32> to vector<8x32xbf16>
    %cst_99 = arith.constant dense<0.000000e+00> : vector<48x32xf32>
    %238 = tpu.matmul %236, %237, %cst_99 {dimension_numbers = #tpu.dot_dimension_numbers<[1], [0], [0], [1], [0, 0, 1, 1], [], []>} : vector<48x8xbf16>, vector<8x32xbf16>, vector<48x32xf32> -> vector<48x32xf32>
    %239 = arith.addf %212, %238 : vector<48x32xf32>
    %240 = vector.extract_strided_slice %209 {offsets = [0, 8], sizes = [48, 8], strides = [1, 1]} : vector<48x96xf32> to vector<48x8xf32>
    %cst_100 = arith.constant 0.353553385 : f32
    %241 = vector.broadcast %cst_100 : f32 to vector<48x8xf32>
    %242 = arith.mulf %240, %241 : vector<48x8xf32>
    %243 = vector.extract_strided_slice %209 {offsets = [0, 40], sizes = [48, 8], strides = [1, 1]} : vector<48x96xf32> to vector<48x8xf32>
    %244 = vector.extract_strided_slice %209 {offsets = [0, 72], sizes = [48, 8], strides = [1, 1]} : vector<48x96xf32> to vector<48x8xf32>
    %245 = arith.truncf %242 : vector<48x8xf32> to vector<48x8xbf16>
    %246 = arith.truncf %243 : vector<48x8xf32> to vector<48x8xbf16>
    %cst_101 = arith.constant dense<0.000000e+00> : vector<48x48xf32>
    %247 = tpu.matmul %245, %246, %cst_101 {dimension_numbers = #tpu.dot_dimension_numbers<[1], [1], [0], [0], [0, 0, 1, 0], [], []>} : vector<48x8xbf16>, vector<48x8xbf16>, vector<48x48xf32> -> vector<48x48xf32>
    %248 = arith.addf %247, %0 : vector<48x48xf32>
    %cst_102 = arith.constant dense<0xFF800000> : vector<48xf32>
    %249 = vector.multi_reduction <maximumf>, %248, %cst_102 [1] : vector<48x48xf32> to vector<48xf32>
    %250 = vector.shape_cast %249 : vector<48xf32> to vector<48x1xf32>
    %251 = vector.broadcast %250 : vector<48x1xf32> to vector<48x48xf32>
    %252 = arith.subf %248, %251 : vector<48x48xf32>
    %253 = math.exp %252 : vector<48x48xf32>
    %cst_103 = arith.constant dense<0.000000e+00> : vector<48xf32>
    %254 = vector.multi_reduction <add>, %253, %cst_103 [1] : vector<48x48xf32> to vector<48xf32>
    %255 = vector.shape_cast %254 : vector<48xf32> to vector<48x1xf32>
    %256 = tpu.reciprocal %255 {approx = true} : vector<48x1xf32> -> vector<48x1xf32>
    %257 = vector.broadcast %256 : vector<48x1xf32> to vector<48x48xf32>
    %258 = arith.mulf %253, %257 : vector<48x48xf32>
    %259 = arith.truncf %258 : vector<48x48xf32> to vector<48x48xbf16>
    %260 = arith.truncf %244 : vector<48x8xf32> to vector<48x8xbf16>
    %cst_104 = arith.constant dense<0.000000e+00> : vector<48x8xf32>
    %261 = tpu.matmul %259, %260, %cst_104 {dimension_numbers = #tpu.dot_dimension_numbers<[1], [0], [0], [1], [0, 0, 1, 1], [], []>} : vector<48x48xbf16>, vector<48x8xbf16>, vector<48x8xf32> -> vector<48x8xf32>
    %262 = vector.extract_strided_slice %211 {offsets = [8, 0], sizes = [8, 32], strides = [1, 1]} : vector<32x32xf32> to vector<8x32xf32>
    %263 = arith.truncf %261 : vector<48x8xf32> to vector<48x8xbf16>
    %264 = arith.truncf %262 : vector<8x32xf32> to vector<8x32xbf16>
    %cst_105 = arith.constant dense<0.000000e+00> : vector<48x32xf32>
    %265 = tpu.matmul %263, %264, %cst_105 {dimension_numbers = #tpu.dot_dimension_numbers<[1], [0], [0], [1], [0, 0, 1, 1], [], []>} : vector<48x8xbf16>, vector<8x32xbf16>, vector<48x32xf32> -> vector<48x32xf32>
    %266 = arith.addf %239, %265 : vector<48x32xf32>
    %267 = vector.extract_strided_slice %209 {offsets = [0, 16], sizes = [48, 8], strides = [1, 1]} : vector<48x96xf32> to vector<48x8xf32>
    %cst_106 = arith.constant 0.353553385 : f32
    %268 = vector.broadcast %cst_106 : f32 to vector<48x8xf32>
    %269 = arith.mulf %267, %268 : vector<48x8xf32>
    %270 = vector.extract_strided_slice %209 {offsets = [0, 48], sizes = [48, 8], strides = [1, 1]} : vector<48x96xf32> to vector<48x8xf32>
    %271 = vector.extract_strided_slice %209 {offsets = [0, 80], sizes = [48, 8], strides = [1, 1]} : vector<48x96xf32> to vector<48x8xf32>
    %272 = arith.truncf %269 : vector<48x8xf32> to vector<48x8xbf16>
    %273 = arith.truncf %270 : vector<48x8xf32> to vector<48x8xbf16>
    %cst_107 = arith.constant dense<0.000000e+00> : vector<48x48xf32>
    %274 = tpu.matmul %272, %273, %cst_107 {dimension_numbers = #tpu.dot_dimension_numbers<[1], [1], [0], [0], [0, 0, 1, 0], [], []>} : vector<48x8xbf16>, vector<48x8xbf16>, vector<48x48xf32> -> vector<48x48xf32>
    %275 = arith.addf %274, %0 : vector<48x48xf32>
    %cst_108 = arith.constant dense<0xFF800000> : vector<48xf32>
    %276 = vector.multi_reduction <maximumf>, %275, %cst_108 [1] : vector<48x48xf32> to vector<48xf32>
    %277 = vector.shape_cast %276 : vector<48xf32> to vector<48x1xf32>
    %278 = vector.broadcast %277 : vector<48x1xf32> to vector<48x48xf32>
    %279 = arith.subf %275, %278 : vector<48x48xf32>
    %280 = math.exp %279 : vector<48x48xf32>
    %cst_109 = arith.constant dense<0.000000e+00> : vector<48xf32>
    %281 = vector.multi_reduction <add>, %280, %cst_109 [1] : vector<48x48xf32> to vector<48xf32>
    %282 = vector.shape_cast %281 : vector<48xf32> to vector<48x1xf32>
    %283 = tpu.reciprocal %282 {approx = true} : vector<48x1xf32> -> vector<48x1xf32>
    %284 = vector.broadcast %283 : vector<48x1xf32> to vector<48x48xf32>
    %285 = arith.mulf %280, %284 : vector<48x48xf32>
    %286 = arith.truncf %285 : vector<48x48xf32> to vector<48x48xbf16>
    %287 = arith.truncf %271 : vector<48x8xf32> to vector<48x8xbf16>
    %cst_110 = arith.constant dense<0.000000e+00> : vector<48x8xf32>
    %288 = tpu.matmul %286, %287, %cst_110 {dimension_numbers = #tpu.dot_dimension_numbers<[1], [0], [0], [1], [0, 0, 1, 1], [], []>} : vector<48x48xbf16>, vector<48x8xbf16>, vector<48x8xf32> -> vector<48x8xf32>
    %289 = vector.extract_strided_slice %211 {offsets = [16, 0], sizes = [8, 32], strides = [1, 1]} : vector<32x32xf32> to vector<8x32xf32>
    %290 = arith.truncf %288 : vector<48x8xf32> to vector<48x8xbf16>
    %291 = arith.truncf %289 : vector<8x32xf32> to vector<8x32xbf16>
    %cst_111 = arith.constant dense<0.000000e+00> : vector<48x32xf32>
    %292 = tpu.matmul %290, %291, %cst_111 {dimension_numbers = #tpu.dot_dimension_numbers<[1], [0], [0], [1], [0, 0, 1, 1], [], []>} : vector<48x8xbf16>, vector<8x32xbf16>, vector<48x32xf32> -> vector<48x32xf32>
    %293 = arith.addf %266, %292 : vector<48x32xf32>
    %294 = vector.extract_strided_slice %209 {offsets = [0, 24], sizes = [48, 8], strides = [1, 1]} : vector<48x96xf32> to vector<48x8xf32>
    %cst_112 = arith.constant 0.353553385 : f32
    %295 = vector.broadcast %cst_112 : f32 to vector<48x8xf32>
    %296 = arith.mulf %294, %295 : vector<48x8xf32>
    %297 = vector.extract_strided_slice %209 {offsets = [0, 56], sizes = [48, 8], strides = [1, 1]} : vector<48x96xf32> to vector<48x8xf32>
    %298 = vector.extract_strided_slice %209 {offsets = [0, 88], sizes = [48, 8], strides = [1, 1]} : vector<48x96xf32> to vector<48x8xf32>
    %299 = arith.truncf %296 : vector<48x8xf32> to vector<48x8xbf16>
    %300 = arith.truncf %297 : vector<48x8xf32> to vector<48x8xbf16>
    %cst_113 = arith.constant dense<0.000000e+00> : vector<48x48xf32>
    %301 = tpu.matmul %299, %300, %cst_113 {dimension_numbers = #tpu.dot_dimension_numbers<[1], [1], [0], [0], [0, 0, 1, 0], [], []>} : vector<48x8xbf16>, vector<48x8xbf16>, vector<48x48xf32> -> vector<48x48xf32>
    %302 = arith.addf %301, %0 : vector<48x48xf32>
    %cst_114 = arith.constant dense<0xFF800000> : vector<48xf32>
    %303 = vector.multi_reduction <maximumf>, %302, %cst_114 [1] : vector<48x48xf32> to vector<48xf32>
    %304 = vector.shape_cast %303 : vector<48xf32> to vector<48x1xf32>
    %305 = vector.broadcast %304 : vector<48x1xf32> to vector<48x48xf32>
    %306 = arith.subf %302, %305 : vector<48x48xf32>
    %307 = math.exp %306 : vector<48x48xf32>
    %cst_115 = arith.constant dense<0.000000e+00> : vector<48xf32>
    %308 = vector.multi_reduction <add>, %307, %cst_115 [1] : vector<48x48xf32> to vector<48xf32>
    %309 = vector.shape_cast %308 : vector<48xf32> to vector<48x1xf32>
    %310 = tpu.reciprocal %309 {approx = true} : vector<48x1xf32> -> vector<48x1xf32>
    %311 = vector.broadcast %310 : vector<48x1xf32> to vector<48x48xf32>
    %312 = arith.mulf %307, %311 : vector<48x48xf32>
    %313 = arith.truncf %312 : vector<48x48xf32> to vector<48x48xbf16>
    %314 = arith.truncf %298 : vector<48x8xf32> to vector<48x8xbf16>
    %cst_116 = arith.constant dense<0.000000e+00> : vector<48x8xf32>
    %315 = tpu.matmul %313, %314, %cst_116 {dimension_numbers = #tpu.dot_dimension_numbers<[1], [0], [0], [1], [0, 0, 1, 1], [], []>} : vector<48x48xbf16>, vector<48x8xbf16>, vector<48x8xf32> -> vector<48x8xf32>
    %316 = vector.extract_strided_slice %211 {offsets = [24, 0], sizes = [8, 32], strides = [1, 1]} : vector<32x32xf32> to vector<8x32xf32>
    %317 = arith.truncf %315 : vector<48x8xf32> to vector<48x8xbf16>
    %318 = arith.truncf %316 : vector<8x32xf32> to vector<8x32xbf16>
    %cst_117 = arith.constant dense<0.000000e+00> : vector<48x32xf32>
    %319 = tpu.matmul %317, %318, %cst_117 {dimension_numbers = #tpu.dot_dimension_numbers<[1], [0], [0], [1], [0, 0, 1, 1], [], []>} : vector<48x8xbf16>, vector<8x32xbf16>, vector<48x32xf32> -> vector<48x32xf32>
    %320 = arith.addf %293, %319 : vector<48x32xf32>
    %c1_118 = arith.constant 1 : index
    %c0_119 = arith.constant 0 : index
    %c0_120 = arith.constant 0 : index
    %321 = vector.load %arg16[%c1_118, %c0_119, %c0_120] : memref<2x1x32xf32, #tpu.memory_space<vmem>>, vector<1x1x32xf32>
    %322 = vector.shape_cast %321 : vector<1x1x32xf32> to vector<1x32xf32>
    %323 = vector.broadcast %322 : vector<1x32xf32> to vector<48x32xf32>
    %324 = arith.addf %320, %323 : vector<48x32xf32>
    %325 = vector.broadcast %1 : vector<48x1xf32> to vector<48x32xf32>
    %326 = arith.mulf %324, %325 : vector<48x32xf32>
    %327 = arith.addf %201, %326 : vector<48x32xf32>
    %c1_121 = arith.constant 1 : index
    %c0_122 = arith.constant 0 : index
    %c0_123 = arith.constant 0 : index
    %328 = vector.load %arg17[%c1_121, %c0_122, %c0_123] : memref<2x1x32xf32, #tpu.memory_space<vmem>>, vector<1x1x32xf32>
    %329 = vector.shape_cast %328 : vector<1x1x32xf32> to vector<1x32xf32>
    %c1_124 = arith.constant 1 : index
    %c0_125 = arith.constant 0 : index
    %c0_126 = arith.constant 0 : index
    %330 = vector.load %arg18[%c1_124, %c0_125, %c0_126] : memref<2x1x32xf32, #tpu.memory_space<vmem>>, vector<1x1x32xf32>
    %331 = vector.shape_cast %330 : vector<1x1x32xf32> to vector<1x32xf32>
    %cst_127 = arith.constant dense<0.000000e+00> : vector<48xf32>
    %332 = vector.multi_reduction <add>, %327, %cst_127 [1] : vector<48x32xf32> to vector<48xf32>
    %333 = vector.shape_cast %332 : vector<48xf32> to vector<48x1xf32>
    %cst_128 = arith.constant 3.200000e+01 : f32
    %334 = vector.broadcast %cst_128 : f32 to vector<48x1xf32>
    %335 = arith.divf %333, %334 : vector<48x1xf32>
    %336 = vector.broadcast %335 : vector<48x1xf32> to vector<48x32xf32>
    %337 = arith.subf %327, %336 : vector<48x32xf32>
    %338 = arith.mulf %337, %337 : vector<48x32xf32>
    %cst_129 = arith.constant dense<0.000000e+00> : vector<48xf32>
    %339 = vector.multi_reduction <add>, %338, %cst_129 [1] : vector<48x32xf32> to vector<48xf32>
    %340 = vector.shape_cast %339 : vector<48xf32> to vector<48x1xf32>
    %cst_130 = arith.constant 3.200000e+01 : f32
    %341 = vector.broadcast %cst_130 : f32 to vector<48x1xf32>
    %342 = arith.divf %340, %341 : vector<48x1xf32>
    %cst_131 = arith.constant 9.99999974E-6 : f32
    %343 = vector.broadcast %cst_131 : f32 to vector<48x1xf32>
    %344 = arith.addf %342, %343 : vector<48x1xf32>
    %345 = math.rsqrt %344 : vector<48x1xf32>
    %346 = vector.broadcast %345 : vector<48x1xf32> to vector<48x32xf32>
    %347 = arith.mulf %337, %346 : vector<48x32xf32>
    %348 = vector.broadcast %329 : vector<1x32xf32> to vector<48x32xf32>
    %349 = arith.mulf %347, %348 : vector<48x32xf32>
    %350 = vector.broadcast %331 : vector<1x32xf32> to vector<48x32xf32>
    %351 = arith.addf %349, %350 : vector<48x32xf32>
    %c1_132 = arith.constant 1 : index
    %c0_133 = arith.constant 0 : index
    %c0_134 = arith.constant 0 : index
    %352 = vector.load %arg19[%c1_132, %c0_133, %c0_134] : memref<2x32x32xbf16, #tpu.memory_space<vmem>>, vector<1x32x32xbf16>
    %353 = vector.shape_cast %352 : vector<1x32x32xbf16> to vector<32x32xbf16>
    %354 = arith.truncf %351 : vector<48x32xf32> to vector<48x32xbf16>
    %cst_135 = arith.constant dense<0.000000e+00> : vector<48x32xf32>
    %355 = tpu.matmul %354, %353, %cst_135 {dimension_numbers = #tpu.dot_dimension_numbers<[1], [0], [0], [1], [0, 0, 1, 1], [], []>} : vector<48x32xbf16>, vector<32x32xbf16>, vector<48x32xf32> -> vector<48x32xf32>
    %c1_136 = arith.constant 1 : index
    %c0_137 = arith.constant 0 : index
    %c0_138 = arith.constant 0 : index
    %356 = vector.load %arg20[%c1_136, %c0_137, %c0_138] : memref<2x1x32xf32, #tpu.memory_space<vmem>>, vector<1x1x32xf32>
    %357 = vector.shape_cast %356 : vector<1x1x32xf32> to vector<1x32xf32>
    %358 = vector.broadcast %357 : vector<1x32xf32> to vector<48x32xf32>
    %359 = arith.addf %355, %358 : vector<48x32xf32>
    %cst_139 = arith.constant 0.000000e+00 : f32
    %360 = vector.broadcast %cst_139 : f32 to vector<48x32xf32>
    %361 = arith.maximumf %359, %360 : vector<48x32xf32>
    %c1_140 = arith.constant 1 : index
    %c0_141 = arith.constant 0 : index
    %c0_142 = arith.constant 0 : index
    %362 = vector.load %arg21[%c1_140, %c0_141, %c0_142] : memref<2x32x32xbf16, #tpu.memory_space<vmem>>, vector<1x32x32xbf16>
    %363 = vector.shape_cast %362 : vector<1x32x32xbf16> to vector<32x32xbf16>
    %364 = arith.truncf %361 : vector<48x32xf32> to vector<48x32xbf16>
    %cst_143 = arith.constant dense<0.000000e+00> : vector<48x32xf32>
    %365 = tpu.matmul %364, %363, %cst_143 {dimension_numbers = #tpu.dot_dimension_numbers<[1], [0], [0], [1], [0, 0, 1, 1], [], []>} : vector<48x32xbf16>, vector<32x32xbf16>, vector<48x32xf32> -> vector<48x32xf32>
    %c1_144 = arith.constant 1 : index
    %c0_145 = arith.constant 0 : index
    %c0_146 = arith.constant 0 : index
    %366 = vector.load %arg22[%c1_144, %c0_145, %c0_146] : memref<2x1x32xf32, #tpu.memory_space<vmem>>, vector<1x1x32xf32>
    %367 = vector.shape_cast %366 : vector<1x1x32xf32> to vector<1x32xf32>
    %368 = vector.broadcast %367 : vector<1x32xf32> to vector<48x32xf32>
    %369 = arith.addf %365, %368 : vector<48x32xf32>
    %370 = arith.addf %351, %369 : vector<48x32xf32>
    %c1_147 = arith.constant 1 : index
    %c0_148 = arith.constant 0 : index
    %c0_149 = arith.constant 0 : index
    %371 = vector.load %arg23[%c1_147, %c0_148, %c0_149] : memref<2x1x32xf32, #tpu.memory_space<vmem>>, vector<1x1x32xf32>
    %372 = vector.shape_cast %371 : vector<1x1x32xf32> to vector<1x32xf32>
    %c1_150 = arith.constant 1 : index
    %c0_151 = arith.constant 0 : index
    %c0_152 = arith.constant 0 : index
    %373 = vector.load %arg24[%c1_150, %c0_151, %c0_152] : memref<2x1x32xf32, #tpu.memory_space<vmem>>, vector<1x1x32xf32>
    %374 = vector.shape_cast %373 : vector<1x1x32xf32> to vector<1x32xf32>
    %cst_153 = arith.constant dense<0.000000e+00> : vector<48xf32>
    %375 = vector.multi_reduction <add>, %370, %cst_153 [1] : vector<48x32xf32> to vector<48xf32>
    %376 = vector.shape_cast %375 : vector<48xf32> to vector<48x1xf32>
    %cst_154 = arith.constant 3.200000e+01 : f32
    %377 = vector.broadcast %cst_154 : f32 to vector<48x1xf32>
    %378 = arith.divf %376, %377 : vector<48x1xf32>
    %379 = vector.broadcast %378 : vector<48x1xf32> to vector<48x32xf32>
    %380 = arith.subf %370, %379 : vector<48x32xf32>
    %381 = arith.mulf %380, %380 : vector<48x32xf32>
    %cst_155 = arith.constant dense<0.000000e+00> : vector<48xf32>
    %382 = vector.multi_reduction <add>, %381, %cst_155 [1] : vector<48x32xf32> to vector<48xf32>
    %383 = vector.shape_cast %382 : vector<48xf32> to vector<48x1xf32>
    %cst_156 = arith.constant 3.200000e+01 : f32
    %384 = vector.broadcast %cst_156 : f32 to vector<48x1xf32>
    %385 = arith.divf %383, %384 : vector<48x1xf32>
    %cst_157 = arith.constant 9.99999974E-6 : f32
    %386 = vector.broadcast %cst_157 : f32 to vector<48x1xf32>
    %387 = arith.addf %385, %386 : vector<48x1xf32>
    %388 = math.rsqrt %387 : vector<48x1xf32>
    %389 = vector.broadcast %388 : vector<48x1xf32> to vector<48x32xf32>
    %390 = arith.mulf %380, %389 : vector<48x32xf32>
    %391 = vector.broadcast %372 : vector<1x32xf32> to vector<48x32xf32>
    %392 = arith.mulf %390, %391 : vector<48x32xf32>
    %393 = vector.broadcast %374 : vector<1x32xf32> to vector<48x32xf32>
    %394 = arith.addf %392, %393 : vector<48x32xf32>
    %c0_158 = arith.constant 0 : index
    %c0_159 = arith.constant 0 : index
    %395 = vector.load %arg3[%c0_158, %c0_159] : memref<48x1xf32, #tpu.memory_space<vmem>>, vector<48x1xf32>
    %396 = vector.broadcast %395 : vector<48x1xf32> to vector<48x32xf32>
    %397 = arith.mulf %394, %396 : vector<48x32xf32>
    %398 = vector.extract_strided_slice %397 {offsets = [0, 0], sizes = [16, 32], strides = [1, 1]} : vector<48x32xf32> to vector<16x32xf32>
    %c0_160 = arith.constant 0 : index
    %c0_161 = arith.constant 0 : index
    %c0_162 = arith.constant 0 : index
    %399 = vector.load %arg4[%c0_160, %c0_161, %c0_162] : memref<3x2x48xf32, #tpu.memory_space<vmem>>, vector<1x2x48xf32>
    %400 = vector.shape_cast %399 : vector<1x2x48xf32> to vector<2x48xf32>
    %401 = arith.truncf %400 : vector<2x48xf32> to vector<2x48xbf16>
    %402 = arith.truncf %397 : vector<48x32xf32> to vector<48x32xbf16>
    %cst_163 = arith.constant dense<0.000000e+00> : vector<2x32xf32>
    %403 = tpu.matmul %401, %402, %cst_163 {dimension_numbers = #tpu.dot_dimension_numbers<[1], [0], [0], [1], [0, 0, 1, 1], [], []>} : vector<2x48xbf16>, vector<48x32xbf16>, vector<2x32xf32> -> vector<2x32xf32>
    %c1_164 = arith.constant 1 : index
    %c0_165 = arith.constant 0 : index
    %c0_166 = arith.constant 0 : index
    %404 = vector.load %arg4[%c1_164, %c0_165, %c0_166] : memref<3x2x48xf32, #tpu.memory_space<vmem>>, vector<1x2x48xf32>
    %405 = vector.shape_cast %404 : vector<1x2x48xf32> to vector<2x48xf32>
    %406 = arith.truncf %405 : vector<2x48xf32> to vector<2x48xbf16>
    %407 = arith.truncf %397 : vector<48x32xf32> to vector<48x32xbf16>
    %cst_167 = arith.constant dense<0.000000e+00> : vector<2x32xf32>
    %408 = tpu.matmul %406, %407, %cst_167 {dimension_numbers = #tpu.dot_dimension_numbers<[1], [0], [0], [1], [0, 0, 1, 1], [], []>} : vector<2x48xbf16>, vector<48x32xbf16>, vector<2x32xf32> -> vector<2x32xf32>
    %c2 = arith.constant 2 : index
    %c0_168 = arith.constant 0 : index
    %c0_169 = arith.constant 0 : index
    %409 = vector.load %arg4[%c2, %c0_168, %c0_169] : memref<3x2x48xf32, #tpu.memory_space<vmem>>, vector<1x2x48xf32>
    %410 = vector.shape_cast %409 : vector<1x2x48xf32> to vector<2x48xf32>
    %411 = arith.truncf %410 : vector<2x48xf32> to vector<2x48xbf16>
    %412 = arith.truncf %397 : vector<48x32xf32> to vector<48x32xbf16>
    %cst_170 = arith.constant dense<0.000000e+00> : vector<2x32xf32>
    %413 = tpu.matmul %411, %412, %cst_170 {dimension_numbers = #tpu.dot_dimension_numbers<[1], [0], [0], [1], [0, 0, 1, 1], [], []>} : vector<2x48xbf16>, vector<48x32xbf16>, vector<2x32xf32> -> vector<2x32xf32>
    %c0_171 = arith.constant 0 : index
    %c0_172 = arith.constant 0 : index
    %414 = vector.load %arg8[%c0_171, %c0_172] : memref<2x20xf32, #tpu.memory_space<vmem>>, vector<2x20xf32>
    %c0_173 = arith.constant 0 : index
    %c0_174 = arith.constant 0 : index
    %415 = vector.load %arg25[%c0_173, %c0_174] : memref<20x16xbf16, #tpu.memory_space<vmem>>, vector<20x16xbf16>
    %416 = arith.truncf %414 : vector<2x20xf32> to vector<2x20xbf16>
    %cst_175 = arith.constant dense<0.000000e+00> : vector<2x16xf32>
    %417 = tpu.matmul %416, %415, %cst_175 {dimension_numbers = #tpu.dot_dimension_numbers<[1], [0], [0], [1], [0, 0, 1, 1], [], []>} : vector<2x20xbf16>, vector<20x16xbf16>, vector<2x16xf32> -> vector<2x16xf32>
    %c0_176 = arith.constant 0 : index
    %c0_177 = arith.constant 0 : index
    %418 = vector.load %arg26[%c0_176, %c0_177] : memref<1x16xf32, #tpu.memory_space<vmem>>, vector<1x16xf32>
    %419 = vector.broadcast %418 : vector<1x16xf32> to vector<2x16xf32>
    %420 = arith.addf %417, %419 : vector<2x16xf32>
    %cst_178 = arith.constant 0.000000e+00 : f32
    %421 = vector.broadcast %cst_178 : f32 to vector<2x16xf32>
    %422 = arith.maximumf %420, %421 : vector<2x16xf32>
    %c0_179 = arith.constant 0 : index
    %c0_180 = arith.constant 0 : index
    %423 = vector.load %arg27[%c0_179, %c0_180] : memref<16x16xbf16, #tpu.memory_space<vmem>>, vector<16x16xbf16>
    %424 = arith.truncf %422 : vector<2x16xf32> to vector<2x16xbf16>
    %cst_181 = arith.constant dense<0.000000e+00> : vector<2x16xf32>
    %425 = tpu.matmul %424, %423, %cst_181 {dimension_numbers = #tpu.dot_dimension_numbers<[1], [0], [0], [1], [0, 0, 1, 1], [], []>} : vector<2x16xbf16>, vector<16x16xbf16>, vector<2x16xf32> -> vector<2x16xf32>
    %c0_182 = arith.constant 0 : index
    %c0_183 = arith.constant 0 : index
    %426 = vector.load %arg28[%c0_182, %c0_183] : memref<1x16xf32, #tpu.memory_space<vmem>>, vector<1x16xf32>
    %427 = vector.broadcast %426 : vector<1x16xf32> to vector<2x16xf32>
    %428 = arith.addf %425, %427 : vector<2x16xf32>
    %cst_184 = arith.constant 0.000000e+00 : f32
    %429 = vector.broadcast %cst_184 : f32 to vector<2x16xf32>
    %430 = arith.maximumf %428, %429 : vector<2x16xf32>
    %c0_185 = arith.constant 0 : index
    %c0_186 = arith.constant 0 : index
    %431 = vector.load %arg9[%c0_185, %c0_186] : memref<2x12xf32, #tpu.memory_space<vmem>>, vector<2x12xf32>
    %c0_187 = arith.constant 0 : index
    %c0_188 = arith.constant 0 : index
    %432 = vector.load %arg29[%c0_187, %c0_188] : memref<12x16xbf16, #tpu.memory_space<vmem>>, vector<12x16xbf16>
    %433 = arith.truncf %431 : vector<2x12xf32> to vector<2x12xbf16>
    %cst_189 = arith.constant dense<0.000000e+00> : vector<2x16xf32>
    %434 = tpu.matmul %433, %432, %cst_189 {dimension_numbers = #tpu.dot_dimension_numbers<[1], [0], [0], [1], [0, 0, 1, 1], [], []>} : vector<2x12xbf16>, vector<12x16xbf16>, vector<2x16xf32> -> vector<2x16xf32>
    %c0_190 = arith.constant 0 : index
    %c0_191 = arith.constant 0 : index
    %435 = vector.load %arg30[%c0_190, %c0_191] : memref<1x16xf32, #tpu.memory_space<vmem>>, vector<1x16xf32>
    %436 = vector.broadcast %435 : vector<1x16xf32> to vector<2x16xf32>
    %437 = arith.addf %434, %436 : vector<2x16xf32>
    %cst_192 = arith.constant 0.000000e+00 : f32
    %438 = vector.broadcast %cst_192 : f32 to vector<2x16xf32>
    %439 = arith.maximumf %437, %438 : vector<2x16xf32>
    %c0_193 = arith.constant 0 : index
    %c0_194 = arith.constant 0 : index
    %440 = vector.load %arg31[%c0_193, %c0_194] : memref<16x16xbf16, #tpu.memory_space<vmem>>, vector<16x16xbf16>
    %441 = arith.truncf %439 : vector<2x16xf32> to vector<2x16xbf16>
    %cst_195 = arith.constant dense<0.000000e+00> : vector<2x16xf32>
    %442 = tpu.matmul %441, %440, %cst_195 {dimension_numbers = #tpu.dot_dimension_numbers<[1], [0], [0], [1], [0, 0, 1, 1], [], []>} : vector<2x16xbf16>, vector<16x16xbf16>, vector<2x16xf32> -> vector<2x16xf32>
    %c0_196 = arith.constant 0 : index
    %c0_197 = arith.constant 0 : index
    %443 = vector.load %arg32[%c0_196, %c0_197] : memref<1x16xf32, #tpu.memory_space<vmem>>, vector<1x16xf32>
    %444 = vector.broadcast %443 : vector<1x16xf32> to vector<2x16xf32>
    %445 = arith.addf %442, %444 : vector<2x16xf32>
    %cst_198 = arith.constant 0.000000e+00 : f32
    %446 = vector.broadcast %cst_198 : f32 to vector<2x16xf32>
    %447 = arith.maximumf %445, %446 : vector<2x16xf32>
    %c0_199 = arith.constant 0 : index
    %c0_200 = arith.constant 0 : index
    %448 = vector.load %arg10[%c0_199, %c0_200] : memref<2x4xf32, #tpu.memory_space<vmem>>, vector<2x4xf32>
    %c0_201 = arith.constant 0 : index
    %c0_202 = arith.constant 0 : index
    %449 = vector.load %arg33[%c0_201, %c0_202] : memref<4x8xbf16, #tpu.memory_space<vmem>>, vector<4x8xbf16>
    %450 = arith.truncf %448 : vector<2x4xf32> to vector<2x4xbf16>
    %cst_203 = arith.constant dense<0.000000e+00> : vector<2x8xf32>
    %451 = tpu.matmul %450, %449, %cst_203 {dimension_numbers = #tpu.dot_dimension_numbers<[1], [0], [0], [1], [0, 0, 1, 1], [], []>} : vector<2x4xbf16>, vector<4x8xbf16>, vector<2x8xf32> -> vector<2x8xf32>
    %c0_204 = arith.constant 0 : index
    %c0_205 = arith.constant 0 : index
    %452 = vector.load %arg34[%c0_204, %c0_205] : memref<1x8xf32, #tpu.memory_space<vmem>>, vector<1x8xf32>
    %453 = vector.broadcast %452 : vector<1x8xf32> to vector<2x8xf32>
    %454 = arith.addf %451, %453 : vector<2x8xf32>
    %cst_206 = arith.constant 0.000000e+00 : f32
    %455 = vector.broadcast %cst_206 : f32 to vector<2x8xf32>
    %456 = arith.maximumf %454, %455 : vector<2x8xf32>
    %c0_207 = arith.constant 0 : index
    %c0_208 = arith.constant 0 : index
    %457 = vector.load %arg35[%c0_207, %c0_208] : memref<8x8xbf16, #tpu.memory_space<vmem>>, vector<8x8xbf16>
    %458 = arith.truncf %456 : vector<2x8xf32> to vector<2x8xbf16>
    %cst_209 = arith.constant dense<0.000000e+00> : vector<2x8xf32>
    %459 = tpu.matmul %458, %457, %cst_209 {dimension_numbers = #tpu.dot_dimension_numbers<[1], [0], [0], [1], [0, 0, 1, 1], [], []>} : vector<2x8xbf16>, vector<8x8xbf16>, vector<2x8xf32> -> vector<2x8xf32>
    %c0_210 = arith.constant 0 : index
    %c0_211 = arith.constant 0 : index
    %460 = vector.load %arg36[%c0_210, %c0_211] : memref<1x8xf32, #tpu.memory_space<vmem>>, vector<1x8xf32>
    %461 = vector.broadcast %460 : vector<1x8xf32> to vector<2x8xf32>
    %462 = arith.addf %459, %461 : vector<2x8xf32>
    %cst_212 = arith.constant 0.000000e+00 : f32
    %463 = vector.broadcast %cst_212 : f32 to vector<2x8xf32>
    %464 = arith.maximumf %462, %463 : vector<2x8xf32>
    %c0_213 = arith.constant 0 : index
    %c0_214 = arith.constant 0 : index
    %465 = vector.load %arg37[%c0_213, %c0_214] : memref<16x40xbf16, #tpu.memory_space<vmem>>, vector<16x40xbf16>
    %466 = arith.truncf %430 : vector<2x16xf32> to vector<2x16xbf16>
    %cst_215 = arith.constant dense<0.000000e+00> : vector<2x40xf32>
    %467 = tpu.matmul %466, %465, %cst_215 {dimension_numbers = #tpu.dot_dimension_numbers<[1], [0], [0], [1], [0, 0, 1, 1], [], []>} : vector<2x16xbf16>, vector<16x40xbf16>, vector<2x40xf32> -> vector<2x40xf32>
    %c0_216 = arith.constant 0 : index
    %c0_217 = arith.constant 0 : index
    %468 = vector.load %arg38[%c0_216, %c0_217] : memref<16x40xbf16, #tpu.memory_space<vmem>>, vector<16x40xbf16>
    %469 = arith.truncf %447 : vector<2x16xf32> to vector<2x16xbf16>
    %cst_218 = arith.constant dense<0.000000e+00> : vector<2x40xf32>
    %470 = tpu.matmul %469, %468, %cst_218 {dimension_numbers = #tpu.dot_dimension_numbers<[1], [0], [0], [1], [0, 0, 1, 1], [], []>} : vector<2x16xbf16>, vector<16x40xbf16>, vector<2x40xf32> -> vector<2x40xf32>
    %471 = arith.addf %467, %470 : vector<2x40xf32>
    %c0_219 = arith.constant 0 : index
    %c0_220 = arith.constant 0 : index
    %472 = vector.load %arg39[%c0_219, %c0_220] : memref<8x40xbf16, #tpu.memory_space<vmem>>, vector<8x40xbf16>
    %473 = arith.truncf %464 : vector<2x8xf32> to vector<2x8xbf16>
    %cst_221 = arith.constant dense<0.000000e+00> : vector<2x40xf32>
    %474 = tpu.matmul %473, %472, %cst_221 {dimension_numbers = #tpu.dot_dimension_numbers<[1], [0], [0], [1], [0, 0, 1, 1], [], []>} : vector<2x8xbf16>, vector<8x40xbf16>, vector<2x40xf32> -> vector<2x40xf32>
    %475 = arith.addf %471, %474 : vector<2x40xf32>
    %c0_222 = arith.constant 0 : index
    %c0_223 = arith.constant 0 : index
    %476 = vector.load %arg40[%c0_222, %c0_223] : memref<1x40xf32, #tpu.memory_space<vmem>>, vector<1x40xf32>
    %477 = vector.broadcast %476 : vector<1x40xf32> to vector<2x40xf32>
    %478 = arith.addf %475, %477 : vector<2x40xf32>
    %cst_224 = arith.constant 0.000000e+00 : f32
    %479 = vector.broadcast %cst_224 : f32 to vector<2x40xf32>
    %480 = arith.maximumf %478, %479 : vector<2x40xf32>
    %c0_225 = arith.constant 0 : index
    %c0_226 = arith.constant 0 : index
    %481 = vector.load %arg41[%c0_225, %c0_226] : memref<40x40xbf16, #tpu.memory_space<vmem>>, vector<40x40xbf16>
    %482 = arith.truncf %480 : vector<2x40xf32> to vector<2x40xbf16>
    %cst_227 = arith.constant dense<0.000000e+00> : vector<2x40xf32>
    %483 = tpu.matmul %482, %481, %cst_227 {dimension_numbers = #tpu.dot_dimension_numbers<[1], [0], [0], [1], [0, 0, 1, 1], [], []>} : vector<2x40xbf16>, vector<40x40xbf16>, vector<2x40xf32> -> vector<2x40xf32>
    %c0_228 = arith.constant 0 : index
    %c0_229 = arith.constant 0 : index
    %484 = vector.load %arg42[%c0_228, %c0_229] : memref<1x40xf32, #tpu.memory_space<vmem>>, vector<1x40xf32>
    %485 = vector.broadcast %484 : vector<1x40xf32> to vector<2x40xf32>
    %486 = arith.addf %483, %485 : vector<2x40xf32>
    %cst_230 = arith.constant 0.000000e+00 : f32
    %487 = vector.broadcast %cst_230 : f32 to vector<2x40xf32>
    %488 = arith.maximumf %486, %487 : vector<2x40xf32>
    %c0_231 = arith.constant 0 : index
    %c0_232 = arith.constant 0 : index
    %489 = vector.load %arg5[%c0_231, %c0_232] : memref<2x3xf32, #tpu.memory_space<vmem>>, vector<2x3xf32>
    %c0_233 = arith.constant 0 : index
    %c0_234 = arith.constant 0 : index
    %490 = vector.load %arg44[%c0_233, %c0_234] : memref<3x171xbf16, #tpu.memory_space<vmem>>, vector<3x171xbf16>
    %491 = arith.truncf %489 : vector<2x3xf32> to vector<2x3xbf16>
    %cst_235 = arith.constant dense<0.000000e+00> : vector<2x171xf32>
    %492 = tpu.matmul %491, %490, %cst_235 {dimension_numbers = #tpu.dot_dimension_numbers<[1], [0], [0], [1], [0, 0, 1, 1], [], []>} : vector<2x3xbf16>, vector<3x171xbf16>, vector<2x171xf32> -> vector<2x171xf32>
    %c0_236 = arith.constant 0 : index
    %c0_237 = arith.constant 0 : index
    %493 = vector.load %arg45[%c0_236, %c0_237] : memref<40x171xbf16, #tpu.memory_space<vmem>>, vector<40x171xbf16>
    %494 = arith.truncf %488 : vector<2x40xf32> to vector<2x40xbf16>
    %cst_238 = arith.constant dense<0.000000e+00> : vector<2x171xf32>
    %495 = tpu.matmul %494, %493, %cst_238 {dimension_numbers = #tpu.dot_dimension_numbers<[1], [0], [0], [1], [0, 0, 1, 1], [], []>} : vector<2x40xbf16>, vector<40x171xbf16>, vector<2x171xf32> -> vector<2x171xf32>
    %496 = arith.addf %492, %495 : vector<2x171xf32>
    %c0_239 = arith.constant 0 : index
    %c0_240 = arith.constant 0 : index
    %c0_241 = arith.constant 0 : index
    %497 = vector.load %arg43[%c0_239, %c0_240, %c0_241] : memref<3x32x171xbf16, #tpu.memory_space<vmem>>, vector<1x32x171xbf16>
    %498 = vector.shape_cast %497 : vector<1x32x171xbf16> to vector<32x171xbf16>
    %499 = arith.truncf %403 : vector<2x32xf32> to vector<2x32xbf16>
    %cst_242 = arith.constant dense<0.000000e+00> : vector<2x171xf32>
    %500 = tpu.matmul %499, %498, %cst_242 {dimension_numbers = #tpu.dot_dimension_numbers<[1], [0], [0], [1], [0, 0, 1, 1], [], []>} : vector<2x32xbf16>, vector<32x171xbf16>, vector<2x171xf32> -> vector<2x171xf32>
    %501 = arith.addf %496, %500 : vector<2x171xf32>
    %c1_243 = arith.constant 1 : index
    %c0_244 = arith.constant 0 : index
    %c0_245 = arith.constant 0 : index
    %502 = vector.load %arg43[%c1_243, %c0_244, %c0_245] : memref<3x32x171xbf16, #tpu.memory_space<vmem>>, vector<1x32x171xbf16>
    %503 = vector.shape_cast %502 : vector<1x32x171xbf16> to vector<32x171xbf16>
    %504 = arith.truncf %408 : vector<2x32xf32> to vector<2x32xbf16>
    %cst_246 = arith.constant dense<0.000000e+00> : vector<2x171xf32>
    %505 = tpu.matmul %504, %503, %cst_246 {dimension_numbers = #tpu.dot_dimension_numbers<[1], [0], [0], [1], [0, 0, 1, 1], [], []>} : vector<2x32xbf16>, vector<32x171xbf16>, vector<2x171xf32> -> vector<2x171xf32>
    %506 = arith.addf %501, %505 : vector<2x171xf32>
    %c2_247 = arith.constant 2 : index
    %c0_248 = arith.constant 0 : index
    %c0_249 = arith.constant 0 : index
    %507 = vector.load %arg43[%c2_247, %c0_248, %c0_249] : memref<3x32x171xbf16, #tpu.memory_space<vmem>>, vector<1x32x171xbf16>
    %508 = vector.shape_cast %507 : vector<1x32x171xbf16> to vector<32x171xbf16>
    %509 = arith.truncf %413 : vector<2x32xf32> to vector<2x32xbf16>
    %cst_250 = arith.constant dense<0.000000e+00> : vector<2x171xf32>
    %510 = tpu.matmul %509, %508, %cst_250 {dimension_numbers = #tpu.dot_dimension_numbers<[1], [0], [0], [1], [0, 0, 1, 1], [], []>} : vector<2x32xbf16>, vector<32x171xbf16>, vector<2x171xf32> -> vector<2x171xf32>
    %511 = arith.addf %506, %510 : vector<2x171xf32>
    %c0_251 = arith.constant 0 : index
    %c0_252 = arith.constant 0 : index
    %512 = vector.load %arg6[%c0_251, %c0_252] : memref<16x2xf32, #tpu.memory_space<vmem>>, vector<16x2xf32>
    %513 = arith.truncf %512 : vector<16x2xf32> to vector<16x2xbf16>
    %514 = arith.truncf %511 : vector<2x171xf32> to vector<2x171xbf16>
    %cst_253 = arith.constant dense<0.000000e+00> : vector<16x171xf32>
    %515 = tpu.matmul %513, %514, %cst_253 {dimension_numbers = #tpu.dot_dimension_numbers<[1], [0], [0], [1], [0, 0, 1, 1], [], []>} : vector<16x2xbf16>, vector<2x171xbf16>, vector<16x171xf32> -> vector<16x171xf32>
    %c0_254 = arith.constant 0 : index
    %c0_255 = arith.constant 0 : index
    %516 = vector.load %arg46[%c0_254, %c0_255] : memref<32x171xbf16, #tpu.memory_space<vmem>>, vector<32x171xbf16>
    %517 = arith.truncf %398 : vector<16x32xf32> to vector<16x32xbf16>
    %cst_256 = arith.constant dense<0.000000e+00> : vector<16x171xf32>
    %518 = tpu.matmul %517, %516, %cst_256 {dimension_numbers = #tpu.dot_dimension_numbers<[1], [0], [0], [1], [0, 0, 1, 1], [], []>} : vector<16x32xbf16>, vector<32x171xbf16>, vector<16x171xf32> -> vector<16x171xf32>
    %519 = arith.addf %515, %518 : vector<16x171xf32>
    %c0_257 = arith.constant 0 : index
    %c0_258 = arith.constant 0 : index
    %520 = vector.load %arg47[%c0_257, %c0_258] : memref<1x171xf32, #tpu.memory_space<vmem>>, vector<1x171xf32>
    %521 = vector.broadcast %520 : vector<1x171xf32> to vector<16x171xf32>
    %522 = arith.addf %519, %521 : vector<16x171xf32>
    %cst_259 = arith.constant 0.000000e+00 : f32
    %523 = vector.broadcast %cst_259 : f32 to vector<16x171xf32>
    %524 = arith.maximumf %522, %523 : vector<16x171xf32>
    %c0_260 = arith.constant 0 : index
    %c0_261 = arith.constant 0 : index
    %525 = vector.load %arg48[%c0_260, %c0_261] : memref<171x171xbf16, #tpu.memory_space<vmem>>, vector<171x171xbf16>
    %526 = arith.truncf %524 : vector<16x171xf32> to vector<16x171xbf16>
    %cst_262 = arith.constant dense<0.000000e+00> : vector<16x171xf32>
    %527 = tpu.matmul %526, %525, %cst_262 {dimension_numbers = #tpu.dot_dimension_numbers<[1], [0], [0], [1], [0, 0, 1, 1], [], []>} : vector<16x171xbf16>, vector<171x171xbf16>, vector<16x171xf32> -> vector<16x171xf32>
    %c0_263 = arith.constant 0 : index
    %c0_264 = arith.constant 0 : index
    %528 = vector.load %arg49[%c0_263, %c0_264] : memref<1x171xf32, #tpu.memory_space<vmem>>, vector<1x171xf32>
    %529 = vector.broadcast %528 : vector<1x171xf32> to vector<16x171xf32>
    %530 = arith.addf %527, %529 : vector<16x171xf32>
    %cst_265 = arith.constant 0.000000e+00 : f32
    %531 = vector.broadcast %cst_265 : f32 to vector<16x171xf32>
    %532 = arith.maximumf %530, %531 : vector<16x171xf32>
    %c0_266 = arith.constant 0 : index
    %c0_267 = arith.constant 0 : index
    %533 = vector.load %arg50[%c0_266, %c0_267] : memref<171x2xbf16, #tpu.memory_space<vmem>>, vector<171x2xbf16>
    %534 = arith.truncf %532 : vector<16x171xf32> to vector<16x171xbf16>
    %cst_268 = arith.constant dense<0.000000e+00> : vector<16x2xf32>
    %535 = tpu.matmul %534, %533, %cst_268 {dimension_numbers = #tpu.dot_dimension_numbers<[1], [0], [0], [1], [0, 0, 1, 1], [], []>} : vector<16x171xbf16>, vector<171x2xbf16>, vector<16x2xf32> -> vector<16x2xf32>
    %c0_269 = arith.constant 0 : index
    %c0_270 = arith.constant 0 : index
    %536 = vector.load %arg51[%c0_269, %c0_270] : memref<1x2xf32, #tpu.memory_space<vmem>>, vector<1x2xf32>
    %537 = vector.broadcast %536 : vector<1x2xf32> to vector<16x2xf32>
    %538 = arith.addf %535, %537 : vector<16x2xf32>
    %c0_271 = arith.constant 0 : index
    %c0_272 = arith.constant 0 : index
    %539 = vector.load %arg69[%c0_271, %c0_272] : memref<16x2xf32, #tpu.memory_space<vmem>>, vector<16x2xf32>
    tpu.vector_store %arg69[%c0_271, %c0_272], %538 {strides = array<i32>} : memref<16x2xf32, #tpu.memory_space<vmem>>, vector<16x2xf32>,
    %c0_273 = arith.constant 0 : index
    %c0_274 = arith.constant 0 : index
    %540 = vector.load %arg7[%c0_273, %c0_274] : memref<2x16xf32, #tpu.memory_space<vmem>>, vector<2x16xf32>
    %541 = arith.truncf %540 : vector<2x16xf32> to vector<2x16xbf16>
    %542 = arith.truncf %398 : vector<16x32xf32> to vector<16x32xbf16>
    %cst_275 = arith.constant dense<0.000000e+00> : vector<2x32xf32>
    %543 = tpu.matmul %541, %542, %cst_275 {dimension_numbers = #tpu.dot_dimension_numbers<[1], [0], [0], [1], [0, 0, 1, 1], [], []>} : vector<2x16xbf16>, vector<16x32xbf16>, vector<2x32xf32> -> vector<2x32xf32>
    %c0_276 = arith.constant 0 : index
    %c0_277 = arith.constant 0 : index
    %544 = vector.load %arg53[%c0_276, %c0_277] : memref<3x171xbf16, #tpu.memory_space<vmem>>, vector<3x171xbf16>
    %545 = arith.truncf %489 : vector<2x3xf32> to vector<2x3xbf16>
    %cst_278 = arith.constant dense<0.000000e+00> : vector<2x171xf32>
    %546 = tpu.matmul %545, %544, %cst_278 {dimension_numbers = #tpu.dot_dimension_numbers<[1], [0], [0], [1], [0, 0, 1, 1], [], []>} : vector<2x3xbf16>, vector<3x171xbf16>, vector<2x171xf32> -> vector<2x171xf32>
    %c0_279 = arith.constant 0 : index
    %c0_280 = arith.constant 0 : index
    %547 = vector.load %arg54[%c0_279, %c0_280] : memref<40x171xbf16, #tpu.memory_space<vmem>>, vector<40x171xbf16>
    %548 = arith.truncf %488 : vector<2x40xf32> to vector<2x40xbf16>
    %cst_281 = arith.constant dense<0.000000e+00> : vector<2x171xf32>
    %549 = tpu.matmul %548, %547, %cst_281 {dimension_numbers = #tpu.dot_dimension_numbers<[1], [0], [0], [1], [0, 0, 1, 1], [], []>} : vector<2x40xbf16>, vector<40x171xbf16>, vector<2x171xf32> -> vector<2x171xf32>
    %550 = arith.addf %546, %549 : vector<2x171xf32>
    %c0_282 = arith.constant 0 : index
    %c0_283 = arith.constant 0 : index
    %c0_284 = arith.constant 0 : index
    %551 = vector.load %arg52[%c0_282, %c0_283, %c0_284] : memref<3x32x171xbf16, #tpu.memory_space<vmem>>, vector<1x32x171xbf16>
    %552 = vector.shape_cast %551 : vector<1x32x171xbf16> to vector<32x171xbf16>
    %553 = arith.truncf %403 : vector<2x32xf32> to vector<2x32xbf16>
    %cst_285 = arith.constant dense<0.000000e+00> : vector<2x171xf32>
    %554 = tpu.matmul %553, %552, %cst_285 {dimension_numbers = #tpu.dot_dimension_numbers<[1], [0], [0], [1], [0, 0, 1, 1], [], []>} : vector<2x32xbf16>, vector<32x171xbf16>, vector<2x171xf32> -> vector<2x171xf32>
    %555 = arith.addf %550, %554 : vector<2x171xf32>
    %c1_286 = arith.constant 1 : index
    %c0_287 = arith.constant 0 : index
    %c0_288 = arith.constant 0 : index
    %556 = vector.load %arg52[%c1_286, %c0_287, %c0_288] : memref<3x32x171xbf16, #tpu.memory_space<vmem>>, vector<1x32x171xbf16>
    %557 = vector.shape_cast %556 : vector<1x32x171xbf16> to vector<32x171xbf16>
    %558 = arith.truncf %408 : vector<2x32xf32> to vector<2x32xbf16>
    %cst_289 = arith.constant dense<0.000000e+00> : vector<2x171xf32>
    %559 = tpu.matmul %558, %557, %cst_289 {dimension_numbers = #tpu.dot_dimension_numbers<[1], [0], [0], [1], [0, 0, 1, 1], [], []>} : vector<2x32xbf16>, vector<32x171xbf16>, vector<2x171xf32> -> vector<2x171xf32>
    %560 = arith.addf %555, %559 : vector<2x171xf32>
    %c2_290 = arith.constant 2 : index
    %c0_291 = arith.constant 0 : index
    %c0_292 = arith.constant 0 : index
    %561 = vector.load %arg52[%c2_290, %c0_291, %c0_292] : memref<3x32x171xbf16, #tpu.memory_space<vmem>>, vector<1x32x171xbf16>
    %562 = vector.shape_cast %561 : vector<1x32x171xbf16> to vector<32x171xbf16>
    %563 = arith.truncf %413 : vector<2x32xf32> to vector<2x32xbf16>
    %cst_293 = arith.constant dense<0.000000e+00> : vector<2x171xf32>
    %564 = tpu.matmul %563, %562, %cst_293 {dimension_numbers = #tpu.dot_dimension_numbers<[1], [0], [0], [1], [0, 0, 1, 1], [], []>} : vector<2x32xbf16>, vector<32x171xbf16>, vector<2x171xf32> -> vector<2x171xf32>
    %565 = arith.addf %560, %564 : vector<2x171xf32>
    %c0_294 = arith.constant 0 : index
    %c0_295 = arith.constant 0 : index
    %566 = vector.load %arg55[%c0_294, %c0_295] : memref<32x171xbf16, #tpu.memory_space<vmem>>, vector<32x171xbf16>
    %567 = arith.truncf %543 : vector<2x32xf32> to vector<2x32xbf16>
    %cst_296 = arith.constant dense<0.000000e+00> : vector<2x171xf32>
    %568 = tpu.matmul %567, %566, %cst_296 {dimension_numbers = #tpu.dot_dimension_numbers<[1], [0], [0], [1], [0, 0, 1, 1], [], []>} : vector<2x32xbf16>, vector<32x171xbf16>, vector<2x171xf32> -> vector<2x171xf32>
    %569 = arith.addf %565, %568 : vector<2x171xf32>
    %c0_297 = arith.constant 0 : index
    %c0_298 = arith.constant 0 : index
    %570 = vector.load %arg56[%c0_297, %c0_298] : memref<1x171xf32, #tpu.memory_space<vmem>>, vector<1x171xf32>
    %571 = vector.broadcast %570 : vector<1x171xf32> to vector<2x171xf32>
    %572 = arith.addf %569, %571 : vector<2x171xf32>
    %cst_299 = arith.constant 0.000000e+00 : f32
    %573 = vector.broadcast %cst_299 : f32 to vector<2x171xf32>
    %574 = arith.maximumf %572, %573 : vector<2x171xf32>
    %c0_300 = arith.constant 0 : index
    %c0_301 = arith.constant 0 : index
    %575 = vector.load %arg57[%c0_300, %c0_301] : memref<171x171xbf16, #tpu.memory_space<vmem>>, vector<171x171xbf16>
    %576 = arith.truncf %574 : vector<2x171xf32> to vector<2x171xbf16>
    %cst_302 = arith.constant dense<0.000000e+00> : vector<2x171xf32>
    %577 = tpu.matmul %576, %575, %cst_302 {dimension_numbers = #tpu.dot_dimension_numbers<[1], [0], [0], [1], [0, 0, 1, 1], [], []>} : vector<2x171xbf16>, vector<171x171xbf16>, vector<2x171xf32> -> vector<2x171xf32>
    %c0_303 = arith.constant 0 : index
    %c0_304 = arith.constant 0 : index
    %578 = vector.load %arg58[%c0_303, %c0_304] : memref<1x171xf32, #tpu.memory_space<vmem>>, vector<1x171xf32>
    %579 = vector.broadcast %578 : vector<1x171xf32> to vector<2x171xf32>
    %580 = arith.addf %577, %579 : vector<2x171xf32>
    %cst_305 = arith.constant 0.000000e+00 : f32
    %581 = vector.broadcast %cst_305 : f32 to vector<2x171xf32>
    %582 = arith.maximumf %580, %581 : vector<2x171xf32>
    %c0_306 = arith.constant 0 : index
    %c0_307 = arith.constant 0 : index
    %583 = vector.load %arg59[%c0_306, %c0_307] : memref<171x1xbf16, #tpu.memory_space<vmem>>, vector<171x1xbf16>
    %584 = arith.truncf %582 : vector<2x171xf32> to vector<2x171xbf16>
    %cst_308 = arith.constant dense<0.000000e+00> : vector<2x1xf32>
    %585 = tpu.matmul %584, %583, %cst_308 {dimension_numbers = #tpu.dot_dimension_numbers<[1], [0], [0], [1], [0, 0, 1, 1], [], []>} : vector<2x171xbf16>, vector<171x1xbf16>, vector<2x1xf32> -> vector<2x1xf32>
    %c0_309 = arith.constant 0 : index
    %c0_310 = arith.constant 0 : index
    %586 = vector.load %arg60[%c0_309, %c0_310] : memref<1x1xf32, #tpu.memory_space<vmem>>, vector<1x1xf32>
    %587 = vector.broadcast %586 : vector<1x1xf32> to vector<2x1xf32>
    %588 = arith.addf %585, %587 : vector<2x1xf32>
    %c0_311 = arith.constant 0 : index
    %c0_312 = arith.constant 0 : index
    %589 = vector.load %arg70[%c0_311, %c0_312] : memref<2x1xf32, #tpu.memory_space<vmem>>, vector<2x1xf32>
    tpu.vector_store %arg70[%c0_311, %c0_312], %588 {strides = array<i32>} : memref<2x1xf32, #tpu.memory_space<vmem>>, vector<2x1xf32>,
    %c0_313 = arith.constant 0 : index
    %c0_314 = arith.constant 0 : index
    %590 = vector.load %arg62[%c0_313, %c0_314] : memref<3x139xbf16, #tpu.memory_space<vmem>>, vector<3x139xbf16>
    %591 = arith.truncf %489 : vector<2x3xf32> to vector<2x3xbf16>
    %cst_315 = arith.constant dense<0.000000e+00> : vector<2x139xf32>
    %592 = tpu.matmul %591, %590, %cst_315 {dimension_numbers = #tpu.dot_dimension_numbers<[1], [0], [0], [1], [0, 0, 1, 1], [], []>} : vector<2x3xbf16>, vector<3x139xbf16>, vector<2x139xf32> -> vector<2x139xf32>
    %c0_316 = arith.constant 0 : index
    %c0_317 = arith.constant 0 : index
    %593 = vector.load %arg63[%c0_316, %c0_317] : memref<40x139xbf16, #tpu.memory_space<vmem>>, vector<40x139xbf16>
    %594 = arith.truncf %488 : vector<2x40xf32> to vector<2x40xbf16>
    %cst_318 = arith.constant dense<0.000000e+00> : vector<2x139xf32>
    %595 = tpu.matmul %594, %593, %cst_318 {dimension_numbers = #tpu.dot_dimension_numbers<[1], [0], [0], [1], [0, 0, 1, 1], [], []>} : vector<2x40xbf16>, vector<40x139xbf16>, vector<2x139xf32> -> vector<2x139xf32>
    %596 = arith.addf %592, %595 : vector<2x139xf32>
    %c0_319 = arith.constant 0 : index
    %c0_320 = arith.constant 0 : index
    %c0_321 = arith.constant 0 : index
    %597 = vector.load %arg61[%c0_319, %c0_320, %c0_321] : memref<3x32x139xbf16, #tpu.memory_space<vmem>>, vector<1x32x139xbf16>
    %598 = vector.shape_cast %597 : vector<1x32x139xbf16> to vector<32x139xbf16>
    %599 = arith.truncf %403 : vector<2x32xf32> to vector<2x32xbf16>
    %cst_322 = arith.constant dense<0.000000e+00> : vector<2x139xf32>
    %600 = tpu.matmul %599, %598, %cst_322 {dimension_numbers = #tpu.dot_dimension_numbers<[1], [0], [0], [1], [0, 0, 1, 1], [], []>} : vector<2x32xbf16>, vector<32x139xbf16>, vector<2x139xf32> -> vector<2x139xf32>
    %601 = arith.addf %596, %600 : vector<2x139xf32>
    %c1_323 = arith.constant 1 : index
    %c0_324 = arith.constant 0 : index
    %c0_325 = arith.constant 0 : index
    %602 = vector.load %arg61[%c1_323, %c0_324, %c0_325] : memref<3x32x139xbf16, #tpu.memory_space<vmem>>, vector<1x32x139xbf16>
    %603 = vector.shape_cast %602 : vector<1x32x139xbf16> to vector<32x139xbf16>
    %604 = arith.truncf %408 : vector<2x32xf32> to vector<2x32xbf16>
    %cst_326 = arith.constant dense<0.000000e+00> : vector<2x139xf32>
    %605 = tpu.matmul %604, %603, %cst_326 {dimension_numbers = #tpu.dot_dimension_numbers<[1], [0], [0], [1], [0, 0, 1, 1], [], []>} : vector<2x32xbf16>, vector<32x139xbf16>, vector<2x139xf32> -> vector<2x139xf32>
    %606 = arith.addf %601, %605 : vector<2x139xf32>
    %c2_327 = arith.constant 2 : index
    %c0_328 = arith.constant 0 : index
    %c0_329 = arith.constant 0 : index
    %607 = vector.load %arg61[%c2_327, %c0_328, %c0_329] : memref<3x32x139xbf16, #tpu.memory_space<vmem>>, vector<1x32x139xbf16>
    %608 = vector.shape_cast %607 : vector<1x32x139xbf16> to vector<32x139xbf16>
    %609 = arith.truncf %413 : vector<2x32xf32> to vector<2x32xbf16>
    %cst_330 = arith.constant dense<0.000000e+00> : vector<2x139xf32>
    %610 = tpu.matmul %609, %608, %cst_330 {dimension_numbers = #tpu.dot_dimension_numbers<[1], [0], [0], [1], [0, 0, 1, 1], [], []>} : vector<2x32xbf16>, vector<32x139xbf16>, vector<2x139xf32> -> vector<2x139xf32>
    %611 = arith.addf %606, %610 : vector<2x139xf32>
    %c0_331 = arith.constant 0 : index
    %c0_332 = arith.constant 0 : index
    %612 = vector.load %arg64[%c0_331, %c0_332] : memref<1x139xf32, #tpu.memory_space<vmem>>, vector<1x139xf32>
    %613 = vector.broadcast %612 : vector<1x139xf32> to vector<2x139xf32>
    %614 = arith.addf %611, %613 : vector<2x139xf32>
    %cst_333 = arith.constant 0.000000e+00 : f32
    %615 = vector.broadcast %cst_333 : f32 to vector<2x139xf32>
    %616 = arith.maximumf %614, %615 : vector<2x139xf32>
    %c0_334 = arith.constant 0 : index
    %c0_335 = arith.constant 0 : index
    %617 = vector.load %arg65[%c0_334, %c0_335] : memref<139x139xbf16, #tpu.memory_space<vmem>>, vector<139x139xbf16>
    %618 = arith.truncf %616 : vector<2x139xf32> to vector<2x139xbf16>
    %cst_336 = arith.constant dense<0.000000e+00> : vector<2x139xf32>
    %619 = tpu.matmul %618, %617, %cst_336 {dimension_numbers = #tpu.dot_dimension_numbers<[1], [0], [0], [1], [0, 0, 1, 1], [], []>} : vector<2x139xbf16>, vector<139x139xbf16>, vector<2x139xf32> -> vector<2x139xf32>
    %c0_337 = arith.constant 0 : index
    %c0_338 = arith.constant 0 : index
    %620 = vector.load %arg66[%c0_337, %c0_338] : memref<1x139xf32, #tpu.memory_space<vmem>>, vector<1x139xf32>
    %621 = vector.broadcast %620 : vector<1x139xf32> to vector<2x139xf32>
    %622 = arith.addf %619, %621 : vector<2x139xf32>
    %cst_339 = arith.constant 0.000000e+00 : f32
    %623 = vector.broadcast %cst_339 : f32 to vector<2x139xf32>
    %624 = arith.maximumf %622, %623 : vector<2x139xf32>
    %c0_340 = arith.constant 0 : index
    %c0_341 = arith.constant 0 : index
    %625 = vector.load %arg67[%c0_340, %c0_341] : memref<139x1xbf16, #tpu.memory_space<vmem>>, vector<139x1xbf16>
    %626 = arith.truncf %624 : vector<2x139xf32> to vector<2x139xbf16>
    %cst_342 = arith.constant dense<0.000000e+00> : vector<2x1xf32>
    %627 = tpu.matmul %626, %625, %cst_342 {dimension_numbers = #tpu.dot_dimension_numbers<[1], [0], [0], [1], [0, 0, 1, 1], [], []>} : vector<2x139xbf16>, vector<139x1xbf16>, vector<2x1xf32> -> vector<2x1xf32>
    %c0_343 = arith.constant 0 : index
    %c0_344 = arith.constant 0 : index
    %628 = vector.load %arg68[%c0_343, %c0_344] : memref<1x1xf32, #tpu.memory_space<vmem>>, vector<1x1xf32>
    %629 = vector.broadcast %628 : vector<1x1xf32> to vector<2x1xf32>
    %630 = arith.addf %627, %629 : vector<2x1xf32>
    %c0_345 = arith.constant 0 : index
    %c0_346 = arith.constant 0 : index
    %631 = vector.load %arg71[%c0_345, %c0_346] : memref<2x1xf32, #tpu.memory_space<vmem>>, vector<2x1xf32>
    tpu.vector_store %arg71[%c0_345, %c0_346], %630 {strides = array<i32>} : memref<2x1xf32, #tpu.memory_space<vmem>>, vector<2x1xf32>,
    return
  }
}

</mosaic_0001>

<llo_original>
// kernel: dqn_forward.1
$region0: #{dqn_forward.1}
  #allocation0 [shape = 'u32[]', space=smem, size = 0x4, offset = 0x4, fixed_abs, tag = 'smem constant byte address 0x4 - core index']
  #allocation1 [shape = 'u32[144,128]{1,0:T(1,128)}', space=vmem, size = 0x12000, scoped, tag = 'internal scratch']
  #allocation2 [shape = 'f32[1,1]{1,0:T(1,128)S(1)}', space=vmem, size = 0x200, scoped, tag = 'scoped memory for dqn_forward.1']
  #allocation3 [shape = 'f32[1,1]{1,0:T(1,128)S(1)}', space=vmem, size = 0x200, scoped, tag = 'scoped memory for dqn_forward.1']
  %s0 = inlined_call_operand.smem [shape: u32[72], index: -1, kind: input, shape index: {}]
  %s1 = sld [smem:[%s0]]
  %s2 = scalar_lea.smem %s0, 1
  %s3 = sld [smem:[%s2]]
  %s4 = scalar_lea.smem %s0, 2
  %s5 = sld [smem:[%s4]]
  %s6 = scalar_lea.smem %s0, 3
  %s7 = sld [smem:[%s6]]
  %s8 = scalar_lea.smem %s0, 4
  %s9 = sld [smem:[%s8]]
  %s10 = scalar_lea.smem %s0, 5
  %s11 = sld [smem:[%s10]]
  %s12 = scalar_lea.smem %s0, 6
  %s13 = sld [smem:[%s12]]
  %s14 = scalar_lea.smem %s0, 7
  %s15 = sld [smem:[%s14]]
  %s16 = scalar_lea.smem %s0, 8
  %s17 = sld [smem:[%s16]]
  %s18 = scalar_lea.smem %s0, 9
  %s19 = sld [smem:[%s18]]
  %s20 = scalar_lea.smem %s0, 10
  %s21 = sld [smem:[%s20]]
  %s22 = scalar_lea.smem %s0, 11
  %s23 = sld [smem:[%s22]]
  %s24 = scalar_lea.smem %s0, 12
  %s25 = sld [smem:[%s24]]
  %s26 = scalar_lea.smem %s0, 13
  %s27 = sld [smem:[%s26]]
  %s28 = scalar_lea.smem %s0, 14
  %s29 = sld [smem:[%s28]]
  %s30 = scalar_lea.smem %s0, 15
  %s31 = sld [smem:[%s30]]
  %s32 = scalar_lea.smem %s0, 16
  %s33 = sld [smem:[%s32]]
  %s34 = scalar_lea.smem %s0, 17
  %s35 = sld [smem:[%s34]]
  %s36 = scalar_lea.smem %s0, 18
  %s37 = sld [smem:[%s36]]
  %s38 = scalar_lea.smem %s0, 19
  %s39 = sld [smem:[%s38]]
  %s40 = scalar_lea.smem %s0, 20
  %s41 = sld [smem:[%s40]]
  %s42 = scalar_lea.smem %s0, 21
  %s43 = sld [smem:[%s42]]
  %s44 = scalar_lea.smem %s0, 22
  %s45 = sld [smem:[%s44]]
  %s46 = scalar_lea.smem %s0, 23
  %s47 = sld [smem:[%s46]]
  %s48 = scalar_lea.smem %s0, 24
  %s49 = sld [smem:[%s48]]
  %s50 = scalar_lea.smem %s0, 25
  %s51 = sld [smem:[%s50]]
  %s52 = scalar_lea.smem %s0, 26
  %s53 = sld [smem:[%s52]]
  %s54 = scalar_lea.smem %s0, 27
  %s55 = sld [smem:[%s54]]
  %s56 = scalar_lea.smem %s0, 28
  %s57 = sld [smem:[%s56]]
  %s58 = scalar_lea.smem %s0, 29
  %s59 = sld [smem:[%s58]]
  %s60 = scalar_lea.smem %s0, 30
  %s61 = sld [smem:[%s60]]
  %s62 = scalar_lea.smem %s0, 31
  %s63 = sld [smem:[%s62]]
  %s64 = scalar_lea.smem %s0, 32
  %s65 = sld [smem:[%s64]]
  %s66 = scalar_lea.smem %s0, 33
  %s67 = sld [smem:[%s66]]
  %s68 = scalar_lea.smem %s0, 34
  %s69 = sld [smem:[%s68]]
  %s70 = scalar_lea.smem %s0, 35
  %s71 = sld [smem:[%s70]]
  %s72 = scalar_lea.smem %s0, 36
  %s73 = sld [smem:[%s72]]
  %s74 = scalar_lea.smem %s0, 37
  %s75 = sld [smem:[%s74]]
  %s76 = scalar_lea.smem %s0, 38
  %s77 = sld [smem:[%s76]]
  %s78 = scalar_lea.smem %s0, 39
  %s79 = sld [smem:[%s78]]
  %s80 = scalar_lea.smem %s0, 40
  %s81 = sld [smem:[%s80]]
  %s82 = scalar_lea.smem %s0, 41
  %s83 = sld [smem:[%s82]]
  %s84 = scalar_lea.smem %s0, 42
  %s85 = sld [smem:[%s84]]
  %s86 = scalar_lea.smem %s0, 43
  %s87 = sld [smem:[%s86]]
  %s88 = scalar_lea.smem %s0, 44
  %s89 = sld [smem:[%s88]]
  %s90 = scalar_lea.smem %s0, 45
  %s91 = sld [smem:[%s90]]
  %s92 = scalar_lea.smem %s0, 46
  %s93 = sld [smem:[%s92]]
  %s94 = scalar_lea.smem %s0, 47
  %s95 = sld [smem:[%s94]]
  %s96 = scalar_lea.smem %s0, 48
  %s97 = sld [smem:[%s96]]
  %s98 = scalar_lea.smem %s0, 49
  %s99 = sld [smem:[%s98]]
  %s100 = scalar_lea.smem %s0, 50
  %s101 = sld [smem:[%s100]]
  %s102 = scalar_lea.smem %s0, 51
  %s103 = sld [smem:[%s102]]
  %s104 = scalar_lea.smem %s0, 52
  %s105 = sld [smem:[%s104]]
  %s106 = scalar_lea.smem %s0, 53
  %s107 = sld [smem:[%s106]]
  %s108 = scalar_lea.smem %s0, 54
  %s109 = sld [smem:[%s108]]
  %s110 = scalar_lea.smem %s0, 55
  %s111 = sld [smem:[%s110]]
  %s112 = scalar_lea.smem %s0, 56
  %s113 = sld [smem:[%s112]]
  %s114 = scalar_lea.smem %s0, 57
  %s115 = sld [smem:[%s114]]
  %s116 = scalar_lea.smem %s0, 58
  %s117 = sld [smem:[%s116]]
  %s118 = scalar_lea.smem %s0, 59
  %s119 = sld [smem:[%s118]]
  %s120 = scalar_lea.smem %s0, 60
  %s121 = sld [smem:[%s120]]
  %s122 = scalar_lea.smem %s0, 61
  %s123 = sld [smem:[%s122]]
  %s124 = scalar_lea.smem %s0, 62
  %s125 = sld [smem:[%s124]]
  %s126 = scalar_lea.smem %s0, 63
  %s127 = sld [smem:[%s126]]
  %s128 = scalar_lea.smem %s0, 64
  %s129 = sld [smem:[%s128]]
  %s130 = scalar_lea.smem %s0, 65
  %s131 = sld [smem:[%s130]]
  %s132 = scalar_lea.smem %s0, 66
  %s133 = sld [smem:[%s132]]
  %s134 = scalar_lea.smem %s0, 67
  %s135 = sld [smem:[%s134]]
  %s136 = scalar_lea.smem %s0, 68
  %s137 = sld [smem:[%s136]]
  %s138 = scalar_lea.smem %s0, 69
  %s139 = sld [smem:[%s138]]
  %s140 = scalar_lea.smem %s0, 70
  %s141 = sld [smem:[%s140]]
  %s142 = scalar_lea.smem %s0, 71
  %s143 = sld [smem:[%s142]]
  %144 = xla_tuple %s139, %s141, %s143
  %s145 = sld [smem:[#allocation0]]
  $region390: #{dqn_forward.1} parent=0
    _
  %s147 = ssub.s32 1, %s145
  %s148 = scalar_select 0, %s147, %s145
  %v149 = vstv %s121
  %150 = vst [vmem:[#allocation2] sm:$0x1] %v149
  %v151 = vstv %s137
  %152 = vst [vmem:[#allocation3] sm:$0x1] %v151
  $region1: #{dqn_forward.1} parent=0
    #allocation4 [shape = 'u8[512]{0}', space=vmem, size = 0x400, scoped, tag = 'input window, operand 12, single buffered']
    #allocation5 [shape = 's32[1]{0}', space=sflag, size = 0x4, scoped, tag = 'scoped memory for dqn_forward.1']
    #allocation6 [shape = 'u8[1024]{0}', space=vmem, size = 0x400, scoped, tag = 'input window, operand 18, single buffered']
    #allocation7 [shape = 's32[1]{0}', space=sflag, size = 0x4, scoped, tag = 'scoped memory for dqn_forward.1']
    #allocation8 [shape = 'u8[1024]{0}', space=vmem, size = 0x400, scoped, tag = 'input window, operand 20, single buffered']
    #allocation9 [shape = 'u8[1024]{0}', space=vmem, size = 0x400, scoped, tag = 'input window, operand 22, single buffered']
    #allocation10 [shape = 's32[1]{0}', space=sflag, size = 0x4, scoped, tag = 'scoped memory for dqn_forward.1']
    #allocation11 [shape = 'u8[1024]{0}', space=vmem, size = 0x400, scoped, tag = 'input window, operand 23, single buffered']
    #allocation12 [shape = 'u8[1024]{0}', space=vmem, size = 0x400, scoped, tag = 'input window, operand 24, single buffered']
    #allocation13 [shape = 's32[1]{0}', space=sflag, size = 0x4, scoped, tag = 'scoped memory for dqn_forward.1']
    #allocation14 [shape = 'u8[512]{0}', space=vmem, size = 0x400, scoped, tag = 'input window, operand 26, single buffered']
    #allocation15 [shape = 'u8[512]{0}', space=vmem, size = 0x400, scoped, tag = 'input window, operand 28, single buffered']
    #allocation16 [shape = 's32[1]{0}', space=sflag, size = 0x4, scoped, tag = 'scoped memory for dqn_forward.1']
    #allocation17 [shape = 'u8[512]{0}', space=vmem, size = 0x400, scoped, tag = 'input window, operand 30, single buffered']
    #allocation18 [shape = 'u8[512]{0}', space=vmem, size = 0x400, scoped, tag = 'input window, operand 32, single buffered']
    #allocation19 [shape = 's32[1]{0}', space=sflag, size = 0x4, scoped, tag = 'scoped memory for dqn_forward.1']
    #allocation20 [shape = 'u8[1024]{0}', space=vmem, size = 0x400, scoped, tag = 'input window, operand 33, single buffered']
    #allocation21 [shape = 'u8[512]{0}', space=vmem, size = 0x400, scoped, tag = 'input window, operand 34, single buffered']
    #allocation22 [shape = 's32[1]{0}', space=sflag, size = 0x4, scoped, tag = 'scoped memory for dqn_forward.1']
    #allocation23 [shape = 'u8[512]{0}', space=vmem, size = 0x400, scoped, tag = 'input window, operand 36, single buffered']
    #allocation24 [shape = 'u8[512]{0}', space=vmem, size = 0x400, scoped, tag = 'input window, operand 40, single buffered']
    #allocation25 [shape = 's32[1]{0}', space=sflag, size = 0x4, scoped, tag = 'scoped memory for dqn_forward.1']
    #allocation26 [shape = 'u8[512]{0}', space=vmem, size = 0x400, scoped, tag = 'input window, operand 42, single buffered']
    #allocation27 [shape = 'u8[1024]{0}', space=vmem, size = 0x400, scoped, tag = 'input window, operand 47, single buffered']
    #allocation28 [shape = 's32[1]{0}', space=sflag, size = 0x4, scoped, tag = 'scoped memory for dqn_forward.1']
    #allocation29 [shape = 'u8[1024]{0}', space=vmem, size = 0x400, scoped, tag = 'input window, operand 49, single buffered']
    #allocation30 [shape = 'u8[512]{0}', space=vmem, size = 0x400, scoped, tag = 'input window, operand 51, single buffered']
    #allocation31 [shape = 's32[1]{0}', space=sflag, size = 0x4, scoped, tag = 'scoped memory for dqn_forward.1']
    #allocation32 [shape = 'u8[1024]{0}', space=vmem, size = 0x400, scoped, tag = 'input window, operand 56, single buffered']
    #allocation33 [shape = 'u8[1024]{0}', space=vmem, size = 0x400, scoped, tag = 'input window, operand 58, single buffered']
    #allocation34 [shape = 's32[1]{0}', space=sflag, size = 0x4, scoped, tag = 'scoped memory for dqn_forward.1']
    #allocation35 [shape = 'u8[1024]{0}', space=vmem, size = 0x400, scoped, tag = 'input window, operand 64, single buffered']
    #allocation36 [shape = 'u8[1024]{0}', space=vmem, size = 0x400, scoped, tag = 'input window, operand 66, single buffered']
    #allocation37 [shape = 's32[1]{0}', space=sflag, size = 0x4, scoped, tag = 'scoped memory for dqn_forward.1']
    %153 = vsyncpa [#allocation5], 0
    %154 = vsyncpa [#allocation7], 0
    %155 = vsyncpa [#allocation10], 0
    %156 = vsyncpa [#allocation13], 0
    %157 = vsyncpa [#allocation16], 0
    %158 = vsyncpa [#allocation19], 0
    %159 = vsyncpa [#allocation22], 0
    %160 = vsyncpa [#allocation25], 0
    %161 = vsyncpa [#allocation28], 0
    %162 = vsyncpa [#allocation31], 0
    %163 = vsyncpa [#allocation34], 0
    %164 = vsyncpa [#allocation37], 0
    // Predicated region
    $region2: #{dqn_forward.1} parent=1 // pred_check
      _
    $region3: #{dqn_forward.1} parent=1 // pred_check_branch
      %166 = sbr.rel (0) target = $region5
    $region4: #{dqn_forward.1} parent=1 // pred_region
      _
    $region5: #{dqn_forward.1} parent=1 // pred_fallthru
      _
    // Predicated region
    $region6: #{dqn_forward.1} parent=1 // pred_check
      _
    $region7: #{dqn_forward.1} parent=1 // pred_check_branch
      %168 = sbr.rel (0) target = $region9
    $region8: #{dqn_forward.1} parent=1 // pred_region
      _
    $region9: #{dqn_forward.1} parent=1 // pred_fallthru
      _
    // Predicated region
    $region10: #{dqn_forward.1} parent=1 // pred_check
      _
    $region11: #{dqn_forward.1} parent=1 // pred_check_branch
      %170 = sbr.rel (0) target = $region13
    $region12: #{dqn_forward.1} parent=1 // pred_region
      _
    $region13: #{dqn_forward.1} parent=1 // pred_fallthru
      _
    // Predicated region
    $region14: #{dqn_forward.1} parent=1 // pred_check
      _
    $region15: #{dqn_forward.1} parent=1 // pred_check_branch
      %172 = sbr.rel (0) target = $region17
    $region16: #{dqn_forward.1} parent=1 // pred_region
      _
    $region17: #{dqn_forward.1} parent=1 // pred_fallthru
      _
    // Predicated region
    $region18: #{dqn_forward.1} parent=1 // pred_check
      _
    $region19: #{dqn_forward.1} parent=1 // pred_check_branch
      %174 = sbr.rel (0) target = $region21
    $region20: #{dqn_forward.1} parent=1 // pred_region
      _
    $region21: #{dqn_forward.1} parent=1 // pred_fallthru
      _
    // Predicated region
    $region22: #{dqn_forward.1} parent=1 // pred_check
      _
    $region23: #{dqn_forward.1} parent=1 // pred_check_branch
      %176 = sbr.rel (0) target = $region25
    $region24: #{dqn_forward.1} parent=1 // pred_region
      _
    $region25: #{dqn_forward.1} parent=1 // pred_fallthru
      _
    // Predicated region
    $region26: #{dqn_forward.1} parent=1 // pred_check
      _
    $region27: #{dqn_forward.1} parent=1 // pred_check_branch
      %178 = sbr.rel (0) target = $region29
    $region28: #{dqn_forward.1} parent=1 // pred_region
      _
    $region29: #{dqn_forward.1} parent=1 // pred_fallthru
      _
    // Predicated region
    $region30: #{dqn_forward.1} parent=1 // pred_check
      _
    $region31: #{dqn_forward.1} parent=1 // pred_check_branch
      %180 = sbr.rel (0) target = $region33
    $region32: #{dqn_forward.1} parent=1 // pred_region
      _
    $region33: #{dqn_forward.1} parent=1 // pred_fallthru
      _
    // Predicated region
    $region34: #{dqn_forward.1} parent=1 // pred_check
      _
    $region35: #{dqn_forward.1} parent=1 // pred_check_branch
      %182 = sbr.rel (0) target = $region37
    $region36: #{dqn_forward.1} parent=1 // pred_region
      _
    $region37: #{dqn_forward.1} parent=1 // pred_fallthru
      _
    // Predicated region
    $region38: #{dqn_forward.1} parent=1 // pred_check
      _
    $region39: #{dqn_forward.1} parent=1 // pred_check_branch
      %184 = sbr.rel (0) target = $region41
    $region40: #{dqn_forward.1} parent=1 // pred_region
      _
    $region41: #{dqn_forward.1} parent=1 // pred_fallthru
      _
    // Predicated region
    $region42: #{dqn_forward.1} parent=1 // pred_check
      _
    $region43: #{dqn_forward.1} parent=1 // pred_check_branch
      %186 = sbr.rel (0) target = $region45
    $region44: #{dqn_forward.1} parent=1 // pred_region
      _
    $region45: #{dqn_forward.1} parent=1 // pred_fallthru
      _
    // Predicated region
    $region46: #{dqn_forward.1} parent=1 // pred_check
      _
    $region47: #{dqn_forward.1} parent=1 // pred_check_branch
      %188 = sbr.rel (0) target = $region49
    $region48: #{dqn_forward.1} parent=1 // pred_region
      _
    $region49: #{dqn_forward.1} parent=1 // pred_fallthru
      _
    // Predicated region
    $region50: #{dqn_forward.1} parent=1 // pred_check
      _
    $region51: #{dqn_forward.1} parent=1 // pred_check_branch
      %190 = sbr.rel (0) target = $region53
    $region52: #{dqn_forward.1} parent=1 // pred_region
      %s192 = ssub.s32 16, 16
      %193 = vsyncadd [#allocation5], %s192
      %s195 = sshll.u32 [#allocation4], 4
      %s196 = int_to_ptr.vmem [resolvable:$true] %s195
      %198 = dma.hbm_to_vmem [thread:$0]  %s25, 16, %s196, [#allocation5]
    $region53: #{dqn_forward.1} parent=1 // pred_fallthru
      _
    // Predicated region
    $region54: #{dqn_forward.1} parent=1 // pred_check
      _
    $region55: #{dqn_forward.1} parent=1 // pred_check_branch
      %200 = sbr.rel (0) target = $region57
    $region56: #{dqn_forward.1} parent=1 // pred_region
      _
    $region57: #{dqn_forward.1} parent=1 // pred_fallthru
      _
    // Predicated region
    $region58: #{dqn_forward.1} parent=1 // pred_check
      _
    $region59: #{dqn_forward.1} parent=1 // pred_check_branch
      %202 = sbr.rel (0) target = $region61
    $region60: #{dqn_forward.1} parent=1 // pred_region
      _
    $region61: #{dqn_forward.1} parent=1 // pred_fallthru
      _
    // Predicated region
    $region62: #{dqn_forward.1} parent=1 // pred_check
      _
    $region63: #{dqn_forward.1} parent=1 // pred_check_branch
      %204 = sbr.rel (0) target = $region65
    $region64: #{dqn_forward.1} parent=1 // pred_region
      _
    $region65: #{dqn_forward.1} parent=1 // pred_fallthru
      _
    // Predicated region
    $region66: #{dqn_forward.1} parent=1 // pred_check
      _
    $region67: #{dqn_forward.1} parent=1 // pred_check_branch
      %206 = sbr.rel (0) target = $region69
    $region68: #{dqn_forward.1} parent=1 // pred_region
      _
    $region69: #{dqn_forward.1} parent=1 // pred_fallthru
      _
    // Predicated region
    $region70: #{dqn_forward.1} parent=1 // pred_check
      _
    $region71: #{dqn_forward.1} parent=1 // pred_check_branch
      %208 = sbr.rel (0) target = $region73
    $region72: #{dqn_forward.1} parent=1 // pred_region
      _
    $region73: #{dqn_forward.1} parent=1 // pred_fallthru
      _
    // Predicated region
    $region74: #{dqn_forward.1} parent=1 // pred_check
      _
    $region75: #{dqn_forward.1} parent=1 // pred_check_branch
      %210 = sbr.rel (0) target = $region77
    $region76: #{dqn_forward.1} parent=1 // pred_region
      %s212 = ssub.s32 32, 32
      %213 = vsyncadd [#allocation7], %s212
      %s214 = sshll.u32 [#allocation6], 4
      %s215 = int_to_ptr.vmem [resolvable:$true] %s214
      %220 = dma.hbm_to_vmem [thread:$0]  %s37, 32, %s215, [#allocation7], 16, 16, 1
    $region77: #{dqn_forward.1} parent=1 // pred_fallthru
      _
    // Predicated region
    $region78: #{dqn_forward.1} parent=1 // pred_check
      _
    $region79: #{dqn_forward.1} parent=1 // pred_check_branch
      %222 = sbr.rel (0) target = $region81
    $region80: #{dqn_forward.1} parent=1 // pred_region
      _
    $region81: #{dqn_forward.1} parent=1 // pred_fallthru
      _
    // Predicated region
    $region82: #{dqn_forward.1} parent=1 // pred_check
      _
    $region83: #{dqn_forward.1} parent=1 // pred_check_branch
      %224 = sbr.rel (0) target = $region85
    $region84: #{dqn_forward.1} parent=1 // pred_region
      %s226 = ssub.s32 32, 32
      %227 = vsyncadd [#allocation7], %s226
      %s228 = sshll.u32 [#allocation8], 4
      %s229 = int_to_ptr.vmem [resolvable:$true] %s228
      %234 = dma.hbm_to_vmem [thread:$0]  %s41, 32, %s229, [#allocation7], 16, 16, 1
    $region85: #{dqn_forward.1} parent=1 // pred_fallthru
      _
    // Predicated region
    $region86: #{dqn_forward.1} parent=1 // pred_check
      _
    $region87: #{dqn_forward.1} parent=1 // pred_check_branch
      %236 = sbr.rel (0) target = $region89
    $region88: #{dqn_forward.1} parent=1 // pred_region
      _
    $region89: #{dqn_forward.1} parent=1 // pred_fallthru
      _
    // Predicated region
    $region90: #{dqn_forward.1} parent=1 // pred_check
      _
    $region91: #{dqn_forward.1} parent=1 // pred_check_branch
      %238 = sbr.rel (0) target = $region93
    $region92: #{dqn_forward.1} parent=1 // pred_region
      %s240 = ssub.s32 32, 32
      %241 = vsyncadd [#allocation10], %s240
      %s242 = sshll.u32 [#allocation9], 4
      %s243 = int_to_ptr.vmem [resolvable:$true] %s242
      %248 = dma.hbm_to_vmem [thread:$0]  %s45, 32, %s243, [#allocation10], 16, 16, 1
    $region93: #{dqn_forward.1} parent=1 // pred_fallthru
      _
    // Predicated region
    $region94: #{dqn_forward.1} parent=1 // pred_check
      _
    $region95: #{dqn_forward.1} parent=1 // pred_check_branch
      %250 = sbr.rel (0) target = $region97
    $region96: #{dqn_forward.1} parent=1 // pred_region
      %s252 = ssub.s32 32, 32
      %253 = vsyncadd [#allocation10], %s252
      %s254 = sshll.u32 [#allocation11], 4
      %s255 = int_to_ptr.vmem [resolvable:$true] %s254
      %260 = dma.hbm_to_vmem [thread:$0]  %s47, 32, %s255, [#allocation10], 16, 16, 1
    $region97: #{dqn_forward.1} parent=1 // pred_fallthru
      _
    // Predicated region
    $region98: #{dqn_forward.1} parent=1 // pred_check
      _
    $region99: #{dqn_forward.1} parent=1 // pred_check_branch
      %262 = sbr.rel (0) target = $region101
    $region100: #{dqn_forward.1} parent=1 // pred_region
      %s264 = ssub.s32 32, 32
      %265 = vsyncadd [#allocation13], %s264
      %s266 = sshll.u32 [#allocation12], 4
      %s267 = int_to_ptr.vmem [resolvable:$true] %s266
      %272 = dma.hbm_to_vmem [thread:$0]  %s49, 32, %s267, [#allocation13], 16, 16, 1
    $region101: #{dqn_forward.1} parent=1 // pred_fallthru
      _
    // Predicated region
    $region102: #{dqn_forward.1} parent=1 // pred_check
      _
    $region103: #{dqn_forward.1} parent=1 // pred_check_branch
      %274 = sbr.rel (0) target = $region105
    $region104: #{dqn_forward.1} parent=1 // pred_region
      _
    $region105: #{dqn_forward.1} parent=1 // pred_fallthru
      _
    // Predicated region
    $region106: #{dqn_forward.1} parent=1 // pred_check
      _
    $region107: #{dqn_forward.1} parent=1 // pred_check_branch
      %276 = sbr.rel (0) target = $region109
    $region108: #{dqn_forward.1} parent=1 // pred_region
      %s278 = ssub.s32 16, 16
      %279 = vsyncadd [#allocation13], %s278
      %s281 = sshll.u32 [#allocation14], 4
      %s282 = int_to_ptr.vmem [resolvable:$true] %s281
      %284 = dma.hbm_to_vmem [thread:$0]  %s53, 16, %s282, [#allocation13]
    $region109: #{dqn_forward.1} parent=1 // pred_fallthru
      _
    // Predicated region
    $region110: #{dqn_forward.1} parent=1 // pred_check
      _
    $region111: #{dqn_forward.1} parent=1 // pred_check_branch
      %286 = sbr.rel (0) target = $region113
    $region112: #{dqn_forward.1} parent=1 // pred_region
      _
    $region113: #{dqn_forward.1} parent=1 // pred_fallthru
      _
    // Predicated region
    $region114: #{dqn_forward.1} parent=1 // pred_check
      _
    $region115: #{dqn_forward.1} parent=1 // pred_check_branch
      %288 = sbr.rel (0) target = $region117
    $region116: #{dqn_forward.1} parent=1 // pred_region
      %s290 = ssub.s32 16, 16
      %291 = vsyncadd [#allocation16], %s290
      %s293 = sshll.u32 [#allocation15], 4
      %s294 = int_to_ptr.vmem [resolvable:$true] %s293
      %296 = dma.hbm_to_vmem [thread:$0]  %s57, 16, %s294, [#allocation16]
    $region117: #{dqn_forward.1} parent=1 // pred_fallthru
      _
    // Predicated region
    $region118: #{dqn_forward.1} parent=1 // pred_check
      _
    $region119: #{dqn_forward.1} parent=1 // pred_check_branch
      %298 = sbr.rel (0) target = $region121
    $region120: #{dqn_forward.1} parent=1 // pred_region
      _
    $region121: #{dqn_forward.1} parent=1 // pred_fallthru
      _
    // Predicated region
    $region122: #{dqn_forward.1} parent=1 // pred_check
      _
    $region123: #{dqn_forward.1} parent=1 // pred_check_branch
      %300 = sbr.rel (0) target = $region125
    $region124: #{dqn_forward.1} parent=1 // pred_region
      %s302 = ssub.s32 16, 16
      %303 = vsyncadd [#allocation16], %s302
      %s305 = sshll.u32 [#allocation17], 4
      %s306 = int_to_ptr.vmem [resolvable:$true] %s305
      %308 = dma.hbm_to_vmem [thread:$0]  %s61, 16, %s306, [#allocation16]
    $region125: #{dqn_forward.1} parent=1 // pred_fallthru
      _
    // Predicated region
    $region126: #{dqn_forward.1} parent=1 // pred_check
      _
    $region127: #{dqn_forward.1} parent=1 // pred_check_branch
      %310 = sbr.rel (0) target = $region129
    $region128: #{dqn_forward.1} parent=1 // pred_region
      _
    $region129: #{dqn_forward.1} parent=1 // pred_fallthru
      _
    // Predicated region
    $region130: #{dqn_forward.1} parent=1 // pred_check
      _
    $region131: #{dqn_forward.1} parent=1 // pred_check_branch
      %312 = sbr.rel (0) target = $region133
    $region132: #{dqn_forward.1} parent=1 // pred_region
      %s314 = ssub.s32 16, 16
      %315 = vsyncadd [#allocation19], %s314
      %s317 = sshll.u32 [#allocation18], 4
      %s318 = int_to_ptr.vmem [resolvable:$true] %s317
      %320 = dma.hbm_to_vmem [thread:$0]  %s65, 16, %s318, [#allocation19]
    $region133: #{dqn_forward.1} parent=1 // pred_fallthru
      _
    // Predicated region
    $region134: #{dqn_forward.1} parent=1 // pred_check
      _
    $region135: #{dqn_forward.1} parent=1 // pred_check_branch
      %322 = sbr.rel (0) target = $region137
    $region136: #{dqn_forward.1} parent=1 // pred_region
      %s324 = ssub.s32 32, 32
      %325 = vsyncadd [#allocation19], %s324
      %s327 = sshll.u32 [#allocation20], 4
      %s328 = int_to_ptr.vmem [resolvable:$true] %s327
      %330 = dma.hbm_to_vmem [thread:$0]  %s67, 32, %s328, [#allocation19]
    $region137: #{dqn_forward.1} parent=1 // pred_fallthru
      _
    // Predicated region
    $region138: #{dqn_forward.1} parent=1 // pred_check
      _
    $region139: #{dqn_forward.1} parent=1 // pred_check_branch
      %332 = sbr.rel (0) target = $region141
    $region140: #{dqn_forward.1} parent=1 // pred_region
      %s334 = ssub.s32 16, 16
      %335 = vsyncadd [#allocation22], %s334
      %s337 = sshll.u32 [#allocation21], 4
      %s338 = int_to_ptr.vmem [resolvable:$true] %s337
      %340 = dma.hbm_to_vmem [thread:$0]  %s69, 16, %s338, [#allocation22]
    $region141: #{dqn_forward.1} parent=1 // pred_fallthru
      _
    // Predicated region
    $region142: #{dqn_forward.1} parent=1 // pred_check
      _
    $region143: #{dqn_forward.1} parent=1 // pred_check_branch
      %342 = sbr.rel (0) target = $region145
    $region144: #{dqn_forward.1} parent=1 // pred_region
      _
    $region145: #{dqn_forward.1} parent=1 // pred_fallthru
      _
    // Predicated region
    $region146: #{dqn_forward.1} parent=1 // pred_check
      _
    $region147: #{dqn_forward.1} parent=1 // pred_check_branch
      %344 = sbr.rel (0) target = $region149
    $region148: #{dqn_forward.1} parent=1 // pred_region
      %s346 = ssub.s32 16, 16
      %347 = vsyncadd [#allocation22], %s346
      %s349 = sshll.u32 [#allocation23], 4
      %s350 = int_to_ptr.vmem [resolvable:$true] %s349
      %352 = dma.hbm_to_vmem [thread:$0]  %s73, 16, %s350, [#allocation22]
    $region149: #{dqn_forward.1} parent=1 // pred_fallthru
      _
    // Predicated region
    $region150: #{dqn_forward.1} parent=1 // pred_check
      _
    $region151: #{dqn_forward.1} parent=1 // pred_check_branch
      %354 = sbr.rel (0) target = $region153
    $region152: #{dqn_forward.1} parent=1 // pred_region
      _
    $region153: #{dqn_forward.1} parent=1 // pred_fallthru
      _
    // Predicated region
    $region154: #{dqn_forward.1} parent=1 // pred_check
      _
    $region155: #{dqn_forward.1} parent=1 // pred_check_branch
      %356 = sbr.rel (0) target = $region157
    $region156: #{dqn_forward.1} parent=1 // pred_region
      _
    $region157: #{dqn_forward.1} parent=1 // pred_fallthru
      _
    // Predicated region
    $region158: #{dqn_forward.1} parent=1 // pred_check
      _
    $region159: #{dqn_forward.1} parent=1 // pred_check_branch
      %358 = sbr.rel (0) target = $region161
    $region160: #{dqn_forward.1} parent=1 // pred_region
      _
    $region161: #{dqn_forward.1} parent=1 // pred_fallthru
      _
    // Predicated region
    $region162: #{dqn_forward.1} parent=1 // pred_check
      _
    $region163: #{dqn_forward.1} parent=1 // pred_check_branch
      %360 = sbr.rel (0) target = $region165
    $region164: #{dqn_forward.1} parent=1 // pred_region
      %s362 = ssub.s32 16, 16
      %363 = vsyncadd [#allocation25], %s362
      %s365 = sshll.u32 [#allocation24], 4
      %s366 = int_to_ptr.vmem [resolvable:$true] %s365
      %368 = dma.hbm_to_vmem [thread:$0]  %s81, 16, %s366, [#allocation25]
    $region165: #{dqn_forward.1} parent=1 // pred_fallthru
      _
    // Predicated region
    $region166: #{dqn_forward.1} parent=1 // pred_check
      _
    $region167: #{dqn_forward.1} parent=1 // pred_check_branch
      %370 = sbr.rel (0) target = $region169
    $region168: #{dqn_forward.1} parent=1 // pred_region
      _
    $region169: #{dqn_forward.1} parent=1 // pred_fallthru
      _
    // Predicated region
    $region170: #{dqn_forward.1} parent=1 // pred_check
      _
    $region171: #{dqn_forward.1} parent=1 // pred_check_branch
      %372 = sbr.rel (0) target = $region173
    $region172: #{dqn_forward.1} parent=1 // pred_region
      %s374 = ssub.s32 16, 16
      %375 = vsyncadd [#allocation25], %s374
      %s377 = sshll.u32 [#allocation26], 4
      %s378 = int_to_ptr.vmem [resolvable:$true] %s377
      %380 = dma.hbm_to_vmem [thread:$0]  %s85, 16, %s378, [#allocation25]
    $region173: #{dqn_forward.1} parent=1 // pred_fallthru
      _
    // Predicated region
    $region174: #{dqn_forward.1} parent=1 // pred_check
      _
    $region175: #{dqn_forward.1} parent=1 // pred_check_branch
      %382 = sbr.rel (0) target = $region177
    $region176: #{dqn_forward.1} parent=1 // pred_region
      _
    $region177: #{dqn_forward.1} parent=1 // pred_fallthru
      _
    // Predicated region
    $region178: #{dqn_forward.1} parent=1 // pred_check
      _
    $region179: #{dqn_forward.1} parent=1 // pred_check_branch
      %384 = sbr.rel (0) target = $region181
    $region180: #{dqn_forward.1} parent=1 // pred_region
      _
    $region181: #{dqn_forward.1} parent=1 // pred_fallthru
      _
    // Predicated region
    $region182: #{dqn_forward.1} parent=1 // pred_check
      _
    $region183: #{dqn_forward.1} parent=1 // pred_check_branch
      %386 = sbr.rel (0) target = $region185
    $region184: #{dqn_forward.1} parent=1 // pred_region
      _
    $region185: #{dqn_forward.1} parent=1 // pred_fallthru
      _
    // Predicated region
    $region186: #{dqn_forward.1} parent=1 // pred_check
      _
    $region187: #{dqn_forward.1} parent=1 // pred_check_branch
      %388 = sbr.rel (0) target = $region189
    $region188: #{dqn_forward.1} parent=1 // pred_region
      _
    $region189: #{dqn_forward.1} parent=1 // pred_fallthru
      _
    // Predicated region
    $region190: #{dqn_forward.1} parent=1 // pred_check
      _
    $region191: #{dqn_forward.1} parent=1 // pred_check_branch
      %390 = sbr.rel (0) target = $region193
    $region192: #{dqn_forward.1} parent=1 // pred_region
      %s392 = ssub.s32 32, 32
      %393 = vsyncadd [#allocation28], %s392
      %s395 = sshll.u32 [#allocation27], 4
      %s396 = int_to_ptr.vmem [resolvable:$true] %s395
      %398 = dma.hbm_to_vmem [thread:$0]  %s95, 32, %s396, [#allocation28]
    $region193: #{dqn_forward.1} parent=1 // pred_fallthru
      _
    // Predicated region
    $region194: #{dqn_forward.1} parent=1 // pred_check
      _
    $region195: #{dqn_forward.1} parent=1 // pred_check_branch
      %400 = sbr.rel (0) target = $region197
    $region196: #{dqn_forward.1} parent=1 // pred_region
      _
    $region197: #{dqn_forward.1} parent=1 // pred_fallthru
      _
    // Predicated region
    $region198: #{dqn_forward.1} parent=1 // pred_check
      _
    $region199: #{dqn_forward.1} parent=1 // pred_check_branch
      %402 = sbr.rel (0) target = $region201
    $region200: #{dqn_forward.1} parent=1 // pred_region
      %s404 = ssub.s32 32, 32
      %405 = vsyncadd [#allocation28], %s404
      %s407 = sshll.u32 [#allocation29], 4
      %s408 = int_to_ptr.vmem [resolvable:$true] %s407
      %410 = dma.hbm_to_vmem [thread:$0]  %s99, 32, %s408, [#allocation28]
    $region201: #{dqn_forward.1} parent=1 // pred_fallthru
      _
    // Predicated region
    $region202: #{dqn_forward.1} parent=1 // pred_check
      _
    $region203: #{dqn_forward.1} parent=1 // pred_check_branch
      %412 = sbr.rel (0) target = $region205
    $region204: #{dqn_forward.1} parent=1 // pred_region
      _
    $region205: #{dqn_forward.1} parent=1 // pred_fallthru
      _
    // Predicated region
    $region206: #{dqn_forward.1} parent=1 // pred_check
      _
    $region207: #{dqn_forward.1} parent=1 // pred_check_branch
      %414 = sbr.rel (0) target = $region209
    $region208: #{dqn_forward.1} parent=1 // pred_region
      %s416 = ssub.s32 16, 16
      %417 = vsyncadd [#allocation31], %s416
      %s419 = sshll.u32 [#allocation30], 4
      %s420 = int_to_ptr.vmem [resolvable:$true] %s419
      %422 = dma.hbm_to_vmem [thread:$0]  %s103, 16, %s420, [#allocation31]
    $region209: #{dqn_forward.1} parent=1 // pred_fallthru
      _
    // Predicated region
    $region210: #{dqn_forward.1} parent=1 // pred_check
      _
    $region211: #{dqn_forward.1} parent=1 // pred_check_branch
      %424 = sbr.rel (0) target = $region213
    $region212: #{dqn_forward.1} parent=1 // pred_region
      _
    $region213: #{dqn_forward.1} parent=1 // pred_fallthru
      _
    // Predicated region
    $region214: #{dqn_forward.1} parent=1 // pred_check
      _
    $region215: #{dqn_forward.1} parent=1 // pred_check_branch
      %426 = sbr.rel (0) target = $region217
    $region216: #{dqn_forward.1} parent=1 // pred_region
      _
    $region217: #{dqn_forward.1} parent=1 // pred_fallthru
      _
    // Predicated region
    $region218: #{dqn_forward.1} parent=1 // pred_check
      _
    $region219: #{dqn_forward.1} parent=1 // pred_check_branch
      %428 = sbr.rel (0) target = $region221
    $region220: #{dqn_forward.1} parent=1 // pred_region
      _
    $region221: #{dqn_forward.1} parent=1 // pred_fallthru
      _
    // Predicated region
    $region222: #{dqn_forward.1} parent=1 // pred_check
      _
    $region223: #{dqn_forward.1} parent=1 // pred_check_branch
      %430 = sbr.rel (0) target = $region225
    $region224: #{dqn_forward.1} parent=1 // pred_region
      _
    $region225: #{dqn_forward.1} parent=1 // pred_fallthru
      _
    // Predicated region
    $region226: #{dqn_forward.1} parent=1 // pred_check
      _
    $region227: #{dqn_forward.1} parent=1 // pred_check_branch
      %432 = sbr.rel (0) target = $region229
    $region228: #{dqn_forward.1} parent=1 // pred_region
      %s434 = ssub.s32 32, 32
      %435 = vsyncadd [#allocation31], %s434
      %s437 = sshll.u32 [#allocation32], 4
      %s438 = int_to_ptr.vmem [resolvable:$true] %s437
      %440 = dma.hbm_to_vmem [thread:$0]  %s113, 32, %s438, [#allocation31]
    $region229: #{dqn_forward.1} parent=1 // pred_fallthru
      _
    // Predicated region
    $region230: #{dqn_forward.1} parent=1 // pred_check
      _
    $region231: #{dqn_forward.1} parent=1 // pred_check_branch
      %442 = sbr.rel (0) target = $region233
    $region232: #{dqn_forward.1} parent=1 // pred_region
      _
    $region233: #{dqn_forward.1} parent=1 // pred_fallthru
      _
    // Predicated region
    $region234: #{dqn_forward.1} parent=1 // pred_check
      _
    $region235: #{dqn_forward.1} parent=1 // pred_check_branch
      %444 = sbr.rel (0) target = $region237
    $region236: #{dqn_forward.1} parent=1 // pred_region
      %s446 = ssub.s32 32, 32
      %447 = vsyncadd [#allocation34], %s446
      %s449 = sshll.u32 [#allocation33], 4
      %s450 = int_to_ptr.vmem [resolvable:$true] %s449
      %452 = dma.hbm_to_vmem [thread:$0]  %s117, 32, %s450, [#allocation34]
    $region237: #{dqn_forward.1} parent=1 // pred_fallthru
      _
    // Predicated region
    $region238: #{dqn_forward.1} parent=1 // pred_check
      _
    $region239: #{dqn_forward.1} parent=1 // pred_check_branch
      %454 = sbr.rel (0) target = $region241
    $region240: #{dqn_forward.1} parent=1 // pred_region
      _
    $region241: #{dqn_forward.1} parent=1 // pred_fallthru
      _
    // Predicated region
    $region242: #{dqn_forward.1} parent=1 // pred_check
      _
    $region243: #{dqn_forward.1} parent=1 // pred_check_branch
      %456 = sbr.rel (0) target = $region245
    $region244: #{dqn_forward.1} parent=1 // pred_region
      _
    $region245: #{dqn_forward.1} parent=1 // pred_fallthru
      _
    // Predicated region
    $region246: #{dqn_forward.1} parent=1 // pred_check
      _
    $region247: #{dqn_forward.1} parent=1 // pred_check_branch
      %458 = sbr.rel (0) target = $region249
    $region248: #{dqn_forward.1} parent=1 // pred_region
      _
    $region249: #{dqn_forward.1} parent=1 // pred_fallthru
      _
    // Predicated region
    $region250: #{dqn_forward.1} parent=1 // pred_check
      _
    $region251: #{dqn_forward.1} parent=1 // pred_check_branch
      %460 = sbr.rel (0) target = $region253
    $region252: #{dqn_forward.1} parent=1 // pred_region
      _
    $region253: #{dqn_forward.1} parent=1 // pred_fallthru
      _
    // Predicated region
    $region254: #{dqn_forward.1} parent=1 // pred_check
      _
    $region255: #{dqn_forward.1} parent=1 // pred_check_branch
      %462 = sbr.rel (0) target = $region257
    $region256: #{dqn_forward.1} parent=1 // pred_region
      _
    $region257: #{dqn_forward.1} parent=1 // pred_fallthru
      _
    // Predicated region
    $region258: #{dqn_forward.1} parent=1 // pred_check
      _
    $region259: #{dqn_forward.1} parent=1 // pred_check_branch
      %464 = sbr.rel (0) target = $region261
    $region260: #{dqn_forward.1} parent=1 // pred_region
      %s466 = ssub.s32 32, 32
      %467 = vsyncadd [#allocation34], %s466
      %s469 = sshll.u32 [#allocation35], 4
      %s470 = int_to_ptr.vmem [resolvable:$true] %s469
      %472 = dma.hbm_to_vmem [thread:$0]  %s129, 32, %s470, [#allocation34]
    $region261: #{dqn_forward.1} parent=1 // pred_fallthru
      _
    // Predicated region
    $region262: #{dqn_forward.1} parent=1 // pred_check
      _
    $region263: #{dqn_forward.1} parent=1 // pred_check_branch
      %474 = sbr.rel (0) target = $region265
    $region264: #{dqn_forward.1} parent=1 // pred_region
      _
    $region265: #{dqn_forward.1} parent=1 // pred_fallthru
      _
    // Predicated region
    $region266: #{dqn_forward.1} parent=1 // pred_check
      _
    $region267: #{dqn_forward.1} parent=1 // pred_check_branch
      %476 = sbr.rel (0) target = $region269
    $region268: #{dqn_forward.1} parent=1 // pred_region
      %s478 = ssub.s32 32, 32
      %479 = vsyncadd [#allocation37], %s478
      %s481 = sshll.u32 [#allocation36], 4
      %s482 = int_to_ptr.vmem [resolvable:$true] %s481
      %484 = dma.hbm_to_vmem [thread:$0]  %s133, 32, %s482, [#allocation37]
    $region269: #{dqn_forward.1} parent=1 // pred_fallthru
      _
    // Predicated region
    $region270: #{dqn_forward.1} parent=1 // pred_check
      _
    $region271: #{dqn_forward.1} parent=1 // pred_check_branch
      %486 = sbr.rel (0) target = $region273
    $region272: #{dqn_forward.1} parent=1 // pred_region
      _
    $region273: #{dqn_forward.1} parent=1 // pred_fallthru
      _
    // Predicated region
    $region274: #{dqn_forward.1} parent=1 // pred_check
      _
    $region275: #{dqn_forward.1} parent=1 // pred_check_branch
      %488 = sbr.rel (0) target = $region277
    $region276: #{dqn_forward.1} parent=1 // pred_region
      _
    $region277: #{dqn_forward.1} parent=1 // pred_fallthru
      _
    // Predicated region
    $region278: #{dqn_forward.1} parent=1 // pred_check
      _
    $region279: #{dqn_forward.1} parent=1 // pred_check_branch
      %490 = sbr.rel (0) target = $region281
    $region280: #{dqn_forward.1} parent=1 // pred_region
      %491 = dma.done [#allocation5], 16
    $region281: #{dqn_forward.1} parent=1 // pred_fallthru
      _
    // Predicated region
    $region282: #{dqn_forward.1} parent=1 // pred_check
      _
    $region283: #{dqn_forward.1} parent=1 // pred_check_branch
      %493 = sbr.rel (0) target = $region285
    $region284: #{dqn_forward.1} parent=1 // pred_region
      %494 = dma.done [#allocation7], 32
    $region285: #{dqn_forward.1} parent=1 // pred_fallthru
      _
    // Predicated region
    $region286: #{dqn_forward.1} parent=1 // pred_check
      _
    $region287: #{dqn_forward.1} parent=1 // pred_check_branch
      %496 = sbr.rel (0) target = $region289
    $region288: #{dqn_forward.1} parent=1 // pred_region
      %497 = dma.done [#allocation7], 32
    $region289: #{dqn_forward.1} parent=1 // pred_fallthru
      _
    // Predicated region
    $region290: #{dqn_forward.1} parent=1 // pred_check
      _
    $region291: #{dqn_forward.1} parent=1 // pred_check_branch
      %499 = sbr.rel (0) target = $region293
    $region292: #{dqn_forward.1} parent=1 // pred_region
      %500 = dma.done [#allocation10], 32
    $region293: #{dqn_forward.1} parent=1 // pred_fallthru
      _
    // Predicated region
    $region294: #{dqn_forward.1} parent=1 // pred_check
      _
    $region295: #{dqn_forward.1} parent=1 // pred_check_branch
      %502 = sbr.rel (0) target = $region297
    $region296: #{dqn_forward.1} parent=1 // pred_region
      %503 = dma.done [#allocation10], 32
    $region297: #{dqn_forward.1} parent=1 // pred_fallthru
      _
    // Predicated region
    $region298: #{dqn_forward.1} parent=1 // pred_check
      _
    $region299: #{dqn_forward.1} parent=1 // pred_check_branch
      %505 = sbr.rel (0) target = $region301
    $region300: #{dqn_forward.1} parent=1 // pred_region
      %506 = dma.done [#allocation13], 32
    $region301: #{dqn_forward.1} parent=1 // pred_fallthru
      _
    // Predicated region
    $region302: #{dqn_forward.1} parent=1 // pred_check
      _
    $region303: #{dqn_forward.1} parent=1 // pred_check_branch
      %508 = sbr.rel (0) target = $region305
    $region304: #{dqn_forward.1} parent=1 // pred_region
      %509 = dma.done [#allocation13], 16
    $region305: #{dqn_forward.1} parent=1 // pred_fallthru
      _
    // Predicated region
    $region306: #{dqn_forward.1} parent=1 // pred_check
      _
    $region307: #{dqn_forward.1} parent=1 // pred_check_branch
      %511 = sbr.rel (0) target = $region309
    $region308: #{dqn_forward.1} parent=1 // pred_region
      %512 = dma.done [#allocation16], 16
    $region309: #{dqn_forward.1} parent=1 // pred_fallthru
      _
    // Predicated region
    $region310: #{dqn_forward.1} parent=1 // pred_check
      _
    $region311: #{dqn_forward.1} parent=1 // pred_check_branch
      %514 = sbr.rel (0) target = $region313
    $region312: #{dqn_forward.1} parent=1 // pred_region
      %515 = dma.done [#allocation16], 16
    $region313: #{dqn_forward.1} parent=1 // pred_fallthru
      _
    // Predicated region
    $region314: #{dqn_forward.1} parent=1 // pred_check
      _
    $region315: #{dqn_forward.1} parent=1 // pred_check_branch
      %517 = sbr.rel (0) target = $region317
    $region316: #{dqn_forward.1} parent=1 // pred_region
      %518 = dma.done [#allocation19], 16
    $region317: #{dqn_forward.1} parent=1 // pred_fallthru
      _
    // Predicated region
    $region318: #{dqn_forward.1} parent=1 // pred_check
      _
    $region319: #{dqn_forward.1} parent=1 // pred_check_branch
      %520 = sbr.rel (0) target = $region321
    $region320: #{dqn_forward.1} parent=1 // pred_region
      %521 = dma.done [#allocation19], 32
    $region321: #{dqn_forward.1} parent=1 // pred_fallthru
      _
    // Predicated region
    $region322: #{dqn_forward.1} parent=1 // pred_check
      _
    $region323: #{dqn_forward.1} parent=1 // pred_check_branch
      %523 = sbr.rel (0) target = $region325
    $region324: #{dqn_forward.1} parent=1 // pred_region
      %524 = dma.done [#allocation22], 16
    $region325: #{dqn_forward.1} parent=1 // pred_fallthru
      _
    // Predicated region
    $region326: #{dqn_forward.1} parent=1 // pred_check
      _
    $region327: #{dqn_forward.1} parent=1 // pred_check_branch
      %526 = sbr.rel (0) target = $region329
    $region328: #{dqn_forward.1} parent=1 // pred_region
      %527 = dma.done [#allocation22], 16
    $region329: #{dqn_forward.1} parent=1 // pred_fallthru
      _
    // Predicated region
    $region330: #{dqn_forward.1} parent=1 // pred_check
      _
    $region331: #{dqn_forward.1} parent=1 // pred_check_branch
      %529 = sbr.rel (0) target = $region333
    $region332: #{dqn_forward.1} parent=1 // pred_region
      %530 = dma.done [#allocation25], 16
    $region333: #{dqn_forward.1} parent=1 // pred_fallthru
      _
    // Predicated region
    $region334: #{dqn_forward.1} parent=1 // pred_check
      _
    $region335: #{dqn_forward.1} parent=1 // pred_check_branch
      %532 = sbr.rel (0) target = $region337
    $region336: #{dqn_forward.1} parent=1 // pred_region
      %533 = dma.done [#allocation25], 16
    $region337: #{dqn_forward.1} parent=1 // pred_fallthru
      _
    // Predicated region
    $region338: #{dqn_forward.1} parent=1 // pred_check
      _
    $region339: #{dqn_forward.1} parent=1 // pred_check_branch
      %535 = sbr.rel (0) target = $region341
    $region340: #{dqn_forward.1} parent=1 // pred_region
      %536 = dma.done [#allocation28], 32
    $region341: #{dqn_forward.1} parent=1 // pred_fallthru
      _
    // Predicated region
    $region342: #{dqn_forward.1} parent=1 // pred_check
      _
    $region343: #{dqn_forward.1} parent=1 // pred_check_branch
      %538 = sbr.rel (0) target = $region345
    $region344: #{dqn_forward.1} parent=1 // pred_region
      %539 = dma.done [#allocation28], 32
    $region345: #{dqn_forward.1} parent=1 // pred_fallthru
      _
    // Predicated region
    $region346: #{dqn_forward.1} parent=1 // pred_check
      _
    $region347: #{dqn_forward.1} parent=1 // pred_check_branch
      %541 = sbr.rel (0) target = $region349
    $region348: #{dqn_forward.1} parent=1 // pred_region
      %542 = dma.done [#allocation31], 16
    $region349: #{dqn_forward.1} parent=1 // pred_fallthru
      _
    // Predicated region
    $region350: #{dqn_forward.1} parent=1 // pred_check
      _
    $region351: #{dqn_forward.1} parent=1 // pred_check_branch
      %544 = sbr.rel (0) target = $region353
    $region352: #{dqn_forward.1} parent=1 // pred_region
      %545 = dma.done [#allocation31], 32
    $region353: #{dqn_forward.1} parent=1 // pred_fallthru
      _
    // Predicated region
    $region354: #{dqn_forward.1} parent=1 // pred_check
      _
    $region355: #{dqn_forward.1} parent=1 // pred_check_branch
      %547 = sbr.rel (0) target = $region357
    $region356: #{dqn_forward.1} parent=1 // pred_region
      %548 = dma.done [#allocation34], 32
    $region357: #{dqn_forward.1} parent=1 // pred_fallthru
      _
    // Predicated region
    $region358: #{dqn_forward.1} parent=1 // pred_check
      _
    $region359: #{dqn_forward.1} parent=1 // pred_check_branch
      %550 = sbr.rel (0) target = $region361
    $region360: #{dqn_forward.1} parent=1 // pred_region
      %551 = dma.done [#allocation34], 32
    $region361: #{dqn_forward.1} parent=1 // pred_fallthru
      _
    // Predicated region
    $region362: #{dqn_forward.1} parent=1 // pred_check
      _
    $region363: #{dqn_forward.1} parent=1 // pred_check_branch
      %553 = sbr.rel (0) target = $region365
    $region364: #{dqn_forward.1} parent=1 // pred_region
      %554 = dma.done [#allocation37], 32
    $region365: #{dqn_forward.1} parent=1 // pred_fallthru
      _
    %v556 = vld [vmem:[%s3] sm:$0xff]
    %v557 = vld [vmem:[%s3 + $0x8] sm:$0xff]
    %v558 = vld [vmem:[%s3 + $0x10] sm:$0xff]
    %v559 = vld [vmem:[%s3 + $0x18] sm:$0xff]
    %v560 = vld [vmem:[%s3 + $0x20] sm:$0xff]
    %v561 = vld [vmem:[%s3 + $0x28] sm:$0xff]
    %v562 = vld [vmem:[%s5] sm:$0xff]
    %v563 = vld [vmem:[%s5 + $0x8] sm:$0xff]
    %v564 = vld [vmem:[%s5 + $0x10] sm:$0xff]
    %v565 = vld [vmem:[%s5 + $0x18] sm:$0xff]
    %v566 = vld [vmem:[%s5 + $0x20] sm:$0xff]
    %v567 = vld [vmem:[%s5 + $0x28] sm:$0xff]
    %v568 = vld [vmem:[%s1] sm:$0xff]
    %v569 = vld [vmem:[%s1 + $0x8] sm:$0xff]
    %v570 = vld [vmem:[%s1 + $0x10] sm:$0xff]
    %v571 = vld [vmem:[%s1 + $0x18] sm:$0xff]
    %v572 = vld [vmem:[%s1 + $0x20] sm:$0xff]
    %v573 = vld [vmem:[%s1 + $0x28] sm:$0xff]
    %v574 = vld [vmem:[%s23] sm:$0xf]
    %v575 = vld [vmem:[%s23 + $0x4] sm:$0xf]
    %v576 = vpack.c.bf16 %v569, %v568
    %v577 = vpack.c.bf16 %v571, %v570
    %v578 = vpack.c.bf16 %v573, %v572
    %v579 = vld [vmem:[#allocation4] sm:$0x1]
    %v581 = vlaneseq
    %v582 = vshrl.u32 %v581, 7
    %v583 = vsub.s32 0, %v582
    %v584 = vrot.slane %v579, %v583
    %v588 = vunpack.c.l.b16 %v574
    %v589 = vunpack.c.l.b16 %v575
    %v590 = vpack.c.b16 %v589, %v588
    %vm592 = vcmask 130048
    %v594 = vsel %vm592, %v576, 0
    %v597 = vsel %vm592, %v577, 0
    %v600 = vsel %vm592, %v578, 0
    %602 = vmatprep.subr.bf16.mxu0 0
    %603 = vmatpush1.bf16.msra.mxu0 %v590
    %604 = vmatprep.subr.bf16.mxu0 0
    %605 = vmatpush1.bf16.msra.mxu0 0
    %606 = vmatprep.subr.bf16.mxu0 0
    %607 = vmatpush1.bf16.msra.mxu0 0
    %608 = vmatprep.subr.bf16.mxu0 0
    %609 = vmatpush1.bf16.msra.mxu0 0
    %610 = vmatprep.subr.bf16.mxu0 0
    %611 = vmatpush1.bf16.msra.mxu0 0
    %612 = vmatprep.subr.bf16.mxu0 0
    %613 = vmatpush1.bf16.msra.mxu0 0
    %614 = vmatprep.subr.bf16.mxu0 0
    %615 = vmatpush1.bf16.msra.mxu0 0
    %616 = vmatprep.subr.bf16.mxu0 0
    %617 = vmatpush1.bf16.msra.mxu0 0
    %618 = vmatprep.subr.bf16.mxu0 0
    %619 = vmatpush1.bf16.msra.mxu0 0
    %620 = vmatprep.subr.bf16.mxu0 0
    %621 = vmatpush1.bf16.msra.mxu0 0
    %622 = vmatprep.subr.bf16.mxu0 0
    %623 = vmatpush1.bf16.msra.mxu0 0
    %624 = vmatprep.subr.bf16.mxu0 0
    %625 = vmatpush1.bf16.msra.mxu0 0
    %626 = vmatprep.subr.bf16.mxu0 0
    %627 = vmatpush1.bf16.msra.mxu0 0
    %628 = vmatprep.subr.bf16.mxu0 0
    %629 = vmatpush1.bf16.msra.mxu0 0
    %630 = vmatprep.subr.bf16.mxu0 0
    %631 = vmatpush1.bf16.msra.mxu0 0
    %632 = vmatprep.subr.bf16.mxu0 0
    %633 = vmatpush1.bf16.msra.mxu0 0
    %634 = vmatprep.mubr.bf16.mxu0 0
    %635 = vmatmul.mubr.bf16.gmra.mrb[0].mxu0 %v594
    %v636 = vpop.f32.mrb[0].mxu0
    %v637 = vadd.f32 %v584, %v636
    %v638 = vpop.f32.mrb[0].mxu0
    %v639 = vpop.f32.mrb[0].mxu0
    %v640 = vadd.f32 %v584, %v639
    %v641 = vpop.f32.mrb[0].mxu0
    %642 = vmatprep.mubr.bf16.mxu0 0
    %643 = vmatmul.mubr.bf16.gmra.mrb[0].mxu0 %v597
    %v644 = vpop.f32.mrb[0].mxu0
    %v645 = vadd.f32 %v584, %v644
    %v646 = vpop.f32.mrb[0].mxu0
    %v647 = vpop.f32.mrb[0].mxu0
    %v648 = vadd.f32 %v584, %v647
    %v649 = vpop.f32.mrb[0].mxu0
    %650 = vmatprep.mubr.bf16.mxu0 0
    %651 = vmatmul.mubr.bf16.gmra.mrb[0].mxu0 %v600
    %v652 = vpop.f32.mrb[0].mxu0
    %v653 = vadd.f32 %v584, %v652
    %v654 = vpop.f32.mrb[0].mxu0
    %v655 = vpop.f32.mrb[0].mxu0
    %v656 = vadd.f32 %v584, %v655
    %v657 = vpop.f32.mrb[0].mxu0
    %658 = vdwg.mxu0
    %v659 = vld [vmem:[%s27] sm:$0xf]
    %v660 = vld [vmem:[%s27 + $0x4] sm:$0xf]
    %v661 = vld [vmem:[%s27 + $0x8] sm:$0xf]
    %v662 = vld [vmem:[%s27 + $0xc] sm:$0xf]
    %v663 = vpack.c.bf16 %v640, %v637
    %v664 = vpack.c.bf16 %v648, %v645
    %v665 = vpack.c.bf16 %v656, %v653
    %v666 = vld [vmem:[%s29] sm:$0x1]
    %v668 = vlaneseq
    %v669 = vshrl.u32 %v668, 7
    %v670 = vsub.s32 0, %v669
    %v671 = vrot.slane %v666, %v670
    %v677 = vunpack.c.l.b16 %v659
    %v678 = vunpack.c.l.b16 %v660
    %v679 = vunpack.c.l.b16 %v661
    %v680 = vunpack.c.l.b16 %v662
    %v681 = vpack.c.b16 %v678, %v677
    %v682 = vpack.c.b16 %v680, %v679
    %vm685 = vcmask 261120
    %v687 = vsel %vm685, %v663, 0
    %v690 = vsel %vm685, %v664, 0
    %v693 = vsel %vm685, %v665, 0
    %695 = vmatprep.subr.bf16.mxu0 0
    %696 = vmatpush1.bf16.msra.mxu0 %v681
    %697 = vmatprep.subr.bf16.mxu0 0
    %698 = vmatpush1.bf16.msra.mxu0 %v682
    %699 = vmatprep.subr.bf16.mxu0 0
    %700 = vmatpush1.bf16.msra.mxu0 0
    %701 = vmatprep.subr.bf16.mxu0 0
    %702 = vmatpush1.bf16.msra.mxu0 0
    %703 = vmatprep.subr.bf16.mxu0 0
    %704 = vmatpush1.bf16.msra.mxu0 0
    %705 = vmatprep.subr.bf16.mxu0 0
    %706 = vmatpush1.bf16.msra.mxu0 0
    %707 = vmatprep.subr.bf16.mxu0 0
    %708 = vmatpush1.bf16.msra.mxu0 0
    %709 = vmatprep.subr.bf16.mxu0 0
    %710 = vmatpush1.bf16.msra.mxu0 0
    %711 = vmatprep.subr.bf16.mxu0 0
    %712 = vmatpush1.bf16.msra.mxu0 0
    %713 = vmatprep.subr.bf16.mxu0 0
    %714 = vmatpush1.bf16.msra.mxu0 0
    %715 = vmatprep.subr.bf16.mxu0 0
    %716 = vmatpush1.bf16.msra.mxu0 0
    %717 = vmatprep.subr.bf16.mxu0 0
    %718 = vmatpush1.bf16.msra.mxu0 0
    %719 = vmatprep.subr.bf16.mxu0 0
    %720 = vmatpush1.bf16.msra.mxu0 0
    %721 = vmatprep.subr.bf16.mxu0 0
    %722 = vmatpush1.bf16.msra.mxu0 0
    %723 = vmatprep.subr.bf16.mxu0 0
    %724 = vmatpush1.bf16.msra.mxu0 0
    %725 = vmatprep.subr.bf16.mxu0 0
    %726 = vmatpush1.bf16.msra.mxu0 0
    %727 = vmatprep.mubr.bf16.mxu0 0
    %728 = vmatmul.mubr.bf16.gmra.mrb[0].mxu0 %v687
    %v729 = vpop.f32.mrb[0].mxu0
    %v730 = vadd.f32 %v671, %v729
    %v731 = vpop.f32.mrb[0].mxu0
    %v732 = vpop.f32.mrb[0].mxu0
    %v733 = vadd.f32 %v671, %v732
    %v734 = vpop.f32.mrb[0].mxu0
    %735 = vmatprep.mubr.bf16.mxu0 0
    %736 = vmatmul.mubr.bf16.gmra.mrb[0].mxu0 %v690
    %v737 = vpop.f32.mrb[0].mxu0
    %v738 = vadd.f32 %v671, %v737
    %v739 = vpop.f32.mrb[0].mxu0
    %v740 = vpop.f32.mrb[0].mxu0
    %v741 = vadd.f32 %v671, %v740
    %v742 = vpop.f32.mrb[0].mxu0
    %743 = vmatprep.mubr.bf16.mxu0 0
    %744 = vmatmul.mubr.bf16.gmra.mrb[0].mxu0 %v693
    %v745 = vpop.f32.mrb[0].mxu0
    %v746 = vadd.f32 %v671, %v745
    %v747 = vpop.f32.mrb[0].mxu0
    %v748 = vpop.f32.mrb[0].mxu0
    %v749 = vadd.f32 %v671, %v748
    %v750 = vpop.f32.mrb[0].mxu0
    %751 = vdwg.mxu0
    %v752 = vld [vmem:[%s31] sm:$0xff]
    %v753 = vld [vmem:[%s31 + $0x8] sm:$0xff]
    %v754 = vld [vmem:[%s31 + $0x10] sm:$0xff]
    %v755 = vld [vmem:[%s31 + $0x18] sm:$0xff]
    %v756 = vmul.f32 %v730, 0.35355338
    %v757 = vmul.f32 %v733, 0.35355338
    %v758 = vmul.f32 %v738, 0.35355338
    %v759 = vmul.f32 %v741, 0.35355338
    %v760 = vmul.f32 %v746, 0.35355338
    %v761 = vmul.f32 %v749, 0.35355338
    %v762 = vpack.c.bf16 %v757, %v756
    %v763 = vpack.c.bf16 %v759, %v758
    %v764 = vpack.c.bf16 %v761, %v760
    %v765 = vpack.c.bf16 %v733, %v730
    %v766 = vpack.c.bf16 %v741, %v738
    %v767 = vpack.c.bf16 %v749, %v746
    %771 = vrot.lane.b32.xlu0 %v765, 96
    %v772 = vpop.permute.xlu0 %771
    %773 = vrot.lane.b32.xlu0 %v766, 96
    %v774 = vpop.permute.xlu0 %773
    %775 = vrot.lane.b32.xlu0 %v767, 96
    %v776 = vpop.permute.xlu0 %775
    %vm777 = vcmask 64512
    %v779 = vsel %vm777, %v762, 0
    %v782 = vsel %vm777, %v763, 0
    %v785 = vsel %vm777, %v764, 0
    %v788 = vsel %vm777, %v772, 0
    %v791 = vsel %vm777, %v774, 0
    %v794 = vsel %vm777, %v776, 0
    %796 = vmatprep.subr.bf16.mxu0 0
    %797 = vmatpush1.bf16.xpose.msra.mxu0 %v788
    %798 = vmatprep.subr.bf16.mxu0 0
    %799 = vmatpush1.bf16.xpose.msra.mxu0 %v791
    %800 = vmatprep.subr.bf16.mxu0 0
    %801 = vmatpush1.bf16.xpose.msra.mxu0 %v794
    %802 = vmatprep.subr.bf16.mxu0 0
    %803 = vmatpush1.bf16.xpose.msra.mxu0 0
    %804 = vmatprep.subr.bf16.mxu0 0
    %805 = vmatpush1.bf16.xpose.msra.mxu0 0
    %806 = vmatprep.subr.bf16.mxu0 0
    %807 = vmatpush1.bf16.xpose.msra.mxu0 0
    %808 = vmatprep.subr.bf16.mxu0 0
    %809 = vmatpush1.bf16.xpose.msra.mxu0 0
    %810 = vmatprep.subr.bf16.mxu0 0
    %811 = vmatpush1.bf16.xpose.msra.mxu0 0
    %812 = vmatprep.subr.bf16.mxu0 0
    %813 = vmatpush1.bf16.xpose.msra.mxu0 0
    %814 = vmatprep.subr.bf16.mxu0 0
    %815 = vmatpush1.bf16.xpose.msra.mxu0 0
    %816 = vmatprep.subr.bf16.mxu0 0
    %817 = vmatpush1.bf16.xpose.msra.mxu0 0
    %818 = vmatprep.subr.bf16.mxu0 0
    %819 = vmatpush1.bf16.xpose.msra.mxu0 0
    %820 = vmatprep.subr.bf16.mxu0 0
    %821 = vmatpush1.bf16.xpose.msra.mxu0 0
    %822 = vmatprep.subr.bf16.mxu0 0
    %823 = vmatpush1.bf16.xpose.msra.mxu0 0
    %824 = vmatprep.subr.bf16.mxu0 0
    %825 = vmatpush1.bf16.xpose.msra.mxu0 0
    %826 = vmatprep.subr.bf16.mxu0 0
    %827 = vmatpush1.bf16.xpose.msra.mxu0 0
    %828 = vmatprep.mubr.bf16.mxu0 0
    %829 = vmatmul.mubr.bf16.gmra.mrb[0].mxu0 %v779
    %v830 = vpop.f32.mrb[0].mxu0
    %v831 = vadd.f32 %v556, %v830
    %v832 = vpop.f32.mrb[0].mxu0
    %v833 = vpop.f32.mrb[0].mxu0
    %v834 = vadd.f32 %v557, %v833
    %v835 = vpop.f32.mrb[0].mxu0
    %836 = vmatprep.mubr.bf16.mxu0 0
    %837 = vmatmul.mubr.bf16.gmra.mrb[0].mxu0 %v782
    %v838 = vpop.f32.mrb[0].mxu0
    %v839 = vadd.f32 %v558, %v838
    %v840 = vpop.f32.mrb[0].mxu0
    %v841 = vpop.f32.mrb[0].mxu0
    %v842 = vadd.f32 %v559, %v841
    %v843 = vpop.f32.mrb[0].mxu0
    %844 = vmatprep.mubr.bf16.mxu0 0
    %845 = vmatmul.mubr.bf16.gmra.mrb[0].mxu0 %v785
    %v846 = vpop.f32.mrb[0].mxu0
    %v847 = vadd.f32 %v560, %v846
    %v848 = vpop.f32.mrb[0].mxu0
    %v849 = vpop.f32.mrb[0].mxu0
    %v850 = vadd.f32 %v561, %v849
    %v851 = vpop.f32.mrb[0].mxu0
    %852 = vdwg.mxu0
    %vm853 = vcmask 392192
    %v854 = vsel %vm853, %v831, -inf
    %855 = vmax.xlane.f32.xlu0 %v854
    %v856 = vpop.xlane.xlu0 %855
    %v857 = vsel %vm853, %v834, -inf
    %858 = vmax.xlane.f32.xlu0 %v857
    %v859 = vpop.xlane.xlu0 %858
    %v860 = vsel %vm853, %v839, -inf
    %861 = vmax.xlane.f32.xlu0 %v860
    %v862 = vpop.xlane.xlu0 %861
    %v863 = vsel %vm853, %v842, -inf
    %864 = vmax.xlane.f32.xlu0 %v863
    %v865 = vpop.xlane.xlu0 %864
    %v866 = vsel %vm853, %v847, -inf
    %867 = vmax.xlane.f32.xlu0 %v866
    %v868 = vpop.xlane.xlu0 %867
    %v869 = vsel %vm853, %v850, -inf
    %870 = vmax.xlane.f32.xlu0 %v869
    %v871 = vpop.xlane.xlu0 %870
    %v872 = vsub.f32 %v831, %v856
    %v873 = vsub.f32 %v834, %v859
    %v874 = vsub.f32 %v839, %v862
    %v875 = vsub.f32 %v842, %v865
    %v876 = vsub.f32 %v847, %v868
    %v877 = vsub.f32 %v850, %v871
    %v878 = vmul.f32 %v872, 1.442695
    %v879 = vpow.pop %v878
    %v880 = vmul.f32 %v873, 1.442695
    %v881 = vpow.pop %v880
    %v882 = vmul.f32 %v874, 1.442695
    %v883 = vpow.pop %v882
    %v884 = vmul.f32 %v875, 1.442695
    %v885 = vpow.pop %v884
    %v886 = vmul.f32 %v876, 1.442695
    %v887 = vpow.pop %v886
    %v888 = vmul.f32 %v877, 1.442695
    %v889 = vpow.pop %v888
    %v890 = vsel %vm853, %v879, 0.0
    %891 = vadd.xlane.f32.xlu0 %v890
    %v892 = vpop.xlane.xlu0 %891
    %v893 = vsel %vm853, %v881, 0.0
    %894 = vadd.xlane.f32.xlu0 %v893
    %v895 = vpop.xlane.xlu0 %894
    %v896 = vsel %vm853, %v883, 0.0
    %897 = vadd.xlane.f32.xlu0 %v896
    %v898 = vpop.xlane.xlu0 %897
    %v899 = vsel %vm853, %v885, 0.0
    %900 = vadd.xlane.f32.xlu0 %v899
    %v901 = vpop.xlane.xlu0 %900
    %v902 = vsel %vm853, %v887, 0.0
    %903 = vadd.xlane.f32.xlu0 %v902
    %v904 = vpop.xlane.xlu0 %903
    %v905 = vsel %vm853, %v889, 0.0
    %906 = vadd.xlane.f32.xlu0 %v905
    %v907 = vpop.xlane.xlu0 %906
    %v908 = vrcp.pop %v892
    %v909 = vrcp.pop %v895
    %v910 = vrcp.pop %v898
    %v911 = vrcp.pop %v901
    %v912 = vrcp.pop %v904
    %v913 = vrcp.pop %v907
    %v914 = vmul.f32 %v879, %v908
    %v915 = vmul.f32 %v881, %v909
    %v916 = vmul.f32 %v883, %v910
    %v917 = vmul.f32 %v885, %v911
    %v918 = vmul.f32 %v887, %v912
    %v919 = vmul.f32 %v889, %v913
    %v920 = vpack.c.bf16 %v915, %v914
    %v921 = vpack.c.bf16 %v917, %v916
    %v922 = vpack.c.bf16 %v919, %v918
    %923 = vrot.lane.b32.xlu0 %v765, 64
    %v924 = vpop.permute.xlu0 %923
    %925 = vrot.lane.b32.xlu0 %v766, 64
    %v926 = vpop.permute.xlu0 %925
    %927 = vrot.lane.b32.xlu0 %v767, 64
    %v928 = vpop.permute.xlu0 %927
    %v933 = vsel %vm853, %v920, 0
    %v936 = vsel %vm853, %v921, 0
    %v939 = vsel %vm853, %v922, 0
    %941 = vmatprep.subr.bf16.mxu0 0
    %942 = vmatpush1.bf16.msra.mxu0 %v924
    %943 = vmatprep.subr.bf16.mxu0 0
    %944 = vmatpush1.bf16.msra.mxu0 %v926
    %945 = vmatprep.subr.bf16.mxu0 0
    %946 = vmatpush1.bf16.msra.mxu0 %v928
    %947 = vmatprep.subr.bf16.mxu0 0
    %948 = vmatpush1.bf16.msra.mxu0 0
    %949 = vmatprep.subr.bf16.mxu0 0
    %950 = vmatpush1.bf16.msra.mxu0 0
    %951 = vmatprep.subr.bf16.mxu0 0
    %952 = vmatpush1.bf16.msra.mxu0 0
    %953 = vmatprep.subr.bf16.mxu0 0
    %954 = vmatpush1.bf16.msra.mxu0 0
    %955 = vmatprep.subr.bf16.mxu0 0
    %956 = vmatpush1.bf16.msra.mxu0 0
    %957 = vmatprep.subr.bf16.mxu0 0
    %958 = vmatpush1.bf16.msra.mxu0 0
    %959 = vmatprep.subr.bf16.mxu0 0
    %960 = vmatpush1.bf16.msra.mxu0 0
    %961 = vmatprep.subr.bf16.mxu0 0
    %962 = vmatpush1.bf16.msra.mxu0 0
    %963 = vmatprep.subr.bf16.mxu0 0
    %964 = vmatpush1.bf16.msra.mxu0 0
    %965 = vmatprep.subr.bf16.mxu0 0
    %966 = vmatpush1.bf16.msra.mxu0 0
    %967 = vmatprep.subr.bf16.mxu0 0
    %968 = vmatpush1.bf16.msra.mxu0 0
    %969 = vmatprep.subr.bf16.mxu0 0
    %970 = vmatpush1.bf16.msra.mxu0 0
    %971 = vmatprep.subr.bf16.mxu0 0
    %972 = vmatpush1.bf16.msra.mxu0 0
    %973 = vmatprep.mubr.bf16.mxu0 0
    %974 = vmatmul.mubr.bf16.gmra.mrb[0].mxu0 %v933
    %v975 = vpop.f32.mrb[0].mxu0
    %v976 = vadd.f32 0.0, %v975
    %v977 = vpop.f32.mrb[0].mxu0
    %v978 = vpop.f32.mrb[0].mxu0
    %v979 = vadd.f32 0.0, %v978
    %v980 = vpop.f32.mrb[0].mxu0
    %981 = vmatprep.mubr.bf16.mxu0 0
    %982 = vmatmul.mubr.bf16.gmra.mrb[0].mxu0 %v936
    %v983 = vpop.f32.mrb[0].mxu0
    %v984 = vadd.f32 0.0, %v983
    %v985 = vpop.f32.mrb[0].mxu0
    %v986 = vpop.f32.mrb[0].mxu0
    %v987 = vadd.f32 0.0, %v986
    %v988 = vpop.f32.mrb[0].mxu0
    %989 = vmatprep.mubr.bf16.mxu0 0
    %990 = vmatmul.mubr.bf16.gmra.mrb[0].mxu0 %v939
    %v991 = vpop.f32.mrb[0].mxu0
    %v992 = vadd.f32 0.0, %v991
    %v993 = vpop.f32.mrb[0].mxu0
    %v994 = vpop.f32.mrb[0].mxu0
    %v995 = vadd.f32 0.0, %v994
    %v996 = vpop.f32.mrb[0].mxu0
    %997 = vdwg.mxu0
    %v998 = vpack.c.bf16 %v979, %v976
    %v999 = vpack.c.bf16 %v987, %v984
    %v1000 = vpack.c.bf16 %v995, %v992
    %v1001 = vpack.c.bf16 %v752, %v752
    %1005 = vrot.lane.b32.xlu0 %v762, 120
    %v1006 = vpop.permute.xlu0 %1005
    %1007 = vrot.lane.b32.xlu0 %v763, 120
    %v1008 = vpop.permute.xlu0 %1007
    %1009 = vrot.lane.b32.xlu0 %v764, 120
    %v1010 = vpop.permute.xlu0 %1009
    %1011 = vrot.lane.b32.xlu0 %v765, 88
    %v1012 = vpop.permute.xlu0 %1011
    %1013 = vrot.lane.b32.xlu0 %v766, 88
    %v1014 = vpop.permute.xlu0 %1013
    %1015 = vrot.lane.b32.xlu0 %v767, 88
    %v1016 = vpop.permute.xlu0 %1015
    %v1018 = vsel %vm777, %v1006, 0
    %v1021 = vsel %vm777, %v1008, 0
    %v1024 = vsel %vm777, %v1010, 0
    %v1027 = vsel %vm777, %v1012, 0
    %v1030 = vsel %vm777, %v1014, 0
    %v1033 = vsel %vm777, %v1016, 0
    %1035 = vmatprep.subr.bf16.mxu0 0
    %1036 = vmatpush1.bf16.xpose.msra.mxu0 %v1027
    %1037 = vmatprep.subr.bf16.mxu0 0
    %1038 = vmatpush1.bf16.xpose.msra.mxu0 %v1030
    %1039 = vmatprep.subr.bf16.mxu0 0
    %1040 = vmatpush1.bf16.xpose.msra.mxu0 %v1033
    %1041 = vmatprep.subr.bf16.mxu0 0
    %1042 = vmatpush1.bf16.xpose.msra.mxu0 0
    %1043 = vmatprep.subr.bf16.mxu0 0
    %1044 = vmatpush1.bf16.xpose.msra.mxu0 0
    %1045 = vmatprep.subr.bf16.mxu0 0
    %1046 = vmatpush1.bf16.xpose.msra.mxu0 0
    %1047 = vmatprep.subr.bf16.mxu0 0
    %1048 = vmatpush1.bf16.xpose.msra.mxu0 0
    %1049 = vmatprep.subr.bf16.mxu0 0
    %1050 = vmatpush1.bf16.xpose.msra.mxu0 0
    %1051 = vmatprep.subr.bf16.mxu0 0
    %1052 = vmatpush1.bf16.xpose.msra.mxu0 0
    %1053 = vmatprep.subr.bf16.mxu0 0
    %1054 = vmatpush1.bf16.xpose.msra.mxu0 0
    %1055 = vmatprep.subr.bf16.mxu0 0
    %1056 = vmatpush1.bf16.xpose.msra.mxu0 0
    %1057 = vmatprep.subr.bf16.mxu0 0
    %1058 = vmatpush1.bf16.xpose.msra.mxu0 0
    %1059 = vmatprep.subr.bf16.mxu0 0
    %1060 = vmatpush1.bf16.xpose.msra.mxu0 0
    %1061 = vmatprep.subr.bf16.mxu0 0
    %1062 = vmatpush1.bf16.xpose.msra.mxu0 0
    %1063 = vmatprep.subr.bf16.mxu0 0
    %1064 = vmatpush1.bf16.xpose.msra.mxu0 0
    %1065 = vmatprep.subr.bf16.mxu0 0
    %1066 = vmatpush1.bf16.xpose.msra.mxu0 0
    %1067 = vmatprep.mubr.bf16.mxu0 0
    %1068 = vmatmul.mubr.bf16.gmra.mrb[0].mxu0 %v1018
    %v1069 = vpop.f32.mrb[0].mxu0
    %v1070 = vadd.f32 %v556, %v1069
    %v1071 = vpop.f32.mrb[0].mxu0
    %v1072 = vpop.f32.mrb[0].mxu0
    %v1073 = vadd.f32 %v557, %v1072
    %v1074 = vpop.f32.mrb[0].mxu0
    %1075 = vmatprep.mubr.bf16.mxu0 0
    %1076 = vmatmul.mubr.bf16.gmra.mrb[0].mxu0 %v1021
    %v1077 = vpop.f32.mrb[0].mxu0
    %v1078 = vadd.f32 %v558, %v1077
    %v1079 = vpop.f32.mrb[0].mxu0
    %v1080 = vpop.f32.mrb[0].mxu0
    %v1081 = vadd.f32 %v559, %v1080
    %v1082 = vpop.f32.mrb[0].mxu0
    %1083 = vmatprep.mubr.bf16.mxu0 0
    %1084 = vmatmul.mubr.bf16.gmra.mrb[0].mxu0 %v1024
    %v1085 = vpop.f32.mrb[0].mxu0
    %v1086 = vadd.f32 %v560, %v1085
    %v1087 = vpop.f32.mrb[0].mxu0
    %v1088 = vpop.f32.mrb[0].mxu0
    %v1089 = vadd.f32 %v561, %v1088
    %v1090 = vpop.f32.mrb[0].mxu0
    %1091 = vdwg.mxu0
    %v1092 = vsel %vm853, %v1070, -inf
    %1093 = vmax.xlane.f32.xlu0 %v1092
    %v1094 = vpop.xlane.xlu0 %1093
    %v1095 = vsel %vm853, %v1073, -inf
    %1096 = vmax.xlane.f32.xlu0 %v1095
    %v1097 = vpop.xlane.xlu0 %1096
    %v1098 = vsel %vm853, %v1078, -inf
    %1099 = vmax.xlane.f32.xlu0 %v1098
    %v1100 = vpop.xlane.xlu0 %1099
    %v1101 = vsel %vm853, %v1081, -inf
    %1102 = vmax.xlane.f32.xlu0 %v1101
    %v1103 = vpop.xlane.xlu0 %1102
    %v1104 = vsel %vm853, %v1086, -inf
    %1105 = vmax.xlane.f32.xlu0 %v1104
    %v1106 = vpop.xlane.xlu0 %1105
    %v1107 = vsel %vm853, %v1089, -inf
    %1108 = vmax.xlane.f32.xlu0 %v1107
    %v1109 = vpop.xlane.xlu0 %1108
    %v1110 = vsub.f32 %v1070, %v1094
    %v1111 = vsub.f32 %v1073, %v1097
    %v1112 = vsub.f32 %v1078, %v1100
    %v1113 = vsub.f32 %v1081, %v1103
    %v1114 = vsub.f32 %v1086, %v1106
    %v1115 = vsub.f32 %v1089, %v1109
    %v1116 = vmul.f32 %v1110, 1.442695
    %v1117 = vpow.pop %v1116
    %v1118 = vmul.f32 %v1111, 1.442695
    %v1119 = vpow.pop %v1118
    %v1120 = vmul.f32 %v1112, 1.442695
    %v1121 = vpow.pop %v1120
    %v1122 = vmul.f32 %v1113, 1.442695
    %v1123 = vpow.pop %v1122
    %v1124 = vmul.f32 %v1114, 1.442695
    %v1125 = vpow.pop %v1124
    %v1126 = vmul.f32 %v1115, 1.442695
    %v1127 = vpow.pop %v1126
    %v1128 = vsel %vm853, %v1117, 0.0
    %1129 = vadd.xlane.f32.xlu0 %v1128
    %v1130 = vpop.xlane.xlu0 %1129
    %v1131 = vsel %vm853, %v1119, 0.0
    %1132 = vadd.xlane.f32.xlu0 %v1131
    %v1133 = vpop.xlane.xlu0 %1132
    %v1134 = vsel %vm853, %v1121, 0.0
    %1135 = vadd.xlane.f32.xlu0 %v1134
    %v1136 = vpop.xlane.xlu0 %1135
    %v1137 = vsel %vm853, %v1123, 0.0
    %1138 = vadd.xlane.f32.xlu0 %v1137
    %v1139 = vpop.xlane.xlu0 %1138
    %v1140 = vsel %vm853, %v1125, 0.0
    %1141 = vadd.xlane.f32.xlu0 %v1140
    %v1142 = vpop.xlane.xlu0 %1141
    %v1143 = vsel %vm853, %v1127, 0.0
    %1144 = vadd.xlane.f32.xlu0 %v1143
    %v1145 = vpop.xlane.xlu0 %1144
    %v1146 = vrcp.pop %v1130
    %v1147 = vrcp.pop %v1133
    %v1148 = vrcp.pop %v1136
    %v1149 = vrcp.pop %v1139
    %v1150 = vrcp.pop %v1142
    %v1151 = vrcp.pop %v1145
    %v1152 = vmul.f32 %v1117, %v1146
    %v1153 = vmul.f32 %v1119, %v1147
    %v1154 = vmul.f32 %v1121, %v1148
    %v1155 = vmul.f32 %v1123, %v1149
    %v1156 = vmul.f32 %v1125, %v1150
    %v1157 = vmul.f32 %v1127, %v1151
    %v1158 = vpack.c.bf16 %v1153, %v1152
    %v1159 = vpack.c.bf16 %v1155, %v1154
    %v1160 = vpack.c.bf16 %v1157, %v1156
    %1161 = vrot.lane.b32.xlu0 %v765, 56
    %v1162 = vpop.permute.xlu0 %1161
    %1163 = vrot.lane.b32.xlu0 %v766, 56
    %v1164 = vpop.permute.xlu0 %1163
    %1165 = vrot.lane.b32.xlu0 %v767, 56
    %v1166 = vpop.permute.xlu0 %1165
    %v1171 = vsel %vm853, %v1158, 0
    %v1174 = vsel %vm853, %v1159, 0
    %v1177 = vsel %vm853, %v1160, 0
    %1179 = vmatprep.subr.bf16.mxu0 0
    %1180 = vmatpush1.bf16.msra.mxu0 %v1162
    %1181 = vmatprep.subr.bf16.mxu0 0
    %1182 = vmatpush1.bf16.msra.mxu0 %v1164
    %1183 = vmatprep.subr.bf16.mxu0 0
    %1184 = vmatpush1.bf16.msra.mxu0 %v1166
    %1185 = vmatprep.subr.bf16.mxu0 0
    %1186 = vmatpush1.bf16.msra.mxu0 0
    %1187 = vmatprep.subr.bf16.mxu0 0
    %1188 = vmatpush1.bf16.msra.mxu0 0
    %1189 = vmatprep.subr.bf16.mxu0 0
    %1190 = vmatpush1.bf16.msra.mxu0 0
    %1191 = vmatprep.subr.bf16.mxu0 0
    %1192 = vmatpush1.bf16.msra.mxu0 0
    %1193 = vmatprep.subr.bf16.mxu0 0
    %1194 = vmatpush1.bf16.msra.mxu0 0
    %1195 = vmatprep.subr.bf16.mxu0 0
    %1196 = vmatpush1.bf16.msra.mxu0 0
    %1197 = vmatprep.subr.bf16.mxu0 0
    %1198 = vmatpush1.bf16.msra.mxu0 0
    %1199 = vmatprep.subr.bf16.mxu0 0
    %1200 = vmatpush1.bf16.msra.mxu0 0
    %1201 = vmatprep.subr.bf16.mxu0 0
    %1202 = vmatpush1.bf16.msra.mxu0 0
    %1203 = vmatprep.subr.bf16.mxu0 0
    %1204 = vmatpush1.bf16.msra.mxu0 0
    %1205 = vmatprep.subr.bf16.mxu0 0
    %1206 = vmatpush1.bf16.msra.mxu0 0
    %1207 = vmatprep.subr.bf16.mxu0 0
    %1208 = vmatpush1.bf16.msra.mxu0 0
    %1209 = vmatprep.subr.bf16.mxu0 0
    %1210 = vmatpush1.bf16.msra.mxu0 0
    %1211 = vmatprep.mubr.bf16.mxu0 0
    %1212 = vmatmul.mubr.bf16.gmra.mrb[0].mxu0 %v1171
    %v1213 = vpop.f32.mrb[0].mxu0
    %v1214 = vadd.f32 0.0, %v1213
    %v1215 = vpop.f32.mrb[0].mxu0
    %v1216 = vpop.f32.mrb[0].mxu0
    %v1217 = vadd.f32 0.0, %v1216
    %v1218 = vpop.f32.mrb[0].mxu0
    %1219 = vmatprep.mubr.bf16.mxu0 0
    %1220 = vmatmul.mubr.bf16.gmra.mrb[0].mxu0 %v1174
    %v1221 = vpop.f32.mrb[0].mxu0
    %v1222 = vadd.f32 0.0, %v1221
    %v1223 = vpop.f32.mrb[0].mxu0
    %v1224 = vpop.f32.mrb[0].mxu0
    %v1225 = vadd.f32 0.0, %v1224
    %v1226 = vpop.f32.mrb[0].mxu0
    %1227 = vmatprep.mubr.bf16.mxu0 0
    %1228 = vmatmul.mubr.bf16.gmra.mrb[0].mxu0 %v1177
    %v1229 = vpop.f32.mrb[0].mxu0
    %v1230 = vadd.f32 0.0, %v1229
    %v1231 = vpop.f32.mrb[0].mxu0
    %v1232 = vpop.f32.mrb[0].mxu0
    %v1233 = vadd.f32 0.0, %v1232
    %v1234 = vpop.f32.mrb[0].mxu0
    %1235 = vdwg.mxu0
    %v1236 = vpack.c.bf16 %v1217, %v1214
    %v1237 = vpack.c.bf16 %v1225, %v1222
    %v1238 = vpack.c.bf16 %v1233, %v1230
    %v1239 = vpack.c.bf16 %v753, %v753
    %v1241 = vsel %vm777, %v1236, 0
    %v1244 = vsel %vm777, %v1237, 0
    %v1247 = vsel %vm777, %v1238, 0
    %vm1249 = vcmask 1043456
    %v1251 = vsel %vm1249, %v1239, 0
    %1253 = vmatprep.subr.bf16.mxu0 0
    %1254 = vmatpush1.bf16.msra.mxu0 %v1251
    %1255 = vmatprep.subr.bf16.mxu0 0
    %1256 = vmatpush1.bf16.msra.mxu0 0
    %1257 = vmatprep.subr.bf16.mxu0 0
    %1258 = vmatpush1.bf16.msra.mxu0 0
    %1259 = vmatprep.subr.bf16.mxu0 0
    %1260 = vmatpush1.bf16.msra.mxu0 0
    %1261 = vmatprep.subr.bf16.mxu0 0
    %1262 = vmatpush1.bf16.msra.mxu0 0
    %1263 = vmatprep.subr.bf16.mxu0 0
    %1264 = vmatpush1.bf16.msra.mxu0 0
    %1265 = vmatprep.subr.bf16.mxu0 0
    %1266 = vmatpush1.bf16.msra.mxu0 0
    %1267 = vmatprep.subr.bf16.mxu0 0
    %1268 = vmatpush1.bf16.msra.mxu0 0
    %1269 = vmatprep.subr.bf16.mxu0 0
    %1270 = vmatpush1.bf16.msra.mxu0 0
    %1271 = vmatprep.subr.bf16.mxu0 0
    %1272 = vmatpush1.bf16.msra.mxu0 0
    %1273 = vmatprep.subr.bf16.mxu0 0
    %1274 = vmatpush1.bf16.msra.mxu0 0
    %1275 = vmatprep.subr.bf16.mxu0 0
    %1276 = vmatpush1.bf16.msra.mxu0 0
    %1277 = vmatprep.subr.bf16.mxu0 0
    %1278 = vmatpush1.bf16.msra.mxu0 0
    %1279 = vmatprep.subr.bf16.mxu0 0
    %1280 = vmatpush1.bf16.msra.mxu0 0
    %1281 = vmatprep.subr.bf16.mxu0 0
    %1282 = vmatpush1.bf16.msra.mxu0 0
    %1283 = vmatprep.subr.bf16.mxu0 0
    %1284 = vmatpush1.bf16.msra.mxu0 0
    %1285 = vmatprep.mubr.bf16.mxu0 0
    %1286 = vmatmul.mubr.bf16.gmra.mrb[0].mxu0 %v1241
    %v1287 = vpop.f32.mrb[0].mxu0
    %v1288 = vadd.f32 0.0, %v1287
    %v1289 = vpop.f32.mrb[0].mxu0
    %v1290 = vpop.f32.mrb[0].mxu0
    %v1291 = vadd.f32 0.0, %v1290
    %v1292 = vpop.f32.mrb[0].mxu0
    %1293 = vmatprep.mubr.bf16.mxu0 0
    %1294 = vmatmul.mubr.bf16.gmra.mrb[0].mxu0 %v1244
    %v1295 = vpop.f32.mrb[0].mxu0
    %v1296 = vadd.f32 0.0, %v1295
    %v1297 = vpop.f32.mrb[0].mxu0
    %v1298 = vpop.f32.mrb[0].mxu0
    %v1299 = vadd.f32 0.0, %v1298
    %v1300 = vpop.f32.mrb[0].mxu0
    %1301 = vmatprep.mubr.bf16.mxu0 0
    %1302 = vmatmul.mubr.bf16.gmra.mrb[0].mxu0 %v1247
    %v1303 = vpop.f32.mrb[0].mxu0
    %v1304 = vadd.f32 0.0, %v1303
    %v1305 = vpop.f32.mrb[0].mxu0
    %v1306 = vpop.f32.mrb[0].mxu0
    %v1307 = vadd.f32 0.0, %v1306
    %v1308 = vpop.f32.mrb[0].mxu0
    %1309 = vdwg.mxu0
    %v1311 = vsel %vm777, %v998, 0
    %v1314 = vsel %vm777, %v999, 0
    %v1317 = vsel %vm777, %v1000, 0
    %v1320 = vsel %vm1249, %v1001, 0
    %1322 = vmatprep.subr.bf16.mxu0 0
    %1323 = vmatpush1.bf16.msra.mxu0 %v1320
    %1324 = vmatprep.subr.bf16.mxu0 0
    %1325 = vmatpush1.bf16.msra.mxu0 0
    %1326 = vmatprep.subr.bf16.mxu0 0
    %1327 = vmatpush1.bf16.msra.mxu0 0
    %1328 = vmatprep.subr.bf16.mxu0 0
    %1329 = vmatpush1.bf16.msra.mxu0 0
    %1330 = vmatprep.subr.bf16.mxu0 0
    %1331 = vmatpush1.bf16.msra.mxu0 0
    %1332 = vmatprep.subr.bf16.mxu0 0
    %1333 = vmatpush1.bf16.msra.mxu0 0
    %1334 = vmatprep.subr.bf16.mxu0 0
    %1335 = vmatpush1.bf16.msra.mxu0 0
    %1336 = vmatprep.subr.bf16.mxu0 0
    %1337 = vmatpush1.bf16.msra.mxu0 0
    %1338 = vmatprep.subr.bf16.mxu0 0
    %1339 = vmatpush1.bf16.msra.mxu0 0
    %1340 = vmatprep.subr.bf16.mxu0 0
    %1341 = vmatpush1.bf16.msra.mxu0 0
    %1342 = vmatprep.subr.bf16.mxu0 0
    %1343 = vmatpush1.bf16.msra.mxu0 0
    %1344 = vmatprep.subr.bf16.mxu0 0
    %1345 = vmatpush1.bf16.msra.mxu0 0
    %1346 = vmatprep.subr.bf16.mxu0 0
    %1347 = vmatpush1.bf16.msra.mxu0 0
    %1348 = vmatprep.subr.bf16.mxu0 0
    %1349 = vmatpush1.bf16.msra.mxu0 0
    %1350 = vmatprep.subr.bf16.mxu0 0
    %1351 = vmatpush1.bf16.msra.mxu0 0
    %1352 = vmatprep.subr.bf16.mxu0 0
    %1353 = vmatpush1.bf16.msra.mxu0 0
    %1354 = vmatprep.mubr.bf16.mxu0 0
    %1355 = vmatmul.mubr.bf16.gmra.mrb[0].mxu0 %v1311
    %v1356 = vpop.f32.mrb[0].mxu0
    %v1357 = vadd.f32 %v1288, %v1356
    %v1358 = vpop.f32.mrb[0].mxu0
    %v1359 = vpop.f32.mrb[0].mxu0
    %v1360 = vadd.f32 %v1291, %v1359
    %v1361 = vpop.f32.mrb[0].mxu0
    %1362 = vmatprep.mubr.bf16.mxu0 0
    %1363 = vmatmul.mubr.bf16.gmra.mrb[0].mxu0 %v1314
    %v1364 = vpop.f32.mrb[0].mxu0
    %v1365 = vadd.f32 %v1296, %v1364
    %v1366 = vpop.f32.mrb[0].mxu0
    %v1367 = vpop.f32.mrb[0].mxu0
    %v1368 = vadd.f32 %v1299, %v1367
    %v1369 = vpop.f32.mrb[0].mxu0
    %1370 = vmatprep.mubr.bf16.mxu0 0
    %1371 = vmatmul.mubr.bf16.gmra.mrb[0].mxu0 %v1317
    %v1372 = vpop.f32.mrb[0].mxu0
    %v1373 = vadd.f32 %v1304, %v1372
    %v1374 = vpop.f32.mrb[0].mxu0
    %v1375 = vpop.f32.mrb[0].mxu0
    %v1376 = vadd.f32 %v1307, %v1375
    %v1377 = vpop.f32.mrb[0].mxu0
    %1378 = vdwg.mxu0
    %1379 = vrot.lane.b32.xlu0 %v762, 112
    %v1380 = vpop.permute.xlu0 %1379
    %1381 = vrot.lane.b32.xlu0 %v763, 112
    %v1382 = vpop.permute.xlu0 %1381
    %1383 = vrot.lane.b32.xlu0 %v764, 112
    %v1384 = vpop.permute.xlu0 %1383
    %1385 = vrot.lane.b32.xlu0 %v765, 80
    %v1386 = vpop.permute.xlu0 %1385
    %1387 = vrot.lane.b32.xlu0 %v766, 80
    %v1388 = vpop.permute.xlu0 %1387
    %1389 = vrot.lane.b32.xlu0 %v767, 80
    %v1390 = vpop.permute.xlu0 %1389
    %v1392 = vsel %vm777, %v1380, 0
    %v1395 = vsel %vm777, %v1382, 0
    %v1398 = vsel %vm777, %v1384, 0
    %v1401 = vsel %vm777, %v1386, 0
    %v1404 = vsel %vm777, %v1388, 0
    %v1407 = vsel %vm777, %v1390, 0
    %1409 = vmatprep.subr.bf16.mxu0 0
    %1410 = vmatpush1.bf16.xpose.msra.mxu0 %v1401
    %1411 = vmatprep.subr.bf16.mxu0 0
    %1412 = vmatpush1.bf16.xpose.msra.mxu0 %v1404
    %1413 = vmatprep.subr.bf16.mxu0 0
    %1414 = vmatpush1.bf16.xpose.msra.mxu0 %v1407
    %1415 = vmatprep.subr.bf16.mxu0 0
    %1416 = vmatpush1.bf16.xpose.msra.mxu0 0
    %1417 = vmatprep.subr.bf16.mxu0 0
    %1418 = vmatpush1.bf16.xpose.msra.mxu0 0
    %1419 = vmatprep.subr.bf16.mxu0 0
    %1420 = vmatpush1.bf16.xpose.msra.mxu0 0
    %1421 = vmatprep.subr.bf16.mxu0 0
    %1422 = vmatpush1.bf16.xpose.msra.mxu0 0
    %1423 = vmatprep.subr.bf16.mxu0 0
    %1424 = vmatpush1.bf16.xpose.msra.mxu0 0
    %1425 = vmatprep.subr.bf16.mxu0 0
    %1426 = vmatpush1.bf16.xpose.msra.mxu0 0
    %1427 = vmatprep.subr.bf16.mxu0 0
    %1428 = vmatpush1.bf16.xpose.msra.mxu0 0
    %1429 = vmatprep.subr.bf16.mxu0 0
    %1430 = vmatpush1.bf16.xpose.msra.mxu0 0
    %1431 = vmatprep.subr.bf16.mxu0 0
    %1432 = vmatpush1.bf16.xpose.msra.mxu0 0
    %1433 = vmatprep.subr.bf16.mxu0 0
    %1434 = vmatpush1.bf16.xpose.msra.mxu0 0
    %1435 = vmatprep.subr.bf16.mxu0 0
    %1436 = vmatpush1.bf16.xpose.msra.mxu0 0
    %1437 = vmatprep.subr.bf16.mxu0 0
    %1438 = vmatpush1.bf16.xpose.msra.mxu0 0
    %1439 = vmatprep.subr.bf16.mxu0 0
    %1440 = vmatpush1.bf16.xpose.msra.mxu0 0
    %1441 = vmatprep.mubr.bf16.mxu0 0
    %1442 = vmatmul.mubr.bf16.gmra.mrb[0].mxu0 %v1392
    %v1443 = vpop.f32.mrb[0].mxu0
    %v1444 = vadd.f32 %v556, %v1443
    %v1445 = vpop.f32.mrb[0].mxu0
    %v1446 = vpop.f32.mrb[0].mxu0
    %v1447 = vadd.f32 %v557, %v1446
    %v1448 = vpop.f32.mrb[0].mxu0
    %1449 = vmatprep.mubr.bf16.mxu0 0
    %1450 = vmatmul.mubr.bf16.gmra.mrb[0].mxu0 %v1395
    %v1451 = vpop.f32.mrb[0].mxu0
    %v1452 = vadd.f32 %v558, %v1451
    %v1453 = vpop.f32.mrb[0].mxu0
    %v1454 = vpop.f32.mrb[0].mxu0
    %v1455 = vadd.f32 %v559, %v1454
    %v1456 = vpop.f32.mrb[0].mxu0
    %1457 = vmatprep.mubr.bf16.mxu0 0
    %1458 = vmatmul.mubr.bf16.gmra.mrb[0].mxu0 %v1398
    %v1459 = vpop.f32.mrb[0].mxu0
    %v1460 = vadd.f32 %v560, %v1459
    %v1461 = vpop.f32.mrb[0].mxu0
    %v1462 = vpop.f32.mrb[0].mxu0
    %v1463 = vadd.f32 %v561, %v1462
    %v1464 = vpop.f32.mrb[0].mxu0
    %1465 = vdwg.mxu0
    %v1466 = vsel %vm853, %v1444, -inf
    %1467 = vmax.xlane.f32.xlu0 %v1466
    %v1468 = vpop.xlane.xlu0 %1467
    %v1469 = vsel %vm853, %v1447, -inf
    %1470 = vmax.xlane.f32.xlu0 %v1469
    %v1471 = vpop.xlane.xlu0 %1470
    %v1472 = vsel %vm853, %v1452, -inf
    %1473 = vmax.xlane.f32.xlu0 %v1472
    %v1474 = vpop.xlane.xlu0 %1473
    %v1475 = vsel %vm853, %v1455, -inf
    %1476 = vmax.xlane.f32.xlu0 %v1475
    %v1477 = vpop.xlane.xlu0 %1476
    %v1478 = vsel %vm853, %v1460, -inf
    %1479 = vmax.xlane.f32.xlu0 %v1478
    %v1480 = vpop.xlane.xlu0 %1479
    %v1481 = vsel %vm853, %v1463, -inf
    %1482 = vmax.xlane.f32.xlu0 %v1481
    %v1483 = vpop.xlane.xlu0 %1482
    %v1484 = vsub.f32 %v1444, %v1468
    %v1485 = vsub.f32 %v1447, %v1471
    %v1486 = vsub.f32 %v1452, %v1474
    %v1487 = vsub.f32 %v1455, %v1477
    %v1488 = vsub.f32 %v1460, %v1480
    %v1489 = vsub.f32 %v1463, %v1483
    %v1490 = vmul.f32 %v1484, 1.442695
    %v1491 = vpow.pop %v1490
    %v1492 = vmul.f32 %v1485, 1.442695
    %v1493 = vpow.pop %v1492
    %v1494 = vmul.f32 %v1486, 1.442695
    %v1495 = vpow.pop %v1494
    %v1496 = vmul.f32 %v1487, 1.442695
    %v1497 = vpow.pop %v1496
    %v1498 = vmul.f32 %v1488, 1.442695
    %v1499 = vpow.pop %v1498
    %v1500 = vmul.f32 %v1489, 1.442695
    %v1501 = vpow.pop %v1500
    %v1502 = vsel %vm853, %v1491, 0.0
    %1503 = vadd.xlane.f32.xlu0 %v1502
    %v1504 = vpop.xlane.xlu0 %1503
    %v1505 = vsel %vm853, %v1493, 0.0
    %1506 = vadd.xlane.f32.xlu0 %v1505
    %v1507 = vpop.xlane.xlu0 %1506
    %v1508 = vsel %vm853, %v1495, 0.0
    %1509 = vadd.xlane.f32.xlu0 %v1508
    %v1510 = vpop.xlane.xlu0 %1509
    %v1511 = vsel %vm853, %v1497, 0.0
    %1512 = vadd.xlane.f32.xlu0 %v1511
    %v1513 = vpop.xlane.xlu0 %1512
    %v1514 = vsel %vm853, %v1499, 0.0
    %1515 = vadd.xlane.f32.xlu0 %v1514
    %v1516 = vpop.xlane.xlu0 %1515
    %v1517 = vsel %vm853, %v1501, 0.0
    %1518 = vadd.xlane.f32.xlu0 %v1517
    %v1519 = vpop.xlane.xlu0 %1518
    %v1520 = vrcp.pop %v1504
    %v1521 = vrcp.pop %v1507
    %v1522 = vrcp.pop %v1510
    %v1523 = vrcp.pop %v1513
    %v1524 = vrcp.pop %v1516
    %v1525 = vrcp.pop %v1519
    %v1526 = vmul.f32 %v1491, %v1520
    %v1527 = vmul.f32 %v1493, %v1521
    %v1528 = vmul.f32 %v1495, %v1522
    %v1529 = vmul.f32 %v1497, %v1523
    %v1530 = vmul.f32 %v1499, %v1524
    %v1531 = vmul.f32 %v1501, %v1525
    %v1532 = vpack.c.bf16 %v1527, %v1526
    %v1533 = vpack.c.bf16 %v1529, %v1528
    %v1534 = vpack.c.bf16 %v1531, %v1530
    %1535 = vrot.lane.b32.xlu0 %v765, 48
    %v1536 = vpop.permute.xlu0 %1535
    %1537 = vrot.lane.b32.xlu0 %v766, 48
    %v1538 = vpop.permute.xlu0 %1537
    %1539 = vrot.lane.b32.xlu0 %v767, 48
    %v1540 = vpop.permute.xlu0 %1539
    %v1545 = vsel %vm853, %v1532, 0
    %v1548 = vsel %vm853, %v1533, 0
    %v1551 = vsel %vm853, %v1534, 0
    %1553 = vmatprep.subr.bf16.mxu0 0
    %1554 = vmatpush1.bf16.msra.mxu0 %v1536
    %1555 = vmatprep.subr.bf16.mxu0 0
    %1556 = vmatpush1.bf16.msra.mxu0 %v1538
    %1557 = vmatprep.subr.bf16.mxu0 0
    %1558 = vmatpush1.bf16.msra.mxu0 %v1540
    %1559 = vmatprep.subr.bf16.mxu0 0
    %1560 = vmatpush1.bf16.msra.mxu0 0
    %1561 = vmatprep.subr.bf16.mxu0 0
    %1562 = vmatpush1.bf16.msra.mxu0 0
    %1563 = vmatprep.subr.bf16.mxu0 0
    %1564 = vmatpush1.bf16.msra.mxu0 0
    %1565 = vmatprep.subr.bf16.mxu0 0
    %1566 = vmatpush1.bf16.msra.mxu0 0
    %1567 = vmatprep.subr.bf16.mxu0 0
    %1568 = vmatpush1.bf16.msra.mxu0 0
    %1569 = vmatprep.subr.bf16.mxu0 0
    %1570 = vmatpush1.bf16.msra.mxu0 0
    %1571 = vmatprep.subr.bf16.mxu0 0
    %1572 = vmatpush1.bf16.msra.mxu0 0
    %1573 = vmatprep.subr.bf16.mxu0 0
    %1574 = vmatpush1.bf16.msra.mxu0 0
    %1575 = vmatprep.subr.bf16.mxu0 0
    %1576 = vmatpush1.bf16.msra.mxu0 0
    %1577 = vmatprep.subr.bf16.mxu0 0
    %1578 = vmatpush1.bf16.msra.mxu0 0
    %1579 = vmatprep.subr.bf16.mxu0 0
    %1580 = vmatpush1.bf16.msra.mxu0 0
    %1581 = vmatprep.subr.bf16.mxu0 0
    %1582 = vmatpush1.bf16.msra.mxu0 0
    %1583 = vmatprep.subr.bf16.mxu0 0
    %1584 = vmatpush1.bf16.msra.mxu0 0
    %1585 = vmatprep.mubr.bf16.mxu0 0
    %1586 = vmatmul.mubr.bf16.gmra.mrb[0].mxu0 %v1545
    %v1587 = vpop.f32.mrb[0].mxu0
    %v1588 = vadd.f32 0.0, %v1587
    %v1589 = vpop.f32.mrb[0].mxu0
    %v1590 = vpop.f32.mrb[0].mxu0
    %v1591 = vadd.f32 0.0, %v1590
    %v1592 = vpop.f32.mrb[0].mxu0
    %1593 = vmatprep.mubr.bf16.mxu0 0
    %1594 = vmatmul.mubr.bf16.gmra.mrb[0].mxu0 %v1548
    %v1595 = vpop.f32.mrb[0].mxu0
    %v1596 = vadd.f32 0.0, %v1595
    %v1597 = vpop.f32.mrb[0].mxu0
    %v1598 = vpop.f32.mrb[0].mxu0
    %v1599 = vadd.f32 0.0, %v1598
    %v1600 = vpop.f32.mrb[0].mxu0
    %1601 = vmatprep.mubr.bf16.mxu0 0
    %1602 = vmatmul.mubr.bf16.gmra.mrb[0].mxu0 %v1551
    %v1603 = vpop.f32.mrb[0].mxu0
    %v1604 = vadd.f32 0.0, %v1603
    %v1605 = vpop.f32.mrb[0].mxu0
    %v1606 = vpop.f32.mrb[0].mxu0
    %v1607 = vadd.f32 0.0, %v1606
    %v1608 = vpop.f32.mrb[0].mxu0
    %1609 = vdwg.mxu0
    %v1610 = vpack.c.bf16 %v1591, %v1588
    %v1611 = vpack.c.bf16 %v1599, %v1596
    %v1612 = vpack.c.bf16 %v1607, %v1604
    %v1613 = vpack.c.bf16 %v754, %v754
    %v1615 = vsel %vm777, %v1610, 0
    %v1618 = vsel %vm777, %v1611, 0
    %v1621 = vsel %vm777, %v1612, 0
    %v1624 = vsel %vm1249, %v1613, 0
    %1626 = vmatprep.subr.bf16.mxu0 0
    %1627 = vmatpush1.bf16.msra.mxu0 %v1624
    %1628 = vmatprep.subr.bf16.mxu0 0
    %1629 = vmatpush1.bf16.msra.mxu0 0
    %1630 = vmatprep.subr.bf16.mxu0 0
    %1631 = vmatpush1.bf16.msra.mxu0 0
    %1632 = vmatprep.subr.bf16.mxu0 0
    %1633 = vmatpush1.bf16.msra.mxu0 0
    %1634 = vmatprep.subr.bf16.mxu0 0
    %1635 = vmatpush1.bf16.msra.mxu0 0
    %1636 = vmatprep.subr.bf16.mxu0 0
    %1637 = vmatpush1.bf16.msra.mxu0 0
    %1638 = vmatprep.subr.bf16.mxu0 0
    %1639 = vmatpush1.bf16.msra.mxu0 0
    %1640 = vmatprep.subr.bf16.mxu0 0
    %1641 = vmatpush1.bf16.msra.mxu0 0
    %1642 = vmatprep.subr.bf16.mxu0 0
    %1643 = vmatpush1.bf16.msra.mxu0 0
    %1644 = vmatprep.subr.bf16.mxu0 0
    %1645 = vmatpush1.bf16.msra.mxu0 0
    %1646 = vmatprep.subr.bf16.mxu0 0
    %1647 = vmatpush1.bf16.msra.mxu0 0
    %1648 = vmatprep.subr.bf16.mxu0 0
    %1649 = vmatpush1.bf16.msra.mxu0 0
    %1650 = vmatprep.subr.bf16.mxu0 0
    %1651 = vmatpush1.bf16.msra.mxu0 0
    %1652 = vmatprep.subr.bf16.mxu0 0
    %1653 = vmatpush1.bf16.msra.mxu0 0
    %1654 = vmatprep.subr.bf16.mxu0 0
    %1655 = vmatpush1.bf16.msra.mxu0 0
    %1656 = vmatprep.subr.bf16.mxu0 0
    %1657 = vmatpush1.bf16.msra.mxu0 0
    %1658 = vmatprep.mubr.bf16.mxu0 0
    %1659 = vmatmul.mubr.bf16.gmra.mrb[0].mxu0 %v1615
    %v1660 = vpop.f32.mrb[0].mxu0
    %v1661 = vadd.f32 0.0, %v1660
    %v1662 = vpop.f32.mrb[0].mxu0
    %v1663 = vpop.f32.mrb[0].mxu0
    %v1664 = vadd.f32 0.0, %v1663
    %v1665 = vpop.f32.mrb[0].mxu0
    %1666 = vmatprep.mubr.bf16.mxu0 0
    %1667 = vmatmul.mubr.bf16.gmra.mrb[0].mxu0 %v1618
    %v1668 = vpop.f32.mrb[0].mxu0
    %v1669 = vadd.f32 0.0, %v1668
    %v1670 = vpop.f32.mrb[0].mxu0
    %v1671 = vpop.f32.mrb[0].mxu0
    %v1672 = vadd.f32 0.0, %v1671
    %v1673 = vpop.f32.mrb[0].mxu0
    %1674 = vmatprep.mubr.bf16.mxu0 0
    %1675 = vmatmul.mubr.bf16.gmra.mrb[0].mxu0 %v1621
    %v1676 = vpop.f32.mrb[0].mxu0
    %v1677 = vadd.f32 0.0, %v1676
    %v1678 = vpop.f32.mrb[0].mxu0
    %v1679 = vpop.f32.mrb[0].mxu0
    %v1680 = vadd.f32 0.0, %v1679
    %v1681 = vpop.f32.mrb[0].mxu0
    %1682 = vdwg.mxu0
    %v1683 = vadd.f32 %v1357, %v1661
    %v1684 = vadd.f32 %v1360, %v1664
    %v1685 = vadd.f32 %v1365, %v1669
    %v1686 = vadd.f32 %v1368, %v1672
    %v1687 = vadd.f32 %v1373, %v1677
    %v1688 = vadd.f32 %v1376, %v1680
    %1689 = vrot.lane.b32.xlu0 %v762, 104
    %v1690 = vpop.permute.xlu0 %1689
    %1691 = vrot.lane.b32.xlu0 %v763, 104
    %v1692 = vpop.permute.xlu0 %1691
    %1693 = vrot.lane.b32.xlu0 %v764, 104
    %v1694 = vpop.permute.xlu0 %1693
    %1695 = vrot.lane.b32.xlu0 %v765, 72
    %v1696 = vpop.permute.xlu0 %1695
    %1697 = vrot.lane.b32.xlu0 %v766, 72
    %v1698 = vpop.permute.xlu0 %1697
    %1699 = vrot.lane.b32.xlu0 %v767, 72
    %v1700 = vpop.permute.xlu0 %1699
    %v1702 = vsel %vm777, %v1690, 0
    %v1705 = vsel %vm777, %v1692, 0
    %v1708 = vsel %vm777, %v1694, 0
    %v1711 = vsel %vm777, %v1696, 0
    %v1714 = vsel %vm777, %v1698, 0
    %v1717 = vsel %vm777, %v1700, 0
    %1719 = vmatprep.subr.bf16.mxu0 0
    %1720 = vmatpush1.bf16.xpose.msra.mxu0 %v1711
    %1721 = vmatprep.subr.bf16.mxu0 0
    %1722 = vmatpush1.bf16.xpose.msra.mxu0 %v1714
    %1723 = vmatprep.subr.bf16.mxu0 0
    %1724 = vmatpush1.bf16.xpose.msra.mxu0 %v1717
    %1725 = vmatprep.subr.bf16.mxu0 0
    %1726 = vmatpush1.bf16.xpose.msra.mxu0 0
    %1727 = vmatprep.subr.bf16.mxu0 0
    %1728 = vmatpush1.bf16.xpose.msra.mxu0 0
    %1729 = vmatprep.subr.bf16.mxu0 0
    %1730 = vmatpush1.bf16.xpose.msra.mxu0 0
    %1731 = vmatprep.subr.bf16.mxu0 0
    %1732 = vmatpush1.bf16.xpose.msra.mxu0 0
    %1733 = vmatprep.subr.bf16.mxu0 0
    %1734 = vmatpush1.bf16.xpose.msra.mxu0 0
    %1735 = vmatprep.subr.bf16.mxu0 0
    %1736 = vmatpush1.bf16.xpose.msra.mxu0 0
    %1737 = vmatprep.subr.bf16.mxu0 0
    %1738 = vmatpush1.bf16.xpose.msra.mxu0 0
    %1739 = vmatprep.subr.bf16.mxu0 0
    %1740 = vmatpush1.bf16.xpose.msra.mxu0 0
    %1741 = vmatprep.subr.bf16.mxu0 0
    %1742 = vmatpush1.bf16.xpose.msra.mxu0 0
    %1743 = vmatprep.subr.bf16.mxu0 0
    %1744 = vmatpush1.bf16.xpose.msra.mxu0 0
    %1745 = vmatprep.subr.bf16.mxu0 0
    %1746 = vmatpush1.bf16.xpose.msra.mxu0 0
    %1747 = vmatprep.subr.bf16.mxu0 0
    %1748 = vmatpush1.bf16.xpose.msra.mxu0 0
    %1749 = vmatprep.subr.bf16.mxu0 0
    %1750 = vmatpush1.bf16.xpose.msra.mxu0 0
    %1751 = vmatprep.mubr.bf16.mxu0 0
    %1752 = vmatmul.mubr.bf16.gmra.mrb[0].mxu0 %v1702
    %v1753 = vpop.f32.mrb[0].mxu0
    %v1754 = vadd.f32 %v556, %v1753
    %v1755 = vpop.f32.mrb[0].mxu0
    %v1756 = vpop.f32.mrb[0].mxu0
    %v1757 = vadd.f32 %v557, %v1756
    %v1758 = vpop.f32.mrb[0].mxu0
    %1759 = vmatprep.mubr.bf16.mxu0 0
    %1760 = vmatmul.mubr.bf16.gmra.mrb[0].mxu0 %v1705
    %v1761 = vpop.f32.mrb[0].mxu0
    %v1762 = vadd.f32 %v558, %v1761
    %v1763 = vpop.f32.mrb[0].mxu0
    %v1764 = vpop.f32.mrb[0].mxu0
    %v1765 = vadd.f32 %v559, %v1764
    %v1766 = vpop.f32.mrb[0].mxu0
    %1767 = vmatprep.mubr.bf16.mxu0 0
    %1768 = vmatmul.mubr.bf16.gmra.mrb[0].mxu0 %v1708
    %v1769 = vpop.f32.mrb[0].mxu0
    %v1770 = vadd.f32 %v560, %v1769
    %v1771 = vpop.f32.mrb[0].mxu0
    %v1772 = vpop.f32.mrb[0].mxu0
    %v1773 = vadd.f32 %v561, %v1772
    %v1774 = vpop.f32.mrb[0].mxu0
    %1775 = vdwg.mxu0
    %v1776 = vsel %vm853, %v1754, -inf
    %1777 = vmax.xlane.f32.xlu0 %v1776
    %v1778 = vpop.xlane.xlu0 %1777
    %v1779 = vsel %vm853, %v1757, -inf
    %1780 = vmax.xlane.f32.xlu0 %v1779
    %v1781 = vpop.xlane.xlu0 %1780
    %v1782 = vsel %vm853, %v1762, -inf
    %1783 = vmax.xlane.f32.xlu0 %v1782
    %v1784 = vpop.xlane.xlu0 %1783
    %v1785 = vsel %vm853, %v1765, -inf
    %1786 = vmax.xlane.f32.xlu0 %v1785
    %v1787 = vpop.xlane.xlu0 %1786
    %v1788 = vsel %vm853, %v1770, -inf
    %1789 = vmax.xlane.f32.xlu0 %v1788
    %v1790 = vpop.xlane.xlu0 %1789
    %v1791 = vsel %vm853, %v1773, -inf
    %1792 = vmax.xlane.f32.xlu0 %v1791
    %v1793 = vpop.xlane.xlu0 %1792
    %v1794 = vsub.f32 %v1754, %v1778
    %v1795 = vsub.f32 %v1757, %v1781
    %v1796 = vsub.f32 %v1762, %v1784
    %v1797 = vsub.f32 %v1765, %v1787
    %v1798 = vsub.f32 %v1770, %v1790
    %v1799 = vsub.f32 %v1773, %v1793
    %v1800 = vmul.f32 %v1794, 1.442695
    %v1801 = vpow.pop %v1800
    %v1802 = vmul.f32 %v1795, 1.442695
    %v1803 = vpow.pop %v1802
    %v1804 = vmul.f32 %v1796, 1.442695
    %v1805 = vpow.pop %v1804
    %v1806 = vmul.f32 %v1797, 1.442695
    %v1807 = vpow.pop %v1806
    %v1808 = vmul.f32 %v1798, 1.442695
    %v1809 = vpow.pop %v1808
    %v1810 = vmul.f32 %v1799, 1.442695
    %v1811 = vpow.pop %v1810
    %v1812 = vsel %vm853, %v1801, 0.0
    %1813 = vadd.xlane.f32.xlu0 %v1812
    %v1814 = vpop.xlane.xlu0 %1813
    %v1815 = vsel %vm853, %v1803, 0.0
    %1816 = vadd.xlane.f32.xlu0 %v1815
    %v1817 = vpop.xlane.xlu0 %1816
    %v1818 = vsel %vm853, %v1805, 0.0
    %1819 = vadd.xlane.f32.xlu0 %v1818
    %v1820 = vpop.xlane.xlu0 %1819
    %v1821 = vsel %vm853, %v1807, 0.0
    %1822 = vadd.xlane.f32.xlu0 %v1821
    %v1823 = vpop.xlane.xlu0 %1822
    %v1824 = vsel %vm853, %v1809, 0.0
    %1825 = vadd.xlane.f32.xlu0 %v1824
    %v1826 = vpop.xlane.xlu0 %1825
    %v1827 = vsel %vm853, %v1811, 0.0
    %1828 = vadd.xlane.f32.xlu0 %v1827
    %v1829 = vpop.xlane.xlu0 %1828
    %v1830 = vrcp.pop %v1814
    %v1831 = vrcp.pop %v1817
    %v1832 = vrcp.pop %v1820
    %v1833 = vrcp.pop %v1823
    %v1834 = vrcp.pop %v1826
    %v1835 = vrcp.pop %v1829
    %v1836 = vmul.f32 %v1801, %v1830
    %v1837 = vmul.f32 %v1803, %v1831
    %v1838 = vmul.f32 %v1805, %v1832
    %v1839 = vmul.f32 %v1807, %v1833
    %v1840 = vmul.f32 %v1809, %v1834
    %v1841 = vmul.f32 %v1811, %v1835
    %v1842 = vpack.c.bf16 %v1837, %v1836
    %v1843 = vpack.c.bf16 %v1839, %v1838
    %v1844 = vpack.c.bf16 %v1841, %v1840
    %1845 = vrot.lane.b32.xlu0 %v765, 40
    %v1846 = vpop.permute.xlu0 %1845
    %1847 = vrot.lane.b32.xlu0 %v766, 40
    %v1848 = vpop.permute.xlu0 %1847
    %1849 = vrot.lane.b32.xlu0 %v767, 40
    %v1850 = vpop.permute.xlu0 %1849
    %v1855 = vsel %vm853, %v1842, 0
    %v1858 = vsel %vm853, %v1843, 0
    %v1861 = vsel %vm853, %v1844, 0
    %1863 = vmatprep.subr.bf16.mxu0 0
    %1864 = vmatpush1.bf16.msra.mxu0 %v1846
    %1865 = vmatprep.subr.bf16.mxu0 0
    %1866 = vmatpush1.bf16.msra.mxu0 %v1848
    %1867 = vmatprep.subr.bf16.mxu0 0
    %1868 = vmatpush1.bf16.msra.mxu0 %v1850
    %1869 = vmatprep.subr.bf16.mxu0 0
    %1870 = vmatpush1.bf16.msra.mxu0 0
    %1871 = vmatprep.subr.bf16.mxu0 0
    %1872 = vmatpush1.bf16.msra.mxu0 0
    %1873 = vmatprep.subr.bf16.mxu0 0
    %1874 = vmatpush1.bf16.msra.mxu0 0
    %1875 = vmatprep.subr.bf16.mxu0 0
    %1876 = vmatpush1.bf16.msra.mxu0 0
    %1877 = vmatprep.subr.bf16.mxu0 0
    %1878 = vmatpush1.bf16.msra.mxu0 0
    %1879 = vmatprep.subr.bf16.mxu0 0
    %1880 = vmatpush1.bf16.msra.mxu0 0
    %1881 = vmatprep.subr.bf16.mxu0 0
    %1882 = vmatpush1.bf16.msra.mxu0 0
    %1883 = vmatprep.subr.bf16.mxu0 0
    %1884 = vmatpush1.bf16.msra.mxu0 0
    %1885 = vmatprep.subr.bf16.mxu0 0
    %1886 = vmatpush1.bf16.msra.mxu0 0
    %1887 = vmatprep.subr.bf16.mxu0 0
    %1888 = vmatpush1.bf16.msra.mxu0 0
    %1889 = vmatprep.subr.bf16.mxu0 0
    %1890 = vmatpush1.bf16.msra.mxu0 0
    %1891 = vmatprep.subr.bf16.mxu0 0
    %1892 = vmatpush1.bf16.msra.mxu0 0
    %1893 = vmatprep.subr.bf16.mxu0 0
    %1894 = vmatpush1.bf16.msra.mxu0 0
    %1895 = vmatprep.mubr.bf16.mxu0 0
    %1896 = vmatmul.mubr.bf16.gmra.mrb[0].mxu0 %v1855
    %v1897 = vpop.f32.mrb[0].mxu0
    %v1898 = vadd.f32 0.0, %v1897
    %v1899 = vpop.f32.mrb[0].mxu0
    %v1900 = vpop.f32.mrb[0].mxu0
    %v1901 = vadd.f32 0.0, %v1900
    %v1902 = vpop.f32.mrb[0].mxu0
    %1903 = vmatprep.mubr.bf16.mxu0 0
    %1904 = vmatmul.mubr.bf16.gmra.mrb[0].mxu0 %v1858
    %v1905 = vpop.f32.mrb[0].mxu0
    %v1906 = vadd.f32 0.0, %v1905
    %v1907 = vpop.f32.mrb[0].mxu0
    %v1908 = vpop.f32.mrb[0].mxu0
    %v1909 = vadd.f32 0.0, %v1908
    %v1910 = vpop.f32.mrb[0].mxu0
    %1911 = vmatprep.mubr.bf16.mxu0 0
    %1912 = vmatmul.mubr.bf16.gmra.mrb[0].mxu0 %v1861
    %v1913 = vpop.f32.mrb[0].mxu0
    %v1914 = vadd.f32 0.0, %v1913
    %v1915 = vpop.f32.mrb[0].mxu0
    %v1916 = vpop.f32.mrb[0].mxu0
    %v1917 = vadd.f32 0.0, %v1916
    %v1918 = vpop.f32.mrb[0].mxu0
    %1919 = vdwg.mxu0
    %v1920 = vpack.c.bf16 %v1901, %v1898
    %v1921 = vpack.c.bf16 %v1909, %v1906
    %v1922 = vpack.c.bf16 %v1917, %v1914
    %v1923 = vpack.c.bf16 %v755, %v755
    %v1925 = vsel %vm777, %v1920, 0
    %v1928 = vsel %vm777, %v1921, 0
    %v1931 = vsel %vm777, %v1922, 0
    %v1934 = vsel %vm1249, %v1923, 0
    %1936 = vmatprep.subr.bf16.mxu0 0
    %1937 = vmatpush1.bf16.msra.mxu0 %v1934
    %1938 = vmatprep.subr.bf16.mxu0 0
    %1939 = vmatpush1.bf16.msra.mxu0 0
    %1940 = vmatprep.subr.bf16.mxu0 0
    %1941 = vmatpush1.bf16.msra.mxu0 0
    %1942 = vmatprep.subr.bf16.mxu0 0
    %1943 = vmatpush1.bf16.msra.mxu0 0
    %1944 = vmatprep.subr.bf16.mxu0 0
    %1945 = vmatpush1.bf16.msra.mxu0 0
    %1946 = vmatprep.subr.bf16.mxu0 0
    %1947 = vmatpush1.bf16.msra.mxu0 0
    %1948 = vmatprep.subr.bf16.mxu0 0
    %1949 = vmatpush1.bf16.msra.mxu0 0
    %1950 = vmatprep.subr.bf16.mxu0 0
    %1951 = vmatpush1.bf16.msra.mxu0 0
    %1952 = vmatprep.subr.bf16.mxu0 0
    %1953 = vmatpush1.bf16.msra.mxu0 0
    %1954 = vmatprep.subr.bf16.mxu0 0
    %1955 = vmatpush1.bf16.msra.mxu0 0
    %1956 = vmatprep.subr.bf16.mxu0 0
    %1957 = vmatpush1.bf16.msra.mxu0 0
    %1958 = vmatprep.subr.bf16.mxu0 0
    %1959 = vmatpush1.bf16.msra.mxu0 0
    %1960 = vmatprep.subr.bf16.mxu0 0
    %1961 = vmatpush1.bf16.msra.mxu0 0
    %1962 = vmatprep.subr.bf16.mxu0 0
    %1963 = vmatpush1.bf16.msra.mxu0 0
    %1964 = vmatprep.subr.bf16.mxu0 0
    %1965 = vmatpush1.bf16.msra.mxu0 0
    %1966 = vmatprep.subr.bf16.mxu0 0
    %1967 = vmatpush1.bf16.msra.mxu0 0
    %1968 = vmatprep.mubr.bf16.mxu0 0
    %1969 = vmatmul.mubr.bf16.gmra.mrb[0].mxu0 %v1925
    %v1970 = vpop.f32.mrb[0].mxu0
    %v1971 = vadd.f32 0.0, %v1970
    %v1972 = vpop.f32.mrb[0].mxu0
    %v1973 = vpop.f32.mrb[0].mxu0
    %v1974 = vadd.f32 0.0, %v1973
    %v1975 = vpop.f32.mrb[0].mxu0
    %1976 = vmatprep.mubr.bf16.mxu0 0
    %1977 = vmatmul.mubr.bf16.gmra.mrb[0].mxu0 %v1928
    %v1978 = vpop.f32.mrb[0].mxu0
    %v1979 = vadd.f32 0.0, %v1978
    %v1980 = vpop.f32.mrb[0].mxu0
    %v1981 = vpop.f32.mrb[0].mxu0
    %v1982 = vadd.f32 0.0, %v1981
    %v1983 = vpop.f32.mrb[0].mxu0
    %1984 = vmatprep.mubr.bf16.mxu0 0
    %1985 = vmatmul.mubr.bf16.gmra.mrb[0].mxu0 %v1931
    %v1986 = vpop.f32.mrb[0].mxu0
    %v1987 = vadd.f32 0.0, %v1986
    %v1988 = vpop.f32.mrb[0].mxu0
    %v1989 = vpop.f32.mrb[0].mxu0
    %v1990 = vadd.f32 0.0, %v1989
    %v1991 = vpop.f32.mrb[0].mxu0
    %1992 = vdwg.mxu0
    %v1993 = vadd.f32 %v1683, %v1971
    %v1994 = vadd.f32 %v1684, %v1974
    %v1995 = vadd.f32 %v1685, %v1979
    %v1996 = vadd.f32 %v1686, %v1982
    %v1997 = vadd.f32 %v1687, %v1987
    %v1998 = vadd.f32 %v1688, %v1990
    %v1999 = vld [vmem:[%s33] sm:$0x1]
    %v2001 = vlaneseq
    %v2002 = vshrl.u32 %v2001, 7
    %v2003 = vsub.s32 0, %v2002
    %v2004 = vrot.slane %v1999, %v2003
    %v2006 = vadd.f32 %v1993, %v2004
    %v2007 = vadd.f32 %v1994, %v2004
    %v2008 = vadd.f32 %v1995, %v2004
    %v2009 = vadd.f32 %v1996, %v2004
    %v2010 = vadd.f32 %v1997, %v2004
    %v2011 = vadd.f32 %v1998, %v2004
    %2013 = vset.pattern.permute.xlu0 0
    %2014 = vperm.xlu0 %2013, %v562
    %v2015 = vpop.permute.xlu0 %2014
    %2018 = vset.pattern.permute.xlu0 0
    %2019 = vperm.xlu0 %2018, %v563
    %v2020 = vpop.permute.xlu0 %2019
    %2023 = vset.pattern.permute.xlu0 0
    %2024 = vperm.xlu0 %2023, %v564
    %v2025 = vpop.permute.xlu0 %2024
    %2028 = vset.pattern.permute.xlu0 0
    %2029 = vperm.xlu0 %2028, %v565
    %v2030 = vpop.permute.xlu0 %2029
    %2033 = vset.pattern.permute.xlu0 0
    %2034 = vperm.xlu0 %2033, %v566
    %v2035 = vpop.permute.xlu0 %2034
    %2038 = vset.pattern.permute.xlu0 0
    %2039 = vperm.xlu0 %2038, %v567
    %v2040 = vpop.permute.xlu0 %2039
    %v2042 = vmul.f32 %v2006, %v2015
    %v2043 = vmul.f32 %v2007, %v2020
    %v2044 = vmul.f32 %v2008, %v2025
    %v2045 = vmul.f32 %v2009, %v2030
    %v2046 = vmul.f32 %v2010, %v2035
    %v2047 = vmul.f32 %v2011, %v2040
    %v2048 = vadd.f32 %v637, %v2042
    %v2049 = vadd.f32 %v640, %v2043
    %v2050 = vadd.f32 %v645, %v2044
    %v2051 = vadd.f32 %v648, %v2045
    %v2052 = vadd.f32 %v653, %v2046
    %v2053 = vadd.f32 %v656, %v2047
    %v2054 = vld [vmem:[%s35] sm:$0x1]
    %v2055 = vld [vmem:[#allocation6] sm:$0x1]
    %v2056 = vsel %vm685, %v2048, 0.0
    %2057 = vadd.xlane.f32.xlu0 %v2056
    %v2058 = vpop.xlane.xlu0 %2057
    %v2059 = vsel %vm685, %v2049, 0.0
    %2060 = vadd.xlane.f32.xlu0 %v2059
    %v2061 = vpop.xlane.xlu0 %2060
    %v2062 = vsel %vm685, %v2050, 0.0
    %2063 = vadd.xlane.f32.xlu0 %v2062
    %v2064 = vpop.xlane.xlu0 %2063
    %v2065 = vsel %vm685, %v2051, 0.0
    %2066 = vadd.xlane.f32.xlu0 %v2065
    %v2067 = vpop.xlane.xlu0 %2066
    %v2068 = vsel %vm685, %v2052, 0.0
    %2069 = vadd.xlane.f32.xlu0 %v2068
    %v2070 = vpop.xlane.xlu0 %2069
    %v2071 = vsel %vm685, %v2053, 0.0
    %2072 = vadd.xlane.f32.xlu0 %v2071
    %v2073 = vpop.xlane.xlu0 %2072
    %v2074 = vrcp.pop 32.0
    %v2075 = vmul.f32 %v2058, %v2074
    %v2076 = vmul.f32 %v2061, %v2074
    %v2077 = vmul.f32 %v2064, %v2074
    %v2078 = vmul.f32 %v2067, %v2074
    %v2079 = vmul.f32 %v2070, %v2074
    %v2080 = vmul.f32 %v2073, %v2074
    %v2081 = vsub.f32 %v2048, %v2075
    %v2082 = vsub.f32 %v2049, %v2076
    %v2083 = vsub.f32 %v2050, %v2077
    %v2084 = vsub.f32 %v2051, %v2078
    %v2085 = vsub.f32 %v2052, %v2079
    %v2086 = vsub.f32 %v2053, %v2080
    %v2087 = vmul.f32 %v2081, %v2081
    %v2088 = vmul.f32 %v2082, %v2082
    %v2089 = vmul.f32 %v2083, %v2083
    %v2090 = vmul.f32 %v2084, %v2084
    %v2091 = vmul.f32 %v2085, %v2085
    %v2092 = vmul.f32 %v2086, %v2086
    %v2093 = vsel %vm685, %v2087, 0.0
    %2094 = vadd.xlane.f32.xlu0 %v2093
    %v2095 = vpop.xlane.xlu0 %2094
    %v2096 = vsel %vm685, %v2088, 0.0
    %2097 = vadd.xlane.f32.xlu0 %v2096
    %v2098 = vpop.xlane.xlu0 %2097
    %v2099 = vsel %vm685, %v2089, 0.0
    %2100 = vadd.xlane.f32.xlu0 %v2099
    %v2101 = vpop.xlane.xlu0 %2100
    %v2102 = vsel %vm685, %v2090, 0.0
    %2103 = vadd.xlane.f32.xlu0 %v2102
    %v2104 = vpop.xlane.xlu0 %2103
    %v2105 = vsel %vm685, %v2091, 0.0
    %2106 = vadd.xlane.f32.xlu0 %v2105
    %v2107 = vpop.xlane.xlu0 %2106
    %v2108 = vsel %vm685, %v2092, 0.0
    %2109 = vadd.xlane.f32.xlu0 %v2108
    %v2110 = vpop.xlane.xlu0 %2109
    %v2111 = vmul.f32 %v2095, %v2074
    %v2112 = vmul.f32 %v2098, %v2074
    %v2113 = vmul.f32 %v2101, %v2074
    %v2114 = vmul.f32 %v2104, %v2074
    %v2115 = vmul.f32 %v2107, %v2074
    %v2116 = vmul.f32 %v2110, %v2074
    %v2117 = vadd.f32 %v2111, 1e-05
    %v2118 = vadd.f32 %v2112, 1e-05
    %v2119 = vadd.f32 %v2113, 1e-05
    %v2120 = vadd.f32 %v2114, 1e-05
    %v2121 = vadd.f32 %v2115, 1e-05
    %v2122 = vadd.f32 %v2116, 1e-05
    %v2123 = vrsqrt.pop %v2117
    %v2124 = vrsqrt.pop %v2118
    %v2125 = vrsqrt.pop %v2119
    %v2126 = vrsqrt.pop %v2120
    %v2127 = vrsqrt.pop %v2121
    %v2128 = vrsqrt.pop %v2122
    %v2129 = vmul.f32 %v2081, %v2123
    %v2130 = vmul.f32 %v2082, %v2124
    %v2131 = vmul.f32 %v2083, %v2125
    %v2132 = vmul.f32 %v2084, %v2126
    %v2133 = vmul.f32 %v2085, %v2127
    %v2134 = vmul.f32 %v2086, %v2128
    %v2136 = vlaneseq
    %v2137 = vshrl.u32 %v2136, 7
    %v2138 = vsub.s32 0, %v2137
    %v2139 = vrot.slane %v2054, %v2138
    %v2141 = vmul.f32 %v2129, %v2139
    %v2142 = vmul.f32 %v2130, %v2139
    %v2143 = vmul.f32 %v2131, %v2139
    %v2144 = vmul.f32 %v2132, %v2139
    %v2145 = vmul.f32 %v2133, %v2139
    %v2146 = vmul.f32 %v2134, %v2139
    %v2148 = vlaneseq
    %v2149 = vshrl.u32 %v2148, 7
    %v2150 = vsub.s32 0, %v2149
    %v2151 = vrot.slane %v2055, %v2150
    %v2153 = vadd.f32 %v2141, %v2151
    %v2154 = vadd.f32 %v2142, %v2151
    %v2155 = vadd.f32 %v2143, %v2151
    %v2156 = vadd.f32 %v2144, %v2151
    %v2157 = vadd.f32 %v2145, %v2151
    %v2158 = vadd.f32 %v2146, %v2151
    %v2159 = vld [vmem:[%s39] sm:$0xf]
    %v2160 = vld [vmem:[%s39 + $0x4] sm:$0xf]
    %v2161 = vld [vmem:[%s39 + $0x8] sm:$0xf]
    %v2162 = vld [vmem:[%s39 + $0xc] sm:$0xf]
    %v2163 = vpack.c.bf16 %v2154, %v2153
    %v2164 = vpack.c.bf16 %v2156, %v2155
    %v2165 = vpack.c.bf16 %v2158, %v2157
    %v2166 = vld [vmem:[#allocation8] sm:$0x1]
    %v2168 = vlaneseq
    %v2169 = vshrl.u32 %v2168, 7
    %v2170 = vsub.s32 0, %v2169
    %v2171 = vrot.slane %v2166, %v2170
    %v2177 = vunpack.c.l.b16 %v2159
    %v2178 = vunpack.c.l.b16 %v2160
    %v2179 = vunpack.c.l.b16 %v2161
    %v2180 = vunpack.c.l.b16 %v2162
    %v2181 = vpack.c.b16 %v2178, %v2177
    %v2182 = vpack.c.b16 %v2180, %v2179
    %v2186 = vsel %vm685, %v2163, 0
    %v2189 = vsel %vm685, %v2164, 0
    %v2192 = vsel %vm685, %v2165, 0
    %2194 = vmatprep.subr.bf16.mxu0 0
    %2195 = vmatpush1.bf16.msra.mxu0 %v2181
    %2196 = vmatprep.subr.bf16.mxu0 0
    %2197 = vmatpush1.bf16.msra.mxu0 %v2182
    %2198 = vmatprep.subr.bf16.mxu0 0
    %2199 = vmatpush1.bf16.msra.mxu0 0
    %2200 = vmatprep.subr.bf16.mxu0 0
    %2201 = vmatpush1.bf16.msra.mxu0 0
    %2202 = vmatprep.subr.bf16.mxu0 0
    %2203 = vmatpush1.bf16.msra.mxu0 0
    %2204 = vmatprep.subr.bf16.mxu0 0
    %2205 = vmatpush1.bf16.msra.mxu0 0
    %2206 = vmatprep.subr.bf16.mxu0 0
    %2207 = vmatpush1.bf16.msra.mxu0 0
    %2208 = vmatprep.subr.bf16.mxu0 0
    %2209 = vmatpush1.bf16.msra.mxu0 0
    %2210 = vmatprep.subr.bf16.mxu0 0
    %2211 = vmatpush1.bf16.msra.mxu0 0
    %2212 = vmatprep.subr.bf16.mxu0 0
    %2213 = vmatpush1.bf16.msra.mxu0 0
    %2214 = vmatprep.subr.bf16.mxu0 0
    %2215 = vmatpush1.bf16.msra.mxu0 0
    %2216 = vmatprep.subr.bf16.mxu0 0
    %2217 = vmatpush1.bf16.msra.mxu0 0
    %2218 = vmatprep.subr.bf16.mxu0 0
    %2219 = vmatpush1.bf16.msra.mxu0 0
    %2220 = vmatprep.subr.bf16.mxu0 0
    %2221 = vmatpush1.bf16.msra.mxu0 0
    %2222 = vmatprep.subr.bf16.mxu0 0
    %2223 = vmatpush1.bf16.msra.mxu0 0
    %2224 = vmatprep.subr.bf16.mxu0 0
    %2225 = vmatpush1.bf16.msra.mxu0 0
    %2226 = vmatprep.mubr.bf16.mxu0 0
    %2227 = vmatmul.mubr.bf16.gmra.mrb[0].mxu0 %v2186
    %v2228 = vpop.f32.mrb[0].mxu0
    %v2229 = vadd.f32 %v2171, %v2228
    %v2230 = vpop.f32.mrb[0].mxu0
    %v2231 = vpop.f32.mrb[0].mxu0
    %v2232 = vadd.f32 %v2171, %v2231
    %v2233 = vpop.f32.mrb[0].mxu0
    %2234 = vmatprep.mubr.bf16.mxu0 0
    %2235 = vmatmul.mubr.bf16.gmra.mrb[0].mxu0 %v2189
    %v2236 = vpop.f32.mrb[0].mxu0
    %v2237 = vadd.f32 %v2171, %v2236
    %v2238 = vpop.f32.mrb[0].mxu0
    %v2239 = vpop.f32.mrb[0].mxu0
    %v2240 = vadd.f32 %v2171, %v2239
    %v2241 = vpop.f32.mrb[0].mxu0
    %2242 = vmatprep.mubr.bf16.mxu0 0
    %2243 = vmatmul.mubr.bf16.gmra.mrb[0].mxu0 %v2192
    %v2244 = vpop.f32.mrb[0].mxu0
    %v2245 = vadd.f32 %v2171, %v2244
    %v2246 = vpop.f32.mrb[0].mxu0
    %v2247 = vpop.f32.mrb[0].mxu0
    %v2248 = vadd.f32 %v2171, %v2247
    %v2249 = vpop.f32.mrb[0].mxu0
    %2250 = vdwg.mxu0
    %v2251 = vmax.f32 %v2229, 0.0
    %v2252 = vmax.f32 %v2232, 0.0
    %v2253 = vmax.f32 %v2237, 0.0
    %v2254 = vmax.f32 %v2240, 0.0
    %v2255 = vmax.f32 %v2245, 0.0
    %v2256 = vmax.f32 %v2248, 0.0
    %v2257 = vld [vmem:[%s43] sm:$0xf]
    %v2258 = vld [vmem:[%s43 + $0x4] sm:$0xf]
    %v2259 = vld [vmem:[%s43 + $0x8] sm:$0xf]
    %v2260 = vld [vmem:[%s43 + $0xc] sm:$0xf]
    %v2261 = vpack.c.bf16 %v2252, %v2251
    %v2262 = vpack.c.bf16 %v2254, %v2253
    %v2263 = vpack.c.bf16 %v2256, %v2255
    %v2264 = vld [vmem:[#allocation9] sm:$0x1]
    %v2266 = vlaneseq
    %v2267 = vshrl.u32 %v2266, 7
    %v2268 = vsub.s32 0, %v2267
    %v2269 = vrot.slane %v2264, %v2268
    %v2275 = vunpack.c.l.b16 %v2257
    %v2276 = vunpack.c.l.b16 %v2258
    %v2277 = vunpack.c.l.b16 %v2259
    %v2278 = vunpack.c.l.b16 %v2260
    %v2279 = vpack.c.b16 %v2276, %v2275
    %v2280 = vpack.c.b16 %v2278, %v2277
    %v2284 = vsel %vm685, %v2261, 0
    %v2287 = vsel %vm685, %v2262, 0
    %v2290 = vsel %vm685, %v2263, 0
    %2292 = vmatprep.subr.bf16.mxu0 0
    %2293 = vmatpush1.bf16.msra.mxu0 %v2279
    %2294 = vmatprep.subr.bf16.mxu0 0
    %2295 = vmatpush1.bf16.msra.mxu0 %v2280
    %2296 = vmatprep.subr.bf16.mxu0 0
    %2297 = vmatpush1.bf16.msra.mxu0 0
    %2298 = vmatprep.subr.bf16.mxu0 0
    %2299 = vmatpush1.bf16.msra.mxu0 0
    %2300 = vmatprep.subr.bf16.mxu0 0
    %2301 = vmatpush1.bf16.msra.mxu0 0
    %2302 = vmatprep.subr.bf16.mxu0 0
    %2303 = vmatpush1.bf16.msra.mxu0 0
    %2304 = vmatprep.subr.bf16.mxu0 0
    %2305 = vmatpush1.bf16.msra.mxu0 0
    %2306 = vmatprep.subr.bf16.mxu0 0
    %2307 = vmatpush1.bf16.msra.mxu0 0
    %2308 = vmatprep.subr.bf16.mxu0 0
    %2309 = vmatpush1.bf16.msra.mxu0 0
    %2310 = vmatprep.subr.bf16.mxu0 0
    %2311 = vmatpush1.bf16.msra.mxu0 0
    %2312 = vmatprep.subr.bf16.mxu0 0
    %2313 = vmatpush1.bf16.msra.mxu0 0
    %2314 = vmatprep.subr.bf16.mxu0 0
    %2315 = vmatpush1.bf16.msra.mxu0 0
    %2316 = vmatprep.subr.bf16.mxu0 0
    %2317 = vmatpush1.bf16.msra.mxu0 0
    %2318 = vmatprep.subr.bf16.mxu0 0
    %2319 = vmatpush1.bf16.msra.mxu0 0
    %2320 = vmatprep.subr.bf16.mxu0 0
    %2321 = vmatpush1.bf16.msra.mxu0 0
    %2322 = vmatprep.subr.bf16.mxu0 0
    %2323 = vmatpush1.bf16.msra.mxu0 0
    %2324 = vmatprep.mubr.bf16.mxu0 0
    %2325 = vmatmul.mubr.bf16.gmra.mrb[0].mxu0 %v2284
    %v2326 = vpop.f32.mrb[0].mxu0
    %v2327 = vadd.f32 %v2269, %v2326
    %v2328 = vpop.f32.mrb[0].mxu0
    %v2329 = vpop.f32.mrb[0].mxu0
    %v2330 = vadd.f32 %v2269, %v2329
    %v2331 = vpop.f32.mrb[0].mxu0
    %2332 = vmatprep.mubr.bf16.mxu0 0
    %2333 = vmatmul.mubr.bf16.gmra.mrb[0].mxu0 %v2287
    %v2334 = vpop.f32.mrb[0].mxu0
    %v2335 = vadd.f32 %v2269, %v2334
    %v2336 = vpop.f32.mrb[0].mxu0
    %v2337 = vpop.f32.mrb[0].mxu0
    %v2338 = vadd.f32 %v2269, %v2337
    %v2339 = vpop.f32.mrb[0].mxu0
    %2340 = vmatprep.mubr.bf16.mxu0 0
    %2341 = vmatmul.mubr.bf16.gmra.mrb[0].mxu0 %v2290
    %v2342 = vpop.f32.mrb[0].mxu0
    %v2343 = vadd.f32 %v2269, %v2342
    %v2344 = vpop.f32.mrb[0].mxu0
    %v2345 = vpop.f32.mrb[0].mxu0
    %v2346 = vadd.f32 %v2269, %v2345
    %v2347 = vpop.f32.mrb[0].mxu0
    %2348 = vdwg.mxu0
    %v2349 = vadd.f32 %v2153, %v2327
    %v2350 = vadd.f32 %v2154, %v2330
    %v2351 = vadd.f32 %v2155, %v2335
    %v2352 = vadd.f32 %v2156, %v2338
    %v2353 = vadd.f32 %v2157, %v2343
    %v2354 = vadd.f32 %v2158, %v2346
    %v2355 = vld [vmem:[#allocation11] sm:$0x1]
    %v2356 = vld [vmem:[#allocation12] sm:$0x1]
    %v2357 = vsel %vm685, %v2349, 0.0
    %2358 = vadd.xlane.f32.xlu0 %v2357
    %v2359 = vpop.xlane.xlu0 %2358
    %v2360 = vsel %vm685, %v2350, 0.0
    %2361 = vadd.xlane.f32.xlu0 %v2360
    %v2362 = vpop.xlane.xlu0 %2361
    %v2363 = vsel %vm685, %v2351, 0.0
    %2364 = vadd.xlane.f32.xlu0 %v2363
    %v2365 = vpop.xlane.xlu0 %2364
    %v2366 = vsel %vm685, %v2352, 0.0
    %2367 = vadd.xlane.f32.xlu0 %v2366
    %v2368 = vpop.xlane.xlu0 %2367
    %v2369 = vsel %vm685, %v2353, 0.0
    %2370 = vadd.xlane.f32.xlu0 %v2369
    %v2371 = vpop.xlane.xlu0 %2370
    %v2372 = vsel %vm685, %v2354, 0.0
    %2373 = vadd.xlane.f32.xlu0 %v2372
    %v2374 = vpop.xlane.xlu0 %2373
    %v2375 = vmul.f32 %v2359, %v2074
    %v2376 = vmul.f32 %v2362, %v2074
    %v2377 = vmul.f32 %v2365, %v2074
    %v2378 = vmul.f32 %v2368, %v2074
    %v2379 = vmul.f32 %v2371, %v2074
    %v2380 = vmul.f32 %v2374, %v2074
    %v2381 = vsub.f32 %v2349, %v2375
    %v2382 = vsub.f32 %v2350, %v2376
    %v2383 = vsub.f32 %v2351, %v2377
    %v2384 = vsub.f32 %v2352, %v2378
    %v2385 = vsub.f32 %v2353, %v2379
    %v2386 = vsub.f32 %v2354, %v2380
    %v2387 = vmul.f32 %v2381, %v2381
    %v2388 = vmul.f32 %v2382, %v2382
    %v2389 = vmul.f32 %v2383, %v2383
    %v2390 = vmul.f32 %v2384, %v2384
    %v2391 = vmul.f32 %v2385, %v2385
    %v2392 = vmul.f32 %v2386, %v2386
    %v2393 = vsel %vm685, %v2387, 0.0
    %2394 = vadd.xlane.f32.xlu0 %v2393
    %v2395 = vpop.xlane.xlu0 %2394
    %v2396 = vsel %vm685, %v2388, 0.0
    %2397 = vadd.xlane.f32.xlu0 %v2396
    %v2398 = vpop.xlane.xlu0 %2397
    %v2399 = vsel %vm685, %v2389, 0.0
    %2400 = vadd.xlane.f32.xlu0 %v2399
    %v2401 = vpop.xlane.xlu0 %2400
    %v2402 = vsel %vm685, %v2390, 0.0
    %2403 = vadd.xlane.f32.xlu0 %v2402
    %v2404 = vpop.xlane.xlu0 %2403
    %v2405 = vsel %vm685, %v2391, 0.0
    %2406 = vadd.xlane.f32.xlu0 %v2405
    %v2407 = vpop.xlane.xlu0 %2406
    %v2408 = vsel %vm685, %v2392, 0.0
    %2409 = vadd.xlane.f32.xlu0 %v2408
    %v2410 = vpop.xlane.xlu0 %2409
    %v2411 = vmul.f32 %v2395, %v2074
    %v2412 = vmul.f32 %v2398, %v2074
    %v2413 = vmul.f32 %v2401, %v2074
    %v2414 = vmul.f32 %v2404, %v2074
    %v2415 = vmul.f32 %v2407, %v2074
    %v2416 = vmul.f32 %v2410, %v2074
    %v2417 = vadd.f32 %v2411, 1e-05
    %v2418 = vadd.f32 %v2412, 1e-05
    %v2419 = vadd.f32 %v2413, 1e-05
    %v2420 = vadd.f32 %v2414, 1e-05
    %v2421 = vadd.f32 %v2415, 1e-05
    %v2422 = vadd.f32 %v2416, 1e-05
    %v2423 = vrsqrt.pop %v2417
    %v2424 = vrsqrt.pop %v2418
    %v2425 = vrsqrt.pop %v2419
    %v2426 = vrsqrt.pop %v2420
    %v2427 = vrsqrt.pop %v2421
    %v2428 = vrsqrt.pop %v2422
    %v2429 = vmul.f32 %v2381, %v2423
    %v2430 = vmul.f32 %v2382, %v2424
    %v2431 = vmul.f32 %v2383, %v2425
    %v2432 = vmul.f32 %v2384, %v2426
    %v2433 = vmul.f32 %v2385, %v2427
    %v2434 = vmul.f32 %v2386, %v2428
    %v2436 = vlaneseq
    %v2437 = vshrl.u32 %v2436, 7
    %v2438 = vsub.s32 0, %v2437
    %v2439 = vrot.slane %v2355, %v2438
    %v2441 = vmul.f32 %v2429, %v2439
    %v2442 = vmul.f32 %v2430, %v2439
    %v2443 = vmul.f32 %v2431, %v2439
    %v2444 = vmul.f32 %v2432, %v2439
    %v2445 = vmul.f32 %v2433, %v2439
    %v2446 = vmul.f32 %v2434, %v2439
    %v2448 = vlaneseq
    %v2449 = vshrl.u32 %v2448, 7
    %v2450 = vsub.s32 0, %v2449
    %v2451 = vrot.slane %v2356, %v2450
    %v2453 = vadd.f32 %v2441, %v2451
    %v2454 = vadd.f32 %v2442, %v2451
    %v2455 = vadd.f32 %v2443, %v2451
    %v2456 = vadd.f32 %v2444, %v2451
    %v2457 = vadd.f32 %v2445, %v2451
    %v2458 = vadd.f32 %v2446, %v2451
    %s2459 = scalar_lea.vmem %s27, 16
    %v2460 = vld [vmem:[%s2459] sm:$0xf]
    %v2461 = vld [vmem:[%s2459 + $0x4] sm:$0xf]
    %v2462 = vld [vmem:[%s2459 + $0x8] sm:$0xf]
    %v2463 = vld [vmem:[%s2459 + $0xc] sm:$0xf]
    %v2464 = vpack.c.bf16 %v2454, %v2453
    %v2465 = vpack.c.bf16 %v2456, %v2455
    %v2466 = vpack.c.bf16 %v2458, %v2457
    %s2467 = scalar_lea.vmem %s29, 1
    %v2468 = vld [vmem:[%s2467] sm:$0x1]
    %v2470 = vlaneseq
    %v2471 = vshrl.u32 %v2470, 7
    %v2472 = vsub.s32 0, %v2471
    %v2473 = vrot.slane %v2468, %v2472
    %v2479 = vunpack.c.l.b16 %v2460
    %v2480 = vunpack.c.l.b16 %v2461
    %v2481 = vunpack.c.l.b16 %v2462
    %v2482 = vunpack.c.l.b16 %v2463
    %v2483 = vpack.c.b16 %v2480, %v2479
    %v2484 = vpack.c.b16 %v2482, %v2481
    %v2488 = vsel %vm685, %v2464, 0
    %v2491 = vsel %vm685, %v2465, 0
    %v2494 = vsel %vm685, %v2466, 0
    %2496 = vmatprep.subr.bf16.mxu0 0
    %2497 = vmatpush1.bf16.msra.mxu0 %v2483
    %2498 = vmatprep.subr.bf16.mxu0 0
    %2499 = vmatpush1.bf16.msra.mxu0 %v2484
    %2500 = vmatprep.subr.bf16.mxu0 0
    %2501 = vmatpush1.bf16.msra.mxu0 0
    %2502 = vmatprep.subr.bf16.mxu0 0
    %2503 = vmatpush1.bf16.msra.mxu0 0
    %2504 = vmatprep.subr.bf16.mxu0 0
    %2505 = vmatpush1.bf16.msra.mxu0 0
    %2506 = vmatprep.subr.bf16.mxu0 0
    %2507 = vmatpush1.bf16.msra.mxu0 0
    %2508 = vmatprep.subr.bf16.mxu0 0
    %2509 = vmatpush1.bf16.msra.mxu0 0
    %2510 = vmatprep.subr.bf16.mxu0 0
    %2511 = vmatpush1.bf16.msra.mxu0 0
    %2512 = vmatprep.subr.bf16.mxu0 0
    %2513 = vmatpush1.bf16.msra.mxu0 0
    %2514 = vmatprep.subr.bf16.mxu0 0
    %2515 = vmatpush1.bf16.msra.mxu0 0
    %2516 = vmatprep.subr.bf16.mxu0 0
    %2517 = vmatpush1.bf16.msra.mxu0 0
    %2518 = vmatprep.subr.bf16.mxu0 0
    %2519 = vmatpush1.bf16.msra.mxu0 0
    %2520 = vmatprep.subr.bf16.mxu0 0
    %2521 = vmatpush1.bf16.msra.mxu0 0
    %2522 = vmatprep.subr.bf16.mxu0 0
    %2523 = vmatpush1.bf16.msra.mxu0 0
    %2524 = vmatprep.subr.bf16.mxu0 0
    %2525 = vmatpush1.bf16.msra.mxu0 0
    %2526 = vmatprep.subr.bf16.mxu0 0
    %2527 = vmatpush1.bf16.msra.mxu0 0
    %2528 = vmatprep.mubr.bf16.mxu0 0
    %2529 = vmatmul.mubr.bf16.gmra.mrb[0].mxu0 %v2488
    %v2530 = vpop.f32.mrb[0].mxu0
    %v2531 = vadd.f32 %v2473, %v2530
    %v2532 = vpop.f32.mrb[0].mxu0
    %v2533 = vpop.f32.mrb[0].mxu0
    %v2534 = vadd.f32 %v2473, %v2533
    %v2535 = vpop.f32.mrb[0].mxu0
    %2536 = vmatprep.mubr.bf16.mxu0 0
    %2537 = vmatmul.mubr.bf16.gmra.mrb[0].mxu0 %v2491
    %v2538 = vpop.f32.mrb[0].mxu0
    %v2539 = vadd.f32 %v2473, %v2538
    %v2540 = vpop.f32.mrb[0].mxu0
    %v2541 = vpop.f32.mrb[0].mxu0
    %v2542 = vadd.f32 %v2473, %v2541
    %v2543 = vpop.f32.mrb[0].mxu0
    %2544 = vmatprep.mubr.bf16.mxu0 0
    %2545 = vmatmul.mubr.bf16.gmra.mrb[0].mxu0 %v2494
    %v2546 = vpop.f32.mrb[0].mxu0
    %v2547 = vadd.f32 %v2473, %v2546
    %v2548 = vpop.f32.mrb[0].mxu0
    %v2549 = vpop.f32.mrb[0].mxu0
    %v2550 = vadd.f32 %v2473, %v2549
    %v2551 = vpop.f32.mrb[0].mxu0
    %2552 = vdwg.mxu0
    %s2553 = scalar_lea.vmem %s31, 32
    %v2554 = vld [vmem:[%s2553] sm:$0xff]
    %v2555 = vld [vmem:[%s2553 + $0x8] sm:$0xff]
    %v2556 = vld [vmem:[%s2553 + $0x10] sm:$0xff]
    %v2557 = vld [vmem:[%s2553 + $0x18] sm:$0xff]
    %v2558 = vmul.f32 %v2531, 0.35355338
    %v2559 = vmul.f32 %v2534, 0.35355338
    %v2560 = vmul.f32 %v2539, 0.35355338
    %v2561 = vmul.f32 %v2542, 0.35355338
    %v2562 = vmul.f32 %v2547, 0.35355338
    %v2563 = vmul.f32 %v2550, 0.35355338
    %v2564 = vpack.c.bf16 %v2559, %v2558
    %v2565 = vpack.c.bf16 %v2561, %v2560
    %v2566 = vpack.c.bf16 %v2563, %v2562
    %v2567 = vpack.c.bf16 %v2534, %v2531
    %v2568 = vpack.c.bf16 %v2542, %v2539
    %v2569 = vpack.c.bf16 %v2550, %v2547
    %2573 = vrot.lane.b32.xlu0 %v2567, 96
    %v2574 = vpop.permute.xlu0 %2573
    %2575 = vrot.lane.b32.xlu0 %v2568, 96
    %v2576 = vpop.permute.xlu0 %2575
    %2577 = vrot.lane.b32.xlu0 %v2569, 96
    %v2578 = vpop.permute.xlu0 %2577
    %v2580 = vsel %vm777, %v2564, 0
    %v2583 = vsel %vm777, %v2565, 0
    %v2586 = vsel %vm777, %v2566, 0
    %v2589 = vsel %vm777, %v2574, 0
    %v2592 = vsel %vm777, %v2576, 0
    %v2595 = vsel %vm777, %v2578, 0
    %2597 = vmatprep.subr.bf16.mxu0 0
    %2598 = vmatpush1.bf16.xpose.msra.mxu0 %v2589
    %2599 = vmatprep.subr.bf16.mxu0 0
    %2600 = vmatpush1.bf16.xpose.msra.mxu0 %v2592
    %2601 = vmatprep.subr.bf16.mxu0 0
    %2602 = vmatpush1.bf16.xpose.msra.mxu0 %v2595
    %2603 = vmatprep.subr.bf16.mxu0 0
    %2604 = vmatpush1.bf16.xpose.msra.mxu0 0
    %2605 = vmatprep.subr.bf16.mxu0 0
    %2606 = vmatpush1.bf16.xpose.msra.mxu0 0
    %2607 = vmatprep.subr.bf16.mxu0 0
    %2608 = vmatpush1.bf16.xpose.msra.mxu0 0
    %2609 = vmatprep.subr.bf16.mxu0 0
    %2610 = vmatpush1.bf16.xpose.msra.mxu0 0
    %2611 = vmatprep.subr.bf16.mxu0 0
    %2612 = vmatpush1.bf16.xpose.msra.mxu0 0
    %2613 = vmatprep.subr.bf16.mxu0 0
    %2614 = vmatpush1.bf16.xpose.msra.mxu0 0
    %2615 = vmatprep.subr.bf16.mxu0 0
    %2616 = vmatpush1.bf16.xpose.msra.mxu0 0
    %2617 = vmatprep.subr.bf16.mxu0 0
    %2618 = vmatpush1.bf16.xpose.msra.mxu0 0
    %2619 = vmatprep.subr.bf16.mxu0 0
    %2620 = vmatpush1.bf16.xpose.msra.mxu0 0
    %2621 = vmatprep.subr.bf16.mxu0 0
    %2622 = vmatpush1.bf16.xpose.msra.mxu0 0
    %2623 = vmatprep.subr.bf16.mxu0 0
    %2624 = vmatpush1.bf16.xpose.msra.mxu0 0
    %2625 = vmatprep.subr.bf16.mxu0 0
    %2626 = vmatpush1.bf16.xpose.msra.mxu0 0
    %2627 = vmatprep.subr.bf16.mxu0 0
    %2628 = vmatpush1.bf16.xpose.msra.mxu0 0
    %2629 = vmatprep.mubr.bf16.mxu0 0
    %2630 = vmatmul.mubr.bf16.gmra.mrb[0].mxu0 %v2580
    %v2631 = vpop.f32.mrb[0].mxu0
    %v2632 = vadd.f32 %v556, %v2631
    %v2633 = vpop.f32.mrb[0].mxu0
    %v2634 = vpop.f32.mrb[0].mxu0
    %v2635 = vadd.f32 %v557, %v2634
    %v2636 = vpop.f32.mrb[0].mxu0
    %2637 = vmatprep.mubr.bf16.mxu0 0
    %2638 = vmatmul.mubr.bf16.gmra.mrb[0].mxu0 %v2583
    %v2639 = vpop.f32.mrb[0].mxu0
    %v2640 = vadd.f32 %v558, %v2639
    %v2641 = vpop.f32.mrb[0].mxu0
    %v2642 = vpop.f32.mrb[0].mxu0
    %v2643 = vadd.f32 %v559, %v2642
    %v2644 = vpop.f32.mrb[0].mxu0
    %2645 = vmatprep.mubr.bf16.mxu0 0
    %2646 = vmatmul.mubr.bf16.gmra.mrb[0].mxu0 %v2586
    %v2647 = vpop.f32.mrb[0].mxu0
    %v2648 = vadd.f32 %v560, %v2647
    %v2649 = vpop.f32.mrb[0].mxu0
    %v2650 = vpop.f32.mrb[0].mxu0
    %v2651 = vadd.f32 %v561, %v2650
    %v2652 = vpop.f32.mrb[0].mxu0
    %2653 = vdwg.mxu0
    %v2654 = vsel %vm853, %v2632, -inf
    %2655 = vmax.xlane.f32.xlu0 %v2654
    %v2656 = vpop.xlane.xlu0 %2655
    %v2657 = vsel %vm853, %v2635, -inf
    %2658 = vmax.xlane.f32.xlu0 %v2657
    %v2659 = vpop.xlane.xlu0 %2658
    %v2660 = vsel %vm853, %v2640, -inf
    %2661 = vmax.xlane.f32.xlu0 %v2660
    %v2662 = vpop.xlane.xlu0 %2661
    %v2663 = vsel %vm853, %v2643, -inf
    %2664 = vmax.xlane.f32.xlu0 %v2663
    %v2665 = vpop.xlane.xlu0 %2664
    %v2666 = vsel %vm853, %v2648, -inf
    %2667 = vmax.xlane.f32.xlu0 %v2666
    %v2668 = vpop.xlane.xlu0 %2667
    %v2669 = vsel %vm853, %v2651, -inf
    %2670 = vmax.xlane.f32.xlu0 %v2669
    %v2671 = vpop.xlane.xlu0 %2670
    %v2672 = vsub.f32 %v2632, %v2656
    %v2673 = vsub.f32 %v2635, %v2659
    %v2674 = vsub.f32 %v2640, %v2662
    %v2675 = vsub.f32 %v2643, %v2665
    %v2676 = vsub.f32 %v2648, %v2668
    %v2677 = vsub.f32 %v2651, %v2671
    %v2678 = vmul.f32 %v2672, 1.442695
    %v2679 = vpow.pop %v2678
    %v2680 = vmul.f32 %v2673, 1.442695
    %v2681 = vpow.pop %v2680
    %v2682 = vmul.f32 %v2674, 1.442695
    %v2683 = vpow.pop %v2682
    %v2684 = vmul.f32 %v2675, 1.442695
    %v2685 = vpow.pop %v2684
    %v2686 = vmul.f32 %v2676, 1.442695
    %v2687 = vpow.pop %v2686
    %v2688 = vmul.f32 %v2677, 1.442695
    %v2689 = vpow.pop %v2688
    %v2690 = vsel %vm853, %v2679, 0.0
    %2691 = vadd.xlane.f32.xlu0 %v2690
    %v2692 = vpop.xlane.xlu0 %2691
    %v2693 = vsel %vm853, %v2681, 0.0
    %2694 = vadd.xlane.f32.xlu0 %v2693
    %v2695 = vpop.xlane.xlu0 %2694
    %v2696 = vsel %vm853, %v2683, 0.0
    %2697 = vadd.xlane.f32.xlu0 %v2696
    %v2698 = vpop.xlane.xlu0 %2697
    %v2699 = vsel %vm853, %v2685, 0.0
    %2700 = vadd.xlane.f32.xlu0 %v2699
    %v2701 = vpop.xlane.xlu0 %2700
    %v2702 = vsel %vm853, %v2687, 0.0
    %2703 = vadd.xlane.f32.xlu0 %v2702
    %v2704 = vpop.xlane.xlu0 %2703
    %v2705 = vsel %vm853, %v2689, 0.0
    %2706 = vadd.xlane.f32.xlu0 %v2705
    %v2707 = vpop.xlane.xlu0 %2706
    %v2708 = vrcp.pop %v2692
    %v2709 = vrcp.pop %v2695
    %v2710 = vrcp.pop %v2698
    %v2711 = vrcp.pop %v2701
    %v2712 = vrcp.pop %v2704
    %v2713 = vrcp.pop %v2707
    %v2714 = vmul.f32 %v2679, %v2708
    %v2715 = vmul.f32 %v2681, %v2709
    %v2716 = vmul.f32 %v2683, %v2710
    %v2717 = vmul.f32 %v2685, %v2711
    %v2718 = vmul.f32 %v2687, %v2712
    %v2719 = vmul.f32 %v2689, %v2713
    %v2720 = vpack.c.bf16 %v2715, %v2714
    %v2721 = vpack.c.bf16 %v2717, %v2716
    %v2722 = vpack.c.bf16 %v2719, %v2718
    %2723 = vrot.lane.b32.xlu0 %v2567, 64
    %v2724 = vpop.permute.xlu0 %2723
    %2725 = vrot.lane.b32.xlu0 %v2568, 64
    %v2726 = vpop.permute.xlu0 %2725
    %2727 = vrot.lane.b32.xlu0 %v2569, 64
    %v2728 = vpop.permute.xlu0 %2727
    %v2733 = vsel %vm853, %v2720, 0
    %v2736 = vsel %vm853, %v2721, 0
    %v2739 = vsel %vm853, %v2722, 0
    %2741 = vmatprep.subr.bf16.mxu0 0
    %2742 = vmatpush1.bf16.msra.mxu0 %v2724
    %2743 = vmatprep.subr.bf16.mxu0 0
    %2744 = vmatpush1.bf16.msra.mxu0 %v2726
    %2745 = vmatprep.subr.bf16.mxu0 0
    %2746 = vmatpush1.bf16.msra.mxu0 %v2728
    %2747 = vmatprep.subr.bf16.mxu0 0
    %2748 = vmatpush1.bf16.msra.mxu0 0
    %2749 = vmatprep.subr.bf16.mxu0 0
    %2750 = vmatpush1.bf16.msra.mxu0 0
    %2751 = vmatprep.subr.bf16.mxu0 0
    %2752 = vmatpush1.bf16.msra.mxu0 0
    %2753 = vmatprep.subr.bf16.mxu0 0
    %2754 = vmatpush1.bf16.msra.mxu0 0
    %2755 = vmatprep.subr.bf16.mxu0 0
    %2756 = vmatpush1.bf16.msra.mxu0 0
    %2757 = vmatprep.subr.bf16.mxu0 0
    %2758 = vmatpush1.bf16.msra.mxu0 0
    %2759 = vmatprep.subr.bf16.mxu0 0
    %2760 = vmatpush1.bf16.msra.mxu0 0
    %2761 = vmatprep.subr.bf16.mxu0 0
    %2762 = vmatpush1.bf16.msra.mxu0 0
    %2763 = vmatprep.subr.bf16.mxu0 0
    %2764 = vmatpush1.bf16.msra.mxu0 0
    %2765 = vmatprep.subr.bf16.mxu0 0
    %2766 = vmatpush1.bf16.msra.mxu0 0
    %2767 = vmatprep.subr.bf16.mxu0 0
    %2768 = vmatpush1.bf16.msra.mxu0 0
    %2769 = vmatprep.subr.bf16.mxu0 0
    %2770 = vmatpush1.bf16.msra.mxu0 0
    %2771 = vmatprep.subr.bf16.mxu0 0
    %2772 = vmatpush1.bf16.msra.mxu0 0
    %2773 = vmatprep.mubr.bf16.mxu0 0
    %2774 = vmatmul.mubr.bf16.gmra.mrb[0].mxu0 %v2733
    %v2775 = vpop.f32.mrb[0].mxu0
    %v2776 = vadd.f32 0.0, %v2775
    %v2777 = vpop.f32.mrb[0].mxu0
    %v2778 = vpop.f32.mrb[0].mxu0
    %v2779 = vadd.f32 0.0, %v2778
    %v2780 = vpop.f32.mrb[0].mxu0
    %2781 = vmatprep.mubr.bf16.mxu0 0
    %2782 = vmatmul.mubr.bf16.gmra.mrb[0].mxu0 %v2736
    %v2783 = vpop.f32.mrb[0].mxu0
    %v2784 = vadd.f32 0.0, %v2783
    %v2785 = vpop.f32.mrb[0].mxu0
    %v2786 = vpop.f32.mrb[0].mxu0
    %v2787 = vadd.f32 0.0, %v2786
    %v2788 = vpop.f32.mrb[0].mxu0
    %2789 = vmatprep.mubr.bf16.mxu0 0
    %2790 = vmatmul.mubr.bf16.gmra.mrb[0].mxu0 %v2739
    %v2791 = vpop.f32.mrb[0].mxu0
    %v2792 = vadd.f32 0.0, %v2791
    %v2793 = vpop.f32.mrb[0].mxu0
    %v2794 = vpop.f32.mrb[0].mxu0
    %v2795 = vadd.f32 0.0, %v2794
    %v2796 = vpop.f32.mrb[0].mxu0
    %2797 = vdwg.mxu0
    %v2798 = vpack.c.bf16 %v2779, %v2776
    %v2799 = vpack.c.bf16 %v2787, %v2784
    %v2800 = vpack.c.bf16 %v2795, %v2792
    %v2801 = vpack.c.bf16 %v2554, %v2554
    %2805 = vrot.lane.b32.xlu0 %v2564, 120
    %v2806 = vpop.permute.xlu0 %2805
    %2807 = vrot.lane.b32.xlu0 %v2565, 120
    %v2808 = vpop.permute.xlu0 %2807
    %2809 = vrot.lane.b32.xlu0 %v2566, 120
    %v2810 = vpop.permute.xlu0 %2809
    %2811 = vrot.lane.b32.xlu0 %v2567, 88
    %v2812 = vpop.permute.xlu0 %2811
    %2813 = vrot.lane.b32.xlu0 %v2568, 88
    %v2814 = vpop.permute.xlu0 %2813
    %2815 = vrot.lane.b32.xlu0 %v2569, 88
    %v2816 = vpop.permute.xlu0 %2815
    %v2818 = vsel %vm777, %v2806, 0
    %v2821 = vsel %vm777, %v2808, 0
    %v2824 = vsel %vm777, %v2810, 0
    %v2827 = vsel %vm777, %v2812, 0
    %v2830 = vsel %vm777, %v2814, 0
    %v2833 = vsel %vm777, %v2816, 0
    %2835 = vmatprep.subr.bf16.mxu0 0
    %2836 = vmatpush1.bf16.xpose.msra.mxu0 %v2827
    %2837 = vmatprep.subr.bf16.mxu0 0
    %2838 = vmatpush1.bf16.xpose.msra.mxu0 %v2830
    %2839 = vmatprep.subr.bf16.mxu0 0
    %2840 = vmatpush1.bf16.xpose.msra.mxu0 %v2833
    %2841 = vmatprep.subr.bf16.mxu0 0
    %2842 = vmatpush1.bf16.xpose.msra.mxu0 0
    %2843 = vmatprep.subr.bf16.mxu0 0
    %2844 = vmatpush1.bf16.xpose.msra.mxu0 0
    %2845 = vmatprep.subr.bf16.mxu0 0
    %2846 = vmatpush1.bf16.xpose.msra.mxu0 0
    %2847 = vmatprep.subr.bf16.mxu0 0
    %2848 = vmatpush1.bf16.xpose.msra.mxu0 0
    %2849 = vmatprep.subr.bf16.mxu0 0
    %2850 = vmatpush1.bf16.xpose.msra.mxu0 0
    %2851 = vmatprep.subr.bf16.mxu0 0
    %2852 = vmatpush1.bf16.xpose.msra.mxu0 0
    %2853 = vmatprep.subr.bf16.mxu0 0
    %2854 = vmatpush1.bf16.xpose.msra.mxu0 0
    %2855 = vmatprep.subr.bf16.mxu0 0
    %2856 = vmatpush1.bf16.xpose.msra.mxu0 0
    %2857 = vmatprep.subr.bf16.mxu0 0
    %2858 = vmatpush1.bf16.xpose.msra.mxu0 0
    %2859 = vmatprep.subr.bf16.mxu0 0
    %2860 = vmatpush1.bf16.xpose.msra.mxu0 0
    %2861 = vmatprep.subr.bf16.mxu0 0
    %2862 = vmatpush1.bf16.xpose.msra.mxu0 0
    %2863 = vmatprep.subr.bf16.mxu0 0
    %2864 = vmatpush1.bf16.xpose.msra.mxu0 0
    %2865 = vmatprep.subr.bf16.mxu0 0
    %2866 = vmatpush1.bf16.xpose.msra.mxu0 0
    %2867 = vmatprep.mubr.bf16.mxu0 0
    %2868 = vmatmul.mubr.bf16.gmra.mrb[0].mxu0 %v2818
    %v2869 = vpop.f32.mrb[0].mxu0
    %v2870 = vadd.f32 %v556, %v2869
    %v2871 = vpop.f32.mrb[0].mxu0
    %v2872 = vpop.f32.mrb[0].mxu0
    %v2873 = vadd.f32 %v557, %v2872
    %v2874 = vpop.f32.mrb[0].mxu0
    %2875 = vmatprep.mubr.bf16.mxu0 0
    %2876 = vmatmul.mubr.bf16.gmra.mrb[0].mxu0 %v2821
    %v2877 = vpop.f32.mrb[0].mxu0
    %v2878 = vadd.f32 %v558, %v2877
    %v2879 = vpop.f32.mrb[0].mxu0
    %v2880 = vpop.f32.mrb[0].mxu0
    %v2881 = vadd.f32 %v559, %v2880
    %v2882 = vpop.f32.mrb[0].mxu0
    %2883 = vmatprep.mubr.bf16.mxu0 0
    %2884 = vmatmul.mubr.bf16.gmra.mrb[0].mxu0 %v2824
    %v2885 = vpop.f32.mrb[0].mxu0
    %v2886 = vadd.f32 %v560, %v2885
    %v2887 = vpop.f32.mrb[0].mxu0
    %v2888 = vpop.f32.mrb[0].mxu0
    %v2889 = vadd.f32 %v561, %v2888
    %v2890 = vpop.f32.mrb[0].mxu0
    %2891 = vdwg.mxu0
    %v2892 = vsel %vm853, %v2870, -inf
    %2893 = vmax.xlane.f32.xlu0 %v2892
    %v2894 = vpop.xlane.xlu0 %2893
    %v2895 = vsel %vm853, %v2873, -inf
    %2896 = vmax.xlane.f32.xlu0 %v2895
    %v2897 = vpop.xlane.xlu0 %2896
    %v2898 = vsel %vm853, %v2878, -inf
    %2899 = vmax.xlane.f32.xlu0 %v2898
    %v2900 = vpop.xlane.xlu0 %2899
    %v2901 = vsel %vm853, %v2881, -inf
    %2902 = vmax.xlane.f32.xlu0 %v2901
    %v2903 = vpop.xlane.xlu0 %2902
    %v2904 = vsel %vm853, %v2886, -inf
    %2905 = vmax.xlane.f32.xlu0 %v2904
    %v2906 = vpop.xlane.xlu0 %2905
    %v2907 = vsel %vm853, %v2889, -inf
    %2908 = vmax.xlane.f32.xlu0 %v2907
    %v2909 = vpop.xlane.xlu0 %2908
    %v2910 = vsub.f32 %v2870, %v2894
    %v2911 = vsub.f32 %v2873, %v2897
    %v2912 = vsub.f32 %v2878, %v2900
    %v2913 = vsub.f32 %v2881, %v2903
    %v2914 = vsub.f32 %v2886, %v2906
    %v2915 = vsub.f32 %v2889, %v2909
    %v2916 = vmul.f32 %v2910, 1.442695
    %v2917 = vpow.pop %v2916
    %v2918 = vmul.f32 %v2911, 1.442695
    %v2919 = vpow.pop %v2918
    %v2920 = vmul.f32 %v2912, 1.442695
    %v2921 = vpow.pop %v2920
    %v2922 = vmul.f32 %v2913, 1.442695
    %v2923 = vpow.pop %v2922
    %v2924 = vmul.f32 %v2914, 1.442695
    %v2925 = vpow.pop %v2924
    %v2926 = vmul.f32 %v2915, 1.442695
    %v2927 = vpow.pop %v2926
    %v2928 = vsel %vm853, %v2917, 0.0
    %2929 = vadd.xlane.f32.xlu0 %v2928
    %v2930 = vpop.xlane.xlu0 %2929
    %v2931 = vsel %vm853, %v2919, 0.0
    %2932 = vadd.xlane.f32.xlu0 %v2931
    %v2933 = vpop.xlane.xlu0 %2932
    %v2934 = vsel %vm853, %v2921, 0.0
    %2935 = vadd.xlane.f32.xlu0 %v2934
    %v2936 = vpop.xlane.xlu0 %2935
    %v2937 = vsel %vm853, %v2923, 0.0
    %2938 = vadd.xlane.f32.xlu0 %v2937
    %v2939 = vpop.xlane.xlu0 %2938
    %v2940 = vsel %vm853, %v2925, 0.0
    %2941 = vadd.xlane.f32.xlu0 %v2940
    %v2942 = vpop.xlane.xlu0 %2941
    %v2943 = vsel %vm853, %v2927, 0.0
    %2944 = vadd.xlane.f32.xlu0 %v2943
    %v2945 = vpop.xlane.xlu0 %2944
    %v2946 = vrcp.pop %v2930
    %v2947 = vrcp.pop %v2933
    %v2948 = vrcp.pop %v2936
    %v2949 = vrcp.pop %v2939
    %v2950 = vrcp.pop %v2942
    %v2951 = vrcp.pop %v2945
    %v2952 = vmul.f32 %v2917, %v2946
    %v2953 = vmul.f32 %v2919, %v2947
    %v2954 = vmul.f32 %v2921, %v2948
    %v2955 = vmul.f32 %v2923, %v2949
    %v2956 = vmul.f32 %v2925, %v2950
    %v2957 = vmul.f32 %v2927, %v2951
    %v2958 = vpack.c.bf16 %v2953, %v2952
    %v2959 = vpack.c.bf16 %v2955, %v2954
    %v2960 = vpack.c.bf16 %v2957, %v2956
    %2961 = vrot.lane.b32.xlu0 %v2567, 56
    %v2962 = vpop.permute.xlu0 %2961
    %2963 = vrot.lane.b32.xlu0 %v2568, 56
    %v2964 = vpop.permute.xlu0 %2963
    %2965 = vrot.lane.b32.xlu0 %v2569, 56
    %v2966 = vpop.permute.xlu0 %2965
    %v2971 = vsel %vm853, %v2958, 0
    %v2974 = vsel %vm853, %v2959, 0
    %v2977 = vsel %vm853, %v2960, 0
    %2979 = vmatprep.subr.bf16.mxu0 0
    %2980 = vmatpush1.bf16.msra.mxu0 %v2962
    %2981 = vmatprep.subr.bf16.mxu0 0
    %2982 = vmatpush1.bf16.msra.mxu0 %v2964
    %2983 = vmatprep.subr.bf16.mxu0 0
    %2984 = vmatpush1.bf16.msra.mxu0 %v2966
    %2985 = vmatprep.subr.bf16.mxu0 0
    %2986 = vmatpush1.bf16.msra.mxu0 0
    %2987 = vmatprep.subr.bf16.mxu0 0
    %2988 = vmatpush1.bf16.msra.mxu0 0
    %2989 = vmatprep.subr.bf16.mxu0 0
    %2990 = vmatpush1.bf16.msra.mxu0 0
    %2991 = vmatprep.subr.bf16.mxu0 0
    %2992 = vmatpush1.bf16.msra.mxu0 0
    %2993 = vmatprep.subr.bf16.mxu0 0
    %2994 = vmatpush1.bf16.msra.mxu0 0
    %2995 = vmatprep.subr.bf16.mxu0 0
    %2996 = vmatpush1.bf16.msra.mxu0 0
    %2997 = vmatprep.subr.bf16.mxu0 0
    %2998 = vmatpush1.bf16.msra.mxu0 0
    %2999 = vmatprep.subr.bf16.mxu0 0
    %3000 = vmatpush1.bf16.msra.mxu0 0
    %3001 = vmatprep.subr.bf16.mxu0 0
    %3002 = vmatpush1.bf16.msra.mxu0 0
    %3003 = vmatprep.subr.bf16.mxu0 0
    %3004 = vmatpush1.bf16.msra.mxu0 0
    %3005 = vmatprep.subr.bf16.mxu0 0
    %3006 = vmatpush1.bf16.msra.mxu0 0
    %3007 = vmatprep.subr.bf16.mxu0 0
    %3008 = vmatpush1.bf16.msra.mxu0 0
    %3009 = vmatprep.subr.bf16.mxu0 0
    %3010 = vmatpush1.bf16.msra.mxu0 0
    %3011 = vmatprep.mubr.bf16.mxu0 0
    %3012 = vmatmul.mubr.bf16.gmra.mrb[0].mxu0 %v2971
    %v3013 = vpop.f32.mrb[0].mxu0
    %v3014 = vadd.f32 0.0, %v3013
    %v3015 = vpop.f32.mrb[0].mxu0
    %v3016 = vpop.f32.mrb[0].mxu0
    %v3017 = vadd.f32 0.0, %v3016
    %v3018 = vpop.f32.mrb[0].mxu0
    %3019 = vmatprep.mubr.bf16.mxu0 0
    %3020 = vmatmul.mubr.bf16.gmra.mrb[0].mxu0 %v2974
    %v3021 = vpop.f32.mrb[0].mxu0
    %v3022 = vadd.f32 0.0, %v3021
    %v3023 = vpop.f32.mrb[0].mxu0
    %v3024 = vpop.f32.mrb[0].mxu0
    %v3025 = vadd.f32 0.0, %v3024
    %v3026 = vpop.f32.mrb[0].mxu0
    %3027 = vmatprep.mubr.bf16.mxu0 0
    %3028 = vmatmul.mubr.bf16.gmra.mrb[0].mxu0 %v2977
    %v3029 = vpop.f32.mrb[0].mxu0
    %v3030 = vadd.f32 0.0, %v3029
    %v3031 = vpop.f32.mrb[0].mxu0
    %v3032 = vpop.f32.mrb[0].mxu0
    %v3033 = vadd.f32 0.0, %v3032
    %v3034 = vpop.f32.mrb[0].mxu0
    %3035 = vdwg.mxu0
    %v3036 = vpack.c.bf16 %v3017, %v3014
    %v3037 = vpack.c.bf16 %v3025, %v3022
    %v3038 = vpack.c.bf16 %v3033, %v3030
    %v3039 = vpack.c.bf16 %v2555, %v2555
    %v3041 = vsel %vm777, %v3036, 0
    %v3044 = vsel %vm777, %v3037, 0
    %v3047 = vsel %vm777, %v3038, 0
    %v3050 = vsel %vm1249, %v3039, 0
    %3052 = vmatprep.subr.bf16.mxu0 0
    %3053 = vmatpush1.bf16.msra.mxu0 %v3050
    %3054 = vmatprep.subr.bf16.mxu0 0
    %3055 = vmatpush1.bf16.msra.mxu0 0
    %3056 = vmatprep.subr.bf16.mxu0 0
    %3057 = vmatpush1.bf16.msra.mxu0 0
    %3058 = vmatprep.subr.bf16.mxu0 0
    %3059 = vmatpush1.bf16.msra.mxu0 0
    %3060 = vmatprep.subr.bf16.mxu0 0
    %3061 = vmatpush1.bf16.msra.mxu0 0
    %3062 = vmatprep.subr.bf16.mxu0 0
    %3063 = vmatpush1.bf16.msra.mxu0 0
    %3064 = vmatprep.subr.bf16.mxu0 0
    %3065 = vmatpush1.bf16.msra.mxu0 0
    %3066 = vmatprep.subr.bf16.mxu0 0
    %3067 = vmatpush1.bf16.msra.mxu0 0
    %3068 = vmatprep.subr.bf16.mxu0 0
    %3069 = vmatpush1.bf16.msra.mxu0 0
    %3070 = vmatprep.subr.bf16.mxu0 0
    %3071 = vmatpush1.bf16.msra.mxu0 0
    %3072 = vmatprep.subr.bf16.mxu0 0
    %3073 = vmatpush1.bf16.msra.mxu0 0
    %3074 = vmatprep.subr.bf16.mxu0 0
    %3075 = vmatpush1.bf16.msra.mxu0 0
    %3076 = vmatprep.subr.bf16.mxu0 0
    %3077 = vmatpush1.bf16.msra.mxu0 0
    %3078 = vmatprep.subr.bf16.mxu0 0
    %3079 = vmatpush1.bf16.msra.mxu0 0
    %3080 = vmatprep.subr.bf16.mxu0 0
    %3081 = vmatpush1.bf16.msra.mxu0 0
    %3082 = vmatprep.subr.bf16.mxu0 0
    %3083 = vmatpush1.bf16.msra.mxu0 0
    %3084 = vmatprep.mubr.bf16.mxu0 0
    %3085 = vmatmul.mubr.bf16.gmra.mrb[0].mxu0 %v3041
    %v3086 = vpop.f32.mrb[0].mxu0
    %v3087 = vadd.f32 0.0, %v3086
    %v3088 = vpop.f32.mrb[0].mxu0
    %v3089 = vpop.f32.mrb[0].mxu0
    %v3090 = vadd.f32 0.0, %v3089
    %v3091 = vpop.f32.mrb[0].mxu0
    %3092 = vmatprep.mubr.bf16.mxu0 0
    %3093 = vmatmul.mubr.bf16.gmra.mrb[0].mxu0 %v3044
    %v3094 = vpop.f32.mrb[0].mxu0
    %v3095 = vadd.f32 0.0, %v3094
    %v3096 = vpop.f32.mrb[0].mxu0
    %v3097 = vpop.f32.mrb[0].mxu0
    %v3098 = vadd.f32 0.0, %v3097
    %v3099 = vpop.f32.mrb[0].mxu0
    %3100 = vmatprep.mubr.bf16.mxu0 0
    %3101 = vmatmul.mubr.bf16.gmra.mrb[0].mxu0 %v3047
    %v3102 = vpop.f32.mrb[0].mxu0
    %v3103 = vadd.f32 0.0, %v3102
    %v3104 = vpop.f32.mrb[0].mxu0
    %v3105 = vpop.f32.mrb[0].mxu0
    %v3106 = vadd.f32 0.0, %v3105
    %v3107 = vpop.f32.mrb[0].mxu0
    %3108 = vdwg.mxu0
    %v3110 = vsel %vm777, %v2798, 0
    %v3113 = vsel %vm777, %v2799, 0
    %v3116 = vsel %vm777, %v2800, 0
    %v3119 = vsel %vm1249, %v2801, 0
    %3121 = vmatprep.subr.bf16.mxu0 0
    %3122 = vmatpush1.bf16.msra.mxu0 %v3119
    %3123 = vmatprep.subr.bf16.mxu0 0
    %3124 = vmatpush1.bf16.msra.mxu0 0
    %3125 = vmatprep.subr.bf16.mxu0 0
    %3126 = vmatpush1.bf16.msra.mxu0 0
    %3127 = vmatprep.subr.bf16.mxu0 0
    %3128 = vmatpush1.bf16.msra.mxu0 0
    %3129 = vmatprep.subr.bf16.mxu0 0
    %3130 = vmatpush1.bf16.msra.mxu0 0
    %3131 = vmatprep.subr.bf16.mxu0 0
    %3132 = vmatpush1.bf16.msra.mxu0 0
    %3133 = vmatprep.subr.bf16.mxu0 0
    %3134 = vmatpush1.bf16.msra.mxu0 0
    %3135 = vmatprep.subr.bf16.mxu0 0
    %3136 = vmatpush1.bf16.msra.mxu0 0
    %3137 = vmatprep.subr.bf16.mxu0 0
    %3138 = vmatpush1.bf16.msra.mxu0 0
    %3139 = vmatprep.subr.bf16.mxu0 0
    %3140 = vmatpush1.bf16.msra.mxu0 0
    %3141 = vmatprep.subr.bf16.mxu0 0
    %3142 = vmatpush1.bf16.msra.mxu0 0
    %3143 = vmatprep.subr.bf16.mxu0 0
    %3144 = vmatpush1.bf16.msra.mxu0 0
    %3145 = vmatprep.subr.bf16.mxu0 0
    %3146 = vmatpush1.bf16.msra.mxu0 0
    %3147 = vmatprep.subr.bf16.mxu0 0
    %3148 = vmatpush1.bf16.msra.mxu0 0
    %3149 = vmatprep.subr.bf16.mxu0 0
    %3150 = vmatpush1.bf16.msra.mxu0 0
    %3151 = vmatprep.subr.bf16.mxu0 0
    %3152 = vmatpush1.bf16.msra.mxu0 0
    %3153 = vmatprep.mubr.bf16.mxu0 0
    %3154 = vmatmul.mubr.bf16.gmra.mrb[0].mxu0 %v3110
    %v3155 = vpop.f32.mrb[0].mxu0
    %v3156 = vadd.f32 %v3087, %v3155
    %v3157 = vpop.f32.mrb[0].mxu0
    %v3158 = vpop.f32.mrb[0].mxu0
    %v3159 = vadd.f32 %v3090, %v3158
    %v3160 = vpop.f32.mrb[0].mxu0
    %3161 = vmatprep.mubr.bf16.mxu0 0
    %3162 = vmatmul.mubr.bf16.gmra.mrb[0].mxu0 %v3113
    %v3163 = vpop.f32.mrb[0].mxu0
    %v3164 = vadd.f32 %v3095, %v3163
    %v3165 = vpop.f32.mrb[0].mxu0
    %v3166 = vpop.f32.mrb[0].mxu0
    %v3167 = vadd.f32 %v3098, %v3166
    %v3168 = vpop.f32.mrb[0].mxu0
    %3169 = vmatprep.mubr.bf16.mxu0 0
    %3170 = vmatmul.mubr.bf16.gmra.mrb[0].mxu0 %v3116
    %v3171 = vpop.f32.mrb[0].mxu0
    %v3172 = vadd.f32 %v3103, %v3171
    %v3173 = vpop.f32.mrb[0].mxu0
    %v3174 = vpop.f32.mrb[0].mxu0
    %v3175 = vadd.f32 %v3106, %v3174
    %v3176 = vpop.f32.mrb[0].mxu0
    %3177 = vdwg.mxu0
    %3178 = vrot.lane.b32.xlu0 %v2564, 112
    %v3179 = vpop.permute.xlu0 %3178
    %3180 = vrot.lane.b32.xlu0 %v2565, 112
    %v3181 = vpop.permute.xlu0 %3180
    %3182 = vrot.lane.b32.xlu0 %v2566, 112
    %v3183 = vpop.permute.xlu0 %3182
    %3184 = vrot.lane.b32.xlu0 %v2567, 80
    %v3185 = vpop.permute.xlu0 %3184
    %3186 = vrot.lane.b32.xlu0 %v2568, 80
    %v3187 = vpop.permute.xlu0 %3186
    %3188 = vrot.lane.b32.xlu0 %v2569, 80
    %v3189 = vpop.permute.xlu0 %3188
    %v3191 = vsel %vm777, %v3179, 0
    %v3194 = vsel %vm777, %v3181, 0
    %v3197 = vsel %vm777, %v3183, 0
    %v3200 = vsel %vm777, %v3185, 0
    %v3203 = vsel %vm777, %v3187, 0
    %v3206 = vsel %vm777, %v3189, 0
    %3208 = vmatprep.subr.bf16.mxu0 0
    %3209 = vmatpush1.bf16.xpose.msra.mxu0 %v3200
    %3210 = vmatprep.subr.bf16.mxu0 0
    %3211 = vmatpush1.bf16.xpose.msra.mxu0 %v3203
    %3212 = vmatprep.subr.bf16.mxu0 0
    %3213 = vmatpush1.bf16.xpose.msra.mxu0 %v3206
    %3214 = vmatprep.subr.bf16.mxu0 0
    %3215 = vmatpush1.bf16.xpose.msra.mxu0 0
    %3216 = vmatprep.subr.bf16.mxu0 0
    %3217 = vmatpush1.bf16.xpose.msra.mxu0 0
    %3218 = vmatprep.subr.bf16.mxu0 0
    %3219 = vmatpush1.bf16.xpose.msra.mxu0 0
    %3220 = vmatprep.subr.bf16.mxu0 0
    %3221 = vmatpush1.bf16.xpose.msra.mxu0 0
    %3222 = vmatprep.subr.bf16.mxu0 0
    %3223 = vmatpush1.bf16.xpose.msra.mxu0 0
    %3224 = vmatprep.subr.bf16.mxu0 0
    %3225 = vmatpush1.bf16.xpose.msra.mxu0 0
    %3226 = vmatprep.subr.bf16.mxu0 0
    %3227 = vmatpush1.bf16.xpose.msra.mxu0 0
    %3228 = vmatprep.subr.bf16.mxu0 0
    %3229 = vmatpush1.bf16.xpose.msra.mxu0 0
    %3230 = vmatprep.subr.bf16.mxu0 0
    %3231 = vmatpush1.bf16.xpose.msra.mxu0 0
    %3232 = vmatprep.subr.bf16.mxu0 0
    %3233 = vmatpush1.bf16.xpose.msra.mxu0 0
    %3234 = vmatprep.subr.bf16.mxu0 0
    %3235 = vmatpush1.bf16.xpose.msra.mxu0 0
    %3236 = vmatprep.subr.bf16.mxu0 0
    %3237 = vmatpush1.bf16.xpose.msra.mxu0 0
    %3238 = vmatprep.subr.bf16.mxu0 0
    %3239 = vmatpush1.bf16.xpose.msra.mxu0 0
    %3240 = vmatprep.mubr.bf16.mxu0 0
    %3241 = vmatmul.mubr.bf16.gmra.mrb[0].mxu0 %v3191
    %v3242 = vpop.f32.mrb[0].mxu0
    %v3243 = vadd.f32 %v556, %v3242
    %v3244 = vpop.f32.mrb[0].mxu0
    %v3245 = vpop.f32.mrb[0].mxu0
    %v3246 = vadd.f32 %v557, %v3245
    %v3247 = vpop.f32.mrb[0].mxu0
    %3248 = vmatprep.mubr.bf16.mxu0 0
    %3249 = vmatmul.mubr.bf16.gmra.mrb[0].mxu0 %v3194
    %v3250 = vpop.f32.mrb[0].mxu0
    %v3251 = vadd.f32 %v558, %v3250
    %v3252 = vpop.f32.mrb[0].mxu0
    %v3253 = vpop.f32.mrb[0].mxu0
    %v3254 = vadd.f32 %v559, %v3253
    %v3255 = vpop.f32.mrb[0].mxu0
    %3256 = vmatprep.mubr.bf16.mxu0 0
    %3257 = vmatmul.mubr.bf16.gmra.mrb[0].mxu0 %v3197
    %v3258 = vpop.f32.mrb[0].mxu0
    %v3259 = vadd.f32 %v560, %v3258
    %v3260 = vpop.f32.mrb[0].mxu0
    %v3261 = vpop.f32.mrb[0].mxu0
    %v3262 = vadd.f32 %v561, %v3261
    %v3263 = vpop.f32.mrb[0].mxu0
    %3264 = vdwg.mxu0
    %v3265 = vsel %vm853, %v3243, -inf
    %3266 = vmax.xlane.f32.xlu0 %v3265
    %v3267 = vpop.xlane.xlu0 %3266
    %v3268 = vsel %vm853, %v3246, -inf
    %3269 = vmax.xlane.f32.xlu0 %v3268
    %v3270 = vpop.xlane.xlu0 %3269
    %v3271 = vsel %vm853, %v3251, -inf
    %3272 = vmax.xlane.f32.xlu0 %v3271
    %v3273 = vpop.xlane.xlu0 %3272
    %v3274 = vsel %vm853, %v3254, -inf
    %3275 = vmax.xlane.f32.xlu0 %v3274
    %v3276 = vpop.xlane.xlu0 %3275
    %v3277 = vsel %vm853, %v3259, -inf
    %3278 = vmax.xlane.f32.xlu0 %v3277
    %v3279 = vpop.xlane.xlu0 %3278
    %v3280 = vsel %vm853, %v3262, -inf
    %3281 = vmax.xlane.f32.xlu0 %v3280
    %v3282 = vpop.xlane.xlu0 %3281
    %v3283 = vsub.f32 %v3243, %v3267
    %v3284 = vsub.f32 %v3246, %v3270
    %v3285 = vsub.f32 %v3251, %v3273
    %v3286 = vsub.f32 %v3254, %v3276
    %v3287 = vsub.f32 %v3259, %v3279
    %v3288 = vsub.f32 %v3262, %v3282
    %v3289 = vmul.f32 %v3283, 1.442695
    %v3290 = vpow.pop %v3289
    %v3291 = vmul.f32 %v3284, 1.442695
    %v3292 = vpow.pop %v3291
    %v3293 = vmul.f32 %v3285, 1.442695
    %v3294 = vpow.pop %v3293
    %v3295 = vmul.f32 %v3286, 1.442695
    %v3296 = vpow.pop %v3295
    %v3297 = vmul.f32 %v3287, 1.442695
    %v3298 = vpow.pop %v3297
    %v3299 = vmul.f32 %v3288, 1.442695
    %v3300 = vpow.pop %v3299
    %v3301 = vsel %vm853, %v3290, 0.0
    %3302 = vadd.xlane.f32.xlu0 %v3301
    %v3303 = vpop.xlane.xlu0 %3302
    %v3304 = vsel %vm853, %v3292, 0.0
    %3305 = vadd.xlane.f32.xlu0 %v3304
    %v3306 = vpop.xlane.xlu0 %3305
    %v3307 = vsel %vm853, %v3294, 0.0
    %3308 = vadd.xlane.f32.xlu0 %v3307
    %v3309 = vpop.xlane.xlu0 %3308
    %v3310 = vsel %vm853, %v3296, 0.0
    %3311 = vadd.xlane.f32.xlu0 %v3310
    %v3312 = vpop.xlane.xlu0 %3311
    %v3313 = vsel %vm853, %v3298, 0.0
    %3314 = vadd.xlane.f32.xlu0 %v3313
    %v3315 = vpop.xlane.xlu0 %3314
    %v3316 = vsel %vm853, %v3300, 0.0
    %3317 = vadd.xlane.f32.xlu0 %v3316
    %v3318 = vpop.xlane.xlu0 %3317
    %v3319 = vrcp.pop %v3303
    %v3320 = vrcp.pop %v3306
    %v3321 = vrcp.pop %v3309
    %v3322 = vrcp.pop %v3312
    %v3323 = vrcp.pop %v3315
    %v3324 = vrcp.pop %v3318
    %v3325 = vmul.f32 %v3290, %v3319
    %v3326 = vmul.f32 %v3292, %v3320
    %v3327 = vmul.f32 %v3294, %v3321
    %v3328 = vmul.f32 %v3296, %v3322
    %v3329 = vmul.f32 %v3298, %v3323
    %v3330 = vmul.f32 %v3300, %v3324
    %v3331 = vpack.c.bf16 %v3326, %v3325
    %v3332 = vpack.c.bf16 %v3328, %v3327
    %v3333 = vpack.c.bf16 %v3330, %v3329
    %3334 = vrot.lane.b32.xlu0 %v2567, 48
    %v3335 = vpop.permute.xlu0 %3334
    %3336 = vrot.lane.b32.xlu0 %v2568, 48
    %v3337 = vpop.permute.xlu0 %3336
    %3338 = vrot.lane.b32.xlu0 %v2569, 48
    %v3339 = vpop.permute.xlu0 %3338
    %v3344 = vsel %vm853, %v3331, 0
    %v3347 = vsel %vm853, %v3332, 0
    %v3350 = vsel %vm853, %v3333, 0
    %3352 = vmatprep.subr.bf16.mxu0 0
    %3353 = vmatpush1.bf16.msra.mxu0 %v3335
    %3354 = vmatprep.subr.bf16.mxu0 0
    %3355 = vmatpush1.bf16.msra.mxu0 %v3337
    %3356 = vmatprep.subr.bf16.mxu0 0
    %3357 = vmatpush1.bf16.msra.mxu0 %v3339
    %3358 = vmatprep.subr.bf16.mxu0 0
    %3359 = vmatpush1.bf16.msra.mxu0 0
    %3360 = vmatprep.subr.bf16.mxu0 0
    %3361 = vmatpush1.bf16.msra.mxu0 0
    %3362 = vmatprep.subr.bf16.mxu0 0
    %3363 = vmatpush1.bf16.msra.mxu0 0
    %3364 = vmatprep.subr.bf16.mxu0 0
    %3365 = vmatpush1.bf16.msra.mxu0 0
    %3366 = vmatprep.subr.bf16.mxu0 0
    %3367 = vmatpush1.bf16.msra.mxu0 0
    %3368 = vmatprep.subr.bf16.mxu0 0
    %3369 = vmatpush1.bf16.msra.mxu0 0
    %3370 = vmatprep.subr.bf16.mxu0 0
    %3371 = vmatpush1.bf16.msra.mxu0 0
    %3372 = vmatprep.subr.bf16.mxu0 0
    %3373 = vmatpush1.bf16.msra.mxu0 0
    %3374 = vmatprep.subr.bf16.mxu0 0
    %3375 = vmatpush1.bf16.msra.mxu0 0
    %3376 = vmatprep.subr.bf16.mxu0 0
    %3377 = vmatpush1.bf16.msra.mxu0 0
    %3378 = vmatprep.subr.bf16.mxu0 0
    %3379 = vmatpush1.bf16.msra.mxu0 0
    %3380 = vmatprep.subr.bf16.mxu0 0
    %3381 = vmatpush1.bf16.msra.mxu0 0
    %3382 = vmatprep.subr.bf16.mxu0 0
    %3383 = vmatpush1.bf16.msra.mxu0 0
    %3384 = vmatprep.mubr.bf16.mxu0 0
    %3385 = vmatmul.mubr.bf16.gmra.mrb[0].mxu0 %v3344
    %v3386 = vpop.f32.mrb[0].mxu0
    %v3387 = vadd.f32 0.0, %v3386
    %v3388 = vpop.f32.mrb[0].mxu0
    %v3389 = vpop.f32.mrb[0].mxu0
    %v3390 = vadd.f32 0.0, %v3389
    %v3391 = vpop.f32.mrb[0].mxu0
    %3392 = vmatprep.mubr.bf16.mxu0 0
    %3393 = vmatmul.mubr.bf16.gmra.mrb[0].mxu0 %v3347
    %v3394 = vpop.f32.mrb[0].mxu0
    %v3395 = vadd.f32 0.0, %v3394
    %v3396 = vpop.f32.mrb[0].mxu0
    %v3397 = vpop.f32.mrb[0].mxu0
    %v3398 = vadd.f32 0.0, %v3397
    %v3399 = vpop.f32.mrb[0].mxu0
    %3400 = vmatprep.mubr.bf16.mxu0 0
    %3401 = vmatmul.mubr.bf16.gmra.mrb[0].mxu0 %v3350
    %v3402 = vpop.f32.mrb[0].mxu0
    %v3403 = vadd.f32 0.0, %v3402
    %v3404 = vpop.f32.mrb[0].mxu0
    %v3405 = vpop.f32.mrb[0].mxu0
    %v3406 = vadd.f32 0.0, %v3405
    %v3407 = vpop.f32.mrb[0].mxu0
    %3408 = vdwg.mxu0
    %v3409 = vpack.c.bf16 %v3390, %v3387
    %v3410 = vpack.c.bf16 %v3398, %v3395
    %v3411 = vpack.c.bf16 %v3406, %v3403
    %v3412 = vpack.c.bf16 %v2556, %v2556
    %v3414 = vsel %vm777, %v3409, 0
    %v3417 = vsel %vm777, %v3410, 0
    %v3420 = vsel %vm777, %v3411, 0
    %v3423 = vsel %vm1249, %v3412, 0
    %3425 = vmatprep.subr.bf16.mxu0 0
    %3426 = vmatpush1.bf16.msra.mxu0 %v3423
    %3427 = vmatprep.subr.bf16.mxu0 0
    %3428 = vmatpush1.bf16.msra.mxu0 0
    %3429 = vmatprep.subr.bf16.mxu0 0
    %3430 = vmatpush1.bf16.msra.mxu0 0
    %3431 = vmatprep.subr.bf16.mxu0 0
    %3432 = vmatpush1.bf16.msra.mxu0 0
    %3433 = vmatprep.subr.bf16.mxu0 0
    %3434 = vmatpush1.bf16.msra.mxu0 0
    %3435 = vmatprep.subr.bf16.mxu0 0
    %3436 = vmatpush1.bf16.msra.mxu0 0
    %3437 = vmatprep.subr.bf16.mxu0 0
    %3438 = vmatpush1.bf16.msra.mxu0 0
    %3439 = vmatprep.subr.bf16.mxu0 0
    %3440 = vmatpush1.bf16.msra.mxu0 0
    %3441 = vmatprep.subr.bf16.mxu0 0
    %3442 = vmatpush1.bf16.msra.mxu0 0
    %3443 = vmatprep.subr.bf16.mxu0 0
    %3444 = vmatpush1.bf16.msra.mxu0 0
    %3445 = vmatprep.subr.bf16.mxu0 0
    %3446 = vmatpush1.bf16.msra.mxu0 0
    %3447 = vmatprep.subr.bf16.mxu0 0
    %3448 = vmatpush1.bf16.msra.mxu0 0
    %3449 = vmatprep.subr.bf16.mxu0 0
    %3450 = vmatpush1.bf16.msra.mxu0 0
    %3451 = vmatprep.subr.bf16.mxu0 0
    %3452 = vmatpush1.bf16.msra.mxu0 0
    %3453 = vmatprep.subr.bf16.mxu0 0
    %3454 = vmatpush1.bf16.msra.mxu0 0
    %3455 = vmatprep.subr.bf16.mxu0 0
    %3456 = vmatpush1.bf16.msra.mxu0 0
    %3457 = vmatprep.mubr.bf16.mxu0 0
    %3458 = vmatmul.mubr.bf16.gmra.mrb[0].mxu0 %v3414
    %v3459 = vpop.f32.mrb[0].mxu0
    %v3460 = vadd.f32 0.0, %v3459
    %v3461 = vpop.f32.mrb[0].mxu0
    %v3462 = vpop.f32.mrb[0].mxu0
    %v3463 = vadd.f32 0.0, %v3462
    %v3464 = vpop.f32.mrb[0].mxu0
    %3465 = vmatprep.mubr.bf16.mxu0 0
    %3466 = vmatmul.mubr.bf16.gmra.mrb[0].mxu0 %v3417
    %v3467 = vpop.f32.mrb[0].mxu0
    %v3468 = vadd.f32 0.0, %v3467
    %v3469 = vpop.f32.mrb[0].mxu0
    %v3470 = vpop.f32.mrb[0].mxu0
    %v3471 = vadd.f32 0.0, %v3470
    %v3472 = vpop.f32.mrb[0].mxu0
    %3473 = vmatprep.mubr.bf16.mxu0 0
    %3474 = vmatmul.mubr.bf16.gmra.mrb[0].mxu0 %v3420
    %v3475 = vpop.f32.mrb[0].mxu0
    %v3476 = vadd.f32 0.0, %v3475
    %v3477 = vpop.f32.mrb[0].mxu0
    %v3478 = vpop.f32.mrb[0].mxu0
    %v3479 = vadd.f32 0.0, %v3478
    %v3480 = vpop.f32.mrb[0].mxu0
    %3481 = vdwg.mxu0
    %v3482 = vadd.f32 %v3156, %v3460
    %v3483 = vadd.f32 %v3159, %v3463
    %v3484 = vadd.f32 %v3164, %v3468
    %v3485 = vadd.f32 %v3167, %v3471
    %v3486 = vadd.f32 %v3172, %v3476
    %v3487 = vadd.f32 %v3175, %v3479
    %3488 = vrot.lane.b32.xlu0 %v2564, 104
    %v3489 = vpop.permute.xlu0 %3488
    %3490 = vrot.lane.b32.xlu0 %v2565, 104
    %v3491 = vpop.permute.xlu0 %3490
    %3492 = vrot.lane.b32.xlu0 %v2566, 104
    %v3493 = vpop.permute.xlu0 %3492
    %3494 = vrot.lane.b32.xlu0 %v2567, 72
    %v3495 = vpop.permute.xlu0 %3494
    %3496 = vrot.lane.b32.xlu0 %v2568, 72
    %v3497 = vpop.permute.xlu0 %3496
    %3498 = vrot.lane.b32.xlu0 %v2569, 72
    %v3499 = vpop.permute.xlu0 %3498
    %v3501 = vsel %vm777, %v3489, 0
    %v3504 = vsel %vm777, %v3491, 0
    %v3507 = vsel %vm777, %v3493, 0
    %v3510 = vsel %vm777, %v3495, 0
    %v3513 = vsel %vm777, %v3497, 0
    %v3516 = vsel %vm777, %v3499, 0
    %3518 = vmatprep.subr.bf16.mxu0 0
    %3519 = vmatpush1.bf16.xpose.msra.mxu0 %v3510
    %3520 = vmatprep.subr.bf16.mxu0 0
    %3521 = vmatpush1.bf16.xpose.msra.mxu0 %v3513
    %3522 = vmatprep.subr.bf16.mxu0 0
    %3523 = vmatpush1.bf16.xpose.msra.mxu0 %v3516
    %3524 = vmatprep.subr.bf16.mxu0 0
    %3525 = vmatpush1.bf16.xpose.msra.mxu0 0
    %3526 = vmatprep.subr.bf16.mxu0 0
    %3527 = vmatpush1.bf16.xpose.msra.mxu0 0
    %3528 = vmatprep.subr.bf16.mxu0 0
    %3529 = vmatpush1.bf16.xpose.msra.mxu0 0
    %3530 = vmatprep.subr.bf16.mxu0 0
    %3531 = vmatpush1.bf16.xpose.msra.mxu0 0
    %3532 = vmatprep.subr.bf16.mxu0 0
    %3533 = vmatpush1.bf16.xpose.msra.mxu0 0
    %3534 = vmatprep.subr.bf16.mxu0 0
    %3535 = vmatpush1.bf16.xpose.msra.mxu0 0
    %3536 = vmatprep.subr.bf16.mxu0 0
    %3537 = vmatpush1.bf16.xpose.msra.mxu0 0
    %3538 = vmatprep.subr.bf16.mxu0 0
    %3539 = vmatpush1.bf16.xpose.msra.mxu0 0
    %3540 = vmatprep.subr.bf16.mxu0 0
    %3541 = vmatpush1.bf16.xpose.msra.mxu0 0
    %3542 = vmatprep.subr.bf16.mxu0 0
    %3543 = vmatpush1.bf16.xpose.msra.mxu0 0
    %3544 = vmatprep.subr.bf16.mxu0 0
    %3545 = vmatpush1.bf16.xpose.msra.mxu0 0
    %3546 = vmatprep.subr.bf16.mxu0 0
    %3547 = vmatpush1.bf16.xpose.msra.mxu0 0
    %3548 = vmatprep.subr.bf16.mxu0 0
    %3549 = vmatpush1.bf16.xpose.msra.mxu0 0
    %3550 = vmatprep.mubr.bf16.mxu0 0
    %3551 = vmatmul.mubr.bf16.gmra.mrb[0].mxu0 %v3501
    %v3552 = vpop.f32.mrb[0].mxu0
    %v3553 = vadd.f32 %v556, %v3552
    %v3554 = vpop.f32.mrb[0].mxu0
    %v3555 = vpop.f32.mrb[0].mxu0
    %v3556 = vadd.f32 %v557, %v3555
    %v3557 = vpop.f32.mrb[0].mxu0
    %3558 = vmatprep.mubr.bf16.mxu0 0
    %3559 = vmatmul.mubr.bf16.gmra.mrb[0].mxu0 %v3504
    %v3560 = vpop.f32.mrb[0].mxu0
    %v3561 = vadd.f32 %v558, %v3560
    %v3562 = vpop.f32.mrb[0].mxu0
    %v3563 = vpop.f32.mrb[0].mxu0
    %v3564 = vadd.f32 %v559, %v3563
    %v3565 = vpop.f32.mrb[0].mxu0
    %3566 = vmatprep.mubr.bf16.mxu0 0
    %3567 = vmatmul.mubr.bf16.gmra.mrb[0].mxu0 %v3507
    %v3568 = vpop.f32.mrb[0].mxu0
    %v3569 = vadd.f32 %v560, %v3568
    %v3570 = vpop.f32.mrb[0].mxu0
    %v3571 = vpop.f32.mrb[0].mxu0
    %v3572 = vadd.f32 %v561, %v3571
    %v3573 = vpop.f32.mrb[0].mxu0
    %3574 = vdwg.mxu0
    %v3575 = vsel %vm853, %v3553, -inf
    %3576 = vmax.xlane.f32.xlu0 %v3575
    %v3577 = vpop.xlane.xlu0 %3576
    %v3578 = vsel %vm853, %v3556, -inf
    %3579 = vmax.xlane.f32.xlu0 %v3578
    %v3580 = vpop.xlane.xlu0 %3579
    %v3581 = vsel %vm853, %v3561, -inf
    %3582 = vmax.xlane.f32.xlu0 %v3581
    %v3583 = vpop.xlane.xlu0 %3582
    %v3584 = vsel %vm853, %v3564, -inf
    %3585 = vmax.xlane.f32.xlu0 %v3584
    %v3586 = vpop.xlane.xlu0 %3585
    %v3587 = vsel %vm853, %v3569, -inf
    %3588 = vmax.xlane.f32.xlu0 %v3587
    %v3589 = vpop.xlane.xlu0 %3588
    %v3590 = vsel %vm853, %v3572, -inf
    %3591 = vmax.xlane.f32.xlu0 %v3590
    %v3592 = vpop.xlane.xlu0 %3591
    %v3593 = vsub.f32 %v3553, %v3577
    %v3594 = vsub.f32 %v3556, %v3580
    %v3595 = vsub.f32 %v3561, %v3583
    %v3596 = vsub.f32 %v3564, %v3586
    %v3597 = vsub.f32 %v3569, %v3589
    %v3598 = vsub.f32 %v3572, %v3592
    %v3599 = vmul.f32 %v3593, 1.442695
    %v3600 = vpow.pop %v3599
    %v3601 = vmul.f32 %v3594, 1.442695
    %v3602 = vpow.pop %v3601
    %v3603 = vmul.f32 %v3595, 1.442695
    %v3604 = vpow.pop %v3603
    %v3605 = vmul.f32 %v3596, 1.442695
    %v3606 = vpow.pop %v3605
    %v3607 = vmul.f32 %v3597, 1.442695
    %v3608 = vpow.pop %v3607
    %v3609 = vmul.f32 %v3598, 1.442695
    %v3610 = vpow.pop %v3609
    %v3611 = vsel %vm853, %v3600, 0.0
    %3612 = vadd.xlane.f32.xlu0 %v3611
    %v3613 = vpop.xlane.xlu0 %3612
    %v3614 = vsel %vm853, %v3602, 0.0
    %3615 = vadd.xlane.f32.xlu0 %v3614
    %v3616 = vpop.xlane.xlu0 %3615
    %v3617 = vsel %vm853, %v3604, 0.0
    %3618 = vadd.xlane.f32.xlu0 %v3617
    %v3619 = vpop.xlane.xlu0 %3618
    %v3620 = vsel %vm853, %v3606, 0.0
    %3621 = vadd.xlane.f32.xlu0 %v3620
    %v3622 = vpop.xlane.xlu0 %3621
    %v3623 = vsel %vm853, %v3608, 0.0
    %3624 = vadd.xlane.f32.xlu0 %v3623
    %v3625 = vpop.xlane.xlu0 %3624
    %v3626 = vsel %vm853, %v3610, 0.0
    %3627 = vadd.xlane.f32.xlu0 %v3626
    %v3628 = vpop.xlane.xlu0 %3627
    %v3629 = vrcp.pop %v3613
    %v3630 = vrcp.pop %v3616
    %v3631 = vrcp.pop %v3619
    %v3632 = vrcp.pop %v3622
    %v3633 = vrcp.pop %v3625
    %v3634 = vrcp.pop %v3628
    %v3635 = vmul.f32 %v3600, %v3629
    %v3636 = vmul.f32 %v3602, %v3630
    %v3637 = vmul.f32 %v3604, %v3631
    %v3638 = vmul.f32 %v3606, %v3632
    %v3639 = vmul.f32 %v3608, %v3633
    %v3640 = vmul.f32 %v3610, %v3634
    %v3641 = vpack.c.bf16 %v3636, %v3635
    %v3642 = vpack.c.bf16 %v3638, %v3637
    %v3643 = vpack.c.bf16 %v3640, %v3639
    %3644 = vrot.lane.b32.xlu0 %v2567, 40
    %v3645 = vpop.permute.xlu0 %3644
    %3646 = vrot.lane.b32.xlu0 %v2568, 40
    %v3647 = vpop.permute.xlu0 %3646
    %3648 = vrot.lane.b32.xlu0 %v2569, 40
    %v3649 = vpop.permute.xlu0 %3648
    %v3654 = vsel %vm853, %v3641, 0
    %v3657 = vsel %vm853, %v3642, 0
    %v3660 = vsel %vm853, %v3643, 0
    %3662 = vmatprep.subr.bf16.mxu0 0
    %3663 = vmatpush1.bf16.msra.mxu0 %v3645
    %3664 = vmatprep.subr.bf16.mxu0 0
    %3665 = vmatpush1.bf16.msra.mxu0 %v3647
    %3666 = vmatprep.subr.bf16.mxu0 0
    %3667 = vmatpush1.bf16.msra.mxu0 %v3649
    %3668 = vmatprep.subr.bf16.mxu0 0
    %3669 = vmatpush1.bf16.msra.mxu0 0
    %3670 = vmatprep.subr.bf16.mxu0 0
    %3671 = vmatpush1.bf16.msra.mxu0 0
    %3672 = vmatprep.subr.bf16.mxu0 0
    %3673 = vmatpush1.bf16.msra.mxu0 0
    %3674 = vmatprep.subr.bf16.mxu0 0
    %3675 = vmatpush1.bf16.msra.mxu0 0
    %3676 = vmatprep.subr.bf16.mxu0 0
    %3677 = vmatpush1.bf16.msra.mxu0 0
    %3678 = vmatprep.subr.bf16.mxu0 0
    %3679 = vmatpush1.bf16.msra.mxu0 0
    %3680 = vmatprep.subr.bf16.mxu0 0
    %3681 = vmatpush1.bf16.msra.mxu0 0
    %3682 = vmatprep.subr.bf16.mxu0 0
    %3683 = vmatpush1.bf16.msra.mxu0 0
    %3684 = vmatprep.subr.bf16.mxu0 0
    %3685 = vmatpush1.bf16.msra.mxu0 0
    %3686 = vmatprep.subr.bf16.mxu0 0
    %3687 = vmatpush1.bf16.msra.mxu0 0
    %3688 = vmatprep.subr.bf16.mxu0 0
    %3689 = vmatpush1.bf16.msra.mxu0 0
    %3690 = vmatprep.subr.bf16.mxu0 0
    %3691 = vmatpush1.bf16.msra.mxu0 0
    %3692 = vmatprep.subr.bf16.mxu0 0
    %3693 = vmatpush1.bf16.msra.mxu0 0
    %3694 = vmatprep.mubr.bf16.mxu0 0
    %3695 = vmatmul.mubr.bf16.gmra.mrb[0].mxu0 %v3654
    %v3696 = vpop.f32.mrb[0].mxu0
    %v3697 = vadd.f32 0.0, %v3696
    %v3698 = vpop.f32.mrb[0].mxu0
    %v3699 = vpop.f32.mrb[0].mxu0
    %v3700 = vadd.f32 0.0, %v3699
    %v3701 = vpop.f32.mrb[0].mxu0
    %3702 = vmatprep.mubr.bf16.mxu0 0
    %3703 = vmatmul.mubr.bf16.gmra.mrb[0].mxu0 %v3657
    %v3704 = vpop.f32.mrb[0].mxu0
    %v3705 = vadd.f32 0.0, %v3704
    %v3706 = vpop.f32.mrb[0].mxu0
    %v3707 = vpop.f32.mrb[0].mxu0
    %v3708 = vadd.f32 0.0, %v3707
    %v3709 = vpop.f32.mrb[0].mxu0
    %3710 = vmatprep.mubr.bf16.mxu0 0
    %3711 = vmatmul.mubr.bf16.gmra.mrb[0].mxu0 %v3660
    %v3712 = vpop.f32.mrb[0].mxu0
    %v3713 = vadd.f32 0.0, %v3712
    %v3714 = vpop.f32.mrb[0].mxu0
    %v3715 = vpop.f32.mrb[0].mxu0
    %v3716 = vadd.f32 0.0, %v3715
    %v3717 = vpop.f32.mrb[0].mxu0
    %3718 = vdwg.mxu0
    %v3719 = vpack.c.bf16 %v3700, %v3697
    %v3720 = vpack.c.bf16 %v3708, %v3705
    %v3721 = vpack.c.bf16 %v3716, %v3713
    %v3722 = vpack.c.bf16 %v2557, %v2557
    %v3724 = vsel %vm777, %v3719, 0
    %v3727 = vsel %vm777, %v3720, 0
    %v3730 = vsel %vm777, %v3721, 0
    %v3733 = vsel %vm1249, %v3722, 0
    %3735 = vmatprep.subr.bf16.mxu0 0
    %3736 = vmatpush1.bf16.msra.mxu0 %v3733
    %3737 = vmatprep.subr.bf16.mxu0 0
    %3738 = vmatpush1.bf16.msra.mxu0 0
    %3739 = vmatprep.subr.bf16.mxu0 0
    %3740 = vmatpush1.bf16.msra.mxu0 0
    %3741 = vmatprep.subr.bf16.mxu0 0
    %3742 = vmatpush1.bf16.msra.mxu0 0
    %3743 = vmatprep.subr.bf16.mxu0 0
    %3744 = vmatpush1.bf16.msra.mxu0 0
    %3745 = vmatprep.subr.bf16.mxu0 0
    %3746 = vmatpush1.bf16.msra.mxu0 0
    %3747 = vmatprep.subr.bf16.mxu0 0
    %3748 = vmatpush1.bf16.msra.mxu0 0
    %3749 = vmatprep.subr.bf16.mxu0 0
    %3750 = vmatpush1.bf16.msra.mxu0 0
    %3751 = vmatprep.subr.bf16.mxu0 0
    %3752 = vmatpush1.bf16.msra.mxu0 0
    %3753 = vmatprep.subr.bf16.mxu0 0
    %3754 = vmatpush1.bf16.msra.mxu0 0
    %3755 = vmatprep.subr.bf16.mxu0 0
    %3756 = vmatpush1.bf16.msra.mxu0 0
    %3757 = vmatprep.subr.bf16.mxu0 0
    %3758 = vmatpush1.bf16.msra.mxu0 0
    %3759 = vmatprep.subr.bf16.mxu0 0
    %3760 = vmatpush1.bf16.msra.mxu0 0
    %3761 = vmatprep.subr.bf16.mxu0 0
    %3762 = vmatpush1.bf16.msra.mxu0 0
    %3763 = vmatprep.subr.bf16.mxu0 0
    %3764 = vmatpush1.bf16.msra.mxu0 0
    %3765 = vmatprep.subr.bf16.mxu0 0
    %3766 = vmatpush1.bf16.msra.mxu0 0
    %3767 = vmatprep.mubr.bf16.mxu0 0
    %3768 = vmatmul.mubr.bf16.gmra.mrb[0].mxu0 %v3724
    %v3769 = vpop.f32.mrb[0].mxu0
    %v3770 = vadd.f32 0.0, %v3769
    %v3771 = vpop.f32.mrb[0].mxu0
    %v3772 = vpop.f32.mrb[0].mxu0
    %v3773 = vadd.f32 0.0, %v3772
    %v3774 = vpop.f32.mrb[0].mxu0
    %3775 = vmatprep.mubr.bf16.mxu0 0
    %3776 = vmatmul.mubr.bf16.gmra.mrb[0].mxu0 %v3727
    %v3777 = vpop.f32.mrb[0].mxu0
    %v3778 = vadd.f32 0.0, %v3777
    %v3779 = vpop.f32.mrb[0].mxu0
    %v3780 = vpop.f32.mrb[0].mxu0
    %v3781 = vadd.f32 0.0, %v3780
    %v3782 = vpop.f32.mrb[0].mxu0
    %3783 = vmatprep.mubr.bf16.mxu0 0
    %3784 = vmatmul.mubr.bf16.gmra.mrb[0].mxu0 %v3730
    %v3785 = vpop.f32.mrb[0].mxu0
    %v3786 = vadd.f32 0.0, %v3785
    %v3787 = vpop.f32.mrb[0].mxu0
    %v3788 = vpop.f32.mrb[0].mxu0
    %v3789 = vadd.f32 0.0, %v3788
    %v3790 = vpop.f32.mrb[0].mxu0
    %3791 = vdwg.mxu0
    %v3792 = vadd.f32 %v3482, %v3770
    %v3793 = vadd.f32 %v3483, %v3773
    %v3794 = vadd.f32 %v3484, %v3778
    %v3795 = vadd.f32 %v3485, %v3781
    %v3796 = vadd.f32 %v3486, %v3786
    %v3797 = vadd.f32 %v3487, %v3789
    %s3798 = scalar_lea.vmem %s33, 1
    %v3799 = vld [vmem:[%s3798] sm:$0x1]
    %v3801 = vlaneseq
    %v3802 = vshrl.u32 %v3801, 7
    %v3803 = vsub.s32 0, %v3802
    %v3804 = vrot.slane %v3799, %v3803
    %v3806 = vadd.f32 %v3792, %v3804
    %v3807 = vadd.f32 %v3793, %v3804
    %v3808 = vadd.f32 %v3794, %v3804
    %v3809 = vadd.f32 %v3795, %v3804
    %v3810 = vadd.f32 %v3796, %v3804
    %v3811 = vadd.f32 %v3797, %v3804
    %v3812 = vmul.f32 %v3806, %v2015
    %v3813 = vmul.f32 %v3807, %v2020
    %v3814 = vmul.f32 %v3808, %v2025
    %v3815 = vmul.f32 %v3809, %v2030
    %v3816 = vmul.f32 %v3810, %v2035
    %v3817 = vmul.f32 %v3811, %v2040
    %v3818 = vadd.f32 %v2453, %v3812
    %v3819 = vadd.f32 %v2454, %v3813
    %v3820 = vadd.f32 %v2455, %v3814
    %v3821 = vadd.f32 %v2456, %v3815
    %v3822 = vadd.f32 %v2457, %v3816
    %v3823 = vadd.f32 %v2458, %v3817
    %s3824 = scalar_lea.vmem %s35, 1
    %v3825 = vld [vmem:[%s3824] sm:$0x1]
    %s3826 = scalar_lea.vmem [#allocation6], 1
    %v3827 = vld [vmem:[%s3826] sm:$0x1]
    %v3828 = vsel %vm685, %v3818, 0.0
    %3829 = vadd.xlane.f32.xlu0 %v3828
    %v3830 = vpop.xlane.xlu0 %3829
    %v3831 = vsel %vm685, %v3819, 0.0
    %3832 = vadd.xlane.f32.xlu0 %v3831
    %v3833 = vpop.xlane.xlu0 %3832
    %v3834 = vsel %vm685, %v3820, 0.0
    %3835 = vadd.xlane.f32.xlu0 %v3834
    %v3836 = vpop.xlane.xlu0 %3835
    %v3837 = vsel %vm685, %v3821, 0.0
    %3838 = vadd.xlane.f32.xlu0 %v3837
    %v3839 = vpop.xlane.xlu0 %3838
    %v3840 = vsel %vm685, %v3822, 0.0
    %3841 = vadd.xlane.f32.xlu0 %v3840
    %v3842 = vpop.xlane.xlu0 %3841
    %v3843 = vsel %vm685, %v3823, 0.0
    %3844 = vadd.xlane.f32.xlu0 %v3843
    %v3845 = vpop.xlane.xlu0 %3844
    %v3846 = vmul.f32 %v3830, %v2074
    %v3847 = vmul.f32 %v3833, %v2074
    %v3848 = vmul.f32 %v3836, %v2074
    %v3849 = vmul.f32 %v3839, %v2074
    %v3850 = vmul.f32 %v3842, %v2074
    %v3851 = vmul.f32 %v3845, %v2074
    %v3852 = vsub.f32 %v3818, %v3846
    %v3853 = vsub.f32 %v3819, %v3847
    %v3854 = vsub.f32 %v3820, %v3848
    %v3855 = vsub.f32 %v3821, %v3849
    %v3856 = vsub.f32 %v3822, %v3850
    %v3857 = vsub.f32 %v3823, %v3851
    %v3858 = vmul.f32 %v3852, %v3852
    %v3859 = vmul.f32 %v3853, %v3853
    %v3860 = vmul.f32 %v3854, %v3854
    %v3861 = vmul.f32 %v3855, %v3855
    %v3862 = vmul.f32 %v3856, %v3856
    %v3863 = vmul.f32 %v3857, %v3857
    %v3864 = vsel %vm685, %v3858, 0.0
    %3865 = vadd.xlane.f32.xlu0 %v3864
    %v3866 = vpop.xlane.xlu0 %3865
    %v3867 = vsel %vm685, %v3859, 0.0
    %3868 = vadd.xlane.f32.xlu0 %v3867
    %v3869 = vpop.xlane.xlu0 %3868
    %v3870 = vsel %vm685, %v3860, 0.0
    %3871 = vadd.xlane.f32.xlu0 %v3870
    %v3872 = vpop.xlane.xlu0 %3871
    %v3873 = vsel %vm685, %v3861, 0.0
    %3874 = vadd.xlane.f32.xlu0 %v3873
    %v3875 = vpop.xlane.xlu0 %3874
    %v3876 = vsel %vm685, %v3862, 0.0
    %3877 = vadd.xlane.f32.xlu0 %v3876
    %v3878 = vpop.xlane.xlu0 %3877
    %v3879 = vsel %vm685, %v3863, 0.0
    %3880 = vadd.xlane.f32.xlu0 %v3879
    %v3881 = vpop.xlane.xlu0 %3880
    %v3882 = vmul.f32 %v3866, %v2074
    %v3883 = vmul.f32 %v3869, %v2074
    %v3884 = vmul.f32 %v3872, %v2074
    %v3885 = vmul.f32 %v3875, %v2074
    %v3886 = vmul.f32 %v3878, %v2074
    %v3887 = vmul.f32 %v3881, %v2074
    %v3888 = vadd.f32 %v3882, 1e-05
    %v3889 = vadd.f32 %v3883, 1e-05
    %v3890 = vadd.f32 %v3884, 1e-05
    %v3891 = vadd.f32 %v3885, 1e-05
    %v3892 = vadd.f32 %v3886, 1e-05
    %v3893 = vadd.f32 %v3887, 1e-05
    %v3894 = vrsqrt.pop %v3888
    %v3895 = vrsqrt.pop %v3889
    %v3896 = vrsqrt.pop %v3890
    %v3897 = vrsqrt.pop %v3891
    %v3898 = vrsqrt.pop %v3892
    %v3899 = vrsqrt.pop %v3893
    %v3900 = vmul.f32 %v3852, %v3894
    %v3901 = vmul.f32 %v3853, %v3895
    %v3902 = vmul.f32 %v3854, %v3896
    %v3903 = vmul.f32 %v3855, %v3897
    %v3904 = vmul.f32 %v3856, %v3898
    %v3905 = vmul.f32 %v3857, %v3899
    %v3907 = vlaneseq
    %v3908 = vshrl.u32 %v3907, 7
    %v3909 = vsub.s32 0, %v3908
    %v3910 = vrot.slane %v3825, %v3909
    %v3912 = vmul.f32 %v3900, %v3910
    %v3913 = vmul.f32 %v3901, %v3910
    %v3914 = vmul.f32 %v3902, %v3910
    %v3915 = vmul.f32 %v3903, %v3910
    %v3916 = vmul.f32 %v3904, %v3910
    %v3917 = vmul.f32 %v3905, %v3910
    %v3919 = vlaneseq
    %v3920 = vshrl.u32 %v3919, 7
    %v3921 = vsub.s32 0, %v3920
    %v3922 = vrot.slane %v3827, %v3921
    %v3924 = vadd.f32 %v3912, %v3922
    %v3925 = vadd.f32 %v3913, %v3922
    %v3926 = vadd.f32 %v3914, %v3922
    %v3927 = vadd.f32 %v3915, %v3922
    %v3928 = vadd.f32 %v3916, %v3922
    %v3929 = vadd.f32 %v3917, %v3922
    %s3930 = scalar_lea.vmem %s39, 16
    %v3931 = vld [vmem:[%s3930] sm:$0xf]
    %v3932 = vld [vmem:[%s3930 + $0x4] sm:$0xf]
    %v3933 = vld [vmem:[%s3930 + $0x8] sm:$0xf]
    %v3934 = vld [vmem:[%s3930 + $0xc] sm:$0xf]
    %v3935 = vpack.c.bf16 %v3925, %v3924
    %v3936 = vpack.c.bf16 %v3927, %v3926
    %v3937 = vpack.c.bf16 %v3929, %v3928
    %s3938 = scalar_lea.vmem [#allocation8], 1
    %v3939 = vld [vmem:[%s3938] sm:$0x1]
    %v3941 = vlaneseq
    %v3942 = vshrl.u32 %v3941, 7
    %v3943 = vsub.s32 0, %v3942
    %v3944 = vrot.slane %v3939, %v3943
    %v3950 = vunpack.c.l.b16 %v3931
    %v3951 = vunpack.c.l.b16 %v3932
    %v3952 = vunpack.c.l.b16 %v3933
    %v3953 = vunpack.c.l.b16 %v3934
    %v3954 = vpack.c.b16 %v3951, %v3950
    %v3955 = vpack.c.b16 %v3953, %v3952
    %v3959 = vsel %vm685, %v3935, 0
    %v3962 = vsel %vm685, %v3936, 0
    %v3965 = vsel %vm685, %v3937, 0
    %3967 = vmatprep.subr.bf16.mxu0 0
    %3968 = vmatpush1.bf16.msra.mxu0 %v3954
    %3969 = vmatprep.subr.bf16.mxu0 0
    %3970 = vmatpush1.bf16.msra.mxu0 %v3955
    %3971 = vmatprep.subr.bf16.mxu0 0
    %3972 = vmatpush1.bf16.msra.mxu0 0
    %3973 = vmatprep.subr.bf16.mxu0 0
    %3974 = vmatpush1.bf16.msra.mxu0 0
    %3975 = vmatprep.subr.bf16.mxu0 0
    %3976 = vmatpush1.bf16.msra.mxu0 0
    %3977 = vmatprep.subr.bf16.mxu0 0
    %3978 = vmatpush1.bf16.msra.mxu0 0
    %3979 = vmatprep.subr.bf16.mxu0 0
    %3980 = vmatpush1.bf16.msra.mxu0 0
    %3981 = vmatprep.subr.bf16.mxu0 0
    %3982 = vmatpush1.bf16.msra.mxu0 0
    %3983 = vmatprep.subr.bf16.mxu0 0
    %3984 = vmatpush1.bf16.msra.mxu0 0
    %3985 = vmatprep.subr.bf16.mxu0 0
    %3986 = vmatpush1.bf16.msra.mxu0 0
    %3987 = vmatprep.subr.bf16.mxu0 0
    %3988 = vmatpush1.bf16.msra.mxu0 0
    %3989 = vmatprep.subr.bf16.mxu0 0
    %3990 = vmatpush1.bf16.msra.mxu0 0
    %3991 = vmatprep.subr.bf16.mxu0 0
    %3992 = vmatpush1.bf16.msra.mxu0 0
    %3993 = vmatprep.subr.bf16.mxu0 0
    %3994 = vmatpush1.bf16.msra.mxu0 0
    %3995 = vmatprep.subr.bf16.mxu0 0
    %3996 = vmatpush1.bf16.msra.mxu0 0
    %3997 = vmatprep.subr.bf16.mxu0 0
    %3998 = vmatpush1.bf16.msra.mxu0 0
    %3999 = vmatprep.mubr.bf16.mxu0 0
    %4000 = vmatmul.mubr.bf16.gmra.mrb[0].mxu0 %v3959
    %v4001 = vpop.f32.mrb[0].mxu0
    %v4002 = vadd.f32 %v3944, %v4001
    %v4003 = vpop.f32.mrb[0].mxu0
    %v4004 = vpop.f32.mrb[0].mxu0
    %v4005 = vadd.f32 %v3944, %v4004
    %v4006 = vpop.f32.mrb[0].mxu0
    %4007 = vmatprep.mubr.bf16.mxu0 0
    %4008 = vmatmul.mubr.bf16.gmra.mrb[0].mxu0 %v3962
    %v4009 = vpop.f32.mrb[0].mxu0
    %v4010 = vadd.f32 %v3944, %v4009
    %v4011 = vpop.f32.mrb[0].mxu0
    %v4012 = vpop.f32.mrb[0].mxu0
    %v4013 = vadd.f32 %v3944, %v4012
    %v4014 = vpop.f32.mrb[0].mxu0
    %4015 = vmatprep.mubr.bf16.mxu0 0
    %4016 = vmatmul.mubr.bf16.gmra.mrb[0].mxu0 %v3965
    %v4017 = vpop.f32.mrb[0].mxu0
    %v4018 = vadd.f32 %v3944, %v4017
    %v4019 = vpop.f32.mrb[0].mxu0
    %v4020 = vpop.f32.mrb[0].mxu0
    %v4021 = vadd.f32 %v3944, %v4020
    %v4022 = vpop.f32.mrb[0].mxu0
    %4023 = vdwg.mxu0
    %v4024 = vmax.f32 %v4002, 0.0
    %v4025 = vmax.f32 %v4005, 0.0
    %v4026 = vmax.f32 %v4010, 0.0
    %v4027 = vmax.f32 %v4013, 0.0
    %v4028 = vmax.f32 %v4018, 0.0
    %v4029 = vmax.f32 %v4021, 0.0
    %s4030 = scalar_lea.vmem %s43, 16
    %v4031 = vld [vmem:[%s4030] sm:$0xf]
    %v4032 = vld [vmem:[%s4030 + $0x4] sm:$0xf]
    %v4033 = vld [vmem:[%s4030 + $0x8] sm:$0xf]
    %v4034 = vld [vmem:[%s4030 + $0xc] sm:$0xf]
    %v4035 = vpack.c.bf16 %v4025, %v4024
    %v4036 = vpack.c.bf16 %v4027, %v4026
    %v4037 = vpack.c.bf16 %v4029, %v4028
    %s4038 = scalar_lea.vmem [#allocation9], 1
    %v4039 = vld [vmem:[%s4038] sm:$0x1]
    %v4041 = vlaneseq
    %v4042 = vshrl.u32 %v4041, 7
    %v4043 = vsub.s32 0, %v4042
    %v4044 = vrot.slane %v4039, %v4043
    %v4050 = vunpack.c.l.b16 %v4031
    %v4051 = vunpack.c.l.b16 %v4032
    %v4052 = vunpack.c.l.b16 %v4033
    %v4053 = vunpack.c.l.b16 %v4034
    %v4054 = vpack.c.b16 %v4051, %v4050
    %v4055 = vpack.c.b16 %v4053, %v4052
    %v4059 = vsel %vm685, %v4035, 0
    %v4062 = vsel %vm685, %v4036, 0
    %v4065 = vsel %vm685, %v4037, 0
    %4067 = vmatprep.subr.bf16.mxu0 0
    %4068 = vmatpush1.bf16.msra.mxu0 %v4054
    %4069 = vmatprep.subr.bf16.mxu0 0
    %4070 = vmatpush1.bf16.msra.mxu0 %v4055
    %4071 = vmatprep.subr.bf16.mxu0 0
    %4072 = vmatpush1.bf16.msra.mxu0 0
    %4073 = vmatprep.subr.bf16.mxu0 0
    %4074 = vmatpush1.bf16.msra.mxu0 0
    %4075 = vmatprep.subr.bf16.mxu0 0
    %4076 = vmatpush1.bf16.msra.mxu0 0
    %4077 = vmatprep.subr.bf16.mxu0 0
    %4078 = vmatpush1.bf16.msra.mxu0 0
    %4079 = vmatprep.subr.bf16.mxu0 0
    %4080 = vmatpush1.bf16.msra.mxu0 0
    %4081 = vmatprep.subr.bf16.mxu0 0
    %4082 = vmatpush1.bf16.msra.mxu0 0
    %4083 = vmatprep.subr.bf16.mxu0 0
    %4084 = vmatpush1.bf16.msra.mxu0 0
    %4085 = vmatprep.subr.bf16.mxu0 0
    %4086 = vmatpush1.bf16.msra.mxu0 0
    %4087 = vmatprep.subr.bf16.mxu0 0
    %4088 = vmatpush1.bf16.msra.mxu0 0
    %4089 = vmatprep.subr.bf16.mxu0 0
    %4090 = vmatpush1.bf16.msra.mxu0 0
    %4091 = vmatprep.subr.bf16.mxu0 0
    %4092 = vmatpush1.bf16.msra.mxu0 0
    %4093 = vmatprep.subr.bf16.mxu0 0
    %4094 = vmatpush1.bf16.msra.mxu0 0
    %4095 = vmatprep.subr.bf16.mxu0 0
    %4096 = vmatpush1.bf16.msra.mxu0 0
    %4097 = vmatprep.subr.bf16.mxu0 0
    %4098 = vmatpush1.bf16.msra.mxu0 0
    %4099 = vmatprep.mubr.bf16.mxu0 0
    %4100 = vmatmul.mubr.bf16.gmra.mrb[0].mxu0 %v4059
    %v4101 = vpop.f32.mrb[0].mxu0
    %v4102 = vadd.f32 %v4044, %v4101
    %v4103 = vpop.f32.mrb[0].mxu0
    %v4104 = vpop.f32.mrb[0].mxu0
    %v4105 = vadd.f32 %v4044, %v4104
    %v4106 = vpop.f32.mrb[0].mxu0
    %4107 = vmatprep.mubr.bf16.mxu0 0
    %4108 = vmatmul.mubr.bf16.gmra.mrb[0].mxu0 %v4062
    %v4109 = vpop.f32.mrb[0].mxu0
    %v4110 = vadd.f32 %v4044, %v4109
    %v4111 = vpop.f32.mrb[0].mxu0
    %v4112 = vpop.f32.mrb[0].mxu0
    %v4113 = vadd.f32 %v4044, %v4112
    %v4114 = vpop.f32.mrb[0].mxu0
    %4115 = vmatprep.mubr.bf16.mxu0 0
    %4116 = vmatmul.mubr.bf16.gmra.mrb[0].mxu0 %v4065
    %v4117 = vpop.f32.mrb[0].mxu0
    %v4118 = vadd.f32 %v4044, %v4117
    %v4119 = vpop.f32.mrb[0].mxu0
    %v4120 = vpop.f32.mrb[0].mxu0
    %v4121 = vadd.f32 %v4044, %v4120
    %v4122 = vpop.f32.mrb[0].mxu0
    %4123 = vdwg.mxu0
    %v4124 = vadd.f32 %v3924, %v4102
    %v4125 = vadd.f32 %v3925, %v4105
    %v4126 = vadd.f32 %v3926, %v4110
    %v4127 = vadd.f32 %v3927, %v4113
    %v4128 = vadd.f32 %v3928, %v4118
    %v4129 = vadd.f32 %v3929, %v4121
    %s4130 = scalar_lea.vmem [#allocation11], 1
    %v4131 = vld [vmem:[%s4130] sm:$0x1]
    %s4132 = scalar_lea.vmem [#allocation12], 1
    %v4133 = vld [vmem:[%s4132] sm:$0x1]
    %v4134 = vsel %vm685, %v4124, 0.0
    %4135 = vadd.xlane.f32.xlu0 %v4134
    %v4136 = vpop.xlane.xlu0 %4135
    %v4137 = vsel %vm685, %v4125, 0.0
    %4138 = vadd.xlane.f32.xlu0 %v4137
    %v4139 = vpop.xlane.xlu0 %4138
    %v4140 = vsel %vm685, %v4126, 0.0
    %4141 = vadd.xlane.f32.xlu0 %v4140
    %v4142 = vpop.xlane.xlu0 %4141
    %v4143 = vsel %vm685, %v4127, 0.0
    %4144 = vadd.xlane.f32.xlu0 %v4143
    %v4145 = vpop.xlane.xlu0 %4144
    %v4146 = vsel %vm685, %v4128, 0.0
    %4147 = vadd.xlane.f32.xlu0 %v4146
    %v4148 = vpop.xlane.xlu0 %4147
    %v4149 = vsel %vm685, %v4129, 0.0
    %4150 = vadd.xlane.f32.xlu0 %v4149
    %v4151 = vpop.xlane.xlu0 %4150
    %v4152 = vmul.f32 %v4136, %v2074
    %v4153 = vmul.f32 %v4139, %v2074
    %v4154 = vmul.f32 %v4142, %v2074
    %v4155 = vmul.f32 %v4145, %v2074
    %v4156 = vmul.f32 %v4148, %v2074
    %v4157 = vmul.f32 %v4151, %v2074
    %v4158 = vsub.f32 %v4124, %v4152
    %v4159 = vsub.f32 %v4125, %v4153
    %v4160 = vsub.f32 %v4126, %v4154
    %v4161 = vsub.f32 %v4127, %v4155
    %v4162 = vsub.f32 %v4128, %v4156
    %v4163 = vsub.f32 %v4129, %v4157
    %v4164 = vmul.f32 %v4158, %v4158
    %v4165 = vmul.f32 %v4159, %v4159
    %v4166 = vmul.f32 %v4160, %v4160
    %v4167 = vmul.f32 %v4161, %v4161
    %v4168 = vmul.f32 %v4162, %v4162
    %v4169 = vmul.f32 %v4163, %v4163
    %v4170 = vsel %vm685, %v4164, 0.0
    %4171 = vadd.xlane.f32.xlu0 %v4170
    %v4172 = vpop.xlane.xlu0 %4171
    %v4173 = vsel %vm685, %v4165, 0.0
    %4174 = vadd.xlane.f32.xlu0 %v4173
    %v4175 = vpop.xlane.xlu0 %4174
    %v4176 = vsel %vm685, %v4166, 0.0
    %4177 = vadd.xlane.f32.xlu0 %v4176
    %v4178 = vpop.xlane.xlu0 %4177
    %v4179 = vsel %vm685, %v4167, 0.0
    %4180 = vadd.xlane.f32.xlu0 %v4179
    %v4181 = vpop.xlane.xlu0 %4180
    %v4182 = vsel %vm685, %v4168, 0.0
    %4183 = vadd.xlane.f32.xlu0 %v4182
    %v4184 = vpop.xlane.xlu0 %4183
    %v4185 = vsel %vm685, %v4169, 0.0
    %4186 = vadd.xlane.f32.xlu0 %v4185
    %v4187 = vpop.xlane.xlu0 %4186
    %v4188 = vmul.f32 %v4172, %v2074
    %v4189 = vmul.f32 %v4175, %v2074
    %v4190 = vmul.f32 %v4178, %v2074
    %v4191 = vmul.f32 %v4181, %v2074
    %v4192 = vmul.f32 %v4184, %v2074
    %v4193 = vmul.f32 %v4187, %v2074
    %v4194 = vadd.f32 %v4188, 1e-05
    %v4195 = vadd.f32 %v4189, 1e-05
    %v4196 = vadd.f32 %v4190, 1e-05
    %v4197 = vadd.f32 %v4191, 1e-05
    %v4198 = vadd.f32 %v4192, 1e-05
    %v4199 = vadd.f32 %v4193, 1e-05
    %v4200 = vrsqrt.pop %v4194
    %v4201 = vrsqrt.pop %v4195
    %v4202 = vrsqrt.pop %v4196
    %v4203 = vrsqrt.pop %v4197
    %v4204 = vrsqrt.pop %v4198
    %v4205 = vrsqrt.pop %v4199
    %v4206 = vmul.f32 %v4158, %v4200
    %v4207 = vmul.f32 %v4159, %v4201
    %v4208 = vmul.f32 %v4160, %v4202
    %v4209 = vmul.f32 %v4161, %v4203
    %v4210 = vmul.f32 %v4162, %v4204
    %v4211 = vmul.f32 %v4163, %v4205
    %v4213 = vlaneseq
    %v4214 = vshrl.u32 %v4213, 7
    %v4215 = vsub.s32 0, %v4214
    %v4216 = vrot.slane %v4131, %v4215
    %v4218 = vmul.f32 %v4206, %v4216
    %v4219 = vmul.f32 %v4207, %v4216
    %v4220 = vmul.f32 %v4208, %v4216
    %v4221 = vmul.f32 %v4209, %v4216
    %v4222 = vmul.f32 %v4210, %v4216
    %v4223 = vmul.f32 %v4211, %v4216
    %v4225 = vlaneseq
    %v4226 = vshrl.u32 %v4225, 7
    %v4227 = vsub.s32 0, %v4226
    %v4228 = vrot.slane %v4133, %v4227
    %v4230 = vadd.f32 %v4218, %v4228
    %v4231 = vadd.f32 %v4219, %v4228
    %v4232 = vadd.f32 %v4220, %v4228
    %v4233 = vadd.f32 %v4221, %v4228
    %v4234 = vadd.f32 %v4222, %v4228
    %v4235 = vadd.f32 %v4223, %v4228
    %v4236 = vld [vmem:[%s7] sm:$0xff]
    %v4237 = vld [vmem:[%s7 + $0x8] sm:$0xff]
    %v4238 = vld [vmem:[%s7 + $0x10] sm:$0xff]
    %v4239 = vld [vmem:[%s7 + $0x18] sm:$0xff]
    %v4240 = vld [vmem:[%s7 + $0x20] sm:$0xff]
    %v4241 = vld [vmem:[%s7 + $0x28] sm:$0xff]
    %4243 = vset.pattern.permute.xlu0 0
    %4244 = vperm.xlu0 %4243, %v4236
    %v4245 = vpop.permute.xlu0 %4244
    %4248 = vset.pattern.permute.xlu0 0
    %4249 = vperm.xlu0 %4248, %v4237
    %v4250 = vpop.permute.xlu0 %4249
    %4253 = vset.pattern.permute.xlu0 0
    %4254 = vperm.xlu0 %4253, %v4238
    %v4255 = vpop.permute.xlu0 %4254
    %4258 = vset.pattern.permute.xlu0 0
    %4259 = vperm.xlu0 %4258, %v4239
    %v4260 = vpop.permute.xlu0 %4259
    %4263 = vset.pattern.permute.xlu0 0
    %4264 = vperm.xlu0 %4263, %v4240
    %v4265 = vpop.permute.xlu0 %4264
    %4268 = vset.pattern.permute.xlu0 0
    %4269 = vperm.xlu0 %4268, %v4241
    %v4270 = vpop.permute.xlu0 %4269
    %v4272 = vmul.f32 %v4230, %v4245
    %v4273 = vmul.f32 %v4231, %v4250
    %v4274 = vmul.f32 %v4232, %v4255
    %v4275 = vmul.f32 %v4233, %v4260
    %v4276 = vmul.f32 %v4234, %v4265
    %v4277 = vmul.f32 %v4235, %v4270
    %v4278 = vld [vmem:[%s9] sm:$0x3]
    %v4279 = vpack.c.bf16 %v4278, %v4278
    %v4280 = vpack.c.bf16 %v4273, %v4272
    %v4281 = vpack.c.bf16 %v4275, %v4274
    %v4282 = vpack.c.bf16 %v4277, %v4276
    %v4284 = vsel %vm853, %v4279, 0
    %4286 = vmatprep.subr.bf16.mxu0 0
    %4287 = vmatpush1.bf16.msra.mxu0 %v4280
    %4288 = vmatprep.subr.bf16.mxu0 0
    %4289 = vmatpush1.bf16.msra.mxu0 %v4281
    %4290 = vmatprep.subr.bf16.mxu0 0
    %4291 = vmatpush1.bf16.msra.mxu0 %v4282
    %4292 = vmatprep.subr.bf16.mxu0 0
    %4293 = vmatpush1.bf16.msra.mxu0 0
    %4294 = vmatprep.subr.bf16.mxu0 0
    %4295 = vmatpush1.bf16.msra.mxu0 0
    %4296 = vmatprep.subr.bf16.mxu0 0
    %4297 = vmatpush1.bf16.msra.mxu0 0
    %4298 = vmatprep.subr.bf16.mxu0 0
    %4299 = vmatpush1.bf16.msra.mxu0 0
    %4300 = vmatprep.subr.bf16.mxu0 0
    %4301 = vmatpush1.bf16.msra.mxu0 0
    %4302 = vmatprep.subr.bf16.mxu0 0
    %4303 = vmatpush1.bf16.msra.mxu0 0
    %4304 = vmatprep.subr.bf16.mxu0 0
    %4305 = vmatpush1.bf16.msra.mxu0 0
    %4306 = vmatprep.subr.bf16.mxu0 0
    %4307 = vmatpush1.bf16.msra.mxu0 0
    %4308 = vmatprep.subr.bf16.mxu0 0
    %4309 = vmatpush1.bf16.msra.mxu0 0
    %4310 = vmatprep.subr.bf16.mxu0 0
    %4311 = vmatpush1.bf16.msra.mxu0 0
    %4312 = vmatprep.subr.bf16.mxu0 0
    %4313 = vmatpush1.bf16.msra.mxu0 0
    %4314 = vmatprep.subr.bf16.mxu0 0
    %4315 = vmatpush1.bf16.msra.mxu0 0
    %4316 = vmatprep.subr.bf16.mxu0 0
    %4317 = vmatpush1.bf16.msra.mxu0 0
    %4318 = vmatprep.mubr.bf16.mxu0 0
    %4319 = vmatmul.mubr.bf16.gmra.mrb[0].mxu0 %v4284
    %v4320 = vpop.f32.mrb[0].mxu0
    %v4321 = vadd.f32 0.0, %v4320
    %v4322 = vpop.f32.mrb[0].mxu0
    %v4323 = vpop.f32.mrb[0].mxu0
    %v4324 = vpop.f32.mrb[0].mxu0
    %4325 = vdwg.mxu0
    %s4326 = scalar_lea.vmem %s9, 2
    %v4327 = vld [vmem:[%s4326] sm:$0x3]
    %v4328 = vpack.c.bf16 %v4327, %v4327
    %v4330 = vsel %vm853, %v4328, 0
    %4332 = vmatprep.subr.bf16.mxu0 0
    %4333 = vmatpush1.bf16.msra.mxu0 %v4280
    %4334 = vmatprep.subr.bf16.mxu0 0
    %4335 = vmatpush1.bf16.msra.mxu0 %v4281
    %4336 = vmatprep.subr.bf16.mxu0 0
    %4337 = vmatpush1.bf16.msra.mxu0 %v4282
    %4338 = vmatprep.subr.bf16.mxu0 0
    %4339 = vmatpush1.bf16.msra.mxu0 0
    %4340 = vmatprep.subr.bf16.mxu0 0
    %4341 = vmatpush1.bf16.msra.mxu0 0
    %4342 = vmatprep.subr.bf16.mxu0 0
    %4343 = vmatpush1.bf16.msra.mxu0 0
    %4344 = vmatprep.subr.bf16.mxu0 0
    %4345 = vmatpush1.bf16.msra.mxu0 0
    %4346 = vmatprep.subr.bf16.mxu0 0
    %4347 = vmatpush1.bf16.msra.mxu0 0
    %4348 = vmatprep.subr.bf16.mxu0 0
    %4349 = vmatpush1.bf16.msra.mxu0 0
    %4350 = vmatprep.subr.bf16.mxu0 0
    %4351 = vmatpush1.bf16.msra.mxu0 0
    %4352 = vmatprep.subr.bf16.mxu0 0
    %4353 = vmatpush1.bf16.msra.mxu0 0
    %4354 = vmatprep.subr.bf16.mxu0 0
    %4355 = vmatpush1.bf16.msra.mxu0 0
    %4356 = vmatprep.subr.bf16.mxu0 0
    %4357 = vmatpush1.bf16.msra.mxu0 0
    %4358 = vmatprep.subr.bf16.mxu0 0
    %4359 = vmatpush1.bf16.msra.mxu0 0
    %4360 = vmatprep.subr.bf16.mxu0 0
    %4361 = vmatpush1.bf16.msra.mxu0 0
    %4362 = vmatprep.subr.bf16.mxu0 0
    %4363 = vmatpush1.bf16.msra.mxu0 0
    %4364 = vmatprep.mubr.bf16.mxu0 0
    %4365 = vmatmul.mubr.bf16.gmra.mrb[0].mxu0 %v4330
    %v4366 = vpop.f32.mrb[0].mxu0
    %v4367 = vadd.f32 0.0, %v4366
    %v4368 = vpop.f32.mrb[0].mxu0
    %v4369 = vpop.f32.mrb[0].mxu0
    %v4370 = vpop.f32.mrb[0].mxu0
    %4371 = vdwg.mxu0
    %s4372 = scalar_lea.vmem %s9, 4
    %v4373 = vld [vmem:[%s4372] sm:$0x3]
    %v4374 = vpack.c.bf16 %v4373, %v4373
    %v4376 = vsel %vm853, %v4374, 0
    %4378 = vmatprep.subr.bf16.mxu0 0
    %4379 = vmatpush1.bf16.msra.mxu0 %v4280
    %4380 = vmatprep.subr.bf16.mxu0 0
    %4381 = vmatpush1.bf16.msra.mxu0 %v4281
    %4382 = vmatprep.subr.bf16.mxu0 0
    %4383 = vmatpush1.bf16.msra.mxu0 %v4282
    %4384 = vmatprep.subr.bf16.mxu0 0
    %4385 = vmatpush1.bf16.msra.mxu0 0
    %4386 = vmatprep.subr.bf16.mxu0 0
    %4387 = vmatpush1.bf16.msra.mxu0 0
    %4388 = vmatprep.subr.bf16.mxu0 0
    %4389 = vmatpush1.bf16.msra.mxu0 0
    %4390 = vmatprep.subr.bf16.mxu0 0
    %4391 = vmatpush1.bf16.msra.mxu0 0
    %4392 = vmatprep.subr.bf16.mxu0 0
    %4393 = vmatpush1.bf16.msra.mxu0 0
    %4394 = vmatprep.subr.bf16.mxu0 0
    %4395 = vmatpush1.bf16.msra.mxu0 0
    %4396 = vmatprep.subr.bf16.mxu0 0
    %4397 = vmatpush1.bf16.msra.mxu0 0
    %4398 = vmatprep.subr.bf16.mxu0 0
    %4399 = vmatpush1.bf16.msra.mxu0 0
    %4400 = vmatprep.subr.bf16.mxu0 0
    %4401 = vmatpush1.bf16.msra.mxu0 0
    %4402 = vmatprep.subr.bf16.mxu0 0
    %4403 = vmatpush1.bf16.msra.mxu0 0
    %4404 = vmatprep.subr.bf16.mxu0 0
    %4405 = vmatpush1.bf16.msra.mxu0 0
    %4406 = vmatprep.subr.bf16.mxu0 0
    %4407 = vmatpush1.bf16.msra.mxu0 0
    %4408 = vmatprep.subr.bf16.mxu0 0
    %4409 = vmatpush1.bf16.msra.mxu0 0
    %4410 = vmatprep.mubr.bf16.mxu0 0
    %4411 = vmatmul.mubr.bf16.gmra.mrb[0].mxu0 %v4376
    %v4412 = vpop.f32.mrb[0].mxu0
    %v4413 = vadd.f32 0.0, %v4412
    %v4414 = vpop.f32.mrb[0].mxu0
    %v4415 = vpop.f32.mrb[0].mxu0
    %v4416 = vpop.f32.mrb[0].mxu0
    %4417 = vdwg.mxu0
    %v4418 = vld [vmem:[%s17] sm:$0x3]
    %v4419 = vld [vmem:[%s51] sm:$0xf]
    %v4420 = vld [vmem:[%s51 + $0x4] sm:$0xf]
    %v4421 = vld [vmem:[%s51 + $0x8] sm:$0x3]
    %v4422 = vpack.c.bf16 %v4418, %v4418
    %v4423 = vld [vmem:[#allocation14] sm:$0x1]
    %v4425 = vlaneseq
    %v4426 = vshrl.u32 %v4425, 7
    %v4427 = vsub.s32 0, %v4426
    %v4428 = vrot.slane %v4423, %v4427
    %v4433 = vunpack.c.l.b16 %v4419
    %v4434 = vunpack.c.l.b16 %v4420
    %v4435 = vunpack.c.l.b16 %v4421
    %v4436 = vpack.c.b16 %v4434, %v4433
    %v4437 = vpack.c.b16 %v4435, %v4435
    %vm4439 = vcmask 162816
    %v4441 = vsel %vm4439, %v4422, 0
    %vm4443 = vcmask 1041408
    %v4445 = vsel %vm4443, %v4437, 0
    %4447 = vmatprep.subr.bf16.mxu0 0
    %4448 = vmatpush1.bf16.msra.mxu0 %v4436
    %4449 = vmatprep.subr.bf16.mxu0 0
    %4450 = vmatpush1.bf16.msra.mxu0 %v4445
    %4451 = vmatprep.subr.bf16.mxu0 0
    %4452 = vmatpush1.bf16.msra.mxu0 0
    %4453 = vmatprep.subr.bf16.mxu0 0
    %4454 = vmatpush1.bf16.msra.mxu0 0
    %4455 = vmatprep.subr.bf16.mxu0 0
    %4456 = vmatpush1.bf16.msra.mxu0 0
    %4457 = vmatprep.subr.bf16.mxu0 0
    %4458 = vmatpush1.bf16.msra.mxu0 0
    %4459 = vmatprep.subr.bf16.mxu0 0
    %4460 = vmatpush1.bf16.msra.mxu0 0
    %4461 = vmatprep.subr.bf16.mxu0 0
    %4462 = vmatpush1.bf16.msra.mxu0 0
    %4463 = vmatprep.subr.bf16.mxu0 0
    %4464 = vmatpush1.bf16.msra.mxu0 0
    %4465 = vmatprep.subr.bf16.mxu0 0
    %4466 = vmatpush1.bf16.msra.mxu0 0
    %4467 = vmatprep.subr.bf16.mxu0 0
    %4468 = vmatpush1.bf16.msra.mxu0 0
    %4469 = vmatprep.subr.bf16.mxu0 0
    %4470 = vmatpush1.bf16.msra.mxu0 0
    %4471 = vmatprep.subr.bf16.mxu0 0
    %4472 = vmatpush1.bf16.msra.mxu0 0
    %4473 = vmatprep.subr.bf16.mxu0 0
    %4474 = vmatpush1.bf16.msra.mxu0 0
    %4475 = vmatprep.subr.bf16.mxu0 0
    %4476 = vmatpush1.bf16.msra.mxu0 0
    %4477 = vmatprep.subr.bf16.mxu0 0
    %4478 = vmatpush1.bf16.msra.mxu0 0
    %4479 = vmatprep.mubr.bf16.mxu0 0
    %4480 = vmatmul.mubr.bf16.gmra.mrb[0].mxu0 %v4441
    %v4481 = vpop.f32.mrb[0].mxu0
    %v4482 = vadd.f32 %v4428, %v4481
    %v4483 = vpop.f32.mrb[0].mxu0
    %v4484 = vpop.f32.mrb[0].mxu0
    %v4485 = vpop.f32.mrb[0].mxu0
    %4486 = vdwg.mxu0
    %v4487 = vmax.f32 %v4482, 0.0
    %v4488 = vld [vmem:[%s55] sm:$0xf]
    %v4489 = vld [vmem:[%s55 + $0x4] sm:$0xf]
    %v4490 = vpack.c.bf16 %v4487, %v4487
    %v4491 = vld [vmem:[#allocation15] sm:$0x1]
    %v4493 = vlaneseq
    %v4494 = vshrl.u32 %v4493, 7
    %v4495 = vsub.s32 0, %v4494
    %v4496 = vrot.slane %v4491, %v4495
    %v4500 = vunpack.c.l.b16 %v4488
    %v4501 = vunpack.c.l.b16 %v4489
    %v4502 = vpack.c.b16 %v4501, %v4500
    %v4505 = vsel %vm592, %v4490, 0
    %4507 = vmatprep.subr.bf16.mxu0 0
    %4508 = vmatpush1.bf16.msra.mxu0 %v4502
    %4509 = vmatprep.subr.bf16.mxu0 0
    %4510 = vmatpush1.bf16.msra.mxu0 0
    %4511 = vmatprep.subr.bf16.mxu0 0
    %4512 = vmatpush1.bf16.msra.mxu0 0
    %4513 = vmatprep.subr.bf16.mxu0 0
    %4514 = vmatpush1.bf16.msra.mxu0 0
    %4515 = vmatprep.subr.bf16.mxu0 0
    %4516 = vmatpush1.bf16.msra.mxu0 0
    %4517 = vmatprep.subr.bf16.mxu0 0
    %4518 = vmatpush1.bf16.msra.mxu0 0
    %4519 = vmatprep.subr.bf16.mxu0 0
    %4520 = vmatpush1.bf16.msra.mxu0 0
    %4521 = vmatprep.subr.bf16.mxu0 0
    %4522 = vmatpush1.bf16.msra.mxu0 0
    %4523 = vmatprep.subr.bf16.mxu0 0
    %4524 = vmatpush1.bf16.msra.mxu0 0
    %4525 = vmatprep.subr.bf16.mxu0 0
    %4526 = vmatpush1.bf16.msra.mxu0 0
    %4527 = vmatprep.subr.bf16.mxu0 0
    %4528 = vmatpush1.bf16.msra.mxu0 0
    %4529 = vmatprep.subr.bf16.mxu0 0
    %4530 = vmatpush1.bf16.msra.mxu0 0
    %4531 = vmatprep.subr.bf16.mxu0 0
    %4532 = vmatpush1.bf16.msra.mxu0 0
    %4533 = vmatprep.subr.bf16.mxu0 0
    %4534 = vmatpush1.bf16.msra.mxu0 0
    %4535 = vmatprep.subr.bf16.mxu0 0
    %4536 = vmatpush1.bf16.msra.mxu0 0
    %4537 = vmatprep.subr.bf16.mxu0 0
    %4538 = vmatpush1.bf16.msra.mxu0 0
    %4539 = vmatprep.mubr.bf16.mxu0 0
    %4540 = vmatmul.mubr.bf16.gmra.mrb[0].mxu0 %v4505
    %v4541 = vpop.f32.mrb[0].mxu0
    %v4542 = vadd.f32 %v4496, %v4541
    %v4543 = vpop.f32.mrb[0].mxu0
    %v4544 = vpop.f32.mrb[0].mxu0
    %v4545 = vpop.f32.mrb[0].mxu0
    %4546 = vdwg.mxu0
    %v4547 = vmax.f32 %v4542, 0.0
    %v4548 = vld [vmem:[%s19] sm:$0x3]
    %v4549 = vld [vmem:[%s59] sm:$0xf]
    %v4550 = vld [vmem:[%s59 + $0x4] sm:$0x3]
    %v4551 = vpack.c.bf16 %v4548, %v4548
    %v4552 = vld [vmem:[#allocation17] sm:$0x1]
    %v4554 = vlaneseq
    %v4555 = vshrl.u32 %v4554, 7
    %v4556 = vsub.s32 0, %v4555
    %v4557 = vrot.slane %v4552, %v4556
    %v4561 = vunpack.c.l.b16 %v4549
    %v4562 = vunpack.c.l.b16 %v4550
    %v4563 = vpack.c.b16 %v4562, %v4561
    %vm4564 = vcmask 97280
    %v4566 = vsel %vm4564, %v4551, 0
    %vm4568 = vcmask 1045504
    %v4570 = vsel %vm4568, %v4563, 0
    %4572 = vmatprep.subr.bf16.mxu0 0
    %4573 = vmatpush1.bf16.msra.mxu0 %v4570
    %4574 = vmatprep.subr.bf16.mxu0 0
    %4575 = vmatpush1.bf16.msra.mxu0 0
    %4576 = vmatprep.subr.bf16.mxu0 0
    %4577 = vmatpush1.bf16.msra.mxu0 0
    %4578 = vmatprep.subr.bf16.mxu0 0
    %4579 = vmatpush1.bf16.msra.mxu0 0
    %4580 = vmatprep.subr.bf16.mxu0 0
    %4581 = vmatpush1.bf16.msra.mxu0 0
    %4582 = vmatprep.subr.bf16.mxu0 0
    %4583 = vmatpush1.bf16.msra.mxu0 0
    %4584 = vmatprep.subr.bf16.mxu0 0
    %4585 = vmatpush1.bf16.msra.mxu0 0
    %4586 = vmatprep.subr.bf16.mxu0 0
    %4587 = vmatpush1.bf16.msra.mxu0 0
    %4588 = vmatprep.subr.bf16.mxu0 0
    %4589 = vmatpush1.bf16.msra.mxu0 0
    %4590 = vmatprep.subr.bf16.mxu0 0
    %4591 = vmatpush1.bf16.msra.mxu0 0
    %4592 = vmatprep.subr.bf16.mxu0 0
    %4593 = vmatpush1.bf16.msra.mxu0 0
    %4594 = vmatprep.subr.bf16.mxu0 0
    %4595 = vmatpush1.bf16.msra.mxu0 0
    %4596 = vmatprep.subr.bf16.mxu0 0
    %4597 = vmatpush1.bf16.msra.mxu0 0
    %4598 = vmatprep.subr.bf16.mxu0 0
    %4599 = vmatpush1.bf16.msra.mxu0 0
    %4600 = vmatprep.subr.bf16.mxu0 0
    %4601 = vmatpush1.bf16.msra.mxu0 0
    %4602 = vmatprep.subr.bf16.mxu0 0
    %4603 = vmatpush1.bf16.msra.mxu0 0
    %4604 = vmatprep.mubr.bf16.mxu0 0
    %4605 = vmatmul.mubr.bf16.gmra.mrb[0].mxu0 %v4566
    %v4606 = vpop.f32.mrb[0].mxu0
    %v4607 = vadd.f32 %v4557, %v4606
    %v4608 = vpop.f32.mrb[0].mxu0
    %v4609 = vpop.f32.mrb[0].mxu0
    %v4610 = vpop.f32.mrb[0].mxu0
    %4611 = vdwg.mxu0
    %v4612 = vmax.f32 %v4607, 0.0
    %v4613 = vld [vmem:[%s63] sm:$0xf]
    %v4614 = vld [vmem:[%s63 + $0x4] sm:$0xf]
    %v4615 = vpack.c.bf16 %v4612, %v4612
    %v4616 = vld [vmem:[#allocation18] sm:$0x1]
    %v4618 = vlaneseq
    %v4619 = vshrl.u32 %v4618, 7
    %v4620 = vsub.s32 0, %v4619
    %v4621 = vrot.slane %v4616, %v4620
    %v4625 = vunpack.c.l.b16 %v4613
    %v4626 = vunpack.c.l.b16 %v4614
    %v4627 = vpack.c.b16 %v4626, %v4625
    %v4630 = vsel %vm592, %v4615, 0
    %4632 = vmatprep.subr.bf16.mxu0 0
    %4633 = vmatpush1.bf16.msra.mxu0 %v4627
    %4634 = vmatprep.subr.bf16.mxu0 0
    %4635 = vmatpush1.bf16.msra.mxu0 0
    %4636 = vmatprep.subr.bf16.mxu0 0
    %4637 = vmatpush1.bf16.msra.mxu0 0
    %4638 = vmatprep.subr.bf16.mxu0 0
    %4639 = vmatpush1.bf16.msra.mxu0 0
    %4640 = vmatprep.subr.bf16.mxu0 0
    %4641 = vmatpush1.bf16.msra.mxu0 0
    %4642 = vmatprep.subr.bf16.mxu0 0
    %4643 = vmatpush1.bf16.msra.mxu0 0
    %4644 = vmatprep.subr.bf16.mxu0 0
    %4645 = vmatpush1.bf16.msra.mxu0 0
    %4646 = vmatprep.subr.bf16.mxu0 0
    %4647 = vmatpush1.bf16.msra.mxu0 0
    %4648 = vmatprep.subr.bf16.mxu0 0
    %4649 = vmatpush1.bf16.msra.mxu0 0
    %4650 = vmatprep.subr.bf16.mxu0 0
    %4651 = vmatpush1.bf16.msra.mxu0 0
    %4652 = vmatprep.subr.bf16.mxu0 0
    %4653 = vmatpush1.bf16.msra.mxu0 0
    %4654 = vmatprep.subr.bf16.mxu0 0
    %4655 = vmatpush1.bf16.msra.mxu0 0
    %4656 = vmatprep.subr.bf16.mxu0 0
    %4657 = vmatpush1.bf16.msra.mxu0 0
    %4658 = vmatprep.subr.bf16.mxu0 0
    %4659 = vmatpush1.bf16.msra.mxu0 0
    %4660 = vmatprep.subr.bf16.mxu0 0
    %4661 = vmatpush1.bf16.msra.mxu0 0
    %4662 = vmatprep.subr.bf16.mxu0 0
    %4663 = vmatpush1.bf16.msra.mxu0 0
    %4664 = vmatprep.mubr.bf16.mxu0 0
    %4665 = vmatmul.mubr.bf16.gmra.mrb[0].mxu0 %v4630
    %v4666 = vpop.f32.mrb[0].mxu0
    %v4667 = vadd.f32 %v4621, %v4666
    %v4668 = vpop.f32.mrb[0].mxu0
    %v4669 = vpop.f32.mrb[0].mxu0
    %v4670 = vpop.f32.mrb[0].mxu0
    %4671 = vdwg.mxu0
    %v4672 = vmax.f32 %v4667, 0.0
    %v4673 = vld [vmem:[%s21] sm:$0x3]
    %v4674 = vld [vmem:[#allocation20] sm:$0x3]
    %v4675 = vpack.c.bf16 %v4673, %v4673
    %v4676 = vld [vmem:[#allocation21] sm:$0x1]
    %v4678 = vlaneseq
    %v4679 = vshrl.u32 %v4678, 7
    %v4680 = vsub.s32 0, %v4679
    %v4681 = vrot.slane %v4676, %v4680
    %vm4683 = vcmask 31744
    %v4685 = vsel %vm4683, %v4675, 0
    %v4688 = vsel %vm4443, %v4674, 0
    %4690 = vmatprep.subr.bf16.mxu0 0
    %4691 = vmatpush1.bf16.msra.mxu0 %v4688
    %4692 = vmatprep.subr.bf16.mxu0 0
    %4693 = vmatpush1.bf16.msra.mxu0 0
    %4694 = vmatprep.subr.bf16.mxu0 0
    %4695 = vmatpush1.bf16.msra.mxu0 0
    %4696 = vmatprep.subr.bf16.mxu0 0
    %4697 = vmatpush1.bf16.msra.mxu0 0
    %4698 = vmatprep.subr.bf16.mxu0 0
    %4699 = vmatpush1.bf16.msra.mxu0 0
    %4700 = vmatprep.subr.bf16.mxu0 0
    %4701 = vmatpush1.bf16.msra.mxu0 0
    %4702 = vmatprep.subr.bf16.mxu0 0
    %4703 = vmatpush1.bf16.msra.mxu0 0
    %4704 = vmatprep.subr.bf16.mxu0 0
    %4705 = vmatpush1.bf16.msra.mxu0 0
    %4706 = vmatprep.subr.bf16.mxu0 0
    %4707 = vmatpush1.bf16.msra.mxu0 0
    %4708 = vmatprep.subr.bf16.mxu0 0
    %4709 = vmatpush1.bf16.msra.mxu0 0
    %4710 = vmatprep.subr.bf16.mxu0 0
    %4711 = vmatpush1.bf16.msra.mxu0 0
    %4712 = vmatprep.subr.bf16.mxu0 0
    %4713 = vmatpush1.bf16.msra.mxu0 0
    %4714 = vmatprep.subr.bf16.mxu0 0
    %4715 = vmatpush1.bf16.msra.mxu0 0
    %4716 = vmatprep.subr.bf16.mxu0 0
    %4717 = vmatpush1.bf16.msra.mxu0 0
    %4718 = vmatprep.subr.bf16.mxu0 0
    %4719 = vmatpush1.bf16.msra.mxu0 0
    %4720 = vmatprep.subr.bf16.mxu0 0
    %4721 = vmatpush1.bf16.msra.mxu0 0
    %4722 = vmatprep.mubr.bf16.mxu0 0
    %4723 = vmatmul.mubr.bf16.gmra.mrb[0].mxu0 %v4685
    %v4724 = vpop.f32.mrb[0].mxu0
    %v4725 = vadd.f32 %v4681, %v4724
    %v4726 = vpop.f32.mrb[0].mxu0
    %v4727 = vpop.f32.mrb[0].mxu0
    %v4728 = vpop.f32.mrb[0].mxu0
    %4729 = vdwg.mxu0
    %v4730 = vmax.f32 %v4725, 0.0
    %v4731 = vld [vmem:[%s71] sm:$0xf]
    %v4732 = vpack.c.bf16 %v4730, %v4730
    %v4733 = vld [vmem:[#allocation23] sm:$0x1]
    %v4735 = vlaneseq
    %v4736 = vshrl.u32 %v4735, 7
    %v4737 = vsub.s32 0, %v4736
    %v4738 = vrot.slane %v4733, %v4737
    %v4741 = vsel %vm777, %v4732, 0
    %v4744 = vsel %vm1249, %v4731, 0
    %4746 = vmatprep.subr.bf16.mxu0 0
    %4747 = vmatpush1.bf16.msra.mxu0 %v4744
    %4748 = vmatprep.subr.bf16.mxu0 0
    %4749 = vmatpush1.bf16.msra.mxu0 0
    %4750 = vmatprep.subr.bf16.mxu0 0
    %4751 = vmatpush1.bf16.msra.mxu0 0
    %4752 = vmatprep.subr.bf16.mxu0 0
    %4753 = vmatpush1.bf16.msra.mxu0 0
    %4754 = vmatprep.subr.bf16.mxu0 0
    %4755 = vmatpush1.bf16.msra.mxu0 0
    %4756 = vmatprep.subr.bf16.mxu0 0
    %4757 = vmatpush1.bf16.msra.mxu0 0
    %4758 = vmatprep.subr.bf16.mxu0 0
    %4759 = vmatpush1.bf16.msra.mxu0 0
    %4760 = vmatprep.subr.bf16.mxu0 0
    %4761 = vmatpush1.bf16.msra.mxu0 0
    %4762 = vmatprep.subr.bf16.mxu0 0
    %4763 = vmatpush1.bf16.msra.mxu0 0
    %4764 = vmatprep.subr.bf16.mxu0 0
    %4765 = vmatpush1.bf16.msra.mxu0 0
    %4766 = vmatprep.subr.bf16.mxu0 0
    %4767 = vmatpush1.bf16.msra.mxu0 0
    %4768 = vmatprep.subr.bf16.mxu0 0
    %4769 = vmatpush1.bf16.msra.mxu0 0
    %4770 = vmatprep.subr.bf16.mxu0 0
    %4771 = vmatpush1.bf16.msra.mxu0 0
    %4772 = vmatprep.subr.bf16.mxu0 0
    %4773 = vmatpush1.bf16.msra.mxu0 0
    %4774 = vmatprep.subr.bf16.mxu0 0
    %4775 = vmatpush1.bf16.msra.mxu0 0
    %4776 = vmatprep.subr.bf16.mxu0 0
    %4777 = vmatpush1.bf16.msra.mxu0 0
    %4778 = vmatprep.mubr.bf16.mxu0 0
    %4779 = vmatmul.mubr.bf16.gmra.mrb[0].mxu0 %v4741
    %v4780 = vpop.f32.mrb[0].mxu0
    %v4781 = vadd.f32 %v4738, %v4780
    %v4782 = vpop.f32.mrb[0].mxu0
    %v4783 = vpop.f32.mrb[0].mxu0
    %v4784 = vpop.f32.mrb[0].mxu0
    %4785 = vdwg.mxu0
    %v4786 = vmax.f32 %v4781, 0.0
    %v4787 = vld [vmem:[%s75] sm:$0xf]
    %v4788 = vld [vmem:[%s75 + $0x4] sm:$0xf]
    %v4789 = vpack.c.bf16 %v4547, %v4547
    %v4790 = vld [vmem:[%s77] sm:$0xf]
    %v4791 = vld [vmem:[%s77 + $0x4] sm:$0xf]
    %v4792 = vpack.c.bf16 %v4672, %v4672
    %v4795 = vunpack.c.l.b16 %v4790
    %v4796 = vunpack.c.l.b16 %v4791
    %v4797 = vpack.c.b16 %v4796, %v4795
    %v4800 = vsel %vm592, %v4792, 0
    %4802 = vmatprep.subr.bf16.mxu0 0
    %4803 = vmatpush1.bf16.msra.mxu0 %v4797
    %4804 = vmatprep.subr.bf16.mxu0 0
    %4805 = vmatpush1.bf16.msra.mxu0 0
    %4806 = vmatprep.subr.bf16.mxu0 0
    %4807 = vmatpush1.bf16.msra.mxu0 0
    %4808 = vmatprep.subr.bf16.mxu0 0
    %4809 = vmatpush1.bf16.msra.mxu0 0
    %4810 = vmatprep.subr.bf16.mxu0 0
    %4811 = vmatpush1.bf16.msra.mxu0 0
    %4812 = vmatprep.subr.bf16.mxu0 0
    %4813 = vmatpush1.bf16.msra.mxu0 0
    %4814 = vmatprep.subr.bf16.mxu0 0
    %4815 = vmatpush1.bf16.msra.mxu0 0
    %4816 = vmatprep.subr.bf16.mxu0 0
    %4817 = vmatpush1.bf16.msra.mxu0 0
    %4818 = vmatprep.subr.bf16.mxu0 0
    %4819 = vmatpush1.bf16.msra.mxu0 0
    %4820 = vmatprep.subr.bf16.mxu0 0
    %4821 = vmatpush1.bf16.msra.mxu0 0
    %4822 = vmatprep.subr.bf16.mxu0 0
    %4823 = vmatpush1.bf16.msra.mxu0 0
    %4824 = vmatprep.subr.bf16.mxu0 0
    %4825 = vmatpush1.bf16.msra.mxu0 0
    %4826 = vmatprep.subr.bf16.mxu0 0
    %4827 = vmatpush1.bf16.msra.mxu0 0
    %4828 = vmatprep.subr.bf16.mxu0 0
    %4829 = vmatpush1.bf16.msra.mxu0 0
    %4830 = vmatprep.subr.bf16.mxu0 0
    %4831 = vmatpush1.bf16.msra.mxu0 0
    %4832 = vmatprep.subr.bf16.mxu0 0
    %4833 = vmatpush1.bf16.msra.mxu0 0
    %4834 = vmatprep.mubr.bf16.mxu0 0
    %4835 = vmatmul.mubr.bf16.gmra.mrb[0].mxu0 %v4800
    %v4836 = vpop.f32.mrb[0].mxu0
    %v4837 = vadd.f32 0.0, %v4836
    %v4838 = vpop.f32.mrb[0].mxu0
    %v4839 = vpop.f32.mrb[0].mxu0
    %v4840 = vpop.f32.mrb[0].mxu0
    %4841 = vdwg.mxu0
    %v4844 = vunpack.c.l.b16 %v4787
    %v4845 = vunpack.c.l.b16 %v4788
    %v4846 = vpack.c.b16 %v4845, %v4844
    %v4849 = vsel %vm592, %v4789, 0
    %4851 = vmatprep.subr.bf16.mxu0 0
    %4852 = vmatpush1.bf16.msra.mxu0 %v4846
    %4853 = vmatprep.subr.bf16.mxu0 0
    %4854 = vmatpush1.bf16.msra.mxu0 0
    %4855 = vmatprep.subr.bf16.mxu0 0
    %4856 = vmatpush1.bf16.msra.mxu0 0
    %4857 = vmatprep.subr.bf16.mxu0 0
    %4858 = vmatpush1.bf16.msra.mxu0 0
    %4859 = vmatprep.subr.bf16.mxu0 0
    %4860 = vmatpush1.bf16.msra.mxu0 0
    %4861 = vmatprep.subr.bf16.mxu0 0
    %4862 = vmatpush1.bf16.msra.mxu0 0
    %4863 = vmatprep.subr.bf16.mxu0 0
    %4864 = vmatpush1.bf16.msra.mxu0 0
    %4865 = vmatprep.subr.bf16.mxu0 0
    %4866 = vmatpush1.bf16.msra.mxu0 0
    %4867 = vmatprep.subr.bf16.mxu0 0
    %4868 = vmatpush1.bf16.msra.mxu0 0
    %4869 = vmatprep.subr.bf16.mxu0 0
    %4870 = vmatpush1.bf16.msra.mxu0 0
    %4871 = vmatprep.subr.bf16.mxu0 0
    %4872 = vmatpush1.bf16.msra.mxu0 0
    %4873 = vmatprep.subr.bf16.mxu0 0
    %4874 = vmatpush1.bf16.msra.mxu0 0
    %4875 = vmatprep.subr.bf16.mxu0 0
    %4876 = vmatpush1.bf16.msra.mxu0 0
    %4877 = vmatprep.subr.bf16.mxu0 0
    %4878 = vmatpush1.bf16.msra.mxu0 0
    %4879 = vmatprep.subr.bf16.mxu0 0
    %4880 = vmatpush1.bf16.msra.mxu0 0
    %4881 = vmatprep.subr.bf16.mxu0 0
    %4882 = vmatpush1.bf16.msra.mxu0 0
    %4883 = vmatprep.mubr.bf16.mxu0 0
    %4884 = vmatmul.mubr.bf16.gmra.mrb[0].mxu0 %v4849
    %v4885 = vpop.f32.mrb[0].mxu0
    %v4886 = vadd.f32 %v4837, %v4885
    %v4887 = vpop.f32.mrb[0].mxu0
    %v4888 = vpop.f32.mrb[0].mxu0
    %v4889 = vpop.f32.mrb[0].mxu0
    %4890 = vdwg.mxu0
    %v4891 = vld [vmem:[%s79] sm:$0xf]
    %v4892 = vpack.c.bf16 %v4786, %v4786
    %v4894 = vsel %vm777, %v4892, 0
    %v4897 = vsel %vm1249, %v4891, 0
    %4899 = vmatprep.subr.bf16.mxu0 0
    %4900 = vmatpush1.bf16.msra.mxu0 %v4897
    %4901 = vmatprep.subr.bf16.mxu0 0
    %4902 = vmatpush1.bf16.msra.mxu0 0
    %4903 = vmatprep.subr.bf16.mxu0 0
    %4904 = vmatpush1.bf16.msra.mxu0 0
    %4905 = vmatprep.subr.bf16.mxu0 0
    %4906 = vmatpush1.bf16.msra.mxu0 0
    %4907 = vmatprep.subr.bf16.mxu0 0
    %4908 = vmatpush1.bf16.msra.mxu0 0
    %4909 = vmatprep.subr.bf16.mxu0 0
    %4910 = vmatpush1.bf16.msra.mxu0 0
    %4911 = vmatprep.subr.bf16.mxu0 0
    %4912 = vmatpush1.bf16.msra.mxu0 0
    %4913 = vmatprep.subr.bf16.mxu0 0
    %4914 = vmatpush1.bf16.msra.mxu0 0
    %4915 = vmatprep.subr.bf16.mxu0 0
    %4916 = vmatpush1.bf16.msra.mxu0 0
    %4917 = vmatprep.subr.bf16.mxu0 0
    %4918 = vmatpush1.bf16.msra.mxu0 0
    %4919 = vmatprep.subr.bf16.mxu0 0
    %4920 = vmatpush1.bf16.msra.mxu0 0
    %4921 = vmatprep.subr.bf16.mxu0 0
    %4922 = vmatpush1.bf16.msra.mxu0 0
    %4923 = vmatprep.subr.bf16.mxu0 0
    %4924 = vmatpush1.bf16.msra.mxu0 0
    %4925 = vmatprep.subr.bf16.mxu0 0
    %4926 = vmatpush1.bf16.msra.mxu0 0
    %4927 = vmatprep.subr.bf16.mxu0 0
    %4928 = vmatpush1.bf16.msra.mxu0 0
    %4929 = vmatprep.subr.bf16.mxu0 0
    %4930 = vmatpush1.bf16.msra.mxu0 0
    %4931 = vmatprep.mubr.bf16.mxu0 0
    %4932 = vmatmul.mubr.bf16.gmra.mrb[0].mxu0 %v4894
    %v4933 = vpop.f32.mrb[0].mxu0
    %v4934 = vadd.f32 0.0, %v4933
    %v4935 = vpop.f32.mrb[0].mxu0
    %v4936 = vpop.f32.mrb[0].mxu0
    %v4937 = vpop.f32.mrb[0].mxu0
    %4938 = vdwg.mxu0
    %v4939 = vadd.f32 %v4886, %v4934
    %v4940 = vld [vmem:[#allocation24] sm:$0x1]
    %v4942 = vlaneseq
    %v4943 = vshrl.u32 %v4942, 7
    %v4944 = vsub.s32 0, %v4943
    %v4945 = vrot.slane %v4940, %v4944
    %v4947 = vadd.f32 %v4939, %v4945
    %v4948 = vmax.f32 %v4947, 0.0
    %v4949 = vld [vmem:[%s83] sm:$0xf]
    %v4950 = vld [vmem:[%s83 + $0x4] sm:$0xf]
    %v4951 = vld [vmem:[%s83 + $0x8] sm:$0xf]
    %v4952 = vld [vmem:[%s83 + $0xc] sm:$0xf]
    %v4953 = vld [vmem:[%s83 + $0x10] sm:$0xf]
    %v4954 = vpack.c.bf16 %v4948, %v4948
    %v4955 = vld [vmem:[#allocation26] sm:$0x1]
    %v4957 = vlaneseq
    %v4958 = vshrl.u32 %v4957, 7
    %v4959 = vsub.s32 0, %v4958
    %v4960 = vrot.slane %v4955, %v4959
    %v4967 = vunpack.c.l.b16 %v4949
    %v4968 = vunpack.c.l.b16 %v4950
    %v4969 = vunpack.c.l.b16 %v4951
    %v4970 = vunpack.c.l.b16 %v4952
    %v4971 = vunpack.c.l.b16 %v4953
    %v4972 = vpack.c.b16 %v4968, %v4967
    %v4973 = vpack.c.b16 %v4970, %v4969
    %v4974 = vpack.c.b16 %v4971, %v4971
    %vm4977 = vcmask 326656
    %v4979 = vsel %vm4977, %v4954, 0
    %v4982 = vsel %vm1249, %v4974, 0
    %4984 = vmatprep.subr.bf16.mxu0 0
    %4985 = vmatpush1.bf16.msra.mxu0 %v4972
    %4986 = vmatprep.subr.bf16.mxu0 0
    %4987 = vmatpush1.bf16.msra.mxu0 %v4973
    %4988 = vmatprep.subr.bf16.mxu0 0
    %4989 = vmatpush1.bf16.msra.mxu0 %v4982
    %4990 = vmatprep.subr.bf16.mxu0 0
    %4991 = vmatpush1.bf16.msra.mxu0 0
    %4992 = vmatprep.subr.bf16.mxu0 0
    %4993 = vmatpush1.bf16.msra.mxu0 0
    %4994 = vmatprep.subr.bf16.mxu0 0
    %4995 = vmatpush1.bf16.msra.mxu0 0
    %4996 = vmatprep.subr.bf16.mxu0 0
    %4997 = vmatpush1.bf16.msra.mxu0 0
    %4998 = vmatprep.subr.bf16.mxu0 0
    %4999 = vmatpush1.bf16.msra.mxu0 0
    %5000 = vmatprep.subr.bf16.mxu0 0
    %5001 = vmatpush1.bf16.msra.mxu0 0
    %5002 = vmatprep.subr.bf16.mxu0 0
    %5003 = vmatpush1.bf16.msra.mxu0 0
    %5004 = vmatprep.subr.bf16.mxu0 0
    %5005 = vmatpush1.bf16.msra.mxu0 0
    %5006 = vmatprep.subr.bf16.mxu0 0
    %5007 = vmatpush1.bf16.msra.mxu0 0
    %5008 = vmatprep.subr.bf16.mxu0 0
    %5009 = vmatpush1.bf16.msra.mxu0 0
    %5010 = vmatprep.subr.bf16.mxu0 0
    %5011 = vmatpush1.bf16.msra.mxu0 0
    %5012 = vmatprep.subr.bf16.mxu0 0
    %5013 = vmatpush1.bf16.msra.mxu0 0
    %5014 = vmatprep.subr.bf16.mxu0 0
    %5015 = vmatpush1.bf16.msra.mxu0 0
    %5016 = vmatprep.mubr.bf16.mxu0 0
    %5017 = vmatmul.mubr.bf16.gmra.mrb[0].mxu0 %v4979
    %v5018 = vpop.f32.mrb[0].mxu0
    %v5019 = vadd.f32 %v4960, %v5018
    %v5020 = vpop.f32.mrb[0].mxu0
    %v5021 = vpop.f32.mrb[0].mxu0
    %v5022 = vpop.f32.mrb[0].mxu0
    %5023 = vdwg.mxu0
    %v5024 = vmax.f32 %v5019, 0.0
    %v5025 = vld [vmem:[%s11] sm:$0x3]
    %v5026 = vld [vmem:[%s89] sm:$0xf]
    %v5027 = vpack.c.bf16 %v5025, %v5025
    %v5028 = vld [vmem:[%s91] sm:$0xff]
    %v5029 = vld [vmem:[%s91 + $0x8] sm:$0xff]
    %v5030 = vld [vmem:[%s91 + $0x10] sm:$0xff]
    %v5031 = vld [vmem:[%s91 + $0x18] sm:$0xff]
    %v5032 = vld [vmem:[%s91 + $0x20] sm:$0xff]
    %v5033 = vpack.c.bf16 %v5024, %v5024
    %v5039 = vunpack.c.l.b16 %v5028
    %v5040 = vunpack.c.h.b16 %v5028
    %v5041 = vunpack.c.l.b16 %v5029
    %v5042 = vunpack.c.h.b16 %v5029
    %v5043 = vunpack.c.l.b16 %v5030
    %v5044 = vunpack.c.h.b16 %v5030
    %v5045 = vunpack.c.l.b16 %v5031
    %v5046 = vunpack.c.h.b16 %v5031
    %v5047 = vunpack.c.l.b16 %v5032
    %v5048 = vunpack.c.h.b16 %v5032
    %v5049 = vpack.c.b16 %v5041, %v5039
    %v5050 = vpack.c.b16 %v5042, %v5040
    %v5051 = vpack.c.b16 %v5045, %v5043
    %v5052 = vpack.c.b16 %v5046, %v5044
    %v5053 = vpack.c.b16 %v5047, %v5047
    %v5054 = vpack.c.b16 %v5048, %v5048
    %v5060 = vsel %vm4977, %v5033, 0
    %v5063 = vsel %vm1249, %v5053, 0
    %v5066 = vsel %vm1249, %v5054, 0
    %5068 = vmatprep.subr.bf16.mxu0 %v5050
    %5069 = vmatpush1.bf16.msra.mxu0 %v5049
    %5070 = vmatprep.subr.bf16.mxu0 %v5052
    %5071 = vmatpush1.bf16.msra.mxu0 %v5051
    %5072 = vmatprep.subr.bf16.mxu0 %v5066
    %5073 = vmatpush1.bf16.msra.mxu0 %v5063
    %5074 = vmatprep.subr.bf16.mxu0 0
    %5075 = vmatpush1.bf16.msra.mxu0 0
    %5076 = vmatprep.subr.bf16.mxu0 0
    %5077 = vmatpush1.bf16.msra.mxu0 0
    %5078 = vmatprep.subr.bf16.mxu0 0
    %5079 = vmatpush1.bf16.msra.mxu0 0
    %5080 = vmatprep.subr.bf16.mxu0 0
    %5081 = vmatpush1.bf16.msra.mxu0 0
    %5082 = vmatprep.subr.bf16.mxu0 0
    %5083 = vmatpush1.bf16.msra.mxu0 0
    %5084 = vmatprep.subr.bf16.mxu0 0
    %5085 = vmatpush1.bf16.msra.mxu0 0
    %5086 = vmatprep.subr.bf16.mxu0 0
    %5087 = vmatpush1.bf16.msra.mxu0 0
    %5088 = vmatprep.subr.bf16.mxu0 0
    %5089 = vmatpush1.bf16.msra.mxu0 0
    %5090 = vmatprep.subr.bf16.mxu0 0
    %5091 = vmatpush1.bf16.msra.mxu0 0
    %5092 = vmatprep.subr.bf16.mxu0 0
    %5093 = vmatpush1.bf16.msra.mxu0 0
    %5094 = vmatprep.subr.bf16.mxu0 0
    %5095 = vmatpush1.bf16.msra.mxu0 0
    %5096 = vmatprep.subr.bf16.mxu0 0
    %5097 = vmatpush1.bf16.msra.mxu0 0
    %5098 = vmatprep.subr.bf16.mxu0 0
    %5099 = vmatpush1.bf16.msra.mxu0 0
    %5100 = vmatprep.mubr.bf16.mxu0 0
    %5101 = vmatmul.mubr.bf16.gmra.mrb[0].mxu0 %v5060
    %v5102 = vpop.f32.mrb[0].mxu0
    %v5103 = vadd.f32 0.0, %v5102
    %v5104 = vpop.f32.mrb[0].mxu0
    %v5105 = vadd.f32 0.0, %v5104
    %v5106 = vpop.f32.mrb[0].mxu0
    %v5107 = vpop.f32.mrb[0].mxu0
    %5108 = vdwg.mxu0
    %v5111 = vunpack.c.l.s4 1983009808
    %v5112 = vunpack.c.0.s8 %v5111
    %v5113 = vlaneseq
    %v5114 = vshrl.u32 %v5113, 7
    %v5115 = vsub.s32 %v5112, %v5114
    %v5116 = vrot.slane %v5026, %v5115
    %v5117 = vcombine.high %v5116, %v5116
    %vm5118 = vcmask 23552
    %v5120 = vsel %vm5118, %v5027, 0
    %vm5122 = vcmask 1040384
    %v5123 = vsel %vm5122, 4294967295, 65535
    %v5124 = vsel %vm4443, %v5123, 0
    %v5126 = vand.u32 %v5116, %v5124
    %v5129 = vand.u32 %v5117, %v5124
    %5131 = vmatprep.subr.bf16.mxu0 %v5129
    %5132 = vmatpush1.bf16.msra.mxu0 %v5126
    %5133 = vmatprep.subr.bf16.mxu0 0
    %5134 = vmatpush1.bf16.msra.mxu0 0
    %5135 = vmatprep.subr.bf16.mxu0 0
    %5136 = vmatpush1.bf16.msra.mxu0 0
    %5137 = vmatprep.subr.bf16.mxu0 0
    %5138 = vmatpush1.bf16.msra.mxu0 0
    %5139 = vmatprep.subr.bf16.mxu0 0
    %5140 = vmatpush1.bf16.msra.mxu0 0
    %5141 = vmatprep.subr.bf16.mxu0 0
    %5142 = vmatpush1.bf16.msra.mxu0 0
    %5143 = vmatprep.subr.bf16.mxu0 0
    %5144 = vmatpush1.bf16.msra.mxu0 0
    %5145 = vmatprep.subr.bf16.mxu0 0
    %5146 = vmatpush1.bf16.msra.mxu0 0
    %5147 = vmatprep.subr.bf16.mxu0 0
    %5148 = vmatpush1.bf16.msra.mxu0 0
    %5149 = vmatprep.subr.bf16.mxu0 0
    %5150 = vmatpush1.bf16.msra.mxu0 0
    %5151 = vmatprep.subr.bf16.mxu0 0
    %5152 = vmatpush1.bf16.msra.mxu0 0
    %5153 = vmatprep.subr.bf16.mxu0 0
    %5154 = vmatpush1.bf16.msra.mxu0 0
    %5155 = vmatprep.subr.bf16.mxu0 0
    %5156 = vmatpush1.bf16.msra.mxu0 0
    %5157 = vmatprep.subr.bf16.mxu0 0
    %5158 = vmatpush1.bf16.msra.mxu0 0
    %5159 = vmatprep.subr.bf16.mxu0 0
    %5160 = vmatpush1.bf16.msra.mxu0 0
    %5161 = vmatprep.subr.bf16.mxu0 0
    %5162 = vmatpush1.bf16.msra.mxu0 0
    %5163 = vmatprep.mubr.bf16.mxu0 0
    %5164 = vmatmul.mubr.bf16.gmra.mrb[0].mxu0 %v5120
    %v5165 = vpop.f32.mrb[0].mxu0
    %v5166 = vadd.f32 %v5103, %v5165
    %v5167 = vpop.f32.mrb[0].mxu0
    %v5168 = vadd.f32 %v5105, %v5167
    %v5169 = vpop.f32.mrb[0].mxu0
    %v5170 = vpop.f32.mrb[0].mxu0
    %5171 = vdwg.mxu0
    %v5172 = vld [vmem:[%s87] sm:$0xff]
    %v5173 = vld [vmem:[%s87 + $0x8] sm:$0xff]
    %v5174 = vld [vmem:[%s87 + $0x10] sm:$0xff]
    %v5175 = vld [vmem:[%s87 + $0x18] sm:$0xff]
    %v5176 = vpack.c.bf16 %v4321, %v4321
    %v5181 = vunpack.c.l.b16 %v5172
    %v5182 = vunpack.c.h.b16 %v5172
    %v5183 = vunpack.c.l.b16 %v5173
    %v5184 = vunpack.c.h.b16 %v5173
    %v5185 = vunpack.c.l.b16 %v5174
    %v5186 = vunpack.c.h.b16 %v5174
    %v5187 = vunpack.c.l.b16 %v5175
    %v5188 = vunpack.c.h.b16 %v5175
    %v5189 = vpack.c.b16 %v5183, %v5181
    %v5190 = vpack.c.b16 %v5184, %v5182
    %v5191 = vpack.c.b16 %v5187, %v5185
    %v5192 = vpack.c.b16 %v5188, %v5186
    %v5198 = vsel %vm685, %v5176, 0
    %5200 = vmatprep.subr.bf16.mxu0 %v5190
    %5201 = vmatpush1.bf16.msra.mxu0 %v5189
    %5202 = vmatprep.subr.bf16.mxu0 %v5192
    %5203 = vmatpush1.bf16.msra.mxu0 %v5191
    %5204 = vmatprep.subr.bf16.mxu0 0
    %5205 = vmatpush1.bf16.msra.mxu0 0
    %5206 = vmatprep.subr.bf16.mxu0 0
    %5207 = vmatpush1.bf16.msra.mxu0 0
    %5208 = vmatprep.subr.bf16.mxu0 0
    %5209 = vmatpush1.bf16.msra.mxu0 0
    %5210 = vmatprep.subr.bf16.mxu0 0
    %5211 = vmatpush1.bf16.msra.mxu0 0
    %5212 = vmatprep.subr.bf16.mxu0 0
    %5213 = vmatpush1.bf16.msra.mxu0 0
    %5214 = vmatprep.subr.bf16.mxu0 0
    %5215 = vmatpush1.bf16.msra.mxu0 0
    %5216 = vmatprep.subr.bf16.mxu0 0
    %5217 = vmatpush1.bf16.msra.mxu0 0
    %5218 = vmatprep.subr.bf16.mxu0 0
    %5219 = vmatpush1.bf16.msra.mxu0 0
    %5220 = vmatprep.subr.bf16.mxu0 0
    %5221 = vmatpush1.bf16.msra.mxu0 0
    %5222 = vmatprep.subr.bf16.mxu0 0
    %5223 = vmatpush1.bf16.msra.mxu0 0
    %5224 = vmatprep.subr.bf16.mxu0 0
    %5225 = vmatpush1.bf16.msra.mxu0 0
    %5226 = vmatprep.subr.bf16.mxu0 0
    %5227 = vmatpush1.bf16.msra.mxu0 0
    %5228 = vmatprep.subr.bf16.mxu0 0
    %5229 = vmatpush1.bf16.msra.mxu0 0
    %5230 = vmatprep.subr.bf16.mxu0 0
    %5231 = vmatpush1.bf16.msra.mxu0 0
    %5232 = vmatprep.mubr.bf16.mxu0 0
    %5233 = vmatmul.mubr.bf16.gmra.mrb[0].mxu0 %v5198
    %v5234 = vpop.f32.mrb[0].mxu0
    %v5235 = vadd.f32 0.0, %v5234
    %v5236 = vpop.f32.mrb[0].mxu0
    %v5237 = vadd.f32 0.0, %v5236
    %v5238 = vpop.f32.mrb[0].mxu0
    %v5239 = vpop.f32.mrb[0].mxu0
    %5240 = vdwg.mxu0
    %v5241 = vadd.f32 %v5166, %v5235
    %v5242 = vadd.f32 %v5168, %v5237
    %s5243 = scalar_lea.vmem %s87, 32
    %v5244 = vld [vmem:[%s5243] sm:$0xff]
    %v5245 = vld [vmem:[%s5243 + $0x8] sm:$0xff]
    %v5246 = vld [vmem:[%s5243 + $0x10] sm:$0xff]
    %v5247 = vld [vmem:[%s5243 + $0x18] sm:$0xff]
    %v5248 = vpack.c.bf16 %v4367, %v4367
    %v5253 = vunpack.c.l.b16 %v5244
    %v5254 = vunpack.c.h.b16 %v5244
    %v5255 = vunpack.c.l.b16 %v5245
    %v5256 = vunpack.c.h.b16 %v5245
    %v5257 = vunpack.c.l.b16 %v5246
    %v5258 = vunpack.c.h.b16 %v5246
    %v5259 = vunpack.c.l.b16 %v5247
    %v5260 = vunpack.c.h.b16 %v5247
    %v5261 = vpack.c.b16 %v5255, %v5253
    %v5262 = vpack.c.b16 %v5256, %v5254
    %v5263 = vpack.c.b16 %v5259, %v5257
    %v5264 = vpack.c.b16 %v5260, %v5258
    %v5270 = vsel %vm685, %v5248, 0
    %5272 = vmatprep.subr.bf16.mxu0 %v5262
    %5273 = vmatpush1.bf16.msra.mxu0 %v5261
    %5274 = vmatprep.subr.bf16.mxu0 %v5264
    %5275 = vmatpush1.bf16.msra.mxu0 %v5263
    %5276 = vmatprep.subr.bf16.mxu0 0
    %5277 = vmatpush1.bf16.msra.mxu0 0
    %5278 = vmatprep.subr.bf16.mxu0 0
    %5279 = vmatpush1.bf16.msra.mxu0 0
    %5280 = vmatprep.subr.bf16.mxu0 0
    %5281 = vmatpush1.bf16.msra.mxu0 0
    %5282 = vmatprep.subr.bf16.mxu0 0
    %5283 = vmatpush1.bf16.msra.mxu0 0
    %5284 = vmatprep.subr.bf16.mxu0 0
    %5285 = vmatpush1.bf16.msra.mxu0 0
    %5286 = vmatprep.subr.bf16.mxu0 0
    %5287 = vmatpush1.bf16.msra.mxu0 0
    %5288 = vmatprep.subr.bf16.mxu0 0
    %5289 = vmatpush1.bf16.msra.mxu0 0
    %5290 = vmatprep.subr.bf16.mxu0 0
    %5291 = vmatpush1.bf16.msra.mxu0 0
    %5292 = vmatprep.subr.bf16.mxu0 0
    %5293 = vmatpush1.bf16.msra.mxu0 0
    %5294 = vmatprep.subr.bf16.mxu0 0
    %5295 = vmatpush1.bf16.msra.mxu0 0
    %5296 = vmatprep.subr.bf16.mxu0 0
    %5297 = vmatpush1.bf16.msra.mxu0 0
    %5298 = vmatprep.subr.bf16.mxu0 0
    %5299 = vmatpush1.bf16.msra.mxu0 0
    %5300 = vmatprep.subr.bf16.mxu0 0
    %5301 = vmatpush1.bf16.msra.mxu0 0
    %5302 = vmatprep.subr.bf16.mxu0 0
    %5303 = vmatpush1.bf16.msra.mxu0 0
    %5304 = vmatprep.mubr.bf16.mxu0 0
    %5305 = vmatmul.mubr.bf16.gmra.mrb[0].mxu0 %v5270
    %v5306 = vpop.f32.mrb[0].mxu0
    %v5307 = vadd.f32 0.0, %v5306
    %v5308 = vpop.f32.mrb[0].mxu0
    %v5309 = vadd.f32 0.0, %v5308
    %v5310 = vpop.f32.mrb[0].mxu0
    %v5311 = vpop.f32.mrb[0].mxu0
    %5312 = vdwg.mxu0
    %v5313 = vadd.f32 %v5241, %v5307
    %v5314 = vadd.f32 %v5242, %v5309
    %s5315 = scalar_lea.vmem %s87, 64
    %v5316 = vld [vmem:[%s5315] sm:$0xff]
    %v5317 = vld [vmem:[%s5315 + $0x8] sm:$0xff]
    %v5318 = vld [vmem:[%s5315 + $0x10] sm:$0xff]
    %v5319 = vld [vmem:[%s5315 + $0x18] sm:$0xff]
    %v5320 = vpack.c.bf16 %v4413, %v4413
    %v5325 = vunpack.c.l.b16 %v5316
    %v5326 = vunpack.c.h.b16 %v5316
    %v5327 = vunpack.c.l.b16 %v5317
    %v5328 = vunpack.c.h.b16 %v5317
    %v5329 = vunpack.c.l.b16 %v5318
    %v5330 = vunpack.c.h.b16 %v5318
    %v5331 = vunpack.c.l.b16 %v5319
    %v5332 = vunpack.c.h.b16 %v5319
    %v5333 = vpack.c.b16 %v5327, %v5325
    %v5334 = vpack.c.b16 %v5328, %v5326
    %v5335 = vpack.c.b16 %v5331, %v5329
    %v5336 = vpack.c.b16 %v5332, %v5330
    %v5342 = vsel %vm685, %v5320, 0
    %5344 = vmatprep.subr.bf16.mxu0 %v5334
    %5345 = vmatpush1.bf16.msra.mxu0 %v5333
    %5346 = vmatprep.subr.bf16.mxu0 %v5336
    %5347 = vmatpush1.bf16.msra.mxu0 %v5335
    %5348 = vmatprep.subr.bf16.mxu0 0
    %5349 = vmatpush1.bf16.msra.mxu0 0
    %5350 = vmatprep.subr.bf16.mxu0 0
    %5351 = vmatpush1.bf16.msra.mxu0 0
    %5352 = vmatprep.subr.bf16.mxu0 0
    %5353 = vmatpush1.bf16.msra.mxu0 0
    %5354 = vmatprep.subr.bf16.mxu0 0
    %5355 = vmatpush1.bf16.msra.mxu0 0
    %5356 = vmatprep.subr.bf16.mxu0 0
    %5357 = vmatpush1.bf16.msra.mxu0 0
    %5358 = vmatprep.subr.bf16.mxu0 0
    %5359 = vmatpush1.bf16.msra.mxu0 0
    %5360 = vmatprep.subr.bf16.mxu0 0
    %5361 = vmatpush1.bf16.msra.mxu0 0
    %5362 = vmatprep.subr.bf16.mxu0 0
    %5363 = vmatpush1.bf16.msra.mxu0 0
    %5364 = vmatprep.subr.bf16.mxu0 0
    %5365 = vmatpush1.bf16.msra.mxu0 0
    %5366 = vmatprep.subr.bf16.mxu0 0
    %5367 = vmatpush1.bf16.msra.mxu0 0
    %5368 = vmatprep.subr.bf16.mxu0 0
    %5369 = vmatpush1.bf16.msra.mxu0 0
    %5370 = vmatprep.subr.bf16.mxu0 0
    %5371 = vmatpush1.bf16.msra.mxu0 0
    %5372 = vmatprep.subr.bf16.mxu0 0
    %5373 = vmatpush1.bf16.msra.mxu0 0
    %5374 = vmatprep.subr.bf16.mxu0 0
    %5375 = vmatpush1.bf16.msra.mxu0 0
    %5376 = vmatprep.mubr.bf16.mxu0 0
    %5377 = vmatmul.mubr.bf16.gmra.mrb[0].mxu0 %v5342
    %v5378 = vpop.f32.mrb[0].mxu0
    %v5379 = vadd.f32 0.0, %v5378
    %v5380 = vpop.f32.mrb[0].mxu0
    %v5381 = vadd.f32 0.0, %v5380
    %v5382 = vpop.f32.mrb[0].mxu0
    %v5383 = vpop.f32.mrb[0].mxu0
    %5384 = vdwg.mxu0
    %v5385 = vadd.f32 %v5313, %v5379
    %v5386 = vadd.f32 %v5314, %v5381
    %v5387 = vld [vmem:[%s13] sm:$0xff]
    %v5388 = vld [vmem:[%s13 + $0x8] sm:$0xff]
    %v5389 = vpack.c.bf16 %v5388, %v5387
    %v5390 = vpack.c.bf16 %v5385, %v5385
    %v5391 = vpack.c.bf16 %v5386, %v5386
    %v5392 = vld [vmem:[%s93] sm:$0xff]
    %v5393 = vld [vmem:[%s93 + $0x8] sm:$0xff]
    %v5394 = vld [vmem:[%s93 + $0x10] sm:$0xff]
    %v5395 = vld [vmem:[%s93 + $0x18] sm:$0xff]
    %v5400 = vunpack.c.l.b16 %v5392
    %v5401 = vunpack.c.h.b16 %v5392
    %v5402 = vunpack.c.l.b16 %v5393
    %v5403 = vunpack.c.h.b16 %v5393
    %v5404 = vunpack.c.l.b16 %v5394
    %v5405 = vunpack.c.h.b16 %v5394
    %v5406 = vunpack.c.l.b16 %v5395
    %v5407 = vunpack.c.h.b16 %v5395
    %v5408 = vpack.c.b16 %v5402, %v5400
    %v5409 = vpack.c.b16 %v5403, %v5401
    %v5410 = vpack.c.b16 %v5406, %v5404
    %v5411 = vpack.c.b16 %v5407, %v5405
    %v5417 = vsel %vm685, %v4280, 0
    %5419 = vmatprep.subr.bf16.mxu0 %v5409
    %5420 = vmatpush1.bf16.msra.mxu0 %v5408
    %5421 = vmatprep.subr.bf16.mxu0 %v5411
    %5422 = vmatpush1.bf16.msra.mxu0 %v5410
    %5423 = vmatprep.subr.bf16.mxu0 0
    %5424 = vmatpush1.bf16.msra.mxu0 0
    %5425 = vmatprep.subr.bf16.mxu0 0
    %5426 = vmatpush1.bf16.msra.mxu0 0
    %5427 = vmatprep.subr.bf16.mxu0 0
    %5428 = vmatpush1.bf16.msra.mxu0 0
    %5429 = vmatprep.subr.bf16.mxu0 0
    %5430 = vmatpush1.bf16.msra.mxu0 0
    %5431 = vmatprep.subr.bf16.mxu0 0
    %5432 = vmatpush1.bf16.msra.mxu0 0
    %5433 = vmatprep.subr.bf16.mxu0 0
    %5434 = vmatpush1.bf16.msra.mxu0 0
    %5435 = vmatprep.subr.bf16.mxu0 0
    %5436 = vmatpush1.bf16.msra.mxu0 0
    %5437 = vmatprep.subr.bf16.mxu0 0
    %5438 = vmatpush1.bf16.msra.mxu0 0
    %5439 = vmatprep.subr.bf16.mxu0 0
    %5440 = vmatpush1.bf16.msra.mxu0 0
    %5441 = vmatprep.subr.bf16.mxu0 0
    %5442 = vmatpush1.bf16.msra.mxu0 0
    %5443 = vmatprep.subr.bf16.mxu0 0
    %5444 = vmatpush1.bf16.msra.mxu0 0
    %5445 = vmatprep.subr.bf16.mxu0 0
    %5446 = vmatpush1.bf16.msra.mxu0 0
    %5447 = vmatprep.subr.bf16.mxu0 0
    %5448 = vmatpush1.bf16.msra.mxu0 0
    %5449 = vmatprep.subr.bf16.mxu0 0
    %5450 = vmatpush1.bf16.msra.mxu0 0
    %5451 = vmatprep.mubr.bf16.mxu0 0
    %5452 = vmatmul.mubr.bf16.gmra.mrb[0].mxu0 %v5417
    %v5453 = vpop.f32.mrb[0].mxu0
    %v5454 = vadd.f32 0.0, %v5453
    %v5455 = vpop.f32.mrb[0].mxu0
    %v5456 = vadd.f32 0.0, %v5455
    %v5457 = vpop.f32.mrb[0].mxu0
    %v5458 = vadd.f32 0.0, %v5457
    %v5459 = vpop.f32.mrb[0].mxu0
    %v5460 = vadd.f32 0.0, %v5459
    %5461 = vdwg.mxu0
    %vm5462 = vcmask 15360
    %v5464 = vsel %vm5462, %v5389, 0
    %v5467 = vsel %vm5122, %v5390, 0
    %v5470 = vsel %vm5122, %v5391, 0
    %5472 = vmatprep.subr.bf16.mxu0 %v5470
    %5473 = vmatpush1.bf16.msra.mxu0 %v5467
    %5474 = vmatprep.subr.bf16.mxu0 0
    %5475 = vmatpush1.bf16.msra.mxu0 0
    %5476 = vmatprep.subr.bf16.mxu0 0
    %5477 = vmatpush1.bf16.msra.mxu0 0
    %5478 = vmatprep.subr.bf16.mxu0 0
    %5479 = vmatpush1.bf16.msra.mxu0 0
    %5480 = vmatprep.subr.bf16.mxu0 0
    %5481 = vmatpush1.bf16.msra.mxu0 0
    %5482 = vmatprep.subr.bf16.mxu0 0
    %5483 = vmatpush1.bf16.msra.mxu0 0
    %5484 = vmatprep.subr.bf16.mxu0 0
    %5485 = vmatpush1.bf16.msra.mxu0 0
    %5486 = vmatprep.subr.bf16.mxu0 0
    %5487 = vmatpush1.bf16.msra.mxu0 0
    %5488 = vmatprep.subr.bf16.mxu0 0
    %5489 = vmatpush1.bf16.msra.mxu0 0
    %5490 = vmatprep.subr.bf16.mxu0 0
    %5491 = vmatpush1.bf16.msra.mxu0 0
    %5492 = vmatprep.subr.bf16.mxu0 0
    %5493 = vmatpush1.bf16.msra.mxu0 0
    %5494 = vmatprep.subr.bf16.mxu0 0
    %5495 = vmatpush1.bf16.msra.mxu0 0
    %5496 = vmatprep.subr.bf16.mxu0 0
    %5497 = vmatpush1.bf16.msra.mxu0 0
    %5498 = vmatprep.subr.bf16.mxu0 0
    %5499 = vmatpush1.bf16.msra.mxu0 0
    %5500 = vmatprep.subr.bf16.mxu0 0
    %5501 = vmatpush1.bf16.msra.mxu0 0
    %5502 = vmatprep.subr.bf16.mxu0 0
    %5503 = vmatpush1.bf16.msra.mxu0 0
    %5504 = vmatprep.mubr.bf16.mxu0 0
    %5505 = vmatmul.mubr.bf16.gmra.mrb[0].mxu0 %v5464
    %v5506 = vpop.f32.mrb[0].mxu0
    %v5507 = vadd.f32 %v5454, %v5506
    %v5508 = vpop.f32.mrb[0].mxu0
    %v5509 = vadd.f32 %v5456, %v5508
    %v5510 = vpop.f32.mrb[0].mxu0
    %v5511 = vadd.f32 %v5458, %v5510
    %v5512 = vpop.f32.mrb[0].mxu0
    %v5513 = vadd.f32 %v5460, %v5512
    %5514 = vdwg.mxu0
    %v5515 = vld [vmem:[#allocation27] sm:$0x3]
    %v5517 = vlaneseq
    %v5518 = vshrl.u32 %v5517, 7
    %v5519 = vsub.s32 0, %v5518
    %v5520 = vrot.slane %v5515, %v5519
    %v5521 = vlaneseq
    %v5522 = vshrl.u32 %v5521, 7
    %v5523 = vsub.s32 1, %v5522
    %v5524 = vrot.slane %v5515, %v5523
    %v5527 = vadd.f32 %v5507, %v5520
    %v5528 = vadd.f32 %v5509, %v5524
    %v5529 = vadd.f32 %v5511, %v5520
    %v5530 = vadd.f32 %v5513, %v5524
    %v5531 = vmax.f32 %v5527, 0.0
    %v5532 = vmax.f32 %v5528, 0.0
    %v5533 = vmax.f32 %v5529, 0.0
    %v5534 = vmax.f32 %v5530, 0.0
    %v5535 = vld [vmem:[%s97] sm:$0xff]
    %v5536 = vld [vmem:[%s97 + $0x8] sm:$0xff]
    %v5537 = vld [vmem:[%s97 + $0x10] sm:$0xff]
    %v5538 = vld [vmem:[%s97 + $0x18] sm:$0xff]
    %v5539 = vld [vmem:[%s97 + $0x20] sm:$0xff]
    %v5540 = vld [vmem:[%s97 + $0x28] sm:$0xff]
    %v5541 = vld [vmem:[%s97 + $0x30] sm:$0xff]
    %v5542 = vld [vmem:[%s97 + $0x38] sm:$0xff]
    %v5543 = vld [vmem:[%s97 + $0x40] sm:$0xff]
    %v5544 = vld [vmem:[%s97 + $0x48] sm:$0xff]
    %v5545 = vld [vmem:[%s97 + $0x50] sm:$0xff]
    %v5546 = vld [vmem:[%s97 + $0x58] sm:$0xff]
    %v5547 = vld [vmem:[%s97 + $0x60] sm:$0xff]
    %v5548 = vld [vmem:[%s97 + $0x68] sm:$0xff]
    %v5549 = vld [vmem:[%s97 + $0x70] sm:$0xff]
    %v5550 = vld [vmem:[%s97 + $0x78] sm:$0xff]
    %v5551 = vld [vmem:[%s97 + $0x80] sm:$0xff]
    %v5552 = vld [vmem:[%s97 + $0x88] sm:$0xff]
    %v5553 = vld [vmem:[%s97 + $0x90] sm:$0xff]
    %v5554 = vld [vmem:[%s97 + $0x98] sm:$0xff]
    %v5555 = vld [vmem:[%s97 + $0xa0] sm:$0xff]
    %v5556 = vld [vmem:[%s97 + $0xa8] sm:$0x33]
    %v5557 = vpack.c.bf16 %v5533, %v5531
    %v5558 = vpack.c.bf16 %v5534, %v5532
    %v5559 = vld [vmem:[#allocation29] sm:$0x3]
    %v5561 = vlaneseq
    %v5562 = vshrl.u32 %v5561, 7
    %v5563 = vsub.s32 0, %v5562
    %v5564 = vrot.slane %v5559, %v5563
    %v5565 = vlaneseq
    %v5566 = vshrl.u32 %v5565, 7
    %v5567 = vsub.s32 1, %v5566
    %v5568 = vrot.slane %v5559, %v5567
    %v5593 = vunpack.c.l.b16 %v5535
    %v5594 = vunpack.c.h.b16 %v5535
    %v5595 = vunpack.c.l.b16 %v5536
    %v5596 = vunpack.c.h.b16 %v5536
    %v5597 = vunpack.c.l.b16 %v5537
    %v5598 = vunpack.c.h.b16 %v5537
    %v5599 = vunpack.c.l.b16 %v5538
    %v5600 = vunpack.c.h.b16 %v5538
    %v5601 = vunpack.c.l.b16 %v5539
    %v5602 = vunpack.c.h.b16 %v5539
    %v5603 = vunpack.c.l.b16 %v5540
    %v5604 = vunpack.c.h.b16 %v5540
    %v5605 = vunpack.c.l.b16 %v5541
    %v5606 = vunpack.c.h.b16 %v5541
    %v5607 = vunpack.c.l.b16 %v5542
    %v5608 = vunpack.c.h.b16 %v5542
    %v5609 = vunpack.c.l.b16 %v5543
    %v5610 = vunpack.c.h.b16 %v5543
    %v5611 = vunpack.c.l.b16 %v5544
    %v5612 = vunpack.c.h.b16 %v5544
    %v5613 = vunpack.c.l.b16 %v5545
    %v5614 = vunpack.c.h.b16 %v5545
    %v5615 = vunpack.c.l.b16 %v5546
    %v5616 = vunpack.c.h.b16 %v5546
    %v5617 = vunpack.c.l.b16 %v5547
    %v5618 = vunpack.c.h.b16 %v5547
    %v5619 = vunpack.c.l.b16 %v5548
    %v5620 = vunpack.c.h.b16 %v5548
    %v5621 = vunpack.c.l.b16 %v5549
    %v5622 = vunpack.c.h.b16 %v5549
    %v5623 = vunpack.c.l.b16 %v5550
    %v5624 = vunpack.c.h.b16 %v5550
    %v5625 = vunpack.c.l.b16 %v5551
    %v5626 = vunpack.c.h.b16 %v5551
    %v5627 = vunpack.c.l.b16 %v5552
    %v5628 = vunpack.c.h.b16 %v5552
    %v5629 = vunpack.c.l.b16 %v5553
    %v5630 = vunpack.c.h.b16 %v5553
    %v5631 = vunpack.c.l.b16 %v5554
    %v5632 = vunpack.c.h.b16 %v5554
    %v5633 = vunpack.c.l.b16 %v5555
    %v5634 = vunpack.c.h.b16 %v5555
    %v5635 = vunpack.c.l.b16 %v5556
    %v5636 = vunpack.c.h.b16 %v5556
    %v5637 = vpack.c.b16 %v5595, %v5593
    %v5638 = vpack.c.b16 %v5596, %v5594
    %v5639 = vpack.c.b16 %v5599, %v5597
    %v5640 = vpack.c.b16 %v5600, %v5598
    %v5641 = vpack.c.b16 %v5603, %v5601
    %v5642 = vpack.c.b16 %v5604, %v5602
    %v5643 = vpack.c.b16 %v5607, %v5605
    %v5644 = vpack.c.b16 %v5608, %v5606
    %v5645 = vpack.c.b16 %v5611, %v5609
    %v5646 = vpack.c.b16 %v5612, %v5610
    %v5647 = vpack.c.b16 %v5615, %v5613
    %v5648 = vpack.c.b16 %v5616, %v5614
    %v5649 = vpack.c.b16 %v5619, %v5617
    %v5650 = vpack.c.b16 %v5620, %v5618
    %v5651 = vpack.c.b16 %v5623, %v5621
    %v5652 = vpack.c.b16 %v5624, %v5622
    %v5653 = vpack.c.b16 %v5627, %v5625
    %v5654 = vpack.c.b16 %v5628, %v5626
    %v5655 = vpack.c.b16 %v5631, %v5629
    %v5656 = vpack.c.b16 %v5632, %v5630
    %v5657 = vpack.c.b16 %v5635, %v5633
    %v5658 = vpack.c.b16 %v5636, %v5634
    %vm5679 = vcmask 351232
    %v5681 = vsel %vm5679, %v5558, 0
    %vm5683 = vcmask 1044480
    %v5684 = vsel %vm5683, 4294967295, 65535
    %v5685 = vsel %vm4568, %v5684, 0
    %v5687 = vand.u32 %v5657, %v5685
    %v5690 = vand.u32 %v5658, %v5685
    %5692 = vmatprep.subr.bf16.mxu0 %v5638
    %5693 = vmatpush1.bf16.msra.mxu0 %v5637
    %5694 = vmatprep.subr.bf16.mxu0 %v5640
    %5695 = vmatpush1.bf16.msra.mxu0 %v5639
    %5696 = vmatprep.subr.bf16.mxu0 %v5642
    %5697 = vmatpush1.bf16.msra.mxu0 %v5641
    %5698 = vmatprep.subr.bf16.mxu0 %v5644
    %5699 = vmatpush1.bf16.msra.mxu0 %v5643
    %5700 = vmatprep.subr.bf16.mxu0 %v5646
    %5701 = vmatpush1.bf16.msra.mxu0 %v5645
    %5702 = vmatprep.subr.bf16.mxu0 %v5648
    %5703 = vmatpush1.bf16.msra.mxu0 %v5647
    %5704 = vmatprep.subr.bf16.mxu0 %v5650
    %5705 = vmatpush1.bf16.msra.mxu0 %v5649
    %5706 = vmatprep.subr.bf16.mxu0 %v5652
    %5707 = vmatpush1.bf16.msra.mxu0 %v5651
    %5708 = vmatprep.subr.bf16.mxu0 %v5654
    %5709 = vmatpush1.bf16.msra.mxu0 %v5653
    %5710 = vmatprep.subr.bf16.mxu0 %v5656
    %5711 = vmatpush1.bf16.msra.mxu0 %v5655
    %5712 = vmatprep.subr.bf16.mxu0 %v5690
    %5713 = vmatpush1.bf16.msra.mxu0 %v5687
    %5714 = vmatprep.subr.bf16.mxu0 0
    %5715 = vmatpush1.bf16.msra.mxu0 0
    %5716 = vmatprep.subr.bf16.mxu0 0
    %5717 = vmatpush1.bf16.msra.mxu0 0
    %5718 = vmatprep.subr.bf16.mxu0 0
    %5719 = vmatpush1.bf16.msra.mxu0 0
    %5720 = vmatprep.subr.bf16.mxu0 0
    %5721 = vmatpush1.bf16.msra.mxu0 0
    %5722 = vmatprep.subr.bf16.mxu0 0
    %5723 = vmatpush1.bf16.msra.mxu0 0
    %5724 = vmatprep.mubr.bf16.mxu0 %v5681
    %5725 = vmatmul.mubr.bf16.gmra.mrb[0].mxu0 %v5557
    %v5726 = vpop.f32.mrb[0].mxu0
    %v5727 = vadd.f32 %v5564, %v5726
    %v5728 = vpop.f32.mrb[0].mxu0
    %v5729 = vadd.f32 %v5568, %v5728
    %v5730 = vpop.f32.mrb[0].mxu0
    %v5731 = vadd.f32 %v5564, %v5730
    %v5732 = vpop.f32.mrb[0].mxu0
    %v5733 = vadd.f32 %v5568, %v5732
    %5734 = vdwg.mxu0
    %v5735 = vmax.f32 %v5727, 0.0
    %v5736 = vmax.f32 %v5729, 0.0
    %v5737 = vmax.f32 %v5731, 0.0
    %v5738 = vmax.f32 %v5733, 0.0
    %v5739 = vld [vmem:[%s101] sm:$0xf]
    %v5740 = vld [vmem:[%s101 + $0x4] sm:$0xf]
    %v5741 = vld [vmem:[%s101 + $0x8] sm:$0xf]
    %v5742 = vld [vmem:[%s101 + $0xc] sm:$0xf]
    %v5743 = vld [vmem:[%s101 + $0x10] sm:$0xf]
    %v5744 = vld [vmem:[%s101 + $0x14] sm:$0xf]
    %v5745 = vld [vmem:[%s101 + $0x18] sm:$0xf]
    %v5746 = vld [vmem:[%s101 + $0x1c] sm:$0xf]
    %v5747 = vld [vmem:[%s101 + $0x20] sm:$0xf]
    %v5748 = vld [vmem:[%s101 + $0x24] sm:$0xf]
    %v5749 = vld [vmem:[%s101 + $0x28] sm:$0xf]
    %v5750 = vld [vmem:[%s101 + $0x2c] sm:$0xf]
    %v5751 = vld [vmem:[%s101 + $0x30] sm:$0xf]
    %v5752 = vld [vmem:[%s101 + $0x34] sm:$0xf]
    %v5753 = vld [vmem:[%s101 + $0x38] sm:$0xf]
    %v5754 = vld [vmem:[%s101 + $0x3c] sm:$0xf]
    %v5755 = vld [vmem:[%s101 + $0x40] sm:$0xf]
    %v5756 = vld [vmem:[%s101 + $0x44] sm:$0xf]
    %v5757 = vld [vmem:[%s101 + $0x48] sm:$0xf]
    %v5758 = vld [vmem:[%s101 + $0x4c] sm:$0xf]
    %v5759 = vld [vmem:[%s101 + $0x50] sm:$0xf]
    %v5760 = vld [vmem:[%s101 + $0x54] sm:$0x3]
    %v5761 = vpack.c.bf16 %v5737, %v5735
    %v5762 = vpack.c.bf16 %v5738, %v5736
    %v5763 = vld [vmem:[#allocation30] sm:$0x1]
    %v5765 = vlaneseq
    %v5766 = vshrl.u32 %v5765, 7
    %v5767 = vsub.s32 0, %v5766
    %v5768 = vrot.slane %v5763, %v5767
    %v5792 = vunpack.c.l.b16 %v5739
    %v5793 = vunpack.c.l.b16 %v5740
    %v5794 = vunpack.c.l.b16 %v5741
    %v5795 = vunpack.c.l.b16 %v5742
    %v5796 = vunpack.c.l.b16 %v5743
    %v5797 = vunpack.c.l.b16 %v5744
    %v5798 = vunpack.c.l.b16 %v5745
    %v5799 = vunpack.c.l.b16 %v5746
    %v5800 = vunpack.c.l.b16 %v5747
    %v5801 = vunpack.c.l.b16 %v5748
    %v5802 = vunpack.c.l.b16 %v5749
    %v5803 = vunpack.c.l.b16 %v5750
    %v5804 = vunpack.c.l.b16 %v5751
    %v5805 = vunpack.c.l.b16 %v5752
    %v5806 = vunpack.c.l.b16 %v5753
    %v5807 = vunpack.c.l.b16 %v5754
    %v5808 = vunpack.c.l.b16 %v5755
    %v5809 = vunpack.c.l.b16 %v5756
    %v5810 = vunpack.c.l.b16 %v5757
    %v5811 = vunpack.c.l.b16 %v5758
    %v5812 = vunpack.c.l.b16 %v5759
    %v5813 = vunpack.c.l.b16 %v5760
    %v5814 = vpack.c.b16 %v5793, %v5792
    %v5815 = vpack.c.b16 %v5795, %v5794
    %v5816 = vpack.c.b16 %v5797, %v5796
    %v5817 = vpack.c.b16 %v5799, %v5798
    %v5818 = vpack.c.b16 %v5801, %v5800
    %v5819 = vpack.c.b16 %v5803, %v5802
    %v5820 = vpack.c.b16 %v5805, %v5804
    %v5821 = vpack.c.b16 %v5807, %v5806
    %v5822 = vpack.c.b16 %v5809, %v5808
    %v5823 = vpack.c.b16 %v5811, %v5810
    %v5824 = vpack.c.b16 %v5813, %v5812
    %v5836 = vsel %vm5679, %v5762, 0
    %v5839 = vand.u32 %v5824, %v5685
    %5841 = vmatprep.subr.bf16.mxu0 0
    %5842 = vmatpush1.bf16.msra.mxu0 %v5814
    %5843 = vmatprep.subr.bf16.mxu0 0
    %5844 = vmatpush1.bf16.msra.mxu0 %v5815
    %5845 = vmatprep.subr.bf16.mxu0 0
    %5846 = vmatpush1.bf16.msra.mxu0 %v5816
    %5847 = vmatprep.subr.bf16.mxu0 0
    %5848 = vmatpush1.bf16.msra.mxu0 %v5817
    %5849 = vmatprep.subr.bf16.mxu0 0
    %5850 = vmatpush1.bf16.msra.mxu0 %v5818
    %5851 = vmatprep.subr.bf16.mxu0 0
    %5852 = vmatpush1.bf16.msra.mxu0 %v5819
    %5853 = vmatprep.subr.bf16.mxu0 0
    %5854 = vmatpush1.bf16.msra.mxu0 %v5820
    %5855 = vmatprep.subr.bf16.mxu0 0
    %5856 = vmatpush1.bf16.msra.mxu0 %v5821
    %5857 = vmatprep.subr.bf16.mxu0 0
    %5858 = vmatpush1.bf16.msra.mxu0 %v5822
    %5859 = vmatprep.subr.bf16.mxu0 0
    %5860 = vmatpush1.bf16.msra.mxu0 %v5823
    %5861 = vmatprep.subr.bf16.mxu0 0
    %5862 = vmatpush1.bf16.msra.mxu0 %v5839
    %5863 = vmatprep.subr.bf16.mxu0 0
    %5864 = vmatpush1.bf16.msra.mxu0 0
    %5865 = vmatprep.subr.bf16.mxu0 0
    %5866 = vmatpush1.bf16.msra.mxu0 0
    %5867 = vmatprep.subr.bf16.mxu0 0
    %5868 = vmatpush1.bf16.msra.mxu0 0
    %5869 = vmatprep.subr.bf16.mxu0 0
    %5870 = vmatpush1.bf16.msra.mxu0 0
    %5871 = vmatprep.subr.bf16.mxu0 0
    %5872 = vmatpush1.bf16.msra.mxu0 0
    %5873 = vmatprep.mubr.bf16.mxu0 %v5836
    %5874 = vmatmul.mubr.bf16.gmra.mrb[0].mxu0 %v5761
    %v5875 = vpop.f32.mrb[0].mxu0
    %v5876 = vadd.f32 %v5768, %v5875
    %v5877 = vpop.f32.mrb[0].mxu0
    %v5878 = vpop.f32.mrb[0].mxu0
    %v5879 = vadd.f32 %v5768, %v5878
    %v5880 = vpop.f32.mrb[0].mxu0
    %5881 = vdwg.mxu0
    %5882 = vst.msk [vmem:[%s139] sm:$0xff] %vm5462, %v5876
    %5883 = vst.msk [vmem:[%s139 + $0x8] sm:$0xff] %vm5462, %v5879
    %v5884 = vld [vmem:[%s15] sm:$0x3]
    %v5885 = vpack.c.bf16 %v5884, %v5884
    %v5887 = vsel %vm592, %v5885, 0
    %5889 = vmatprep.subr.bf16.mxu0 0
    %5890 = vmatpush1.bf16.msra.mxu0 %v4280
    %5891 = vmatprep.subr.bf16.mxu0 0
    %5892 = vmatpush1.bf16.msra.mxu0 0
    %5893 = vmatprep.subr.bf16.mxu0 0
    %5894 = vmatpush1.bf16.msra.mxu0 0
    %5895 = vmatprep.subr.bf16.mxu0 0
    %5896 = vmatpush1.bf16.msra.mxu0 0
    %5897 = vmatprep.subr.bf16.mxu0 0
    %5898 = vmatpush1.bf16.msra.mxu0 0
    %5899 = vmatprep.subr.bf16.mxu0 0
    %5900 = vmatpush1.bf16.msra.mxu0 0
    %5901 = vmatprep.subr.bf16.mxu0 0
    %5902 = vmatpush1.bf16.msra.mxu0 0
    %5903 = vmatprep.subr.bf16.mxu0 0
    %5904 = vmatpush1.bf16.msra.mxu0 0
    %5905 = vmatprep.subr.bf16.mxu0 0
    %5906 = vmatpush1.bf16.msra.mxu0 0
    %5907 = vmatprep.subr.bf16.mxu0 0
    %5908 = vmatpush1.bf16.msra.mxu0 0
    %5909 = vmatprep.subr.bf16.mxu0 0
    %5910 = vmatpush1.bf16.msra.mxu0 0
    %5911 = vmatprep.subr.bf16.mxu0 0
    %5912 = vmatpush1.bf16.msra.mxu0 0
    %5913 = vmatprep.subr.bf16.mxu0 0
    %5914 = vmatpush1.bf16.msra.mxu0 0
    %5915 = vmatprep.subr.bf16.mxu0 0
    %5916 = vmatpush1.bf16.msra.mxu0 0
    %5917 = vmatprep.subr.bf16.mxu0 0
    %5918 = vmatpush1.bf16.msra.mxu0 0
    %5919 = vmatprep.subr.bf16.mxu0 0
    %5920 = vmatpush1.bf16.msra.mxu0 0
    %5921 = vmatprep.mubr.bf16.mxu0 0
    %5922 = vmatmul.mubr.bf16.gmra.mrb[0].mxu0 %v5887
    %v5923 = vpop.f32.mrb[0].mxu0
    %v5924 = vadd.f32 0.0, %v5923
    %v5925 = vpop.f32.mrb[0].mxu0
    %v5926 = vpop.f32.mrb[0].mxu0
    %v5927 = vpop.f32.mrb[0].mxu0
    %5928 = vdwg.mxu0
    %v5929 = vld [vmem:[%s107] sm:$0xf]
    %v5930 = vld [vmem:[%s109] sm:$0xff]
    %v5931 = vld [vmem:[%s109 + $0x8] sm:$0xff]
    %v5932 = vld [vmem:[%s109 + $0x10] sm:$0xff]
    %v5933 = vld [vmem:[%s109 + $0x18] sm:$0xff]
    %v5934 = vld [vmem:[%s109 + $0x20] sm:$0xff]
    %v5940 = vunpack.c.l.b16 %v5930
    %v5941 = vunpack.c.h.b16 %v5930
    %v5942 = vunpack.c.l.b16 %v5931
    %v5943 = vunpack.c.h.b16 %v5931
    %v5944 = vunpack.c.l.b16 %v5932
    %v5945 = vunpack.c.h.b16 %v5932
    %v5946 = vunpack.c.l.b16 %v5933
    %v5947 = vunpack.c.h.b16 %v5933
    %v5948 = vunpack.c.l.b16 %v5934
    %v5949 = vunpack.c.h.b16 %v5934
    %v5950 = vpack.c.b16 %v5942, %v5940
    %v5951 = vpack.c.b16 %v5943, %v5941
    %v5952 = vpack.c.b16 %v5946, %v5944
    %v5953 = vpack.c.b16 %v5947, %v5945
    %v5954 = vpack.c.b16 %v5948, %v5948
    %v5955 = vpack.c.b16 %v5949, %v5949
    %v5961 = vsel %vm1249, %v5954, 0
    %v5964 = vsel %vm1249, %v5955, 0
    %5966 = vmatprep.subr.bf16.mxu0 %v5951
    %5967 = vmatpush1.bf16.msra.mxu0 %v5950
    %5968 = vmatprep.subr.bf16.mxu0 %v5953
    %5969 = vmatpush1.bf16.msra.mxu0 %v5952
    %5970 = vmatprep.subr.bf16.mxu0 %v5964
    %5971 = vmatpush1.bf16.msra.mxu0 %v5961
    %5972 = vmatprep.subr.bf16.mxu0 0
    %5973 = vmatpush1.bf16.msra.mxu0 0
    %5974 = vmatprep.subr.bf16.mxu0 0
    %5975 = vmatpush1.bf16.msra.mxu0 0
    %5976 = vmatprep.subr.bf16.mxu0 0
    %5977 = vmatpush1.bf16.msra.mxu0 0
    %5978 = vmatprep.subr.bf16.mxu0 0
    %5979 = vmatpush1.bf16.msra.mxu0 0
    %5980 = vmatprep.subr.bf16.mxu0 0
    %5981 = vmatpush1.bf16.msra.mxu0 0
    %5982 = vmatprep.subr.bf16.mxu0 0
    %5983 = vmatpush1.bf16.msra.mxu0 0
    %5984 = vmatprep.subr.bf16.mxu0 0
    %5985 = vmatpush1.bf16.msra.mxu0 0
    %5986 = vmatprep.subr.bf16.mxu0 0
    %5987 = vmatpush1.bf16.msra.mxu0 0
    %5988 = vmatprep.subr.bf16.mxu0 0
    %5989 = vmatpush1.bf16.msra.mxu0 0
    %5990 = vmatprep.subr.bf16.mxu0 0
    %5991 = vmatpush1.bf16.msra.mxu0 0
    %5992 = vmatprep.subr.bf16.mxu0 0
    %5993 = vmatpush1.bf16.msra.mxu0 0
    %5994 = vmatprep.subr.bf16.mxu0 0
    %5995 = vmatpush1.bf16.msra.mxu0 0
    %5996 = vmatprep.subr.bf16.mxu0 0
    %5997 = vmatpush1.bf16.msra.mxu0 0
    %5998 = vmatprep.mubr.bf16.mxu0 0
    %5999 = vmatmul.mubr.bf16.gmra.mrb[0].mxu0 %v5060
    %v6000 = vpop.f32.mrb[0].mxu0
    %v6001 = vadd.f32 0.0, %v6000
    %v6002 = vpop.f32.mrb[0].mxu0
    %v6003 = vadd.f32 0.0, %v6002
    %v6004 = vpop.f32.mrb[0].mxu0
    %v6005 = vpop.f32.mrb[0].mxu0
    %6006 = vdwg.mxu0
    %v6009 = vunpack.c.l.s4 1983009808
    %v6010 = vunpack.c.0.s8 %v6009
    %v6011 = vlaneseq
    %v6012 = vshrl.u32 %v6011, 7
    %v6013 = vsub.s32 %v6010, %v6012
    %v6014 = vrot.slane %v5929, %v6013
    %v6015 = vcombine.high %v6014, %v6014
    %v6017 = vand.u32 %v6014, %v5124
    %v6020 = vand.u32 %v6015, %v5124
    %6022 = vmatprep.subr.bf16.mxu0 %v6020
    %6023 = vmatpush1.bf16.msra.mxu0 %v6017
    %6024 = vmatprep.subr.bf16.mxu0 0
    %6025 = vmatpush1.bf16.msra.mxu0 0
    %6026 = vmatprep.subr.bf16.mxu0 0
    %6027 = vmatpush1.bf16.msra.mxu0 0
    %6028 = vmatprep.subr.bf16.mxu0 0
    %6029 = vmatpush1.bf16.msra.mxu0 0
    %6030 = vmatprep.subr.bf16.mxu0 0
    %6031 = vmatpush1.bf16.msra.mxu0 0
    %6032 = vmatprep.subr.bf16.mxu0 0
    %6033 = vmatpush1.bf16.msra.mxu0 0
    %6034 = vmatprep.subr.bf16.mxu0 0
    %6035 = vmatpush1.bf16.msra.mxu0 0
    %6036 = vmatprep.subr.bf16.mxu0 0
    %6037 = vmatpush1.bf16.msra.mxu0 0
    %6038 = vmatprep.subr.bf16.mxu0 0
    %6039 = vmatpush1.bf16.msra.mxu0 0
    %6040 = vmatprep.subr.bf16.mxu0 0
    %6041 = vmatpush1.bf16.msra.mxu0 0
    %6042 = vmatprep.subr.bf16.mxu0 0
    %6043 = vmatpush1.bf16.msra.mxu0 0
    %6044 = vmatprep.subr.bf16.mxu0 0
    %6045 = vmatpush1.bf16.msra.mxu0 0
    %6046 = vmatprep.subr.bf16.mxu0 0
    %6047 = vmatpush1.bf16.msra.mxu0 0
    %6048 = vmatprep.subr.bf16.mxu0 0
    %6049 = vmatpush1.bf16.msra.mxu0 0
    %6050 = vmatprep.subr.bf16.mxu0 0
    %6051 = vmatpush1.bf16.msra.mxu0 0
    %6052 = vmatprep.subr.bf16.mxu0 0
    %6053 = vmatpush1.bf16.msra.mxu0 0
    %6054 = vmatprep.mubr.bf16.mxu0 0
    %6055 = vmatmul.mubr.bf16.gmra.mrb[0].mxu0 %v5120
    %v6056 = vpop.f32.mrb[0].mxu0
    %v6057 = vadd.f32 %v6001, %v6056
    %v6058 = vpop.f32.mrb[0].mxu0
    %v6059 = vadd.f32 %v6003, %v6058
    %v6060 = vpop.f32.mrb[0].mxu0
    %v6061 = vpop.f32.mrb[0].mxu0
    %6062 = vdwg.mxu0
    %v6063 = vld [vmem:[%s105] sm:$0xff]
    %v6064 = vld [vmem:[%s105 + $0x8] sm:$0xff]
    %v6065 = vld [vmem:[%s105 + $0x10] sm:$0xff]
    %v6066 = vld [vmem:[%s105 + $0x18] sm:$0xff]
    %v6071 = vunpack.c.l.b16 %v6063
    %v6072 = vunpack.c.h.b16 %v6063
    %v6073 = vunpack.c.l.b16 %v6064
    %v6074 = vunpack.c.h.b16 %v6064
    %v6075 = vunpack.c.l.b16 %v6065
    %v6076 = vunpack.c.h.b16 %v6065
    %v6077 = vunpack.c.l.b16 %v6066
    %v6078 = vunpack.c.h.b16 %v6066
    %v6079 = vpack.c.b16 %v6073, %v6071
    %v6080 = vpack.c.b16 %v6074, %v6072
    %v6081 = vpack.c.b16 %v6077, %v6075
    %v6082 = vpack.c.b16 %v6078, %v6076
    %6087 = vmatprep.subr.bf16.mxu0 %v6080
    %6088 = vmatpush1.bf16.msra.mxu0 %v6079
    %6089 = vmatprep.subr.bf16.mxu0 %v6082
    %6090 = vmatpush1.bf16.msra.mxu0 %v6081
    %6091 = vmatprep.subr.bf16.mxu0 0
    %6092 = vmatpush1.bf16.msra.mxu0 0
    %6093 = vmatprep.subr.bf16.mxu0 0
    %6094 = vmatpush1.bf16.msra.mxu0 0
    %6095 = vmatprep.subr.bf16.mxu0 0
    %6096 = vmatpush1.bf16.msra.mxu0 0
    %6097 = vmatprep.subr.bf16.mxu0 0
    %6098 = vmatpush1.bf16.msra.mxu0 0
    %6099 = vmatprep.subr.bf16.mxu0 0
    %6100 = vmatpush1.bf16.msra.mxu0 0
    %6101 = vmatprep.subr.bf16.mxu0 0
    %6102 = vmatpush1.bf16.msra.mxu0 0
    %6103 = vmatprep.subr.bf16.mxu0 0
    %6104 = vmatpush1.bf16.msra.mxu0 0
    %6105 = vmatprep.subr.bf16.mxu0 0
    %6106 = vmatpush1.bf16.msra.mxu0 0
    %6107 = vmatprep.subr.bf16.mxu0 0
    %6108 = vmatpush1.bf16.msra.mxu0 0
    %6109 = vmatprep.subr.bf16.mxu0 0
    %6110 = vmatpush1.bf16.msra.mxu0 0
    %6111 = vmatprep.subr.bf16.mxu0 0
    %6112 = vmatpush1.bf16.msra.mxu0 0
    %6113 = vmatprep.subr.bf16.mxu0 0
    %6114 = vmatpush1.bf16.msra.mxu0 0
    %6115 = vmatprep.subr.bf16.mxu0 0
    %6116 = vmatpush1.bf16.msra.mxu0 0
    %6117 = vmatprep.subr.bf16.mxu0 0
    %6118 = vmatpush1.bf16.msra.mxu0 0
    %6119 = vmatprep.mubr.bf16.mxu0 0
    %6120 = vmatmul.mubr.bf16.gmra.mrb[0].mxu0 %v5198
    %v6121 = vpop.f32.mrb[0].mxu0
    %v6122 = vadd.f32 0.0, %v6121
    %v6123 = vpop.f32.mrb[0].mxu0
    %v6124 = vadd.f32 0.0, %v6123
    %v6125 = vpop.f32.mrb[0].mxu0
    %v6126 = vpop.f32.mrb[0].mxu0
    %6127 = vdwg.mxu0
    %v6128 = vadd.f32 %v6057, %v6122
    %v6129 = vadd.f32 %v6059, %v6124
    %s6130 = scalar_lea.vmem %s105, 32
    %v6131 = vld [vmem:[%s6130] sm:$0xff]
    %v6132 = vld [vmem:[%s6130 + $0x8] sm:$0xff]
    %v6133 = vld [vmem:[%s6130 + $0x10] sm:$0xff]
    %v6134 = vld [vmem:[%s6130 + $0x18] sm:$0xff]
    %v6139 = vunpack.c.l.b16 %v6131
    %v6140 = vunpack.c.h.b16 %v6131
    %v6141 = vunpack.c.l.b16 %v6132
    %v6142 = vunpack.c.h.b16 %v6132
    %v6143 = vunpack.c.l.b16 %v6133
    %v6144 = vunpack.c.h.b16 %v6133
    %v6145 = vunpack.c.l.b16 %v6134
    %v6146 = vunpack.c.h.b16 %v6134
    %v6147 = vpack.c.b16 %v6141, %v6139
    %v6148 = vpack.c.b16 %v6142, %v6140
    %v6149 = vpack.c.b16 %v6145, %v6143
    %v6150 = vpack.c.b16 %v6146, %v6144
    %6155 = vmatprep.subr.bf16.mxu0 %v6148
    %6156 = vmatpush1.bf16.msra.mxu0 %v6147
    %6157 = vmatprep.subr.bf16.mxu0 %v6150
    %6158 = vmatpush1.bf16.msra.mxu0 %v6149
    %6159 = vmatprep.subr.bf16.mxu0 0
    %6160 = vmatpush1.bf16.msra.mxu0 0
    %6161 = vmatprep.subr.bf16.mxu0 0
    %6162 = vmatpush1.bf16.msra.mxu0 0
    %6163 = vmatprep.subr.bf16.mxu0 0
    %6164 = vmatpush1.bf16.msra.mxu0 0
    %6165 = vmatprep.subr.bf16.mxu0 0
    %6166 = vmatpush1.bf16.msra.mxu0 0
    %6167 = vmatprep.subr.bf16.mxu0 0
    %6168 = vmatpush1.bf16.msra.mxu0 0
    %6169 = vmatprep.subr.bf16.mxu0 0
    %6170 = vmatpush1.bf16.msra.mxu0 0
    %6171 = vmatprep.subr.bf16.mxu0 0
    %6172 = vmatpush1.bf16.msra.mxu0 0
    %6173 = vmatprep.subr.bf16.mxu0 0
    %6174 = vmatpush1.bf16.msra.mxu0 0
    %6175 = vmatprep.subr.bf16.mxu0 0
    %6176 = vmatpush1.bf16.msra.mxu0 0
    %6177 = vmatprep.subr.bf16.mxu0 0
    %6178 = vmatpush1.bf16.msra.mxu0 0
    %6179 = vmatprep.subr.bf16.mxu0 0
    %6180 = vmatpush1.bf16.msra.mxu0 0
    %6181 = vmatprep.subr.bf16.mxu0 0
    %6182 = vmatpush1.bf16.msra.mxu0 0
    %6183 = vmatprep.subr.bf16.mxu0 0
    %6184 = vmatpush1.bf16.msra.mxu0 0
    %6185 = vmatprep.subr.bf16.mxu0 0
    %6186 = vmatpush1.bf16.msra.mxu0 0
    %6187 = vmatprep.mubr.bf16.mxu0 0
    %6188 = vmatmul.mubr.bf16.gmra.mrb[0].mxu0 %v5270
    %v6189 = vpop.f32.mrb[0].mxu0
    %v6190 = vadd.f32 0.0, %v6189
    %v6191 = vpop.f32.mrb[0].mxu0
    %v6192 = vadd.f32 0.0, %v6191
    %v6193 = vpop.f32.mrb[0].mxu0
    %v6194 = vpop.f32.mrb[0].mxu0
    %6195 = vdwg.mxu0
    %v6196 = vadd.f32 %v6128, %v6190
    %v6197 = vadd.f32 %v6129, %v6192
    %s6198 = scalar_lea.vmem %s105, 64
    %v6199 = vld [vmem:[%s6198] sm:$0xff]
    %v6200 = vld [vmem:[%s6198 + $0x8] sm:$0xff]
    %v6201 = vld [vmem:[%s6198 + $0x10] sm:$0xff]
    %v6202 = vld [vmem:[%s6198 + $0x18] sm:$0xff]
    %v6207 = vunpack.c.l.b16 %v6199
    %v6208 = vunpack.c.h.b16 %v6199
    %v6209 = vunpack.c.l.b16 %v6200
    %v6210 = vunpack.c.h.b16 %v6200
    %v6211 = vunpack.c.l.b16 %v6201
    %v6212 = vunpack.c.h.b16 %v6201
    %v6213 = vunpack.c.l.b16 %v6202
    %v6214 = vunpack.c.h.b16 %v6202
    %v6215 = vpack.c.b16 %v6209, %v6207
    %v6216 = vpack.c.b16 %v6210, %v6208
    %v6217 = vpack.c.b16 %v6213, %v6211
    %v6218 = vpack.c.b16 %v6214, %v6212
    %6223 = vmatprep.subr.bf16.mxu0 %v6216
    %6224 = vmatpush1.bf16.msra.mxu0 %v6215
    %6225 = vmatprep.subr.bf16.mxu0 %v6218
    %6226 = vmatpush1.bf16.msra.mxu0 %v6217
    %6227 = vmatprep.subr.bf16.mxu0 0
    %6228 = vmatpush1.bf16.msra.mxu0 0
    %6229 = vmatprep.subr.bf16.mxu0 0
    %6230 = vmatpush1.bf16.msra.mxu0 0
    %6231 = vmatprep.subr.bf16.mxu0 0
    %6232 = vmatpush1.bf16.msra.mxu0 0
    %6233 = vmatprep.subr.bf16.mxu0 0
    %6234 = vmatpush1.bf16.msra.mxu0 0
    %6235 = vmatprep.subr.bf16.mxu0 0
    %6236 = vmatpush1.bf16.msra.mxu0 0
    %6237 = vmatprep.subr.bf16.mxu0 0
    %6238 = vmatpush1.bf16.msra.mxu0 0
    %6239 = vmatprep.subr.bf16.mxu0 0
    %6240 = vmatpush1.bf16.msra.mxu0 0
    %6241 = vmatprep.subr.bf16.mxu0 0
    %6242 = vmatpush1.bf16.msra.mxu0 0
    %6243 = vmatprep.subr.bf16.mxu0 0
    %6244 = vmatpush1.bf16.msra.mxu0 0
    %6245 = vmatprep.subr.bf16.mxu0 0
    %6246 = vmatpush1.bf16.msra.mxu0 0
    %6247 = vmatprep.subr.bf16.mxu0 0
    %6248 = vmatpush1.bf16.msra.mxu0 0
    %6249 = vmatprep.subr.bf16.mxu0 0
    %6250 = vmatpush1.bf16.msra.mxu0 0
    %6251 = vmatprep.subr.bf16.mxu0 0
    %6252 = vmatpush1.bf16.msra.mxu0 0
    %6253 = vmatprep.subr.bf16.mxu0 0
    %6254 = vmatpush1.bf16.msra.mxu0 0
    %6255 = vmatprep.mubr.bf16.mxu0 0
    %6256 = vmatmul.mubr.bf16.gmra.mrb[0].mxu0 %v5342
    %v6257 = vpop.f32.mrb[0].mxu0
    %v6258 = vadd.f32 0.0, %v6257
    %v6259 = vpop.f32.mrb[0].mxu0
    %v6260 = vadd.f32 0.0, %v6259
    %v6261 = vpop.f32.mrb[0].mxu0
    %v6262 = vpop.f32.mrb[0].mxu0
    %6263 = vdwg.mxu0
    %v6264 = vadd.f32 %v6196, %v6258
    %v6265 = vadd.f32 %v6197, %v6260
    %v6266 = vld [vmem:[%s111] sm:$0xff]
    %v6267 = vld [vmem:[%s111 + $0x8] sm:$0xff]
    %v6268 = vld [vmem:[%s111 + $0x10] sm:$0xff]
    %v6269 = vld [vmem:[%s111 + $0x18] sm:$0xff]
    %v6270 = vpack.c.bf16 %v5924, %v5924
    %v6275 = vunpack.c.l.b16 %v6266
    %v6276 = vunpack.c.h.b16 %v6266
    %v6277 = vunpack.c.l.b16 %v6267
    %v6278 = vunpack.c.h.b16 %v6267
    %v6279 = vunpack.c.l.b16 %v6268
    %v6280 = vunpack.c.h.b16 %v6268
    %v6281 = vunpack.c.l.b16 %v6269
    %v6282 = vunpack.c.h.b16 %v6269
    %v6283 = vpack.c.b16 %v6277, %v6275
    %v6284 = vpack.c.b16 %v6278, %v6276
    %v6285 = vpack.c.b16 %v6281, %v6279
    %v6286 = vpack.c.b16 %v6282, %v6280
    %v6292 = vsel %vm685, %v6270, 0
    %6294 = vmatprep.subr.bf16.mxu0 %v6284
    %6295 = vmatpush1.bf16.msra.mxu0 %v6283
    %6296 = vmatprep.subr.bf16.mxu0 %v6286
    %6297 = vmatpush1.bf16.msra.mxu0 %v6285
    %6298 = vmatprep.subr.bf16.mxu0 0
    %6299 = vmatpush1.bf16.msra.mxu0 0
    %6300 = vmatprep.subr.bf16.mxu0 0
    %6301 = vmatpush1.bf16.msra.mxu0 0
    %6302 = vmatprep.subr.bf16.mxu0 0
    %6303 = vmatpush1.bf16.msra.mxu0 0
    %6304 = vmatprep.subr.bf16.mxu0 0
    %6305 = vmatpush1.bf16.msra.mxu0 0
    %6306 = vmatprep.subr.bf16.mxu0 0
    %6307 = vmatpush1.bf16.msra.mxu0 0
    %6308 = vmatprep.subr.bf16.mxu0 0
    %6309 = vmatpush1.bf16.msra.mxu0 0
    %6310 = vmatprep.subr.bf16.mxu0 0
    %6311 = vmatpush1.bf16.msra.mxu0 0
    %6312 = vmatprep.subr.bf16.mxu0 0
    %6313 = vmatpush1.bf16.msra.mxu0 0
    %6314 = vmatprep.subr.bf16.mxu0 0
    %6315 = vmatpush1.bf16.msra.mxu0 0
    %6316 = vmatprep.subr.bf16.mxu0 0
    %6317 = vmatpush1.bf16.msra.mxu0 0
    %6318 = vmatprep.subr.bf16.mxu0 0
    %6319 = vmatpush1.bf16.msra.mxu0 0
    %6320 = vmatprep.subr.bf16.mxu0 0
    %6321 = vmatpush1.bf16.msra.mxu0 0
    %6322 = vmatprep.subr.bf16.mxu0 0
    %6323 = vmatpush1.bf16.msra.mxu0 0
    %6324 = vmatprep.subr.bf16.mxu0 0
    %6325 = vmatpush1.bf16.msra.mxu0 0
    %6326 = vmatprep.mubr.bf16.mxu0 0
    %6327 = vmatmul.mubr.bf16.gmra.mrb[0].mxu0 %v6292
    %v6328 = vpop.f32.mrb[0].mxu0
    %v6329 = vadd.f32 0.0, %v6328
    %v6330 = vpop.f32.mrb[0].mxu0
    %v6331 = vadd.f32 0.0, %v6330
    %v6332 = vpop.f32.mrb[0].mxu0
    %v6333 = vpop.f32.mrb[0].mxu0
    %6334 = vdwg.mxu0
    %v6335 = vadd.f32 %v6264, %v6329
    %v6336 = vadd.f32 %v6265, %v6331
    %v6337 = vld [vmem:[#allocation32] sm:$0x3]
    %v6339 = vlaneseq
    %v6340 = vshrl.u32 %v6339, 7
    %v6341 = vsub.s32 0, %v6340
    %v6342 = vrot.slane %v6337, %v6341
    %v6343 = vlaneseq
    %v6344 = vshrl.u32 %v6343, 7
    %v6345 = vsub.s32 1, %v6344
    %v6346 = vrot.slane %v6337, %v6345
    %v6349 = vadd.f32 %v6335, %v6342
    %v6350 = vadd.f32 %v6336, %v6346
    %v6351 = vmax.f32 %v6349, 0.0
    %v6352 = vmax.f32 %v6350, 0.0
    %v6353 = vld [vmem:[%s115] sm:$0xff]
    %v6354 = vld [vmem:[%s115 + $0x8] sm:$0xff]
    %v6355 = vld [vmem:[%s115 + $0x10] sm:$0xff]
    %v6356 = vld [vmem:[%s115 + $0x18] sm:$0xff]
    %v6357 = vld [vmem:[%s115 + $0x20] sm:$0xff]
    %v6358 = vld [vmem:[%s115 + $0x28] sm:$0xff]
    %v6359 = vld [vmem:[%s115 + $0x30] sm:$0xff]
    %v6360 = vld [vmem:[%s115 + $0x38] sm:$0xff]
    %v6361 = vld [vmem:[%s115 + $0x40] sm:$0xff]
    %v6362 = vld [vmem:[%s115 + $0x48] sm:$0xff]
    %v6363 = vld [vmem:[%s115 + $0x50] sm:$0xff]
    %v6364 = vld [vmem:[%s115 + $0x58] sm:$0xff]
    %v6365 = vld [vmem:[%s115 + $0x60] sm:$0xff]
    %v6366 = vld [vmem:[%s115 + $0x68] sm:$0xff]
    %v6367 = vld [vmem:[%s115 + $0x70] sm:$0xff]
    %v6368 = vld [vmem:[%s115 + $0x78] sm:$0xff]
    %v6369 = vld [vmem:[%s115 + $0x80] sm:$0xff]
    %v6370 = vld [vmem:[%s115 + $0x88] sm:$0xff]
    %v6371 = vld [vmem:[%s115 + $0x90] sm:$0xff]
    %v6372 = vld [vmem:[%s115 + $0x98] sm:$0xff]
    %v6373 = vld [vmem:[%s115 + $0xa0] sm:$0xff]
    %v6374 = vld [vmem:[%s115 + $0xa8] sm:$0x33]
    %v6375 = vpack.c.bf16 %v6351, %v6351
    %v6376 = vpack.c.bf16 %v6352, %v6352
    %v6377 = vld [vmem:[#allocation33] sm:$0x3]
    %v6379 = vlaneseq
    %v6380 = vshrl.u32 %v6379, 7
    %v6381 = vsub.s32 0, %v6380
    %v6382 = vrot.slane %v6377, %v6381
    %v6383 = vlaneseq
    %v6384 = vshrl.u32 %v6383, 7
    %v6385 = vsub.s32 1, %v6384
    %v6386 = vrot.slane %v6377, %v6385
    %v6411 = vunpack.c.l.b16 %v6353
    %v6412 = vunpack.c.h.b16 %v6353
    %v6413 = vunpack.c.l.b16 %v6354
    %v6414 = vunpack.c.h.b16 %v6354
    %v6415 = vunpack.c.l.b16 %v6355
    %v6416 = vunpack.c.h.b16 %v6355
    %v6417 = vunpack.c.l.b16 %v6356
    %v6418 = vunpack.c.h.b16 %v6356
    %v6419 = vunpack.c.l.b16 %v6357
    %v6420 = vunpack.c.h.b16 %v6357
    %v6421 = vunpack.c.l.b16 %v6358
    %v6422 = vunpack.c.h.b16 %v6358
    %v6423 = vunpack.c.l.b16 %v6359
    %v6424 = vunpack.c.h.b16 %v6359
    %v6425 = vunpack.c.l.b16 %v6360
    %v6426 = vunpack.c.h.b16 %v6360
    %v6427 = vunpack.c.l.b16 %v6361
    %v6428 = vunpack.c.h.b16 %v6361
    %v6429 = vunpack.c.l.b16 %v6362
    %v6430 = vunpack.c.h.b16 %v6362
    %v6431 = vunpack.c.l.b16 %v6363
    %v6432 = vunpack.c.h.b16 %v6363
    %v6433 = vunpack.c.l.b16 %v6364
    %v6434 = vunpack.c.h.b16 %v6364
    %v6435 = vunpack.c.l.b16 %v6365
    %v6436 = vunpack.c.h.b16 %v6365
    %v6437 = vunpack.c.l.b16 %v6366
    %v6438 = vunpack.c.h.b16 %v6366
    %v6439 = vunpack.c.l.b16 %v6367
    %v6440 = vunpack.c.h.b16 %v6367
    %v6441 = vunpack.c.l.b16 %v6368
    %v6442 = vunpack.c.h.b16 %v6368
    %v6443 = vunpack.c.l.b16 %v6369
    %v6444 = vunpack.c.h.b16 %v6369
    %v6445 = vunpack.c.l.b16 %v6370
    %v6446 = vunpack.c.h.b16 %v6370
    %v6447 = vunpack.c.l.b16 %v6371
    %v6448 = vunpack.c.h.b16 %v6371
    %v6449 = vunpack.c.l.b16 %v6372
    %v6450 = vunpack.c.h.b16 %v6372
    %v6451 = vunpack.c.l.b16 %v6373
    %v6452 = vunpack.c.h.b16 %v6373
    %v6453 = vunpack.c.l.b16 %v6374
    %v6454 = vunpack.c.h.b16 %v6374
    %v6455 = vpack.c.b16 %v6413, %v6411
    %v6456 = vpack.c.b16 %v6414, %v6412
    %v6457 = vpack.c.b16 %v6417, %v6415
    %v6458 = vpack.c.b16 %v6418, %v6416
    %v6459 = vpack.c.b16 %v6421, %v6419
    %v6460 = vpack.c.b16 %v6422, %v6420
    %v6461 = vpack.c.b16 %v6425, %v6423
    %v6462 = vpack.c.b16 %v6426, %v6424
    %v6463 = vpack.c.b16 %v6429, %v6427
    %v6464 = vpack.c.b16 %v6430, %v6428
    %v6465 = vpack.c.b16 %v6433, %v6431
    %v6466 = vpack.c.b16 %v6434, %v6432
    %v6467 = vpack.c.b16 %v6437, %v6435
    %v6468 = vpack.c.b16 %v6438, %v6436
    %v6469 = vpack.c.b16 %v6441, %v6439
    %v6470 = vpack.c.b16 %v6442, %v6440
    %v6471 = vpack.c.b16 %v6445, %v6443
    %v6472 = vpack.c.b16 %v6446, %v6444
    %v6473 = vpack.c.b16 %v6449, %v6447
    %v6474 = vpack.c.b16 %v6450, %v6448
    %v6475 = vpack.c.b16 %v6453, %v6451
    %v6476 = vpack.c.b16 %v6454, %v6452
    %v6498 = vsel %vm5679, %v6376, 0
    %v6501 = vand.u32 %v6475, %v5685
    %v6504 = vand.u32 %v6476, %v5685
    %6506 = vmatprep.subr.bf16.mxu0 %v6456
    %6507 = vmatpush1.bf16.msra.mxu0 %v6455
    %6508 = vmatprep.subr.bf16.mxu0 %v6458
    %6509 = vmatpush1.bf16.msra.mxu0 %v6457
    %6510 = vmatprep.subr.bf16.mxu0 %v6460
    %6511 = vmatpush1.bf16.msra.mxu0 %v6459
    %6512 = vmatprep.subr.bf16.mxu0 %v6462
    %6513 = vmatpush1.bf16.msra.mxu0 %v6461
    %6514 = vmatprep.subr.bf16.mxu0 %v6464
    %6515 = vmatpush1.bf16.msra.mxu0 %v6463
    %6516 = vmatprep.subr.bf16.mxu0 %v6466
    %6517 = vmatpush1.bf16.msra.mxu0 %v6465
    %6518 = vmatprep.subr.bf16.mxu0 %v6468
    %6519 = vmatpush1.bf16.msra.mxu0 %v6467
    %6520 = vmatprep.subr.bf16.mxu0 %v6470
    %6521 = vmatpush1.bf16.msra.mxu0 %v6469
    %6522 = vmatprep.subr.bf16.mxu0 %v6472
    %6523 = vmatpush1.bf16.msra.mxu0 %v6471
    %6524 = vmatprep.subr.bf16.mxu0 %v6474
    %6525 = vmatpush1.bf16.msra.mxu0 %v6473
    %6526 = vmatprep.subr.bf16.mxu0 %v6504
    %6527 = vmatpush1.bf16.msra.mxu0 %v6501
    %6528 = vmatprep.subr.bf16.mxu0 0
    %6529 = vmatpush1.bf16.msra.mxu0 0
    %6530 = vmatprep.subr.bf16.mxu0 0
    %6531 = vmatpush1.bf16.msra.mxu0 0
    %6532 = vmatprep.subr.bf16.mxu0 0
    %6533 = vmatpush1.bf16.msra.mxu0 0
    %6534 = vmatprep.subr.bf16.mxu0 0
    %6535 = vmatpush1.bf16.msra.mxu0 0
    %6536 = vmatprep.subr.bf16.mxu0 0
    %6537 = vmatpush1.bf16.msra.mxu0 0
    %6538 = vmatprep.mubr.bf16.mxu0 %v6498
    %6539 = vmatmul.mubr.bf16.gmra.mrb[0].mxu0 %v6375
    %v6540 = vpop.f32.mrb[0].mxu0
    %v6541 = vadd.f32 %v6382, %v6540
    %v6542 = vpop.f32.mrb[0].mxu0
    %v6543 = vadd.f32 %v6386, %v6542
    %v6544 = vpop.f32.mrb[0].mxu0
    %v6545 = vpop.f32.mrb[0].mxu0
    %6546 = vdwg.mxu0
    %v6547 = vmax.f32 %v6541, 0.0
    %v6548 = vmax.f32 %v6543, 0.0
    %v6549 = vld [vmem:[%s119] sm:$0xf]
    %v6550 = vld [vmem:[%s119 + $0x4] sm:$0xf]
    %v6551 = vld [vmem:[%s119 + $0x8] sm:$0xf]
    %v6552 = vld [vmem:[%s119 + $0xc] sm:$0xf]
    %v6553 = vld [vmem:[%s119 + $0x10] sm:$0xf]
    %v6554 = vld [vmem:[%s119 + $0x14] sm:$0xf]
    %v6555 = vld [vmem:[%s119 + $0x18] sm:$0xf]
    %v6556 = vld [vmem:[%s119 + $0x1c] sm:$0xf]
    %v6557 = vld [vmem:[%s119 + $0x20] sm:$0xf]
    %v6558 = vld [vmem:[%s119 + $0x24] sm:$0xf]
    %v6559 = vld [vmem:[%s119 + $0x28] sm:$0xf]
    %v6560 = vld [vmem:[%s119 + $0x2c] sm:$0xf]
    %v6561 = vld [vmem:[%s119 + $0x30] sm:$0xf]
    %v6562 = vld [vmem:[%s119 + $0x34] sm:$0xf]
    %v6563 = vld [vmem:[%s119 + $0x38] sm:$0xf]
    %v6564 = vld [vmem:[%s119 + $0x3c] sm:$0xf]
    %v6565 = vld [vmem:[%s119 + $0x40] sm:$0xf]
    %v6566 = vld [vmem:[%s119 + $0x44] sm:$0xf]
    %v6567 = vld [vmem:[%s119 + $0x48] sm:$0xf]
    %v6568 = vld [vmem:[%s119 + $0x4c] sm:$0xf]
    %v6569 = vld [vmem:[%s119 + $0x50] sm:$0xf]
    %v6570 = vld [vmem:[%s119 + $0x54] sm:$0x3]
    %v6571 = vpack.c.bf16 %v6547, %v6547
    %v6572 = vpack.c.bf16 %v6548, %v6548
    %v6573 = vld [vmem:[#allocation2] sm:$0x1]
    %v6575 = vlaneseq
    %v6576 = vshrl.u32 %v6575, 7
    %v6577 = vsub.s32 0, %v6576
    %v6578 = vrot.slane %v6573, %v6577
    %v6602 = vunpack.c.l.b16 %v6549
    %v6603 = vunpack.c.l.b16 %v6550
    %v6604 = vunpack.c.l.b16 %v6551
    %v6605 = vunpack.c.l.b16 %v6552
    %v6606 = vunpack.c.l.b16 %v6553
    %v6607 = vunpack.c.l.b16 %v6554
    %v6608 = vunpack.c.l.b16 %v6555
    %v6609 = vunpack.c.l.b16 %v6556
    %v6610 = vunpack.c.l.b16 %v6557
    %v6611 = vunpack.c.l.b16 %v6558
    %v6612 = vunpack.c.l.b16 %v6559
    %v6613 = vunpack.c.l.b16 %v6560
    %v6614 = vunpack.c.l.b16 %v6561
    %v6615 = vunpack.c.l.b16 %v6562
    %v6616 = vunpack.c.l.b16 %v6563
    %v6617 = vunpack.c.l.b16 %v6564
    %v6618 = vunpack.c.l.b16 %v6565
    %v6619 = vunpack.c.l.b16 %v6566
    %v6620 = vunpack.c.l.b16 %v6567
    %v6621 = vunpack.c.l.b16 %v6568
    %v6622 = vunpack.c.l.b16 %v6569
    %v6623 = vunpack.c.l.b16 %v6570
    %v6624 = vpack.c.b16 %v6603, %v6602
    %v6625 = vpack.c.b16 %v6605, %v6604
    %v6626 = vpack.c.b16 %v6607, %v6606
    %v6627 = vpack.c.b16 %v6609, %v6608
    %v6628 = vpack.c.b16 %v6611, %v6610
    %v6629 = vpack.c.b16 %v6613, %v6612
    %v6630 = vpack.c.b16 %v6615, %v6614
    %v6631 = vpack.c.b16 %v6617, %v6616
    %v6632 = vpack.c.b16 %v6619, %v6618
    %v6633 = vpack.c.b16 %v6621, %v6620
    %v6634 = vpack.c.b16 %v6623, %v6622
    %v6646 = vsel %vm5679, %v6572, 0
    %v6649 = vand.u32 %v6634, %v5685
    %6651 = vmatprep.subr.bf16.mxu0 0
    %6652 = vmatpush1.bf16.msra.mxu0 %v6624
    %6653 = vmatprep.subr.bf16.mxu0 0
    %6654 = vmatpush1.bf16.msra.mxu0 %v6625
    %6655 = vmatprep.subr.bf16.mxu0 0
    %6656 = vmatpush1.bf16.msra.mxu0 %v6626
    %6657 = vmatprep.subr.bf16.mxu0 0
    %6658 = vmatpush1.bf16.msra.mxu0 %v6627
    %6659 = vmatprep.subr.bf16.mxu0 0
    %6660 = vmatpush1.bf16.msra.mxu0 %v6628
    %6661 = vmatprep.subr.bf16.mxu0 0
    %6662 = vmatpush1.bf16.msra.mxu0 %v6629
    %6663 = vmatprep.subr.bf16.mxu0 0
    %6664 = vmatpush1.bf16.msra.mxu0 %v6630
    %6665 = vmatprep.subr.bf16.mxu0 0
    %6666 = vmatpush1.bf16.msra.mxu0 %v6631
    %6667 = vmatprep.subr.bf16.mxu0 0
    %6668 = vmatpush1.bf16.msra.mxu0 %v6632
    %6669 = vmatprep.subr.bf16.mxu0 0
    %6670 = vmatpush1.bf16.msra.mxu0 %v6633
    %6671 = vmatprep.subr.bf16.mxu0 0
    %6672 = vmatpush1.bf16.msra.mxu0 %v6649
    %6673 = vmatprep.subr.bf16.mxu0 0
    %6674 = vmatpush1.bf16.msra.mxu0 0
    %6675 = vmatprep.subr.bf16.mxu0 0
    %6676 = vmatpush1.bf16.msra.mxu0 0
    %6677 = vmatprep.subr.bf16.mxu0 0
    %6678 = vmatpush1.bf16.msra.mxu0 0
    %6679 = vmatprep.subr.bf16.mxu0 0
    %6680 = vmatpush1.bf16.msra.mxu0 0
    %6681 = vmatprep.subr.bf16.mxu0 0
    %6682 = vmatpush1.bf16.msra.mxu0 0
    %6683 = vmatprep.mubr.bf16.mxu0 %v6646
    %6684 = vmatmul.mubr.bf16.gmra.mrb[0].mxu0 %v6571
    %v6685 = vpop.f32.mrb[0].mxu0
    %v6686 = vadd.f32 %v6578, %v6685
    %v6687 = vpop.f32.mrb[0].mxu0
    %v6688 = vpop.f32.mrb[0].mxu0
    %v6689 = vpop.f32.mrb[0].mxu0
    %6690 = vdwg.mxu0
    %vm6691 = vcmask 1024
    %6692 = vst.msk [vmem:[%s141] sm:$0x3] %vm6691, %v6686
    %v6693 = vld [vmem:[%s125] sm:$0xf]
    %v6694 = vld [vmem:[%s127] sm:$0xff]
    %v6695 = vld [vmem:[%s127 + $0x8] sm:$0xff]
    %v6696 = vld [vmem:[%s127 + $0x10] sm:$0xff]
    %v6697 = vld [vmem:[%s127 + $0x18] sm:$0xff]
    %v6698 = vld [vmem:[%s127 + $0x20] sm:$0xff]
    %v6704 = vunpack.c.l.b16 %v6694
    %v6705 = vunpack.c.h.b16 %v6694
    %v6706 = vunpack.c.l.b16 %v6695
    %v6707 = vunpack.c.h.b16 %v6695
    %v6708 = vunpack.c.l.b16 %v6696
    %v6709 = vunpack.c.h.b16 %v6696
    %v6710 = vunpack.c.l.b16 %v6697
    %v6711 = vunpack.c.h.b16 %v6697
    %v6712 = vunpack.c.l.b16 %v6698
    %v6713 = vunpack.c.h.b16 %v6698
    %v6714 = vpack.c.b16 %v6706, %v6704
    %v6715 = vpack.c.b16 %v6707, %v6705
    %v6716 = vpack.c.b16 %v6710, %v6708
    %v6717 = vpack.c.b16 %v6711, %v6709
    %v6718 = vpack.c.b16 %v6712, %v6712
    %v6719 = vpack.c.b16 %v6713, %v6713
    %v6725 = vsel %vm1249, %v6718, 0
    %v6728 = vsel %vm1249, %v6719, 0
    %6730 = vmatprep.subr.bf16.mxu0 %v6715
    %6731 = vmatpush1.bf16.msra.mxu0 %v6714
    %6732 = vmatprep.subr.bf16.mxu0 %v6717
    %6733 = vmatpush1.bf16.msra.mxu0 %v6716
    %6734 = vmatprep.subr.bf16.mxu0 %v6728
    %6735 = vmatpush1.bf16.msra.mxu0 %v6725
    %6736 = vmatprep.subr.bf16.mxu0 0
    %6737 = vmatpush1.bf16.msra.mxu0 0
    %6738 = vmatprep.subr.bf16.mxu0 0
    %6739 = vmatpush1.bf16.msra.mxu0 0
    %6740 = vmatprep.subr.bf16.mxu0 0
    %6741 = vmatpush1.bf16.msra.mxu0 0
    %6742 = vmatprep.subr.bf16.mxu0 0
    %6743 = vmatpush1.bf16.msra.mxu0 0
    %6744 = vmatprep.subr.bf16.mxu0 0
    %6745 = vmatpush1.bf16.msra.mxu0 0
    %6746 = vmatprep.subr.bf16.mxu0 0
    %6747 = vmatpush1.bf16.msra.mxu0 0
    %6748 = vmatprep.subr.bf16.mxu0 0
    %6749 = vmatpush1.bf16.msra.mxu0 0
    %6750 = vmatprep.subr.bf16.mxu0 0
    %6751 = vmatpush1.bf16.msra.mxu0 0
    %6752 = vmatprep.subr.bf16.mxu0 0
    %6753 = vmatpush1.bf16.msra.mxu0 0
    %6754 = vmatprep.subr.bf16.mxu0 0
    %6755 = vmatpush1.bf16.msra.mxu0 0
    %6756 = vmatprep.subr.bf16.mxu0 0
    %6757 = vmatpush1.bf16.msra.mxu0 0
    %6758 = vmatprep.subr.bf16.mxu0 0
    %6759 = vmatpush1.bf16.msra.mxu0 0
    %6760 = vmatprep.subr.bf16.mxu0 0
    %6761 = vmatpush1.bf16.msra.mxu0 0
    %6762 = vmatprep.mubr.bf16.mxu0 0
    %6763 = vmatmul.mubr.bf16.gmra.mrb[0].mxu0 %v5060
    %v6764 = vpop.f32.mrb[0].mxu0
    %v6765 = vadd.f32 0.0, %v6764
    %v6766 = vpop.f32.mrb[0].mxu0
    %v6767 = vadd.f32 0.0, %v6766
    %v6768 = vpop.f32.mrb[0].mxu0
    %v6769 = vpop.f32.mrb[0].mxu0
    %6770 = vdwg.mxu0
    %v6773 = vunpack.c.l.s4 1983009808
    %v6774 = vunpack.c.0.s8 %v6773
    %v6775 = vlaneseq
    %v6776 = vshrl.u32 %v6775, 7
    %v6777 = vsub.s32 %v6774, %v6776
    %v6778 = vrot.slane %v6693, %v6777
    %v6779 = vcombine.high %v6778, %v6778
    %v6781 = vand.u32 %v6778, %v5124
    %v6784 = vand.u32 %v6779, %v5124
    %6786 = vmatprep.subr.bf16.mxu0 %v6784
    %6787 = vmatpush1.bf16.msra.mxu0 %v6781
    %6788 = vmatprep.subr.bf16.mxu0 0
    %6789 = vmatpush1.bf16.msra.mxu0 0
    %6790 = vmatprep.subr.bf16.mxu0 0
    %6791 = vmatpush1.bf16.msra.mxu0 0
    %6792 = vmatprep.subr.bf16.mxu0 0
    %6793 = vmatpush1.bf16.msra.mxu0 0
    %6794 = vmatprep.subr.bf16.mxu0 0
    %6795 = vmatpush1.bf16.msra.mxu0 0
    %6796 = vmatprep.subr.bf16.mxu0 0
    %6797 = vmatpush1.bf16.msra.mxu0 0
    %6798 = vmatprep.subr.bf16.mxu0 0
    %6799 = vmatpush1.bf16.msra.mxu0 0
    %6800 = vmatprep.subr.bf16.mxu0 0
    %6801 = vmatpush1.bf16.msra.mxu0 0
    %6802 = vmatprep.subr.bf16.mxu0 0
    %6803 = vmatpush1.bf16.msra.mxu0 0
    %6804 = vmatprep.subr.bf16.mxu0 0
    %6805 = vmatpush1.bf16.msra.mxu0 0
    %6806 = vmatprep.subr.bf16.mxu0 0
    %6807 = vmatpush1.bf16.msra.mxu0 0
    %6808 = vmatprep.subr.bf16.mxu0 0
    %6809 = vmatpush1.bf16.msra.mxu0 0
    %6810 = vmatprep.subr.bf16.mxu0 0
    %6811 = vmatpush1.bf16.msra.mxu0 0
    %6812 = vmatprep.subr.bf16.mxu0 0
    %6813 = vmatpush1.bf16.msra.mxu0 0
    %6814 = vmatprep.subr.bf16.mxu0 0
    %6815 = vmatpush1.bf16.msra.mxu0 0
    %6816 = vmatprep.subr.bf16.mxu0 0
    %6817 = vmatpush1.bf16.msra.mxu0 0
    %6818 = vmatprep.mubr.bf16.mxu0 0
    %6819 = vmatmul.mubr.bf16.gmra.mrb[0].mxu0 %v5120
    %v6820 = vpop.f32.mrb[0].mxu0
    %v6821 = vadd.f32 %v6765, %v6820
    %v6822 = vpop.f32.mrb[0].mxu0
    %v6823 = vadd.f32 %v6767, %v6822
    %v6824 = vpop.f32.mrb[0].mxu0
    %v6825 = vpop.f32.mrb[0].mxu0
    %6826 = vdwg.mxu0
    %v6827 = vld [vmem:[%s123] sm:$0xff]
    %v6828 = vld [vmem:[%s123 + $0x8] sm:$0xff]
    %v6829 = vld [vmem:[%s123 + $0x10] sm:$0xff]
    %v6830 = vld [vmem:[%s123 + $0x18] sm:$0xff]
    %v6835 = vunpack.c.l.b16 %v6827
    %v6836 = vunpack.c.h.b16 %v6827
    %v6837 = vunpack.c.l.b16 %v6828
    %v6838 = vunpack.c.h.b16 %v6828
    %v6839 = vunpack.c.l.b16 %v6829
    %v6840 = vunpack.c.h.b16 %v6829
    %v6841 = vunpack.c.l.b16 %v6830
    %v6842 = vunpack.c.h.b16 %v6830
    %v6843 = vpack.c.b16 %v6837, %v6835
    %v6844 = vpack.c.b16 %v6838, %v6836
    %v6845 = vpack.c.b16 %v6841, %v6839
    %v6846 = vpack.c.b16 %v6842, %v6840
    %6851 = vmatprep.subr.bf16.mxu0 %v6844
    %6852 = vmatpush1.bf16.msra.mxu0 %v6843
    %6853 = vmatprep.subr.bf16.mxu0 %v6846
    %6854 = vmatpush1.bf16.msra.mxu0 %v6845
    %6855 = vmatprep.subr.bf16.mxu0 0
    %6856 = vmatpush1.bf16.msra.mxu0 0
    %6857 = vmatprep.subr.bf16.mxu0 0
    %6858 = vmatpush1.bf16.msra.mxu0 0
    %6859 = vmatprep.subr.bf16.mxu0 0
    %6860 = vmatpush1.bf16.msra.mxu0 0
    %6861 = vmatprep.subr.bf16.mxu0 0
    %6862 = vmatpush1.bf16.msra.mxu0 0
    %6863 = vmatprep.subr.bf16.mxu0 0
    %6864 = vmatpush1.bf16.msra.mxu0 0
    %6865 = vmatprep.subr.bf16.mxu0 0
    %6866 = vmatpush1.bf16.msra.mxu0 0
    %6867 = vmatprep.subr.bf16.mxu0 0
    %6868 = vmatpush1.bf16.msra.mxu0 0
    %6869 = vmatprep.subr.bf16.mxu0 0
    %6870 = vmatpush1.bf16.msra.mxu0 0
    %6871 = vmatprep.subr.bf16.mxu0 0
    %6872 = vmatpush1.bf16.msra.mxu0 0
    %6873 = vmatprep.subr.bf16.mxu0 0
    %6874 = vmatpush1.bf16.msra.mxu0 0
    %6875 = vmatprep.subr.bf16.mxu0 0
    %6876 = vmatpush1.bf16.msra.mxu0 0
    %6877 = vmatprep.subr.bf16.mxu0 0
    %6878 = vmatpush1.bf16.msra.mxu0 0
    %6879 = vmatprep.subr.bf16.mxu0 0
    %6880 = vmatpush1.bf16.msra.mxu0 0
    %6881 = vmatprep.subr.bf16.mxu0 0
    %6882 = vmatpush1.bf16.msra.mxu0 0
    %6883 = vmatprep.mubr.bf16.mxu0 0
    %6884 = vmatmul.mubr.bf16.gmra.mrb[0].mxu0 %v5198
    %v6885 = vpop.f32.mrb[0].mxu0
    %v6886 = vadd.f32 0.0, %v6885
    %v6887 = vpop.f32.mrb[0].mxu0
    %v6888 = vadd.f32 0.0, %v6887
    %v6889 = vpop.f32.mrb[0].mxu0
    %v6890 = vpop.f32.mrb[0].mxu0
    %6891 = vdwg.mxu0
    %v6892 = vadd.f32 %v6821, %v6886
    %v6893 = vadd.f32 %v6823, %v6888
    %s6894 = scalar_lea.vmem %s123, 32
    %v6895 = vld [vmem:[%s6894] sm:$0xff]
    %v6896 = vld [vmem:[%s6894 + $0x8] sm:$0xff]
    %v6897 = vld [vmem:[%s6894 + $0x10] sm:$0xff]
    %v6898 = vld [vmem:[%s6894 + $0x18] sm:$0xff]
    %v6903 = vunpack.c.l.b16 %v6895
    %v6904 = vunpack.c.h.b16 %v6895
    %v6905 = vunpack.c.l.b16 %v6896
    %v6906 = vunpack.c.h.b16 %v6896
    %v6907 = vunpack.c.l.b16 %v6897
    %v6908 = vunpack.c.h.b16 %v6897
    %v6909 = vunpack.c.l.b16 %v6898
    %v6910 = vunpack.c.h.b16 %v6898
    %v6911 = vpack.c.b16 %v6905, %v6903
    %v6912 = vpack.c.b16 %v6906, %v6904
    %v6913 = vpack.c.b16 %v6909, %v6907
    %v6914 = vpack.c.b16 %v6910, %v6908
    %6919 = vmatprep.subr.bf16.mxu0 %v6912
    %6920 = vmatpush1.bf16.msra.mxu0 %v6911
    %6921 = vmatprep.subr.bf16.mxu0 %v6914
    %6922 = vmatpush1.bf16.msra.mxu0 %v6913
    %6923 = vmatprep.subr.bf16.mxu0 0
    %6924 = vmatpush1.bf16.msra.mxu0 0
    %6925 = vmatprep.subr.bf16.mxu0 0
    %6926 = vmatpush1.bf16.msra.mxu0 0
    %6927 = vmatprep.subr.bf16.mxu0 0
    %6928 = vmatpush1.bf16.msra.mxu0 0
    %6929 = vmatprep.subr.bf16.mxu0 0
    %6930 = vmatpush1.bf16.msra.mxu0 0
    %6931 = vmatprep.subr.bf16.mxu0 0
    %6932 = vmatpush1.bf16.msra.mxu0 0
    %6933 = vmatprep.subr.bf16.mxu0 0
    %6934 = vmatpush1.bf16.msra.mxu0 0
    %6935 = vmatprep.subr.bf16.mxu0 0
    %6936 = vmatpush1.bf16.msra.mxu0 0
    %6937 = vmatprep.subr.bf16.mxu0 0
    %6938 = vmatpush1.bf16.msra.mxu0 0
    %6939 = vmatprep.subr.bf16.mxu0 0
    %6940 = vmatpush1.bf16.msra.mxu0 0
    %6941 = vmatprep.subr.bf16.mxu0 0
    %6942 = vmatpush1.bf16.msra.mxu0 0
    %6943 = vmatprep.subr.bf16.mxu0 0
    %6944 = vmatpush1.bf16.msra.mxu0 0
    %6945 = vmatprep.subr.bf16.mxu0 0
    %6946 = vmatpush1.bf16.msra.mxu0 0
    %6947 = vmatprep.subr.bf16.mxu0 0
    %6948 = vmatpush1.bf16.msra.mxu0 0
    %6949 = vmatprep.subr.bf16.mxu0 0
    %6950 = vmatpush1.bf16.msra.mxu0 0
    %6951 = vmatprep.mubr.bf16.mxu0 0
    %6952 = vmatmul.mubr.bf16.gmra.mrb[0].mxu0 %v5270
    %v6953 = vpop.f32.mrb[0].mxu0
    %v6954 = vadd.f32 0.0, %v6953
    %v6955 = vpop.f32.mrb[0].mxu0
    %v6956 = vadd.f32 0.0, %v6955
    %v6957 = vpop.f32.mrb[0].mxu0
    %v6958 = vpop.f32.mrb[0].mxu0
    %6959 = vdwg.mxu0
    %v6960 = vadd.f32 %v6892, %v6954
    %v6961 = vadd.f32 %v6893, %v6956
    %s6962 = scalar_lea.vmem %s123, 64
    %v6963 = vld [vmem:[%s6962] sm:$0xff]
    %v6964 = vld [vmem:[%s6962 + $0x8] sm:$0xff]
    %v6965 = vld [vmem:[%s6962 + $0x10] sm:$0xff]
    %v6966 = vld [vmem:[%s6962 + $0x18] sm:$0xff]
    %v6971 = vunpack.c.l.b16 %v6963
    %v6972 = vunpack.c.h.b16 %v6963
    %v6973 = vunpack.c.l.b16 %v6964
    %v6974 = vunpack.c.h.b16 %v6964
    %v6975 = vunpack.c.l.b16 %v6965
    %v6976 = vunpack.c.h.b16 %v6965
    %v6977 = vunpack.c.l.b16 %v6966
    %v6978 = vunpack.c.h.b16 %v6966
    %v6979 = vpack.c.b16 %v6973, %v6971
    %v6980 = vpack.c.b16 %v6974, %v6972
    %v6981 = vpack.c.b16 %v6977, %v6975
    %v6982 = vpack.c.b16 %v6978, %v6976
    %6987 = vmatprep.subr.bf16.mxu0 %v6980
    %6988 = vmatpush1.bf16.msra.mxu0 %v6979
    %6989 = vmatprep.subr.bf16.mxu0 %v6982
    %6990 = vmatpush1.bf16.msra.mxu0 %v6981
    %6991 = vmatprep.subr.bf16.mxu0 0
    %6992 = vmatpush1.bf16.msra.mxu0 0
    %6993 = vmatprep.subr.bf16.mxu0 0
    %6994 = vmatpush1.bf16.msra.mxu0 0
    %6995 = vmatprep.subr.bf16.mxu0 0
    %6996 = vmatpush1.bf16.msra.mxu0 0
    %6997 = vmatprep.subr.bf16.mxu0 0
    %6998 = vmatpush1.bf16.msra.mxu0 0
    %6999 = vmatprep.subr.bf16.mxu0 0
    %7000 = vmatpush1.bf16.msra.mxu0 0
    %7001 = vmatprep.subr.bf16.mxu0 0
    %7002 = vmatpush1.bf16.msra.mxu0 0
    %7003 = vmatprep.subr.bf16.mxu0 0
    %7004 = vmatpush1.bf16.msra.mxu0 0
    %7005 = vmatprep.subr.bf16.mxu0 0
    %7006 = vmatpush1.bf16.msra.mxu0 0
    %7007 = vmatprep.subr.bf16.mxu0 0
    %7008 = vmatpush1.bf16.msra.mxu0 0
    %7009 = vmatprep.subr.bf16.mxu0 0
    %7010 = vmatpush1.bf16.msra.mxu0 0
    %7011 = vmatprep.subr.bf16.mxu0 0
    %7012 = vmatpush1.bf16.msra.mxu0 0
    %7013 = vmatprep.subr.bf16.mxu0 0
    %7014 = vmatpush1.bf16.msra.mxu0 0
    %7015 = vmatprep.subr.bf16.mxu0 0
    %7016 = vmatpush1.bf16.msra.mxu0 0
    %7017 = vmatprep.subr.bf16.mxu0 0
    %7018 = vmatpush1.bf16.msra.mxu0 0
    %7019 = vmatprep.mubr.bf16.mxu0 0
    %7020 = vmatmul.mubr.bf16.gmra.mrb[0].mxu0 %v5342
    %v7021 = vpop.f32.mrb[0].mxu0
    %v7022 = vadd.f32 0.0, %v7021
    %v7023 = vpop.f32.mrb[0].mxu0
    %v7024 = vadd.f32 0.0, %v7023
    %v7025 = vpop.f32.mrb[0].mxu0
    %v7026 = vpop.f32.mrb[0].mxu0
    %7027 = vdwg.mxu0
    %v7028 = vadd.f32 %v6960, %v7022
    %v7029 = vadd.f32 %v6961, %v7024
    %v7030 = vld [vmem:[#allocation35] sm:$0x3]
    %v7032 = vlaneseq
    %v7033 = vshrl.u32 %v7032, 7
    %v7034 = vsub.s32 0, %v7033
    %v7035 = vrot.slane %v7030, %v7034
    %v7036 = vlaneseq
    %v7037 = vshrl.u32 %v7036, 7
    %v7038 = vsub.s32 1, %v7037
    %v7039 = vrot.slane %v7030, %v7038
    %v7042 = vadd.f32 %v7028, %v7035
    %v7043 = vadd.f32 %v7029, %v7039
    %v7044 = vmax.f32 %v7042, 0.0
    %v7045 = vmax.f32 %v7043, 0.0
    %v7046 = vld [vmem:[%s131] sm:$0xff]
    %v7047 = vld [vmem:[%s131 + $0x8] sm:$0xff]
    %v7048 = vld [vmem:[%s131 + $0x10] sm:$0xff]
    %v7049 = vld [vmem:[%s131 + $0x18] sm:$0xff]
    %v7050 = vld [vmem:[%s131 + $0x20] sm:$0xff]
    %v7051 = vld [vmem:[%s131 + $0x28] sm:$0xff]
    %v7052 = vld [vmem:[%s131 + $0x30] sm:$0xff]
    %v7053 = vld [vmem:[%s131 + $0x38] sm:$0xff]
    %v7054 = vld [vmem:[%s131 + $0x40] sm:$0xff]
    %v7055 = vld [vmem:[%s131 + $0x48] sm:$0xff]
    %v7056 = vld [vmem:[%s131 + $0x50] sm:$0xff]
    %v7057 = vld [vmem:[%s131 + $0x58] sm:$0xff]
    %v7058 = vld [vmem:[%s131 + $0x60] sm:$0xff]
    %v7059 = vld [vmem:[%s131 + $0x68] sm:$0xff]
    %v7060 = vld [vmem:[%s131 + $0x70] sm:$0xff]
    %v7061 = vld [vmem:[%s131 + $0x78] sm:$0xff]
    %v7062 = vld [vmem:[%s131 + $0x80] sm:$0xff]
    %v7063 = vld [vmem:[%s131 + $0x88] sm:$0x33]
    %v7064 = vpack.c.bf16 %v7044, %v7044
    %v7065 = vpack.c.bf16 %v7045, %v7045
    %v7066 = vld [vmem:[#allocation36] sm:$0x3]
    %v7068 = vlaneseq
    %v7069 = vshrl.u32 %v7068, 7
    %v7070 = vsub.s32 0, %v7069
    %v7071 = vrot.slane %v7066, %v7070
    %v7072 = vlaneseq
    %v7073 = vshrl.u32 %v7072, 7
    %v7074 = vsub.s32 1, %v7073
    %v7075 = vrot.slane %v7066, %v7074
    %v7096 = vunpack.c.l.b16 %v7046
    %v7097 = vunpack.c.h.b16 %v7046
    %v7098 = vunpack.c.l.b16 %v7047
    %v7099 = vunpack.c.h.b16 %v7047
    %v7100 = vunpack.c.l.b16 %v7048
    %v7101 = vunpack.c.h.b16 %v7048
    %v7102 = vunpack.c.l.b16 %v7049
    %v7103 = vunpack.c.h.b16 %v7049
    %v7104 = vunpack.c.l.b16 %v7050
    %v7105 = vunpack.c.h.b16 %v7050
    %v7106 = vunpack.c.l.b16 %v7051
    %v7107 = vunpack.c.h.b16 %v7051
    %v7108 = vunpack.c.l.b16 %v7052
    %v7109 = vunpack.c.h.b16 %v7052
    %v7110 = vunpack.c.l.b16 %v7053
    %v7111 = vunpack.c.h.b16 %v7053
    %v7112 = vunpack.c.l.b16 %v7054
    %v7113 = vunpack.c.h.b16 %v7054
    %v7114 = vunpack.c.l.b16 %v7055
    %v7115 = vunpack.c.h.b16 %v7055
    %v7116 = vunpack.c.l.b16 %v7056
    %v7117 = vunpack.c.h.b16 %v7056
    %v7118 = vunpack.c.l.b16 %v7057
    %v7119 = vunpack.c.h.b16 %v7057
    %v7120 = vunpack.c.l.b16 %v7058
    %v7121 = vunpack.c.h.b16 %v7058
    %v7122 = vunpack.c.l.b16 %v7059
    %v7123 = vunpack.c.h.b16 %v7059
    %v7124 = vunpack.c.l.b16 %v7060
    %v7125 = vunpack.c.h.b16 %v7060
    %v7126 = vunpack.c.l.b16 %v7061
    %v7127 = vunpack.c.h.b16 %v7061
    %v7128 = vunpack.c.l.b16 %v7062
    %v7129 = vunpack.c.h.b16 %v7062
    %v7130 = vunpack.c.l.b16 %v7063
    %v7131 = vunpack.c.h.b16 %v7063
    %v7132 = vpack.c.b16 %v7098, %v7096
    %v7133 = vpack.c.b16 %v7099, %v7097
    %v7134 = vpack.c.b16 %v7102, %v7100
    %v7135 = vpack.c.b16 %v7103, %v7101
    %v7136 = vpack.c.b16 %v7106, %v7104
    %v7137 = vpack.c.b16 %v7107, %v7105
    %v7138 = vpack.c.b16 %v7110, %v7108
    %v7139 = vpack.c.b16 %v7111, %v7109
    %v7140 = vpack.c.b16 %v7114, %v7112
    %v7141 = vpack.c.b16 %v7115, %v7113
    %v7142 = vpack.c.b16 %v7118, %v7116
    %v7143 = vpack.c.b16 %v7119, %v7117
    %v7144 = vpack.c.b16 %v7122, %v7120
    %v7145 = vpack.c.b16 %v7123, %v7121
    %v7146 = vpack.c.b16 %v7126, %v7124
    %v7147 = vpack.c.b16 %v7127, %v7125
    %v7148 = vpack.c.b16 %v7130, %v7128
    %v7149 = vpack.c.b16 %v7131, %v7129
    %vm7166 = vcmask 89088
    %v7168 = vsel %vm7166, %v7065, 0
    %v7171 = vand.u32 %v7148, %v5685
    %v7174 = vand.u32 %v7149, %v5685
    %7176 = vmatprep.subr.bf16.mxu0 %v7133
    %7177 = vmatpush1.bf16.msra.mxu0 %v7132
    %7178 = vmatprep.subr.bf16.mxu0 %v7135
    %7179 = vmatpush1.bf16.msra.mxu0 %v7134
    %7180 = vmatprep.subr.bf16.mxu0 %v7137
    %7181 = vmatpush1.bf16.msra.mxu0 %v7136
    %7182 = vmatprep.subr.bf16.mxu0 %v7139
    %7183 = vmatpush1.bf16.msra.mxu0 %v7138
    %7184 = vmatprep.subr.bf16.mxu0 %v7141
    %7185 = vmatpush1.bf16.msra.mxu0 %v7140
    %7186 = vmatprep.subr.bf16.mxu0 %v7143
    %7187 = vmatpush1.bf16.msra.mxu0 %v7142
    %7188 = vmatprep.subr.bf16.mxu0 %v7145
    %7189 = vmatpush1.bf16.msra.mxu0 %v7144
    %7190 = vmatprep.subr.bf16.mxu0 %v7147
    %7191 = vmatpush1.bf16.msra.mxu0 %v7146
    %7192 = vmatprep.subr.bf16.mxu0 %v7174
    %7193 = vmatpush1.bf16.msra.mxu0 %v7171
    %7194 = vmatprep.subr.bf16.mxu0 0
    %7195 = vmatpush1.bf16.msra.mxu0 0
    %7196 = vmatprep.subr.bf16.mxu0 0
    %7197 = vmatpush1.bf16.msra.mxu0 0
    %7198 = vmatprep.subr.bf16.mxu0 0
    %7199 = vmatpush1.bf16.msra.mxu0 0
    %7200 = vmatprep.subr.bf16.mxu0 0
    %7201 = vmatpush1.bf16.msra.mxu0 0
    %7202 = vmatprep.subr.bf16.mxu0 0
    %7203 = vmatpush1.bf16.msra.mxu0 0
    %7204 = vmatprep.subr.bf16.mxu0 0
    %7205 = vmatpush1.bf16.msra.mxu0 0
    %7206 = vmatprep.subr.bf16.mxu0 0
    %7207 = vmatpush1.bf16.msra.mxu0 0
    %7208 = vmatprep.mubr.bf16.mxu0 %v7168
    %7209 = vmatmul.mubr.bf16.gmra.mrb[0].mxu0 %v7064
    %v7210 = vpop.f32.mrb[0].mxu0
    %v7211 = vadd.f32 %v7071, %v7210
    %v7212 = vpop.f32.mrb[0].mxu0
    %v7213 = vadd.f32 %v7075, %v7212
    %v7214 = vpop.f32.mrb[0].mxu0
    %v7215 = vpop.f32.mrb[0].mxu0
    %7216 = vdwg.mxu0
    %v7217 = vmax.f32 %v7211, 0.0
    %v7218 = vmax.f32 %v7213, 0.0
    %v7219 = vld [vmem:[%s135] sm:$0xf]
    %v7220 = vld [vmem:[%s135 + $0x4] sm:$0xf]
    %v7221 = vld [vmem:[%s135 + $0x8] sm:$0xf]
    %v7222 = vld [vmem:[%s135 + $0xc] sm:$0xf]
    %v7223 = vld [vmem:[%s135 + $0x10] sm:$0xf]
    %v7224 = vld [vmem:[%s135 + $0x14] sm:$0xf]
    %v7225 = vld [vmem:[%s135 + $0x18] sm:$0xf]
    %v7226 = vld [vmem:[%s135 + $0x1c] sm:$0xf]
    %v7227 = vld [vmem:[%s135 + $0x20] sm:$0xf]
    %v7228 = vld [vmem:[%s135 + $0x24] sm:$0xf]
    %v7229 = vld [vmem:[%s135 + $0x28] sm:$0xf]
    %v7230 = vld [vmem:[%s135 + $0x2c] sm:$0xf]
    %v7231 = vld [vmem:[%s135 + $0x30] sm:$0xf]
    %v7232 = vld [vmem:[%s135 + $0x34] sm:$0xf]
    %v7233 = vld [vmem:[%s135 + $0x38] sm:$0xf]
    %v7234 = vld [vmem:[%s135 + $0x3c] sm:$0xf]
    %v7235 = vld [vmem:[%s135 + $0x40] sm:$0xf]
    %v7236 = vld [vmem:[%s135 + $0x44] sm:$0x3]
    %v7237 = vpack.c.bf16 %v7217, %v7217
    %v7238 = vpack.c.bf16 %v7218, %v7218
    %v7239 = vld [vmem:[#allocation3] sm:$0x1]
    %v7241 = vlaneseq
    %v7242 = vshrl.u32 %v7241, 7
    %v7243 = vsub.s32 0, %v7242
    %v7244 = vrot.slane %v7239, %v7243
    %v7264 = vunpack.c.l.b16 %v7219
    %v7265 = vunpack.c.l.b16 %v7220
    %v7266 = vunpack.c.l.b16 %v7221
    %v7267 = vunpack.c.l.b16 %v7222
    %v7268 = vunpack.c.l.b16 %v7223
    %v7269 = vunpack.c.l.b16 %v7224
    %v7270 = vunpack.c.l.b16 %v7225
    %v7271 = vunpack.c.l.b16 %v7226
    %v7272 = vunpack.c.l.b16 %v7227
    %v7273 = vunpack.c.l.b16 %v7228
    %v7274 = vunpack.c.l.b16 %v7229
    %v7275 = vunpack.c.l.b16 %v7230
    %v7276 = vunpack.c.l.b16 %v7231
    %v7277 = vunpack.c.l.b16 %v7232
    %v7278 = vunpack.c.l.b16 %v7233
    %v7279 = vunpack.c.l.b16 %v7234
    %v7280 = vunpack.c.l.b16 %v7235
    %v7281 = vunpack.c.l.b16 %v7236
    %v7282 = vpack.c.b16 %v7265, %v7264
    %v7283 = vpack.c.b16 %v7267, %v7266
    %v7284 = vpack.c.b16 %v7269, %v7268
    %v7285 = vpack.c.b16 %v7271, %v7270
    %v7286 = vpack.c.b16 %v7273, %v7272
    %v7287 = vpack.c.b16 %v7275, %v7274
    %v7288 = vpack.c.b16 %v7277, %v7276
    %v7289 = vpack.c.b16 %v7279, %v7278
    %v7290 = vpack.c.b16 %v7281, %v7280
    %v7300 = vsel %vm7166, %v7238, 0
    %v7303 = vand.u32 %v7290, %v5685
    %7305 = vmatprep.subr.bf16.mxu0 0
    %7306 = vmatpush1.bf16.msra.mxu0 %v7282
    %7307 = vmatprep.subr.bf16.mxu0 0
    %7308 = vmatpush1.bf16.msra.mxu0 %v7283
    %7309 = vmatprep.subr.bf16.mxu0 0
    %7310 = vmatpush1.bf16.msra.mxu0 %v7284
    %7311 = vmatprep.subr.bf16.mxu0 0
    %7312 = vmatpush1.bf16.msra.mxu0 %v7285
    %7313 = vmatprep.subr.bf16.mxu0 0
    %7314 = vmatpush1.bf16.msra.mxu0 %v7286
    %7315 = vmatprep.subr.bf16.mxu0 0
    %7316 = vmatpush1.bf16.msra.mxu0 %v7287
    %7317 = vmatprep.subr.bf16.mxu0 0
    %7318 = vmatpush1.bf16.msra.mxu0 %v7288
    %7319 = vmatprep.subr.bf16.mxu0 0
    %7320 = vmatpush1.bf16.msra.mxu0 %v7289
    %7321 = vmatprep.subr.bf16.mxu0 0
    %7322 = vmatpush1.bf16.msra.mxu0 %v7303
    %7323 = vmatprep.subr.bf16.mxu0 0
    %7324 = vmatpush1.bf16.msra.mxu0 0
    %7325 = vmatprep.subr.bf16.mxu0 0
    %7326 = vmatpush1.bf16.msra.mxu0 0
    %7327 = vmatprep.subr.bf16.mxu0 0
    %7328 = vmatpush1.bf16.msra.mxu0 0
    %7329 = vmatprep.subr.bf16.mxu0 0
    %7330 = vmatpush1.bf16.msra.mxu0 0
    %7331 = vmatprep.subr.bf16.mxu0 0
    %7332 = vmatpush1.bf16.msra.mxu0 0
    %7333 = vmatprep.subr.bf16.mxu0 0
    %7334 = vmatpush1.bf16.msra.mxu0 0
    %7335 = vmatprep.subr.bf16.mxu0 0
    %7336 = vmatpush1.bf16.msra.mxu0 0
    %7337 = vmatprep.mubr.bf16.mxu0 %v7300
    %7338 = vmatmul.mubr.bf16.gmra.mrb[0].mxu0 %v7237
    %v7339 = vpop.f32.mrb[0].mxu0
    %v7340 = vadd.f32 %v7244, %v7339
    %v7341 = vpop.f32.mrb[0].mxu0
    %v7342 = vpop.f32.mrb[0].mxu0
    %v7343 = vpop.f32.mrb[0].mxu0
    %7344 = vdwg.mxu0
    %7345 = vst.msk [vmem:[%s143] sm:$0x3] %vm6691, %v7340
    // Predicated region
    $region366: #{dqn_forward.1} parent=1 // pred_check
      _
    $region367: #{dqn_forward.1} parent=1 // pred_check_branch
      %7347 = sbr.rel (0) target = $region369
    $region368: #{dqn_forward.1} parent=1 // pred_region
      _
    $region369: #{dqn_forward.1} parent=1 // pred_fallthru
      _
    // Predicated region
    $region370: #{dqn_forward.1} parent=1 // pred_check
      _
    $region371: #{dqn_forward.1} parent=1 // pred_check_branch
      %7349 = sbr.rel (0) target = $region373
    $region372: #{dqn_forward.1} parent=1 // pred_region
      _
    $region373: #{dqn_forward.1} parent=1 // pred_fallthru
      _
    // Predicated region
    $region374: #{dqn_forward.1} parent=1 // pred_check
      _
    $region375: #{dqn_forward.1} parent=1 // pred_check_branch
      %7351 = sbr.rel (0) target = $region377
    $region376: #{dqn_forward.1} parent=1 // pred_region
      _
    $region377: #{dqn_forward.1} parent=1 // pred_fallthru
      _
    // Predicated region
    $region378: #{dqn_forward.1} parent=1 // pred_check
      _
    $region379: #{dqn_forward.1} parent=1 // pred_check_branch
      %7353 = sbr.rel (0) target = $region381
    $region380: #{dqn_forward.1} parent=1 // pred_region
      _
    $region381: #{dqn_forward.1} parent=1 // pred_fallthru
      _
    // Predicated region
    $region382: #{dqn_forward.1} parent=1 // pred_check
      _
    $region383: #{dqn_forward.1} parent=1 // pred_check_branch
      %7355 = sbr.rel (0) target = $region385
    $region384: #{dqn_forward.1} parent=1 // pred_region
      _
    $region385: #{dqn_forward.1} parent=1 // pred_fallthru
      _
    // Predicated region
    $region386: #{dqn_forward.1} parent=1 // pred_check
      _
    $region387: #{dqn_forward.1} parent=1 // pred_check_branch
      %7357 = sbr.rel (0) target = $region389
    $region388: #{dqn_forward.1} parent=1 // pred_region
      _
    $region389: #{dqn_forward.1} parent=1 // pred_fallthru
      _
    %7358 = vsyncpa [#allocation5], 1
    %7359 = vsyncpa [#allocation7], 1
    %7360 = vsyncpa [#allocation10], 1
    %7361 = vsyncpa [#allocation13], 1
    %7362 = vsyncpa [#allocation16], 1
    %7363 = vsyncpa [#allocation19], 1
    %7364 = vsyncpa [#allocation22], 1
    %7365 = vsyncpa [#allocation25], 1
    %7366 = vsyncpa [#allocation28], 1
    %7367 = vsyncpa [#allocation31], 1
    %7368 = vsyncpa [#allocation34], 1
    %7369 = vsyncpa [#allocation37], 1

</llo_original>
